<compile_context>
chip_gen: v7x
topology: tpu7x:2x2x1
jax: 0.10.0
libtpu: 0.0.40
codegen_flags: <defaults>
</compile_context>

<pallas_src>
import functools
import numpy as np

import jax
import jax.numpy as jnp
from jax.experimental import pallas as pl
from jax.experimental.pallas import tpu as pltpu

EPS = 1e-5          # nn.BatchNorm2d default
NEG_SLOPE = 0.01    # nn.LeakyReLU default

_VMEM = pl.BlockSpec(memory_space=pltpu.MemorySpace.VMEM)


# ----------------------------------------------------------------------------
# Host-side (one-time, offline) weight repacking into banded matrices.
# ----------------------------------------------------------------------------
def _band(w_hwio, w_in, w_out, stride, pad, in_ch_total=None, in_ch_off=0):
    """Per-kernel-row banded weight matrices for a conv along the lane-folded
    W axis.  w_hwio: [K, K, cin, cout].  Returns
    [K, w_in*in_ch_total, w_out*cout] with W-direction zero padding, stride and
    (optional) input-channel selection folded in."""
    K = w_hwio.shape[0]
    cin, cout = w_hwio.shape[2], w_hwio.shape[3]
    ict = in_ch_total if in_ch_total is not None else cin
    m = np.zeros((K, w_in * ict, w_out * cout), np.float32)
    for ky in range(K):
        for kx in range(K):
            for wo in range(w_out):
                wi = wo * stride + kx - pad
                if 0 <= wi < w_in:
                    m[ky,
                      wi * ict + in_ch_off: wi * ict + in_ch_off + cin,
                      wo * cout: (wo + 1) * cout] = w_hwio[ky, kx]
    return m


def _ps_u2(w_hwio, chh, w2):
    """conv_u2 (3x3, pad 1) fused with PixelShuffle(2) in sub-pixel-conv form.
    Returns {(out_row_phase i, low-res row offset a): [w2*4*chh, 2*w2*chh]}.
    u1 channel order is the PyTorch PixelShuffle order q = c*4 + i2*2 + j2."""
    W = 2 * w2
    keys = [(0, -1), (0, 0), (1, 0), (1, 1)]
    mats = {k: np.zeros((w2 * 4 * chh, W * chh), np.float32) for k in keys}
    for i in (0, 1):
        for dy in (-1, 0, 1):
            a, i2 = divmod(i + dy, 2)
            for j in (0, 1):
                for dx in (-1, 0, 1):
                    b, j2 = divmod(j + dx, 2)
                    for w in range(w2):
                        wi = w + b
                        if not 0 <= wi < w2:
                            continue
                        for c in range(chh):
                            q = c * 4 + i2 * 2 + j2
                            mats[(i, a)][wi * 4 * chh + q,
                                         (2 * w + j) * chh:(2 * w + j) * chh + chh] += \
                                w_hwio[dy + 1, dx + 1, c, :]
    return mats


def _slab_offsets(cin, chh, cout, W):
    """Static row offsets of every banded matrix inside the packed slabs."""
    W2 = W // 2
    o128, r = {}, 0
    o128["c1a"] = r; r += 5 * W * cin
    o128["c1b"] = r; r += 5 * W * chh
    for k in ("pse0", "pse1", "pso0", "pso1"):
        o128[k] = r; r += W2 * 4 * chh
    n128 = r
    o64, r = {}, 0
    o64["L"] = r;     r += 5 * W * chh
    o64["R1"] = r;    r += 5 * W * chh
    o64["R2"] = r;    r += 5 * W2 * chh
    o64["R3"] = r;    r += 5 * W2 * chh
    o64["catL"] = r;  r += W2 * chh
    o64["catR"] = r;  r += W2 * chh
    o64["skip"] = r;  r += W * cin
    o64["skip2"] = r; r += W * chh
    n64 = r
    return o128, n128, o64, n64


def pack_params(p, W):
    """One-time repack of module params into a few lane-dense weight slabs.
    (For a real PyTorch checkpoint, convert OIHW conv weights to HWIO first.)
    Conv biases followed by training-mode BN are dropped (they cancel exactly);
    only conv_u1's bias is kept."""
    f = lambda a: np.asarray(a, np.float32)
    cin, chh = f(p["w1a"]).shape[2], f(p["w1a"]).shape[3]
    cout = f(p["ws"]).shape[3]
    half, W2 = chh // 2, W // 2
    o128, n128, o64, n64 = _slab_offsets(cin, chh, cout, W)

    # --- 128-lane slab (everything producing chh channels at full W) --------
    w128 = np.zeros((n128, W * chh), np.float32)
    w128[o128["c1a"]:o128["c1a"] + 5 * W * cin, :] = \
        _band(f(p["w1a"]), W, W, 1, 2).reshape(-1, W * chh)
    w128[o128["c1b"]:o128["c1b"] + 5 * W * chh, :] = \
        _band(f(p["w1b"]), W, W, 1, 2).reshape(-1, W * chh)
    ps = _ps_u2(f(p["wu2"]), chh, W2)
    for key, ia in (("pse0", (0, -1)), ("pse1", (0, 0)),
                    ("pso0", (1, 0)), ("pso1", (1, 1))):
        w128[o128[key]:o128[key] + W2 * 4 * chh, :] = ps[ia]

    # --- 64-lane slab (half-resolution convs + 1x1 convs) -------------------
    c64 = max(W2 * chh, W * cout)
    w64 = np.zeros((n64, c64), np.float32)

    def put64(name, mat):
        w64[o64[name]:o64[name] + mat.shape[0], :mat.shape[1]] = mat

    put64("L",  _band(f(p["wL"]),  W, W2, 2, 2, in_ch_total=chh, in_ch_off=0
                      ).reshape(-1, W2 * chh))
    put64("R1", _band(f(p["wR1"]), W, W2, 2, 2, in_ch_total=chh, in_ch_off=half
                      ).reshape(-1, W2 * chh))
    put64("R2", _band(f(p["wR2"]), W2, W2, 1, 2).reshape(-1, W2 * chh))
    put64("R3", _band(f(p["wR3"]), W2, W2, 1, 2).reshape(-1, W2 * chh))
    wc = f(p["wc"])
    put64("catL", _band(wc[:, :, :chh, :], W2, W2, 1, 0).reshape(-1, W2 * chh))
    put64("catR", _band(wc[:, :, chh:, :], W2, W2, 1, 0).reshape(-1, W2 * chh))
    put64("skip",  _band(f(p["ws"]),  W, W, 1, 0).reshape(-1, W * cout))
    put64("skip2", _band(f(p["ws2"]), W, W, 1, 0).reshape(-1, W * cout))

    # --- 256-lane slab: conv_u1 ---------------------------------------------
    w256 = _band(f(p["wu1"]), W2, W2, 1, 1).reshape(-1, W2 * 4 * chh)

    # conv_u1 bias, tiled across W2 (only surviving conv bias)
    bu1 = np.tile(f(p["bu1"]).reshape(-1), W2)[None, :]

    # BN gammas/betas packed: row 2k = gamma_k, row 2k+1 = beta_k
    cmax = max(chh, cout)
    bnvec = np.zeros((20, cmax), np.float32)
    order = [("g1a", "be1a", chh), ("g1b", "be1b", chh), ("gL", "beL", chh),
             ("gR1", "beR1", chh), ("gR2", "beR2", chh), ("gR3", "beR3", chh),
             ("gc", "bec", chh), ("gu", "beu", chh),
             ("gs", "bes", cout), ("gs2", "bes2", cout)]
    for k, (gn, bt, C) in enumerate(order):
        bnvec[2 * k, :C] = f(p[gn]).reshape(-1)
        bnvec[2 * k + 1, :C] = f(p[bt]).reshape(-1)

    return {"w128": jnp.asarray(w128), "w64": jnp.asarray(w64),
            "w256": jnp.asarray(w256), "bu1": jnp.asarray(bu1),
            "bn": jnp.asarray(bnvec)}


# ----------------------------------------------------------------------------
# The fused kernel.
# ----------------------------------------------------------------------------
def _make_kernel(B, H, W, cin, chh, cout):
    H2, W2 = H // 2, W // 2
    o128, _, o64, _ = _slab_offsets(cin, chh, cout, W)

    def kernel(x_ref, w128, w64, w256, bu1_ref, bnv_ref, o_ref,
               xpad, opad, hpad, u1pad):
        f32 = jnp.float32

        # -------- tiny helpers ------------------------------------------------
        def sel_matrix(Ws, C):
            """0/1 fold (L->C) and unfold (C->L) matrices for L = Ws*C lanes."""
            L = Ws * C
            li = jax.lax.broadcasted_iota(jnp.int32, (L, C), 0)
            ci = jax.lax.broadcasted_iota(jnp.int32, (L, C), 1)
            liT = jax.lax.broadcasted_iota(jnp.int32, (C, L), 1)
            ciT = jax.lax.broadcasted_iota(jnp.int32, (C, L), 0)
            if C & (C - 1) == 0:
                mF, mFT = (li & (C - 1)) == ci, (liT & (C - 1)) == ciT
            else:
                mF, mFT = (li % C) == ci, (liT % C) == ciT
            F = jnp.where(mF, 1.0, 0.0).astype(f32)
            FT = jnp.where(mFT, 1.0, 0.0).astype(f32)
            return F, FT

        def batchnorm(parts, Ws, C, idx, act, F, FT):
            """Training-mode BN (one pass) + activation on one or more 2-D
            [rows, Ws*C] slabs sharing the same statistics."""
            n = sum(p.shape[0] for p in parts) * Ws
            colsum = parts[0].sum(axis=0, keepdims=True)
            colsq = (parts[0] * parts[0]).sum(axis=0, keepdims=True)
            for p in parts[1:]:
                colsum = colsum + p.sum(axis=0, keepdims=True)
                colsq = colsq + (p * p).sum(axis=0, keepdims=True)
            ch = jnp.dot(jnp.concatenate([colsum, colsq], axis=0), F,
                         preferred_element_type=f32)                  # [2, C]
            mean = ch[0:1] * (1.0 / n)
            var = ch[1:2] * (1.0 / n) - mean * mean
            gamma = bnv_ref[2 * idx:2 * idx + 1, 0:C]
            beta = bnv_ref[2 * idx + 1:2 * idx + 2, 0:C]
            scale = gamma * jax.lax.rsqrt(var + EPS)
            shift = beta - mean * scale
            ss = jnp.dot(jnp.concatenate([scale, shift], axis=0), FT,
                         preferred_element_type=f32)                  # [2, L]
            outs = []
            for p in parts:
                y = p * ss[0:1, :] + ss[1:2, :]
                if act == "relu":
                    y = jnp.maximum(y, 0.0)
                elif act == "leaky":
                    y = jnp.where(y >= 0.0, y, NEG_SLOPE * y)
                outs.append(y)
            return outs if len(outs) > 1 else outs[0]

        def band_conv(buf, base, hout, K, stride, w_ref, off, ncols):
            """KxK conv as K banded matmuls (one per kernel row)."""
            bb, _, rpk = buf.shape
            acc = None
            for ky in range(K):
                if stride == 1:
                    slab = buf[:, base + ky: base + ky + hout, :]
                else:
                    slab = buf[:, pl.ds(base + ky, hout, stride), :]
                term = jnp.dot(slab.reshape(bb * hout, rpk),
                               w_ref[off + ky * rpk: off + (ky + 1) * rpk, 0:ncols],
                               preferred_element_type=f32)
                acc = term if acc is None else acc + term
            return acc

        def zero_halo(buf, pad):
            z = jnp.zeros((buf.shape[0], pad, buf.shape[2]), f32)
            buf[:, 0:pad, :] = z
            buf[:, buf.shape[1] - pad:buf.shape[1], :] = z

        F_f8, FT_f8 = sel_matrix(W, chh)     # full-res, chh channels
        F_h8, FT_h8 = sel_matrix(W2, chh)    # half-res, chh channels
        F_f4, FT_f4 = sel_matrix(W, cout)    # full-res, cout channels

        # zero only the halo rows of the staging buffers, once
        zero_halo(xpad, 2)
        zero_halo(opad, 2)
        zero_halo(hpad, 2)
        zero_halo(u1pad, 1)

        # ---------------- layer1 --------------------------------------------
        xpad[:, 2:2 + H, :] = x_ref[...]
        o = band_conv(xpad, 0, H, 5, 1, w128, o128["c1a"], W * chh)
        o = batchnorm([o], W, chh, 0, "relu", F_f8, FT_f8)
        opad[:, 2:2 + H, :] = o.reshape(B, H, W * chh)
        o1 = band_conv(opad, 0, H, 5, 1, w128, o128["c1b"], W * chh)
        o1 = batchnorm([o1], W, chh, 1, "leaky", F_f8, FT_f8)
        opad[:, 2:2 + H, :] = o1.reshape(B, H, W * chh)    # opad now holds o1

        # ---------------- layer_L / layer_R (chunk folded into weights) ------
        o2L = band_conv(opad, 0, H2, 5, 2, w64, o64["L"], W2 * chh)
        o2L = batchnorm([o2L], W2, chh, 2, "leaky", F_h8, FT_h8)

        r = band_conv(opad, 0, H2, 5, 2, w64, o64["R1"], W2 * chh)
        r = batchnorm([r], W2, chh, 3, "leaky", F_h8, FT_h8)
        hpad[:, 2:2 + H2, :] = r.reshape(B, H2, W2 * chh)
        r = band_conv(hpad, 0, H2, 5, 1, w64, o64["R2"], W2 * chh)
        r = batchnorm([r], W2, chh, 4, "leaky", F_h8, FT_h8)
        hpad[:, 2:2 + H2, :] = r.reshape(B, H2, W2 * chh)
        o2R = band_conv(hpad, 0, H2, 5, 1, w64, o64["R3"], W2 * chh)
        o2R = batchnorm([o2R], W2, chh, 5, "leaky", F_h8, FT_h8)

        # ---------------- layer_cat: 1x1 conv on concat = split matmuls ------
        o3 = (jnp.dot(o2L, w64[o64["catL"]:o64["catL"] + W2 * chh, 0:W2 * chh],
                      preferred_element_type=f32)
              + jnp.dot(o2R, w64[o64["catR"]:o64["catR"] + W2 * chh, 0:W2 * chh],
                        preferred_element_type=f32))
        o3 = batchnorm([o3], W2, chh, 6, "leaky", F_h8, FT_h8)

        # ---------------- layer_up: conv_u1 -> fused PixelShuffle + conv_u2 --
        hpad[:, 2:2 + H2, :] = o3.reshape(B, H2, W2 * chh)   # pad-1 view @ rows 1..
        u1 = band_conv(hpad, 1, H2, 3, 1, w256, 0, W2 * 4 * chh) + bu1_ref[...]
        u1pad[:, 1:1 + H2, :] = u1.reshape(B, H2, W2 * 4 * chh)

        rpk2 = W2 * 4 * chh

        def ps_mm(slab_off, key):
            slab = u1pad[:, slab_off:slab_off + H2, :].reshape(B * H2, rpk2)
            return jnp.dot(slab, w128[o128[key]:o128[key] + rpk2, :],
                           preferred_element_type=f32)

        u2e = ps_mm(0, "pse0") + ps_mm(1, "pse1")    # even full-res rows
        u2o = ps_mm(1, "pso0") + ps_mm(2, "pso1")    # odd  full-res rows
        u2e, u2o = batchnorm([u2e, u2o], W, chh, 7, "none", F_f8, FT_f8)

        # residual  o4 = layer_up(o3) + o1   (o1 row parities read from opad)
        o1e = opad[:, pl.ds(2, H2, 2), :].reshape(B * H2, W * chh)
        o1o = opad[:, pl.ds(3, H2, 2), :].reshape(B * H2, W * chh)
        o4e = u2e + o1e
        o4o = u2o + o1o

        # ---------------- skip(x) + skip2(o4): 1x1 convs + BN ---------------
        wsk = w64[o64["skip"]:o64["skip"] + W * cin, 0:W * cout]
        xe = x_ref[:, pl.ds(0, H2, 2), :].reshape(B * H2, W * cin)
        xo = x_ref[:, pl.ds(1, H2, 2), :].reshape(B * H2, W * cin)
        s1e = jnp.dot(xe, wsk, preferred_element_type=f32)
        s1o = jnp.dot(xo, wsk, preferred_element_type=f32)
        s1e, s1o = batchnorm([s1e, s1o], W, cout, 8, "none", F_f4, FT_f4)

        wsk2 = w64[o64["skip2"]:o64["skip2"] + W * chh, 0:W * cout]
        s2e = jnp.dot(o4e, wsk2, preferred_element_type=f32)
        s2o = jnp.dot(o4o, wsk2, preferred_element_type=f32)
        s2e, s2o = batchnorm([s2e, s2o], W, cout, 9, "none", F_f4, FT_f4)

        # lane-dense output: [B*H2, 2*W*cout], even|odd row phases side by side
        o_ref[...] = jnp.concatenate([s1e + s2e, s1o + s2o], axis=1)

    return kernel


# ----------------------------------------------------------------------------
# Host wrapper.
# ----------------------------------------------------------------------------
def resblock_forward(x_nchw, packed, *, chh, cout):
    x = jnp.transpose(x_nchw, (0, 2, 3, 1)).astype(jnp.float32)    # NCHW -> NHWC
    B, H, W, cin = x.shape
    H2, W2 = H // 2, W // 2
    xf = x.reshape(B, H, W * cin)                                  # fold W,C -> lanes

    kernel = _make_kernel(B, H, W, cin, chh, cout)
    scratch = [
        pltpu.VMEM((B, H + 4, W * cin), jnp.float32),        # xpad  (5x5, pad 2)
        pltpu.VMEM((B, H + 4, W * chh), jnp.float32),        # opad  (o, then o1)
        pltpu.VMEM((B, H2 + 4, W2 * chh), jnp.float32),      # hpad  (r1, r2, o3)
        pltpu.VMEM((B, H2 + 2, W2 * 4 * chh), jnp.float32),  # u1pad (3x3, pad 1)
    ]
    out = pl.pallas_call(
        kernel,
        out_shape=jax.ShapeDtypeStruct((B * H2, 2 * W * cout), jnp.float32),
        in_specs=[_VMEM] * 6,
        out_specs=_VMEM,
        scratch_shapes=scratch,
    )(xf, packed["w128"], packed["w64"], packed["w256"],
      packed["bu1"], packed["bn"])

    # un-interleave the row-parity phases: [B*H2, 2*W*cout] is exactly the
    # row-major layout of [B, H2, 2(parity), W, cout] == [B, H, W, cout].
    out = out.reshape(B, H, W, cout)
    return jnp.transpose(out, (0, 3, 1, 2))                        # NHWC -> NCHW


# ----------------------------------------------------------------------------
# Parameters (HWIO conv weights; biases that cancel in BN are still created
# for module fidelity but never used by the kernel).
# ----------------------------------------------------------------------------
def init_params(key, channels, ch_h, out_channels):
    p = {}

    def conv_init(k, ksz, cin, cout):
        kw, kb = jax.random.split(k)
        w = jax.random.normal(kw, (ksz, ksz, cin, cout), jnp.float32) * 0.1
        b = jax.random.normal(kb, (cout,), jnp.float32) * 0.1
        return w, b

    def bn_init(c):
        return jnp.ones((1, c), jnp.float32), jnp.zeros((1, c), jnp.float32)

    keys = jax.random.split(key, 11)
    half = ch_h // 2
    p["w1a"], p["b1a"] = conv_init(keys[0], 5, channels, ch_h)
    p["g1a"], p["be1a"] = bn_init(ch_h)
    p["w1b"], p["b1b"] = conv_init(keys[1], 5, ch_h, ch_h)
    p["g1b"], p["be1b"] = bn_init(ch_h)
    p["wL"], p["bL"] = conv_init(keys[2], 5, half, ch_h)
    p["gL"], p["beL"] = bn_init(ch_h)
    p["wR1"], p["bR1"] = conv_init(keys[3], 5, half, ch_h)
    p["gR1"], p["beR1"] = bn_init(ch_h)
    p["wR2"], p["bR2"] = conv_init(keys[4], 5, ch_h, ch_h)
    p["gR2"], p["beR2"] = bn_init(ch_h)
    p["wR3"], p["bR3"] = conv_init(keys[5], 5, ch_h, ch_h)
    p["gR3"], p["beR3"] = bn_init(ch_h)
    p["wc"], p["bc"] = conv_init(keys[6], 1, 2 * ch_h, ch_h)
    p["gc"], p["bec"] = bn_init(ch_h)
    p["wu1"], p["bu1"] = conv_init(keys[7], 3, ch_h, 4 * ch_h)
    p["wu2"], p["bu2"] = conv_init(keys[8], 3, ch_h, ch_h)
    p["gu"], p["beu"] = bn_init(ch_h)
    p["ws"], p["bs"] = conv_init(keys[9], 1, channels, out_channels)
    p["gs"], p["bes"] = bn_init(out_channels)
    p["ws2"], p["bs2"] = conv_init(keys[10], 1, ch_h, out_channels)
    p["gs2"], p["bes2"] = bn_init(out_channels)
    return p


# ----------------------------------------------------------------------------
if __name__ == "__main__":
    key = jax.random.PRNGKey(0)
    kx, kp = jax.random.split(key)

    B, channels, H, W = 2, 4, 16, 16
    channels_hind = 8
    out_channels = channels            # ResBlock default: out_channels or channels

    x = jax.random.normal(kx, (B, channels, H, W), jnp.float32)
    params = init_params(kp, channels, channels_hind, out_channels)
    packed = pack_params(params, W)    # one-time offline weight repack

    fwd = jax.jit(resblock_forward, static_argnames=("chh", "cout"))
    out = fwd(x, packed, chh=channels_hind, cout=out_channels)
    jax.block_until_ready(out)

    assert out.shape == (B, out_channels, H, W), out.shape
    assert bool(jnp.all(jnp.isfinite(out)))
    print("KERNEL_OK")
</pallas_src>

<mosaic_0001>
module attributes {stable_mosaic.version = 11 : i64} {
  func.func @kernel(%arg0: memref<2x16x64xf32, #tpu.memory_space<vmem>>, %arg1: memref<1984x128xf32, #tpu.memory_space<vmem>>, %arg2: memref<2240x64xf32, #tpu.memory_space<vmem>>, %arg3: memref<192x256xf32, #tpu.memory_space<vmem>>, %arg4: memref<1x256xf32, #tpu.memory_space<vmem>>, %arg5: memref<20x8xf32, #tpu.memory_space<vmem>>, %arg6: memref<16x128xf32, #tpu.memory_space<vmem>>, %arg7: memref<2x20x64xf32, #tpu.memory_space<vmem>>, %arg8: memref<2x20x128xf32, #tpu.memory_space<vmem>>, %arg9: memref<2x12x64xf32, #tpu.memory_space<vmem>>, %arg10: memref<2x10x256xf32, #tpu.memory_space<vmem>>) attributes {dimension_semantics = [], scalar_prefetch = 0 : i64, scratch_operands = 4 : i64, tpu.core_type = #tpu.core_type<tc>} {
    %0 = tpu.iota {dimensions = array<i32: 0>} : vector<128x8xi32>
    %1 = tpu.iota {dimensions = array<i32: 1>} : vector<128x8xi32>
    %2 = tpu.iota {dimensions = array<i32: 1>} : vector<8x128xi32>
    %3 = tpu.iota {dimensions = array<i32: 0>} : vector<8x128xi32>
    %c7_i32 = arith.constant 7 : i32
    %4 = vector.broadcast %c7_i32 : i32 to vector<128x8xi32>
    %5 = arith.andi %0, %4 : vector<128x8xi32>
    %6 = arith.cmpi eq, %5, %1 : vector<128x8xi32>
    %c7_i32_0 = arith.constant 7 : i32
    %7 = vector.broadcast %c7_i32_0 : i32 to vector<8x128xi32>
    %8 = arith.andi %2, %7 : vector<8x128xi32>
    %9 = arith.cmpi eq, %8, %3 : vector<8x128xi32>
    %cst = arith.constant 1.000000e+00 : f32
    %cst_1 = arith.constant 0.000000e+00 : f32
    %10 = vector.broadcast %cst : f32 to vector<128x8xf32>
    %11 = vector.broadcast %cst_1 : f32 to vector<128x8xf32>
    %12 = arith.select %6, %10, %11 : vector<128x8xi1>, vector<128x8xf32>
    %cst_2 = arith.constant 1.000000e+00 : f32
    %cst_3 = arith.constant 0.000000e+00 : f32
    %13 = vector.broadcast %cst_2 : f32 to vector<8x128xf32>
    %14 = vector.broadcast %cst_3 : f32 to vector<8x128xf32>
    %15 = arith.select %9, %13, %14 : vector<8x128xi1>, vector<8x128xf32>
    %16 = tpu.iota {dimensions = array<i32: 0>} : vector<64x8xi32>
    %17 = tpu.iota {dimensions = array<i32: 1>} : vector<64x8xi32>
    %18 = tpu.iota {dimensions = array<i32: 1>} : vector<8x64xi32>
    %19 = tpu.iota {dimensions = array<i32: 0>} : vector<8x64xi32>
    %c7_i32_4 = arith.constant 7 : i32
    %20 = vector.broadcast %c7_i32_4 : i32 to vector<64x8xi32>
    %21 = arith.andi %16, %20 : vector<64x8xi32>
    %22 = arith.cmpi eq, %21, %17 : vector<64x8xi32>
    %c7_i32_5 = arith.constant 7 : i32
    %23 = vector.broadcast %c7_i32_5 : i32 to vector<8x64xi32>
    %24 = arith.andi %18, %23 : vector<8x64xi32>
    %25 = arith.cmpi eq, %24, %19 : vector<8x64xi32>
    %cst_6 = arith.constant 1.000000e+00 : f32
    %cst_7 = arith.constant 0.000000e+00 : f32
    %26 = vector.broadcast %cst_6 : f32 to vector<64x8xf32>
    %27 = vector.broadcast %cst_7 : f32 to vector<64x8xf32>
    %28 = arith.select %22, %26, %27 : vector<64x8xi1>, vector<64x8xf32>
    %cst_8 = arith.constant 1.000000e+00 : f32
    %cst_9 = arith.constant 0.000000e+00 : f32
    %29 = vector.broadcast %cst_8 : f32 to vector<8x64xf32>
    %30 = vector.broadcast %cst_9 : f32 to vector<8x64xf32>
    %31 = arith.select %25, %29, %30 : vector<8x64xi1>, vector<8x64xf32>
    %32 = tpu.iota {dimensions = array<i32: 0>} : vector<64x4xi32>
    %33 = tpu.iota {dimensions = array<i32: 1>} : vector<64x4xi32>
    %34 = tpu.iota {dimensions = array<i32: 1>} : vector<4x64xi32>
    %35 = tpu.iota {dimensions = array<i32: 0>} : vector<4x64xi32>
    %c3_i32 = arith.constant 3 : i32
    %36 = vector.broadcast %c3_i32 : i32 to vector<64x4xi32>
    %37 = arith.andi %32, %36 : vector<64x4xi32>
    %38 = arith.cmpi eq, %37, %33 : vector<64x4xi32>
    %c3_i32_10 = arith.constant 3 : i32
    %39 = vector.broadcast %c3_i32_10 : i32 to vector<4x64xi32>
    %40 = arith.andi %34, %39 : vector<4x64xi32>
    %41 = arith.cmpi eq, %40, %35 : vector<4x64xi32>
    %cst_11 = arith.constant 1.000000e+00 : f32
    %cst_12 = arith.constant 0.000000e+00 : f32
    %42 = vector.broadcast %cst_11 : f32 to vector<64x4xf32>
    %43 = vector.broadcast %cst_12 : f32 to vector<64x4xf32>
    %44 = arith.select %38, %42, %43 : vector<64x4xi1>, vector<64x4xf32>
    %cst_13 = arith.constant 1.000000e+00 : f32
    %cst_14 = arith.constant 0.000000e+00 : f32
    %45 = vector.broadcast %cst_13 : f32 to vector<4x64xf32>
    %46 = vector.broadcast %cst_14 : f32 to vector<4x64xf32>
    %47 = arith.select %41, %45, %46 : vector<4x64xi1>, vector<4x64xf32>
    %cst_15 = arith.constant 0.000000e+00 : f32
    %48 = vector.broadcast %cst_15 : f32 to vector<2x2x64xf32>
    %c0 = arith.constant 0 : index
    %c0_16 = arith.constant 0 : index
    %c0_17 = arith.constant 0 : index
    %49 = vector.load %arg7[%c0, %c0_16, %c0_17] : memref<2x20x64xf32, #tpu.memory_space<vmem>>, vector<2x2x64xf32>
    tpu.vector_store %arg7[%c0, %c0_16, %c0_17], %48 {strides = array<i32>} : memref<2x20x64xf32, #tpu.memory_space<vmem>>, vector<2x2x64xf32>,
    %c0_18 = arith.constant 0 : index
    %c18 = arith.constant 18 : index
    %c0_19 = arith.constant 0 : index
    %50 = vector.load %arg7[%c0_18, %c18, %c0_19] : memref<2x20x64xf32, #tpu.memory_space<vmem>>, vector<2x2x64xf32>
    tpu.vector_store %arg7[%c0_18, %c18, %c0_19], %48 {strides = array<i32>} : memref<2x20x64xf32, #tpu.memory_space<vmem>>, vector<2x2x64xf32>,
    %cst_20 = arith.constant 0.000000e+00 : f32
    %51 = vector.broadcast %cst_20 : f32 to vector<2x2x128xf32>
    %c0_21 = arith.constant 0 : index
    %c0_22 = arith.constant 0 : index
    %c0_23 = arith.constant 0 : index
    %52 = vector.load %arg8[%c0_21, %c0_22, %c0_23] : memref<2x20x128xf32, #tpu.memory_space<vmem>>, vector<2x2x128xf32>
    tpu.vector_store %arg8[%c0_21, %c0_22, %c0_23], %51 {strides = array<i32>} : memref<2x20x128xf32, #tpu.memory_space<vmem>>, vector<2x2x128xf32>,
    %c0_24 = arith.constant 0 : index
    %c18_25 = arith.constant 18 : index
    %c0_26 = arith.constant 0 : index
    %53 = vector.load %arg8[%c0_24, %c18_25, %c0_26] : memref<2x20x128xf32, #tpu.memory_space<vmem>>, vector<2x2x128xf32>
    tpu.vector_store %arg8[%c0_24, %c18_25, %c0_26], %51 {strides = array<i32>} : memref<2x20x128xf32, #tpu.memory_space<vmem>>, vector<2x2x128xf32>,
    %cst_27 = arith.constant 0.000000e+00 : f32
    %54 = vector.broadcast %cst_27 : f32 to vector<2x2x64xf32>
    %c0_28 = arith.constant 0 : index
    %c0_29 = arith.constant 0 : index
    %c0_30 = arith.constant 0 : index
    %55 = vector.load %arg9[%c0_28, %c0_29, %c0_30] : memref<2x12x64xf32, #tpu.memory_space<vmem>>, vector<2x2x64xf32>
    tpu.vector_store %arg9[%c0_28, %c0_29, %c0_30], %54 {strides = array<i32>} : memref<2x12x64xf32, #tpu.memory_space<vmem>>, vector<2x2x64xf32>,
    %c0_31 = arith.constant 0 : index
    %c10 = arith.constant 10 : index
    %c0_32 = arith.constant 0 : index
    %56 = vector.load %arg9[%c0_31, %c10, %c0_32] : memref<2x12x64xf32, #tpu.memory_space<vmem>>, vector<2x2x64xf32>
    tpu.vector_store %arg9[%c0_31, %c10, %c0_32], %54 {strides = array<i32>} : memref<2x12x64xf32, #tpu.memory_space<vmem>>, vector<2x2x64xf32>,
    %cst_33 = arith.constant 0.000000e+00 : f32
    %57 = vector.broadcast %cst_33 : f32 to vector<2x1x256xf32>
    %c0_34 = arith.constant 0 : index
    %c0_35 = arith.constant 0 : index
    %c0_36 = arith.constant 0 : index
    %58 = vector.load %arg10[%c0_34, %c0_35, %c0_36] : memref<2x10x256xf32, #tpu.memory_space<vmem>>, vector<2x1x256xf32>
    tpu.vector_store %arg10[%c0_34, %c0_35, %c0_36], %57 {strides = array<i32>} : memref<2x10x256xf32, #tpu.memory_space<vmem>>, vector<2x1x256xf32>,
    %c0_37 = arith.constant 0 : index
    %c9 = arith.constant 9 : index
    %c0_38 = arith.constant 0 : index
    %59 = vector.load %arg10[%c0_37, %c9, %c0_38] : memref<2x10x256xf32, #tpu.memory_space<vmem>>, vector<2x1x256xf32>
    tpu.vector_store %arg10[%c0_37, %c9, %c0_38], %57 {strides = array<i32>} : memref<2x10x256xf32, #tpu.memory_space<vmem>>, vector<2x1x256xf32>,
    %c0_39 = arith.constant 0 : index
    %c0_40 = arith.constant 0 : index
    %c0_41 = arith.constant 0 : index
    %60 = vector.load %arg0[%c0_39, %c0_40, %c0_41] : memref<2x16x64xf32, #tpu.memory_space<vmem>>, vector<2x16x64xf32>
    %c0_42 = arith.constant 0 : index
    %c2 = arith.constant 2 : index
    %c0_43 = arith.constant 0 : index
    %61 = vector.load %arg7[%c0_42, %c2, %c0_43] : memref<2x20x64xf32, #tpu.memory_space<vmem>>, vector<2x16x64xf32>
    tpu.vector_store %arg7[%c0_42, %c2, %c0_43], %60 {strides = array<i32>} : memref<2x20x64xf32, #tpu.memory_space<vmem>>, vector<2x16x64xf32>,
    %c0_44 = arith.constant 0 : index
    %c0_45 = arith.constant 0 : index
    %c0_46 = arith.constant 0 : index
    %62 = vector.load %arg7[%c0_44, %c0_45, %c0_46] : memref<2x20x64xf32, #tpu.memory_space<vmem>>, vector<2x16x64xf32>
    %63 = vector.shape_cast %62 : vector<2x16x64xf32> to vector<32x64xf32>
    %c0_47 = arith.constant 0 : index
    %c0_48 = arith.constant 0 : index
    %64 = vector.load %arg1[%c0_47, %c0_48] : memref<1984x128xf32, #tpu.memory_space<vmem>>, vector<64x128xf32>
    %cst_49 = arith.constant dense<0.000000e+00> : vector<32x128xf32>
    %65 = tpu.matmul %63, %64, %cst_49 {dimension_numbers = #tpu.dot_dimension_numbers<[1], [0], [0], [1], [0, 0, 1, 1], [], []>} : vector<32x64xf32>, vector<64x128xf32>, vector<32x128xf32> -> vector<32x128xf32>
    %c0_50 = arith.constant 0 : index
    %c1 = arith.constant 1 : index
    %c0_51 = arith.constant 0 : index
    %66 = vector.load %arg7[%c0_50, %c1, %c0_51] : memref<2x20x64xf32, #tpu.memory_space<vmem>>, vector<2x16x64xf32>
    %67 = vector.shape_cast %66 : vector<2x16x64xf32> to vector<32x64xf32>
    %c64 = arith.constant 64 : index
    %c0_52 = arith.constant 0 : index
    %68 = vector.load %arg1[%c64, %c0_52] : memref<1984x128xf32, #tpu.memory_space<vmem>>, vector<64x128xf32>
    %cst_53 = arith.constant dense<0.000000e+00> : vector<32x128xf32>
    %69 = tpu.matmul %67, %68, %cst_53 {dimension_numbers = #tpu.dot_dimension_numbers<[1], [0], [0], [1], [0, 0, 1, 1], [], []>} : vector<32x64xf32>, vector<64x128xf32>, vector<32x128xf32> -> vector<32x128xf32>
    %70 = arith.addf %65, %69 : vector<32x128xf32>
    %c0_54 = arith.constant 0 : index
    %c2_55 = arith.constant 2 : index
    %c0_56 = arith.constant 0 : index
    %71 = vector.load %arg7[%c0_54, %c2_55, %c0_56] : memref<2x20x64xf32, #tpu.memory_space<vmem>>, vector<2x16x64xf32>
    %72 = vector.shape_cast %71 : vector<2x16x64xf32> to vector<32x64xf32>
    %c128 = arith.constant 128 : index
    %c0_57 = arith.constant 0 : index
    %73 = vector.load %arg1[%c128, %c0_57] : memref<1984x128xf32, #tpu.memory_space<vmem>>, vector<64x128xf32>
    %cst_58 = arith.constant dense<0.000000e+00> : vector<32x128xf32>
    %74 = tpu.matmul %72, %73, %cst_58 {dimension_numbers = #tpu.dot_dimension_numbers<[1], [0], [0], [1], [0, 0, 1, 1], [], []>} : vector<32x64xf32>, vector<64x128xf32>, vector<32x128xf32> -> vector<32x128xf32>
    %75 = arith.addf %70, %74 : vector<32x128xf32>
    %c0_59 = arith.constant 0 : index
    %c3 = arith.constant 3 : index
    %c0_60 = arith.constant 0 : index
    %76 = vector.load %arg7[%c0_59, %c3, %c0_60] : memref<2x20x64xf32, #tpu.memory_space<vmem>>, vector<2x16x64xf32>
    %77 = vector.shape_cast %76 : vector<2x16x64xf32> to vector<32x64xf32>
    %c192 = arith.constant 192 : index
    %c0_61 = arith.constant 0 : index
    %78 = vector.load %arg1[%c192, %c0_61] : memref<1984x128xf32, #tpu.memory_space<vmem>>, vector<64x128xf32>
    %cst_62 = arith.constant dense<0.000000e+00> : vector<32x128xf32>
    %79 = tpu.matmul %77, %78, %cst_62 {dimension_numbers = #tpu.dot_dimension_numbers<[1], [0], [0], [1], [0, 0, 1, 1], [], []>} : vector<32x64xf32>, vector<64x128xf32>, vector<32x128xf32> -> vector<32x128xf32>
    %80 = arith.addf %75, %79 : vector<32x128xf32>
    %c0_63 = arith.constant 0 : index
    %c4 = arith.constant 4 : index
    %c0_64 = arith.constant 0 : index
    %81 = vector.load %arg7[%c0_63, %c4, %c0_64] : memref<2x20x64xf32, #tpu.memory_space<vmem>>, vector<2x16x64xf32>
    %82 = vector.shape_cast %81 : vector<2x16x64xf32> to vector<32x64xf32>
    %c256 = arith.constant 256 : index
    %c0_65 = arith.constant 0 : index
    %83 = vector.load %arg1[%c256, %c0_65] : memref<1984x128xf32, #tpu.memory_space<vmem>>, vector<64x128xf32>
    %cst_66 = arith.constant dense<0.000000e+00> : vector<32x128xf32>
    %84 = tpu.matmul %82, %83, %cst_66 {dimension_numbers = #tpu.dot_dimension_numbers<[1], [0], [0], [1], [0, 0, 1, 1], [], []>} : vector<32x64xf32>, vector<64x128xf32>, vector<32x128xf32> -> vector<32x128xf32>
    %85 = arith.addf %80, %84 : vector<32x128xf32>
    %cst_67 = arith.constant dense<0.000000e+00> : vector<128xf32>
    %86 = vector.multi_reduction <add>, %85, %cst_67 [0] : vector<32x128xf32> to vector<128xf32>
    %87 = vector.shape_cast %86 : vector<128xf32> to vector<1x128xf32>
    %88 = arith.mulf %85, %85 : vector<32x128xf32>
    %cst_68 = arith.constant dense<0.000000e+00> : vector<128xf32>
    %89 = vector.multi_reduction <add>, %88, %cst_68 [0] : vector<32x128xf32> to vector<128xf32>
    %90 = vector.shape_cast %89 : vector<128xf32> to vector<1x128xf32>
    %91 = tpu.concatenate %87, %90 in 0 : vector<1x128xf32>, vector<1x128xf32> -> vector<2x128xf32>
    %cst_69 = arith.constant dense<0.000000e+00> : vector<2x8xf32>
    %92 = tpu.matmul %91, %12, %cst_69 {dimension_numbers = #tpu.dot_dimension_numbers<[1], [0], [0], [1], [0, 0, 1, 1], [], []>} : vector<2x128xf32>, vector<128x8xf32>, vector<2x8xf32> -> vector<2x8xf32>
    %93 = vector.extract_strided_slice %92 {offsets = [0, 0], sizes = [1, 8], strides = [1, 1]} : vector<2x8xf32> to vector<1x8xf32>
    %cst_70 = arith.constant 0.001953125 : f32
    %94 = vector.broadcast %cst_70 : f32 to vector<1x8xf32>
    %95 = arith.mulf %93, %94 : vector<1x8xf32>
    %96 = vector.extract_strided_slice %92 {offsets = [1, 0], sizes = [1, 8], strides = [1, 1]} : vector<2x8xf32> to vector<1x8xf32>
    %cst_71 = arith.constant 0.001953125 : f32
    %97 = vector.broadcast %cst_71 : f32 to vector<1x8xf32>
    %98 = arith.mulf %96, %97 : vector<1x8xf32>
    %99 = arith.mulf %95, %95 : vector<1x8xf32>
    %100 = arith.subf %98, %99 : vector<1x8xf32>
    %c0_72 = arith.constant 0 : index
    %c0_73 = arith.constant 0 : index
    %101 = vector.load %arg5[%c0_72, %c0_73] : memref<20x8xf32, #tpu.memory_space<vmem>>, vector<1x8xf32>
    %c1_74 = arith.constant 1 : index
    %c0_75 = arith.constant 0 : index
    %102 = vector.load %arg5[%c1_74, %c0_75] : memref<20x8xf32, #tpu.memory_space<vmem>>, vector<1x8xf32>
    %cst_76 = arith.constant 9.99999974E-6 : f32
    %103 = vector.broadcast %cst_76 : f32 to vector<1x8xf32>
    %104 = arith.addf %100, %103 : vector<1x8xf32>
    %105 = math.rsqrt %104 : vector<1x8xf32>
    %106 = arith.mulf %101, %105 : vector<1x8xf32>
    %107 = arith.mulf %95, %106 : vector<1x8xf32>
    %108 = arith.subf %102, %107 : vector<1x8xf32>
    %109 = tpu.concatenate %106, %108 in 0 : vector<1x8xf32>, vector<1x8xf32> -> vector<2x8xf32>
    %cst_77 = arith.constant dense<0.000000e+00> : vector<2x128xf32>
    %110 = tpu.matmul %109, %15, %cst_77 {dimension_numbers = #tpu.dot_dimension_numbers<[1], [0], [0], [1], [0, 0, 1, 1], [], []>} : vector<2x8xf32>, vector<8x128xf32>, vector<2x128xf32> -> vector<2x128xf32>
    %111 = vector.extract_strided_slice %110 {offsets = [0, 0], sizes = [1, 128], strides = [1, 1]} : vector<2x128xf32> to vector<1x128xf32>
    %112 = vector.broadcast %111 : vector<1x128xf32> to vector<32x128xf32>
    %113 = arith.mulf %85, %112 : vector<32x128xf32>
    %114 = vector.extract_strided_slice %110 {offsets = [1, 0], sizes = [1, 128], strides = [1, 1]} : vector<2x128xf32> to vector<1x128xf32>
    %115 = vector.broadcast %114 : vector<1x128xf32> to vector<32x128xf32>
    %116 = arith.addf %113, %115 : vector<32x128xf32>
    %cst_78 = arith.constant 0.000000e+00 : f32
    %117 = vector.broadcast %cst_78 : f32 to vector<32x128xf32>
    %118 = arith.maximumf %116, %117 : vector<32x128xf32>
    %119 = vector.shape_cast %118 : vector<32x128xf32> to vector<2x16x128xf32>
    %c0_79 = arith.constant 0 : index
    %c2_80 = arith.constant 2 : index
    %c0_81 = arith.constant 0 : index
    %120 = vector.load %arg8[%c0_79, %c2_80, %c0_81] : memref<2x20x128xf32, #tpu.memory_space<vmem>>, vector<2x16x128xf32>
    tpu.vector_store %arg8[%c0_79, %c2_80, %c0_81], %119 {strides = array<i32>} : memref<2x20x128xf32, #tpu.memory_space<vmem>>, vector<2x16x128xf32>,
    %c0_82 = arith.constant 0 : index
    %c0_83 = arith.constant 0 : index
    %c0_84 = arith.constant 0 : index
    %121 = vector.load %arg8[%c0_82, %c0_83, %c0_84] : memref<2x20x128xf32, #tpu.memory_space<vmem>>, vector<2x16x128xf32>
    %122 = vector.shape_cast %121 : vector<2x16x128xf32> to vector<32x128xf32>
    %c320 = arith.constant 320 : index
    %c0_85 = arith.constant 0 : index
    %123 = vector.load %arg1[%c320, %c0_85] : memref<1984x128xf32, #tpu.memory_space<vmem>>, vector<128x128xf32>
    %cst_86 = arith.constant dense<0.000000e+00> : vector<32x128xf32>
    %124 = tpu.matmul %122, %123, %cst_86 {dimension_numbers = #tpu.dot_dimension_numbers<[1], [0], [0], [1], [0, 0, 1, 1], [], []>} : vector<32x128xf32>, vector<128x128xf32>, vector<32x128xf32> -> vector<32x128xf32>
    %c0_87 = arith.constant 0 : index
    %c1_88 = arith.constant 1 : index
    %c0_89 = arith.constant 0 : index
    %125 = vector.load %arg8[%c0_87, %c1_88, %c0_89] : memref<2x20x128xf32, #tpu.memory_space<vmem>>, vector<2x16x128xf32>
    %126 = vector.shape_cast %125 : vector<2x16x128xf32> to vector<32x128xf32>
    %c448 = arith.constant 448 : index
    %c0_90 = arith.constant 0 : index
    %127 = vector.load %arg1[%c448, %c0_90] : memref<1984x128xf32, #tpu.memory_space<vmem>>, vector<128x128xf32>
    %cst_91 = arith.constant dense<0.000000e+00> : vector<32x128xf32>
    %128 = tpu.matmul %126, %127, %cst_91 {dimension_numbers = #tpu.dot_dimension_numbers<[1], [0], [0], [1], [0, 0, 1, 1], [], []>} : vector<32x128xf32>, vector<128x128xf32>, vector<32x128xf32> -> vector<32x128xf32>
    %129 = arith.addf %124, %128 : vector<32x128xf32>
    %c0_92 = arith.constant 0 : index
    %c2_93 = arith.constant 2 : index
    %c0_94 = arith.constant 0 : index
    %130 = vector.load %arg8[%c0_92, %c2_93, %c0_94] : memref<2x20x128xf32, #tpu.memory_space<vmem>>, vector<2x16x128xf32>
    %131 = vector.shape_cast %130 : vector<2x16x128xf32> to vector<32x128xf32>
    %c576 = arith.constant 576 : index
    %c0_95 = arith.constant 0 : index
    %132 = vector.load %arg1[%c576, %c0_95] : memref<1984x128xf32, #tpu.memory_space<vmem>>, vector<128x128xf32>
    %cst_96 = arith.constant dense<0.000000e+00> : vector<32x128xf32>
    %133 = tpu.matmul %131, %132, %cst_96 {dimension_numbers = #tpu.dot_dimension_numbers<[1], [0], [0], [1], [0, 0, 1, 1], [], []>} : vector<32x128xf32>, vector<128x128xf32>, vector<32x128xf32> -> vector<32x128xf32>
    %134 = arith.addf %129, %133 : vector<32x128xf32>
    %c0_97 = arith.constant 0 : index
    %c3_98 = arith.constant 3 : index
    %c0_99 = arith.constant 0 : index
    %135 = vector.load %arg8[%c0_97, %c3_98, %c0_99] : memref<2x20x128xf32, #tpu.memory_space<vmem>>, vector<2x16x128xf32>
    %136 = vector.shape_cast %135 : vector<2x16x128xf32> to vector<32x128xf32>
    %c704 = arith.constant 704 : index
    %c0_100 = arith.constant 0 : index
    %137 = vector.load %arg1[%c704, %c0_100] : memref<1984x128xf32, #tpu.memory_space<vmem>>, vector<128x128xf32>
    %cst_101 = arith.constant dense<0.000000e+00> : vector<32x128xf32>
    %138 = tpu.matmul %136, %137, %cst_101 {dimension_numbers = #tpu.dot_dimension_numbers<[1], [0], [0], [1], [0, 0, 1, 1], [], []>} : vector<32x128xf32>, vector<128x128xf32>, vector<32x128xf32> -> vector<32x128xf32>
    %139 = arith.addf %134, %138 : vector<32x128xf32>
    %c0_102 = arith.constant 0 : index
    %c4_103 = arith.constant 4 : index
    %c0_104 = arith.constant 0 : index
    %140 = vector.load %arg8[%c0_102, %c4_103, %c0_104] : memref<2x20x128xf32, #tpu.memory_space<vmem>>, vector<2x16x128xf32>
    %141 = vector.shape_cast %140 : vector<2x16x128xf32> to vector<32x128xf32>
    %c832 = arith.constant 832 : index
    %c0_105 = arith.constant 0 : index
    %142 = vector.load %arg1[%c832, %c0_105] : memref<1984x128xf32, #tpu.memory_space<vmem>>, vector<128x128xf32>
    %cst_106 = arith.constant dense<0.000000e+00> : vector<32x128xf32>
    %143 = tpu.matmul %141, %142, %cst_106 {dimension_numbers = #tpu.dot_dimension_numbers<[1], [0], [0], [1], [0, 0, 1, 1], [], []>} : vector<32x128xf32>, vector<128x128xf32>, vector<32x128xf32> -> vector<32x128xf32>
    %144 = arith.addf %139, %143 : vector<32x128xf32>
    %cst_107 = arith.constant dense<0.000000e+00> : vector<128xf32>
    %145 = vector.multi_reduction <add>, %144, %cst_107 [0] : vector<32x128xf32> to vector<128xf32>
    %146 = vector.shape_cast %145 : vector<128xf32> to vector<1x128xf32>
    %147 = arith.mulf %144, %144 : vector<32x128xf32>
    %cst_108 = arith.constant dense<0.000000e+00> : vector<128xf32>
    %148 = vector.multi_reduction <add>, %147, %cst_108 [0] : vector<32x128xf32> to vector<128xf32>
    %149 = vector.shape_cast %148 : vector<128xf32> to vector<1x128xf32>
    %150 = tpu.concatenate %146, %149 in 0 : vector<1x128xf32>, vector<1x128xf32> -> vector<2x128xf32>
    %cst_109 = arith.constant dense<0.000000e+00> : vector<2x8xf32>
    %151 = tpu.matmul %150, %12, %cst_109 {dimension_numbers = #tpu.dot_dimension_numbers<[1], [0], [0], [1], [0, 0, 1, 1], [], []>} : vector<2x128xf32>, vector<128x8xf32>, vector<2x8xf32> -> vector<2x8xf32>
    %152 = vector.extract_strided_slice %151 {offsets = [0, 0], sizes = [1, 8], strides = [1, 1]} : vector<2x8xf32> to vector<1x8xf32>
    %cst_110 = arith.constant 0.001953125 : f32
    %153 = vector.broadcast %cst_110 : f32 to vector<1x8xf32>
    %154 = arith.mulf %152, %153 : vector<1x8xf32>
    %155 = vector.extract_strided_slice %151 {offsets = [1, 0], sizes = [1, 8], strides = [1, 1]} : vector<2x8xf32> to vector<1x8xf32>
    %cst_111 = arith.constant 0.001953125 : f32
    %156 = vector.broadcast %cst_111 : f32 to vector<1x8xf32>
    %157 = arith.mulf %155, %156 : vector<1x8xf32>
    %158 = arith.mulf %154, %154 : vector<1x8xf32>
    %159 = arith.subf %157, %158 : vector<1x8xf32>
    %c2_112 = arith.constant 2 : index
    %c0_113 = arith.constant 0 : index
    %160 = vector.load %arg5[%c2_112, %c0_113] : memref<20x8xf32, #tpu.memory_space<vmem>>, vector<1x8xf32>
    %c3_114 = arith.constant 3 : index
    %c0_115 = arith.constant 0 : index
    %161 = vector.load %arg5[%c3_114, %c0_115] : memref<20x8xf32, #tpu.memory_space<vmem>>, vector<1x8xf32>
    %cst_116 = arith.constant 9.99999974E-6 : f32
    %162 = vector.broadcast %cst_116 : f32 to vector<1x8xf32>
    %163 = arith.addf %159, %162 : vector<1x8xf32>
    %164 = math.rsqrt %163 : vector<1x8xf32>
    %165 = arith.mulf %160, %164 : vector<1x8xf32>
    %166 = arith.mulf %154, %165 : vector<1x8xf32>
    %167 = arith.subf %161, %166 : vector<1x8xf32>
    %168 = tpu.concatenate %165, %167 in 0 : vector<1x8xf32>, vector<1x8xf32> -> vector<2x8xf32>
    %cst_117 = arith.constant dense<0.000000e+00> : vector<2x128xf32>
    %169 = tpu.matmul %168, %15, %cst_117 {dimension_numbers = #tpu.dot_dimension_numbers<[1], [0], [0], [1], [0, 0, 1, 1], [], []>} : vector<2x8xf32>, vector<8x128xf32>, vector<2x128xf32> -> vector<2x128xf32>
    %170 = vector.extract_strided_slice %169 {offsets = [0, 0], sizes = [1, 128], strides = [1, 1]} : vector<2x128xf32> to vector<1x128xf32>
    %171 = vector.broadcast %170 : vector<1x128xf32> to vector<32x128xf32>
    %172 = arith.mulf %144, %171 : vector<32x128xf32>
    %173 = vector.extract_strided_slice %169 {offsets = [1, 0], sizes = [1, 128], strides = [1, 1]} : vector<2x128xf32> to vector<1x128xf32>
    %174 = vector.broadcast %173 : vector<1x128xf32> to vector<32x128xf32>
    %175 = arith.addf %172, %174 : vector<32x128xf32>
    %cst_118 = arith.constant 0.000000e+00 : f32
    %176 = vector.broadcast %cst_118 : f32 to vector<32x128xf32>
    %177 = arith.cmpf oge, %175, %176 : vector<32x128xf32>
    %cst_119 = arith.constant 0.00999999977 : f32
    %178 = vector.broadcast %cst_119 : f32 to vector<32x128xf32>
    %179 = arith.mulf %178, %175 : vector<32x128xf32>
    %180 = arith.select %177, %175, %179 : vector<32x128xi1>, vector<32x128xf32>
    %181 = vector.shape_cast %180 : vector<32x128xf32> to vector<2x16x128xf32>
    %c0_120 = arith.constant 0 : index
    %c2_121 = arith.constant 2 : index
    %c0_122 = arith.constant 0 : index
    %182 = vector.load %arg8[%c0_120, %c2_121, %c0_122] : memref<2x20x128xf32, #tpu.memory_space<vmem>>, vector<2x16x128xf32>
    tpu.vector_store %arg8[%c0_120, %c2_121, %c0_122], %181 {strides = array<i32>} : memref<2x20x128xf32, #tpu.memory_space<vmem>>, vector<2x16x128xf32>,
    %c0_123 = arith.constant 0 : index
    %c0_124 = arith.constant 0 : index
    %c0_125 = arith.constant 0 : index
    %183 = tpu.strided_load %arg8[%c0_123, %c0_124, %c0_125] {strides = array<i32: 1, 2, 1>} : memref<2x20x128xf32, #tpu.memory_space<vmem>>, vector<2x8x128xf32>
    %184 = vector.shape_cast %183 : vector<2x8x128xf32> to vector<16x128xf32>
    %c0_126 = arith.constant 0 : index
    %c0_127 = arith.constant 0 : index
    %185 = vector.load %arg2[%c0_126, %c0_127] : memref<2240x64xf32, #tpu.memory_space<vmem>>, vector<128x64xf32>
    %cst_128 = arith.constant dense<0.000000e+00> : vector<16x64xf32>
    %186 = tpu.matmul %184, %185, %cst_128 {dimension_numbers = #tpu.dot_dimension_numbers<[1], [0], [0], [1], [0, 0, 1, 1], [], []>} : vector<16x128xf32>, vector<128x64xf32>, vector<16x64xf32> -> vector<16x64xf32>
    %c0_129 = arith.constant 0 : index
    %c1_130 = arith.constant 1 : index
    %c0_131 = arith.constant 0 : index
    %187 = tpu.strided_load %arg8[%c0_129, %c1_130, %c0_131] {strides = array<i32: 1, 2, 1>} : memref<2x20x128xf32, #tpu.memory_space<vmem>>, vector<2x8x128xf32>
    %188 = vector.shape_cast %187 : vector<2x8x128xf32> to vector<16x128xf32>
    %c128_132 = arith.constant 128 : index
    %c0_133 = arith.constant 0 : index
    %189 = vector.load %arg2[%c128_132, %c0_133] : memref<2240x64xf32, #tpu.memory_space<vmem>>, vector<128x64xf32>
    %cst_134 = arith.constant dense<0.000000e+00> : vector<16x64xf32>
    %190 = tpu.matmul %188, %189, %cst_134 {dimension_numbers = #tpu.dot_dimension_numbers<[1], [0], [0], [1], [0, 0, 1, 1], [], []>} : vector<16x128xf32>, vector<128x64xf32>, vector<16x64xf32> -> vector<16x64xf32>
    %191 = arith.addf %186, %190 : vector<16x64xf32>
    %c0_135 = arith.constant 0 : index
    %c2_136 = arith.constant 2 : index
    %c0_137 = arith.constant 0 : index
    %192 = tpu.strided_load %arg8[%c0_135, %c2_136, %c0_137] {strides = array<i32: 1, 2, 1>} : memref<2x20x128xf32, #tpu.memory_space<vmem>>, vector<2x8x128xf32>
    %193 = vector.shape_cast %192 : vector<2x8x128xf32> to vector<16x128xf32>
    %c256_138 = arith.constant 256 : index
    %c0_139 = arith.constant 0 : index
    %194 = vector.load %arg2[%c256_138, %c0_139] : memref<2240x64xf32, #tpu.memory_space<vmem>>, vector<128x64xf32>
    %cst_140 = arith.constant dense<0.000000e+00> : vector<16x64xf32>
    %195 = tpu.matmul %193, %194, %cst_140 {dimension_numbers = #tpu.dot_dimension_numbers<[1], [0], [0], [1], [0, 0, 1, 1], [], []>} : vector<16x128xf32>, vector<128x64xf32>, vector<16x64xf32> -> vector<16x64xf32>
    %196 = arith.addf %191, %195 : vector<16x64xf32>
    %c0_141 = arith.constant 0 : index
    %c3_142 = arith.constant 3 : index
    %c0_143 = arith.constant 0 : index
    %197 = tpu.strided_load %arg8[%c0_141, %c3_142, %c0_143] {strides = array<i32: 1, 2, 1>} : memref<2x20x128xf32, #tpu.memory_space<vmem>>, vector<2x8x128xf32>
    %198 = vector.shape_cast %197 : vector<2x8x128xf32> to vector<16x128xf32>
    %c384 = arith.constant 384 : index
    %c0_144 = arith.constant 0 : index
    %199 = vector.load %arg2[%c384, %c0_144] : memref<2240x64xf32, #tpu.memory_space<vmem>>, vector<128x64xf32>
    %cst_145 = arith.constant dense<0.000000e+00> : vector<16x64xf32>
    %200 = tpu.matmul %198, %199, %cst_145 {dimension_numbers = #tpu.dot_dimension_numbers<[1], [0], [0], [1], [0, 0, 1, 1], [], []>} : vector<16x128xf32>, vector<128x64xf32>, vector<16x64xf32> -> vector<16x64xf32>
    %201 = arith.addf %196, %200 : vector<16x64xf32>
    %c0_146 = arith.constant 0 : index
    %c4_147 = arith.constant 4 : index
    %c0_148 = arith.constant 0 : index
    %202 = tpu.strided_load %arg8[%c0_146, %c4_147, %c0_148] {strides = array<i32: 1, 2, 1>} : memref<2x20x128xf32, #tpu.memory_space<vmem>>, vector<2x8x128xf32>
    %203 = vector.shape_cast %202 : vector<2x8x128xf32> to vector<16x128xf32>
    %c512 = arith.constant 512 : index
    %c0_149 = arith.constant 0 : index
    %204 = vector.load %arg2[%c512, %c0_149] : memref<2240x64xf32, #tpu.memory_space<vmem>>, vector<128x64xf32>
    %cst_150 = arith.constant dense<0.000000e+00> : vector<16x64xf32>
    %205 = tpu.matmul %203, %204, %cst_150 {dimension_numbers = #tpu.dot_dimension_numbers<[1], [0], [0], [1], [0, 0, 1, 1], [], []>} : vector<16x128xf32>, vector<128x64xf32>, vector<16x64xf32> -> vector<16x64xf32>
    %206 = arith.addf %201, %205 : vector<16x64xf32>
    %cst_151 = arith.constant dense<0.000000e+00> : vector<64xf32>
    %207 = vector.multi_reduction <add>, %206, %cst_151 [0] : vector<16x64xf32> to vector<64xf32>
    %208 = vector.shape_cast %207 : vector<64xf32> to vector<1x64xf32>
    %209 = arith.mulf %206, %206 : vector<16x64xf32>
    %cst_152 = arith.constant dense<0.000000e+00> : vector<64xf32>
    %210 = vector.multi_reduction <add>, %209, %cst_152 [0] : vector<16x64xf32> to vector<64xf32>
    %211 = vector.shape_cast %210 : vector<64xf32> to vector<1x64xf32>
    %212 = tpu.concatenate %208, %211 in 0 : vector<1x64xf32>, vector<1x64xf32> -> vector<2x64xf32>
    %cst_153 = arith.constant dense<0.000000e+00> : vector<2x8xf32>
    %213 = tpu.matmul %212, %28, %cst_153 {dimension_numbers = #tpu.dot_dimension_numbers<[1], [0], [0], [1], [0, 0, 1, 1], [], []>} : vector<2x64xf32>, vector<64x8xf32>, vector<2x8xf32> -> vector<2x8xf32>
    %214 = vector.extract_strided_slice %213 {offsets = [0, 0], sizes = [1, 8], strides = [1, 1]} : vector<2x8xf32> to vector<1x8xf32>
    %cst_154 = arith.constant 7.812500e-03 : f32
    %215 = vector.broadcast %cst_154 : f32 to vector<1x8xf32>
    %216 = arith.mulf %214, %215 : vector<1x8xf32>
    %217 = vector.extract_strided_slice %213 {offsets = [1, 0], sizes = [1, 8], strides = [1, 1]} : vector<2x8xf32> to vector<1x8xf32>
    %cst_155 = arith.constant 7.812500e-03 : f32
    %218 = vector.broadcast %cst_155 : f32 to vector<1x8xf32>
    %219 = arith.mulf %217, %218 : vector<1x8xf32>
    %220 = arith.mulf %216, %216 : vector<1x8xf32>
    %221 = arith.subf %219, %220 : vector<1x8xf32>
    %c4_156 = arith.constant 4 : index
    %c0_157 = arith.constant 0 : index
    %222 = vector.load %arg5[%c4_156, %c0_157] : memref<20x8xf32, #tpu.memory_space<vmem>>, vector<1x8xf32>
    %c5 = arith.constant 5 : index
    %c0_158 = arith.constant 0 : index
    %223 = vector.load %arg5[%c5, %c0_158] : memref<20x8xf32, #tpu.memory_space<vmem>>, vector<1x8xf32>
    %cst_159 = arith.constant 9.99999974E-6 : f32
    %224 = vector.broadcast %cst_159 : f32 to vector<1x8xf32>
    %225 = arith.addf %221, %224 : vector<1x8xf32>
    %226 = math.rsqrt %225 : vector<1x8xf32>
    %227 = arith.mulf %222, %226 : vector<1x8xf32>
    %228 = arith.mulf %216, %227 : vector<1x8xf32>
    %229 = arith.subf %223, %228 : vector<1x8xf32>
    %230 = tpu.concatenate %227, %229 in 0 : vector<1x8xf32>, vector<1x8xf32> -> vector<2x8xf32>
    %cst_160 = arith.constant dense<0.000000e+00> : vector<2x64xf32>
    %231 = tpu.matmul %230, %31, %cst_160 {dimension_numbers = #tpu.dot_dimension_numbers<[1], [0], [0], [1], [0, 0, 1, 1], [], []>} : vector<2x8xf32>, vector<8x64xf32>, vector<2x64xf32> -> vector<2x64xf32>
    %232 = vector.extract_strided_slice %231 {offsets = [0, 0], sizes = [1, 64], strides = [1, 1]} : vector<2x64xf32> to vector<1x64xf32>
    %233 = vector.broadcast %232 : vector<1x64xf32> to vector<16x64xf32>
    %234 = arith.mulf %206, %233 : vector<16x64xf32>
    %235 = vector.extract_strided_slice %231 {offsets = [1, 0], sizes = [1, 64], strides = [1, 1]} : vector<2x64xf32> to vector<1x64xf32>
    %236 = vector.broadcast %235 : vector<1x64xf32> to vector<16x64xf32>
    %237 = arith.addf %234, %236 : vector<16x64xf32>
    %cst_161 = arith.constant 0.000000e+00 : f32
    %238 = vector.broadcast %cst_161 : f32 to vector<16x64xf32>
    %239 = arith.cmpf oge, %237, %238 : vector<16x64xf32>
    %cst_162 = arith.constant 0.00999999977 : f32
    %240 = vector.broadcast %cst_162 : f32 to vector<16x64xf32>
    %241 = arith.mulf %240, %237 : vector<16x64xf32>
    %242 = arith.select %239, %237, %241 : vector<16x64xi1>, vector<16x64xf32>
    %c0_163 = arith.constant 0 : index
    %c0_164 = arith.constant 0 : index
    %c0_165 = arith.constant 0 : index
    %243 = tpu.strided_load %arg8[%c0_163, %c0_164, %c0_165] {strides = array<i32: 1, 2, 1>} : memref<2x20x128xf32, #tpu.memory_space<vmem>>, vector<2x8x128xf32>
    %244 = vector.shape_cast %243 : vector<2x8x128xf32> to vector<16x128xf32>
    %c640 = arith.constant 640 : index
    %c0_166 = arith.constant 0 : index
    %245 = vector.load %arg2[%c640, %c0_166] : memref<2240x64xf32, #tpu.memory_space<vmem>>, vector<128x64xf32>
    %cst_167 = arith.constant dense<0.000000e+00> : vector<16x64xf32>
    %246 = tpu.matmul %244, %245, %cst_167 {dimension_numbers = #tpu.dot_dimension_numbers<[1], [0], [0], [1], [0, 0, 1, 1], [], []>} : vector<16x128xf32>, vector<128x64xf32>, vector<16x64xf32> -> vector<16x64xf32>
    %c0_168 = arith.constant 0 : index
    %c1_169 = arith.constant 1 : index
    %c0_170 = arith.constant 0 : index
    %247 = tpu.strided_load %arg8[%c0_168, %c1_169, %c0_170] {strides = array<i32: 1, 2, 1>} : memref<2x20x128xf32, #tpu.memory_space<vmem>>, vector<2x8x128xf32>
    %248 = vector.shape_cast %247 : vector<2x8x128xf32> to vector<16x128xf32>
    %c768 = arith.constant 768 : index
    %c0_171 = arith.constant 0 : index
    %249 = vector.load %arg2[%c768, %c0_171] : memref<2240x64xf32, #tpu.memory_space<vmem>>, vector<128x64xf32>
    %cst_172 = arith.constant dense<0.000000e+00> : vector<16x64xf32>
    %250 = tpu.matmul %248, %249, %cst_172 {dimension_numbers = #tpu.dot_dimension_numbers<[1], [0], [0], [1], [0, 0, 1, 1], [], []>} : vector<16x128xf32>, vector<128x64xf32>, vector<16x64xf32> -> vector<16x64xf32>
    %251 = arith.addf %246, %250 : vector<16x64xf32>
    %c0_173 = arith.constant 0 : index
    %c2_174 = arith.constant 2 : index
    %c0_175 = arith.constant 0 : index
    %252 = tpu.strided_load %arg8[%c0_173, %c2_174, %c0_175] {strides = array<i32: 1, 2, 1>} : memref<2x20x128xf32, #tpu.memory_space<vmem>>, vector<2x8x128xf32>
    %253 = vector.shape_cast %252 : vector<2x8x128xf32> to vector<16x128xf32>
    %c896 = arith.constant 896 : index
    %c0_176 = arith.constant 0 : index
    %254 = vector.load %arg2[%c896, %c0_176] : memref<2240x64xf32, #tpu.memory_space<vmem>>, vector<128x64xf32>
    %cst_177 = arith.constant dense<0.000000e+00> : vector<16x64xf32>
    %255 = tpu.matmul %253, %254, %cst_177 {dimension_numbers = #tpu.dot_dimension_numbers<[1], [0], [0], [1], [0, 0, 1, 1], [], []>} : vector<16x128xf32>, vector<128x64xf32>, vector<16x64xf32> -> vector<16x64xf32>
    %256 = arith.addf %251, %255 : vector<16x64xf32>
    %c0_178 = arith.constant 0 : index
    %c3_179 = arith.constant 3 : index
    %c0_180 = arith.constant 0 : index
    %257 = tpu.strided_load %arg8[%c0_178, %c3_179, %c0_180] {strides = array<i32: 1, 2, 1>} : memref<2x20x128xf32, #tpu.memory_space<vmem>>, vector<2x8x128xf32>
    %258 = vector.shape_cast %257 : vector<2x8x128xf32> to vector<16x128xf32>
    %c1024 = arith.constant 1024 : index
    %c0_181 = arith.constant 0 : index
    %259 = vector.load %arg2[%c1024, %c0_181] : memref<2240x64xf32, #tpu.memory_space<vmem>>, vector<128x64xf32>
    %cst_182 = arith.constant dense<0.000000e+00> : vector<16x64xf32>
    %260 = tpu.matmul %258, %259, %cst_182 {dimension_numbers = #tpu.dot_dimension_numbers<[1], [0], [0], [1], [0, 0, 1, 1], [], []>} : vector<16x128xf32>, vector<128x64xf32>, vector<16x64xf32> -> vector<16x64xf32>
    %261 = arith.addf %256, %260 : vector<16x64xf32>
    %c0_183 = arith.constant 0 : index
    %c4_184 = arith.constant 4 : index
    %c0_185 = arith.constant 0 : index
    %262 = tpu.strided_load %arg8[%c0_183, %c4_184, %c0_185] {strides = array<i32: 1, 2, 1>} : memref<2x20x128xf32, #tpu.memory_space<vmem>>, vector<2x8x128xf32>
    %263 = vector.shape_cast %262 : vector<2x8x128xf32> to vector<16x128xf32>
    %c1152 = arith.constant 1152 : index
    %c0_186 = arith.constant 0 : index
    %264 = vector.load %arg2[%c1152, %c0_186] : memref<2240x64xf32, #tpu.memory_space<vmem>>, vector<128x64xf32>
    %cst_187 = arith.constant dense<0.000000e+00> : vector<16x64xf32>
    %265 = tpu.matmul %263, %264, %cst_187 {dimension_numbers = #tpu.dot_dimension_numbers<[1], [0], [0], [1], [0, 0, 1, 1], [], []>} : vector<16x128xf32>, vector<128x64xf32>, vector<16x64xf32> -> vector<16x64xf32>
    %266 = arith.addf %261, %265 : vector<16x64xf32>
    %cst_188 = arith.constant dense<0.000000e+00> : vector<64xf32>
    %267 = vector.multi_reduction <add>, %266, %cst_188 [0] : vector<16x64xf32> to vector<64xf32>
    %268 = vector.shape_cast %267 : vector<64xf32> to vector<1x64xf32>
    %269 = arith.mulf %266, %266 : vector<16x64xf32>
    %cst_189 = arith.constant dense<0.000000e+00> : vector<64xf32>
    %270 = vector.multi_reduction <add>, %269, %cst_189 [0] : vector<16x64xf32> to vector<64xf32>
    %271 = vector.shape_cast %270 : vector<64xf32> to vector<1x64xf32>
    %272 = tpu.concatenate %268, %271 in 0 : vector<1x64xf32>, vector<1x64xf32> -> vector<2x64xf32>
    %cst_190 = arith.constant dense<0.000000e+00> : vector<2x8xf32>
    %273 = tpu.matmul %272, %28, %cst_190 {dimension_numbers = #tpu.dot_dimension_numbers<[1], [0], [0], [1], [0, 0, 1, 1], [], []>} : vector<2x64xf32>, vector<64x8xf32>, vector<2x8xf32> -> vector<2x8xf32>
    %274 = vector.extract_strided_slice %273 {offsets = [0, 0], sizes = [1, 8], strides = [1, 1]} : vector<2x8xf32> to vector<1x8xf32>
    %cst_191 = arith.constant 7.812500e-03 : f32
    %275 = vector.broadcast %cst_191 : f32 to vector<1x8xf32>
    %276 = arith.mulf %274, %275 : vector<1x8xf32>
    %277 = vector.extract_strided_slice %273 {offsets = [1, 0], sizes = [1, 8], strides = [1, 1]} : vector<2x8xf32> to vector<1x8xf32>
    %cst_192 = arith.constant 7.812500e-03 : f32
    %278 = vector.broadcast %cst_192 : f32 to vector<1x8xf32>
    %279 = arith.mulf %277, %278 : vector<1x8xf32>
    %280 = arith.mulf %276, %276 : vector<1x8xf32>
    %281 = arith.subf %279, %280 : vector<1x8xf32>
    %c6 = arith.constant 6 : index
    %c0_193 = arith.constant 0 : index
    %282 = vector.load %arg5[%c6, %c0_193] : memref<20x8xf32, #tpu.memory_space<vmem>>, vector<1x8xf32>
    %c7 = arith.constant 7 : index
    %c0_194 = arith.constant 0 : index
    %283 = vector.load %arg5[%c7, %c0_194] : memref<20x8xf32, #tpu.memory_space<vmem>>, vector<1x8xf32>
    %cst_195 = arith.constant 9.99999974E-6 : f32
    %284 = vector.broadcast %cst_195 : f32 to vector<1x8xf32>
    %285 = arith.addf %281, %284 : vector<1x8xf32>
    %286 = math.rsqrt %285 : vector<1x8xf32>
    %287 = arith.mulf %282, %286 : vector<1x8xf32>
    %288 = arith.mulf %276, %287 : vector<1x8xf32>
    %289 = arith.subf %283, %288 : vector<1x8xf32>
    %290 = tpu.concatenate %287, %289 in 0 : vector<1x8xf32>, vector<1x8xf32> -> vector<2x8xf32>
    %cst_196 = arith.constant dense<0.000000e+00> : vector<2x64xf32>
    %291 = tpu.matmul %290, %31, %cst_196 {dimension_numbers = #tpu.dot_dimension_numbers<[1], [0], [0], [1], [0, 0, 1, 1], [], []>} : vector<2x8xf32>, vector<8x64xf32>, vector<2x64xf32> -> vector<2x64xf32>
    %292 = vector.extract_strided_slice %291 {offsets = [0, 0], sizes = [1, 64], strides = [1, 1]} : vector<2x64xf32> to vector<1x64xf32>
    %293 = vector.broadcast %292 : vector<1x64xf32> to vector<16x64xf32>
    %294 = arith.mulf %266, %293 : vector<16x64xf32>
    %295 = vector.extract_strided_slice %291 {offsets = [1, 0], sizes = [1, 64], strides = [1, 1]} : vector<2x64xf32> to vector<1x64xf32>
    %296 = vector.broadcast %295 : vector<1x64xf32> to vector<16x64xf32>
    %297 = arith.addf %294, %296 : vector<16x64xf32>
    %cst_197 = arith.constant 0.000000e+00 : f32
    %298 = vector.broadcast %cst_197 : f32 to vector<16x64xf32>
    %299 = arith.cmpf oge, %297, %298 : vector<16x64xf32>
    %cst_198 = arith.constant 0.00999999977 : f32
    %300 = vector.broadcast %cst_198 : f32 to vector<16x64xf32>
    %301 = arith.mulf %300, %297 : vector<16x64xf32>
    %302 = arith.select %299, %297, %301 : vector<16x64xi1>, vector<16x64xf32>
    %303 = vector.shape_cast %302 : vector<16x64xf32> to vector<2x8x64xf32>
    %c0_199 = arith.constant 0 : index
    %c2_200 = arith.constant 2 : index
    %c0_201 = arith.constant 0 : index
    %304 = vector.load %arg9[%c0_199, %c2_200, %c0_201] : memref<2x12x64xf32, #tpu.memory_space<vmem>>, vector<2x8x64xf32>
    tpu.vector_store %arg9[%c0_199, %c2_200, %c0_201], %303 {strides = array<i32>} : memref<2x12x64xf32, #tpu.memory_space<vmem>>, vector<2x8x64xf32>,
    %c0_202 = arith.constant 0 : index
    %c0_203 = arith.constant 0 : index
    %c0_204 = arith.constant 0 : index
    %305 = vector.load %arg9[%c0_202, %c0_203, %c0_204] : memref<2x12x64xf32, #tpu.memory_space<vmem>>, vector<2x8x64xf32>
    %306 = vector.shape_cast %305 : vector<2x8x64xf32> to vector<16x64xf32>
    %c1280 = arith.constant 1280 : index
    %c0_205 = arith.constant 0 : index
    %307 = vector.load %arg2[%c1280, %c0_205] : memref<2240x64xf32, #tpu.memory_space<vmem>>, vector<64x64xf32>
    %cst_206 = arith.constant dense<0.000000e+00> : vector<16x64xf32>
    %308 = tpu.matmul %306, %307, %cst_206 {dimension_numbers = #tpu.dot_dimension_numbers<[1], [0], [0], [1], [0, 0, 1, 1], [], []>} : vector<16x64xf32>, vector<64x64xf32>, vector<16x64xf32> -> vector<16x64xf32>
    %c0_207 = arith.constant 0 : index
    %c1_208 = arith.constant 1 : index
    %c0_209 = arith.constant 0 : index
    %309 = vector.load %arg9[%c0_207, %c1_208, %c0_209] : memref<2x12x64xf32, #tpu.memory_space<vmem>>, vector<2x8x64xf32>
    %310 = vector.shape_cast %309 : vector<2x8x64xf32> to vector<16x64xf32>
    %c1344 = arith.constant 1344 : index
    %c0_210 = arith.constant 0 : index
    %311 = vector.load %arg2[%c1344, %c0_210] : memref<2240x64xf32, #tpu.memory_space<vmem>>, vector<64x64xf32>
    %cst_211 = arith.constant dense<0.000000e+00> : vector<16x64xf32>
    %312 = tpu.matmul %310, %311, %cst_211 {dimension_numbers = #tpu.dot_dimension_numbers<[1], [0], [0], [1], [0, 0, 1, 1], [], []>} : vector<16x64xf32>, vector<64x64xf32>, vector<16x64xf32> -> vector<16x64xf32>
    %313 = arith.addf %308, %312 : vector<16x64xf32>
    %c0_212 = arith.constant 0 : index
    %c2_213 = arith.constant 2 : index
    %c0_214 = arith.constant 0 : index
    %314 = vector.load %arg9[%c0_212, %c2_213, %c0_214] : memref<2x12x64xf32, #tpu.memory_space<vmem>>, vector<2x8x64xf32>
    %315 = vector.shape_cast %314 : vector<2x8x64xf32> to vector<16x64xf32>
    %c1408 = arith.constant 1408 : index
    %c0_215 = arith.constant 0 : index
    %316 = vector.load %arg2[%c1408, %c0_215] : memref<2240x64xf32, #tpu.memory_space<vmem>>, vector<64x64xf32>
    %cst_216 = arith.constant dense<0.000000e+00> : vector<16x64xf32>
    %317 = tpu.matmul %315, %316, %cst_216 {dimension_numbers = #tpu.dot_dimension_numbers<[1], [0], [0], [1], [0, 0, 1, 1], [], []>} : vector<16x64xf32>, vector<64x64xf32>, vector<16x64xf32> -> vector<16x64xf32>
    %318 = arith.addf %313, %317 : vector<16x64xf32>
    %c0_217 = arith.constant 0 : index
    %c3_218 = arith.constant 3 : index
    %c0_219 = arith.constant 0 : index
    %319 = vector.load %arg9[%c0_217, %c3_218, %c0_219] : memref<2x12x64xf32, #tpu.memory_space<vmem>>, vector<2x8x64xf32>
    %320 = vector.shape_cast %319 : vector<2x8x64xf32> to vector<16x64xf32>
    %c1472 = arith.constant 1472 : index
    %c0_220 = arith.constant 0 : index
    %321 = vector.load %arg2[%c1472, %c0_220] : memref<2240x64xf32, #tpu.memory_space<vmem>>, vector<64x64xf32>
    %cst_221 = arith.constant dense<0.000000e+00> : vector<16x64xf32>
    %322 = tpu.matmul %320, %321, %cst_221 {dimension_numbers = #tpu.dot_dimension_numbers<[1], [0], [0], [1], [0, 0, 1, 1], [], []>} : vector<16x64xf32>, vector<64x64xf32>, vector<16x64xf32> -> vector<16x64xf32>
    %323 = arith.addf %318, %322 : vector<16x64xf32>
    %c0_222 = arith.constant 0 : index
    %c4_223 = arith.constant 4 : index
    %c0_224 = arith.constant 0 : index
    %324 = vector.load %arg9[%c0_222, %c4_223, %c0_224] : memref<2x12x64xf32, #tpu.memory_space<vmem>>, vector<2x8x64xf32>
    %325 = vector.shape_cast %324 : vector<2x8x64xf32> to vector<16x64xf32>
    %c1536 = arith.constant 1536 : index
    %c0_225 = arith.constant 0 : index
    %326 = vector.load %arg2[%c1536, %c0_225] : memref<2240x64xf32, #tpu.memory_space<vmem>>, vector<64x64xf32>
    %cst_226 = arith.constant dense<0.000000e+00> : vector<16x64xf32>
    %327 = tpu.matmul %325, %326, %cst_226 {dimension_numbers = #tpu.dot_dimension_numbers<[1], [0], [0], [1], [0, 0, 1, 1], [], []>} : vector<16x64xf32>, vector<64x64xf32>, vector<16x64xf32> -> vector<16x64xf32>
    %328 = arith.addf %323, %327 : vector<16x64xf32>
    %cst_227 = arith.constant dense<0.000000e+00> : vector<64xf32>
    %329 = vector.multi_reduction <add>, %328, %cst_227 [0] : vector<16x64xf32> to vector<64xf32>
    %330 = vector.shape_cast %329 : vector<64xf32> to vector<1x64xf32>
    %331 = arith.mulf %328, %328 : vector<16x64xf32>
    %cst_228 = arith.constant dense<0.000000e+00> : vector<64xf32>
    %332 = vector.multi_reduction <add>, %331, %cst_228 [0] : vector<16x64xf32> to vector<64xf32>
    %333 = vector.shape_cast %332 : vector<64xf32> to vector<1x64xf32>
    %334 = tpu.concatenate %330, %333 in 0 : vector<1x64xf32>, vector<1x64xf32> -> vector<2x64xf32>
    %cst_229 = arith.constant dense<0.000000e+00> : vector<2x8xf32>
    %335 = tpu.matmul %334, %28, %cst_229 {dimension_numbers = #tpu.dot_dimension_numbers<[1], [0], [0], [1], [0, 0, 1, 1], [], []>} : vector<2x64xf32>, vector<64x8xf32>, vector<2x8xf32> -> vector<2x8xf32>
    %336 = vector.extract_strided_slice %335 {offsets = [0, 0], sizes = [1, 8], strides = [1, 1]} : vector<2x8xf32> to vector<1x8xf32>
    %cst_230 = arith.constant 7.812500e-03 : f32
    %337 = vector.broadcast %cst_230 : f32 to vector<1x8xf32>
    %338 = arith.mulf %336, %337 : vector<1x8xf32>
    %339 = vector.extract_strided_slice %335 {offsets = [1, 0], sizes = [1, 8], strides = [1, 1]} : vector<2x8xf32> to vector<1x8xf32>
    %cst_231 = arith.constant 7.812500e-03 : f32
    %340 = vector.broadcast %cst_231 : f32 to vector<1x8xf32>
    %341 = arith.mulf %339, %340 : vector<1x8xf32>
    %342 = arith.mulf %338, %338 : vector<1x8xf32>
    %343 = arith.subf %341, %342 : vector<1x8xf32>
    %c8 = arith.constant 8 : index
    %c0_232 = arith.constant 0 : index
    %344 = vector.load %arg5[%c8, %c0_232] : memref<20x8xf32, #tpu.memory_space<vmem>>, vector<1x8xf32>
    %c9_233 = arith.constant 9 : index
    %c0_234 = arith.constant 0 : index
    %345 = vector.load %arg5[%c9_233, %c0_234] : memref<20x8xf32, #tpu.memory_space<vmem>>, vector<1x8xf32>
    %cst_235 = arith.constant 9.99999974E-6 : f32
    %346 = vector.broadcast %cst_235 : f32 to vector<1x8xf32>
    %347 = arith.addf %343, %346 : vector<1x8xf32>
    %348 = math.rsqrt %347 : vector<1x8xf32>
    %349 = arith.mulf %344, %348 : vector<1x8xf32>
    %350 = arith.mulf %338, %349 : vector<1x8xf32>
    %351 = arith.subf %345, %350 : vector<1x8xf32>
    %352 = tpu.concatenate %349, %351 in 0 : vector<1x8xf32>, vector<1x8xf32> -> vector<2x8xf32>
    %cst_236 = arith.constant dense<0.000000e+00> : vector<2x64xf32>
    %353 = tpu.matmul %352, %31, %cst_236 {dimension_numbers = #tpu.dot_dimension_numbers<[1], [0], [0], [1], [0, 0, 1, 1], [], []>} : vector<2x8xf32>, vector<8x64xf32>, vector<2x64xf32> -> vector<2x64xf32>
    %354 = vector.extract_strided_slice %353 {offsets = [0, 0], sizes = [1, 64], strides = [1, 1]} : vector<2x64xf32> to vector<1x64xf32>
    %355 = vector.broadcast %354 : vector<1x64xf32> to vector<16x64xf32>
    %356 = arith.mulf %328, %355 : vector<16x64xf32>
    %357 = vector.extract_strided_slice %353 {offsets = [1, 0], sizes = [1, 64], strides = [1, 1]} : vector<2x64xf32> to vector<1x64xf32>
    %358 = vector.broadcast %357 : vector<1x64xf32> to vector<16x64xf32>
    %359 = arith.addf %356, %358 : vector<16x64xf32>
    %cst_237 = arith.constant 0.000000e+00 : f32
    %360 = vector.broadcast %cst_237 : f32 to vector<16x64xf32>
    %361 = arith.cmpf oge, %359, %360 : vector<16x64xf32>
    %cst_238 = arith.constant 0.00999999977 : f32
    %362 = vector.broadcast %cst_238 : f32 to vector<16x64xf32>
    %363 = arith.mulf %362, %359 : vector<16x64xf32>
    %364 = arith.select %361, %359, %363 : vector<16x64xi1>, vector<16x64xf32>
    %365 = vector.shape_cast %364 : vector<16x64xf32> to vector<2x8x64xf32>
    %c0_239 = arith.constant 0 : index
    %c2_240 = arith.constant 2 : index
    %c0_241 = arith.constant 0 : index
    %366 = vector.load %arg9[%c0_239, %c2_240, %c0_241] : memref<2x12x64xf32, #tpu.memory_space<vmem>>, vector<2x8x64xf32>
    tpu.vector_store %arg9[%c0_239, %c2_240, %c0_241], %365 {strides = array<i32>} : memref<2x12x64xf32, #tpu.memory_space<vmem>>, vector<2x8x64xf32>,
    %c0_242 = arith.constant 0 : index
    %c0_243 = arith.constant 0 : index
    %c0_244 = arith.constant 0 : index
    %367 = vector.load %arg9[%c0_242, %c0_243, %c0_244] : memref<2x12x64xf32, #tpu.memory_space<vmem>>, vector<2x8x64xf32>
    %368 = vector.shape_cast %367 : vector<2x8x64xf32> to vector<16x64xf32>
    %c1600 = arith.constant 1600 : index
    %c0_245 = arith.constant 0 : index
    %369 = vector.load %arg2[%c1600, %c0_245] : memref<2240x64xf32, #tpu.memory_space<vmem>>, vector<64x64xf32>
    %cst_246 = arith.constant dense<0.000000e+00> : vector<16x64xf32>
    %370 = tpu.matmul %368, %369, %cst_246 {dimension_numbers = #tpu.dot_dimension_numbers<[1], [0], [0], [1], [0, 0, 1, 1], [], []>} : vector<16x64xf32>, vector<64x64xf32>, vector<16x64xf32> -> vector<16x64xf32>
    %c0_247 = arith.constant 0 : index
    %c1_248 = arith.constant 1 : index
    %c0_249 = arith.constant 0 : index
    %371 = vector.load %arg9[%c0_247, %c1_248, %c0_249] : memref<2x12x64xf32, #tpu.memory_space<vmem>>, vector<2x8x64xf32>
    %372 = vector.shape_cast %371 : vector<2x8x64xf32> to vector<16x64xf32>
    %c1664 = arith.constant 1664 : index
    %c0_250 = arith.constant 0 : index
    %373 = vector.load %arg2[%c1664, %c0_250] : memref<2240x64xf32, #tpu.memory_space<vmem>>, vector<64x64xf32>
    %cst_251 = arith.constant dense<0.000000e+00> : vector<16x64xf32>
    %374 = tpu.matmul %372, %373, %cst_251 {dimension_numbers = #tpu.dot_dimension_numbers<[1], [0], [0], [1], [0, 0, 1, 1], [], []>} : vector<16x64xf32>, vector<64x64xf32>, vector<16x64xf32> -> vector<16x64xf32>
    %375 = arith.addf %370, %374 : vector<16x64xf32>
    %c0_252 = arith.constant 0 : index
    %c2_253 = arith.constant 2 : index
    %c0_254 = arith.constant 0 : index
    %376 = vector.load %arg9[%c0_252, %c2_253, %c0_254] : memref<2x12x64xf32, #tpu.memory_space<vmem>>, vector<2x8x64xf32>
    %377 = vector.shape_cast %376 : vector<2x8x64xf32> to vector<16x64xf32>
    %c1728 = arith.constant 1728 : index
    %c0_255 = arith.constant 0 : index
    %378 = vector.load %arg2[%c1728, %c0_255] : memref<2240x64xf32, #tpu.memory_space<vmem>>, vector<64x64xf32>
    %cst_256 = arith.constant dense<0.000000e+00> : vector<16x64xf32>
    %379 = tpu.matmul %377, %378, %cst_256 {dimension_numbers = #tpu.dot_dimension_numbers<[1], [0], [0], [1], [0, 0, 1, 1], [], []>} : vector<16x64xf32>, vector<64x64xf32>, vector<16x64xf32> -> vector<16x64xf32>
    %380 = arith.addf %375, %379 : vector<16x64xf32>
    %c0_257 = arith.constant 0 : index
    %c3_258 = arith.constant 3 : index
    %c0_259 = arith.constant 0 : index
    %381 = vector.load %arg9[%c0_257, %c3_258, %c0_259] : memref<2x12x64xf32, #tpu.memory_space<vmem>>, vector<2x8x64xf32>
    %382 = vector.shape_cast %381 : vector<2x8x64xf32> to vector<16x64xf32>
    %c1792 = arith.constant 1792 : index
    %c0_260 = arith.constant 0 : index
    %383 = vector.load %arg2[%c1792, %c0_260] : memref<2240x64xf32, #tpu.memory_space<vmem>>, vector<64x64xf32>
    %cst_261 = arith.constant dense<0.000000e+00> : vector<16x64xf32>
    %384 = tpu.matmul %382, %383, %cst_261 {dimension_numbers = #tpu.dot_dimension_numbers<[1], [0], [0], [1], [0, 0, 1, 1], [], []>} : vector<16x64xf32>, vector<64x64xf32>, vector<16x64xf32> -> vector<16x64xf32>
    %385 = arith.addf %380, %384 : vector<16x64xf32>
    %c0_262 = arith.constant 0 : index
    %c4_263 = arith.constant 4 : index
    %c0_264 = arith.constant 0 : index
    %386 = vector.load %arg9[%c0_262, %c4_263, %c0_264] : memref<2x12x64xf32, #tpu.memory_space<vmem>>, vector<2x8x64xf32>
    %387 = vector.shape_cast %386 : vector<2x8x64xf32> to vector<16x64xf32>
    %c1856 = arith.constant 1856 : index
    %c0_265 = arith.constant 0 : index
    %388 = vector.load %arg2[%c1856, %c0_265] : memref<2240x64xf32, #tpu.memory_space<vmem>>, vector<64x64xf32>
    %cst_266 = arith.constant dense<0.000000e+00> : vector<16x64xf32>
    %389 = tpu.matmul %387, %388, %cst_266 {dimension_numbers = #tpu.dot_dimension_numbers<[1], [0], [0], [1], [0, 0, 1, 1], [], []>} : vector<16x64xf32>, vector<64x64xf32>, vector<16x64xf32> -> vector<16x64xf32>
    %390 = arith.addf %385, %389 : vector<16x64xf32>
    %cst_267 = arith.constant dense<0.000000e+00> : vector<64xf32>
    %391 = vector.multi_reduction <add>, %390, %cst_267 [0] : vector<16x64xf32> to vector<64xf32>
    %392 = vector.shape_cast %391 : vector<64xf32> to vector<1x64xf32>
    %393 = arith.mulf %390, %390 : vector<16x64xf32>
    %cst_268 = arith.constant dense<0.000000e+00> : vector<64xf32>
    %394 = vector.multi_reduction <add>, %393, %cst_268 [0] : vector<16x64xf32> to vector<64xf32>
    %395 = vector.shape_cast %394 : vector<64xf32> to vector<1x64xf32>
    %396 = tpu.concatenate %392, %395 in 0 : vector<1x64xf32>, vector<1x64xf32> -> vector<2x64xf32>
    %cst_269 = arith.constant dense<0.000000e+00> : vector<2x8xf32>
    %397 = tpu.matmul %396, %28, %cst_269 {dimension_numbers = #tpu.dot_dimension_numbers<[1], [0], [0], [1], [0, 0, 1, 1], [], []>} : vector<2x64xf32>, vector<64x8xf32>, vector<2x8xf32> -> vector<2x8xf32>
    %398 = vector.extract_strided_slice %397 {offsets = [0, 0], sizes = [1, 8], strides = [1, 1]} : vector<2x8xf32> to vector<1x8xf32>
    %cst_270 = arith.constant 7.812500e-03 : f32
    %399 = vector.broadcast %cst_270 : f32 to vector<1x8xf32>
    %400 = arith.mulf %398, %399 : vector<1x8xf32>
    %401 = vector.extract_strided_slice %397 {offsets = [1, 0], sizes = [1, 8], strides = [1, 1]} : vector<2x8xf32> to vector<1x8xf32>
    %cst_271 = arith.constant 7.812500e-03 : f32
    %402 = vector.broadcast %cst_271 : f32 to vector<1x8xf32>
    %403 = arith.mulf %401, %402 : vector<1x8xf32>
    %404 = arith.mulf %400, %400 : vector<1x8xf32>
    %405 = arith.subf %403, %404 : vector<1x8xf32>
    %c10_272 = arith.constant 10 : index
    %c0_273 = arith.constant 0 : index
    %406 = vector.load %arg5[%c10_272, %c0_273] : memref<20x8xf32, #tpu.memory_space<vmem>>, vector<1x8xf32>
    %c11 = arith.constant 11 : index
    %c0_274 = arith.constant 0 : index
    %407 = vector.load %arg5[%c11, %c0_274] : memref<20x8xf32, #tpu.memory_space<vmem>>, vector<1x8xf32>
    %cst_275 = arith.constant 9.99999974E-6 : f32
    %408 = vector.broadcast %cst_275 : f32 to vector<1x8xf32>
    %409 = arith.addf %405, %408 : vector<1x8xf32>
    %410 = math.rsqrt %409 : vector<1x8xf32>
    %411 = arith.mulf %406, %410 : vector<1x8xf32>
    %412 = arith.mulf %400, %411 : vector<1x8xf32>
    %413 = arith.subf %407, %412 : vector<1x8xf32>
    %414 = tpu.concatenate %411, %413 in 0 : vector<1x8xf32>, vector<1x8xf32> -> vector<2x8xf32>
    %cst_276 = arith.constant dense<0.000000e+00> : vector<2x64xf32>
    %415 = tpu.matmul %414, %31, %cst_276 {dimension_numbers = #tpu.dot_dimension_numbers<[1], [0], [0], [1], [0, 0, 1, 1], [], []>} : vector<2x8xf32>, vector<8x64xf32>, vector<2x64xf32> -> vector<2x64xf32>
    %416 = vector.extract_strided_slice %415 {offsets = [0, 0], sizes = [1, 64], strides = [1, 1]} : vector<2x64xf32> to vector<1x64xf32>
    %417 = vector.broadcast %416 : vector<1x64xf32> to vector<16x64xf32>
    %418 = arith.mulf %390, %417 : vector<16x64xf32>
    %419 = vector.extract_strided_slice %415 {offsets = [1, 0], sizes = [1, 64], strides = [1, 1]} : vector<2x64xf32> to vector<1x64xf32>
    %420 = vector.broadcast %419 : vector<1x64xf32> to vector<16x64xf32>
    %421 = arith.addf %418, %420 : vector<16x64xf32>
    %cst_277 = arith.constant 0.000000e+00 : f32
    %422 = vector.broadcast %cst_277 : f32 to vector<16x64xf32>
    %423 = arith.cmpf oge, %421, %422 : vector<16x64xf32>
    %cst_278 = arith.constant 0.00999999977 : f32
    %424 = vector.broadcast %cst_278 : f32 to vector<16x64xf32>
    %425 = arith.mulf %424, %421 : vector<16x64xf32>
    %426 = arith.select %423, %421, %425 : vector<16x64xi1>, vector<16x64xf32>
    %c1920 = arith.constant 1920 : index
    %c0_279 = arith.constant 0 : index
    %427 = vector.load %arg2[%c1920, %c0_279] : memref<2240x64xf32, #tpu.memory_space<vmem>>, vector<64x64xf32>
    %cst_280 = arith.constant dense<0.000000e+00> : vector<16x64xf32>
    %428 = tpu.matmul %242, %427, %cst_280 {dimension_numbers = #tpu.dot_dimension_numbers<[1], [0], [0], [1], [0, 0, 1, 1], [], []>} : vector<16x64xf32>, vector<64x64xf32>, vector<16x64xf32> -> vector<16x64xf32>
    %c1984 = arith.constant 1984 : index
    %c0_281 = arith.constant 0 : index
    %429 = vector.load %arg2[%c1984, %c0_281] : memref<2240x64xf32, #tpu.memory_space<vmem>>, vector<64x64xf32>
    %cst_282 = arith.constant dense<0.000000e+00> : vector<16x64xf32>
    %430 = tpu.matmul %426, %429, %cst_282 {dimension_numbers = #tpu.dot_dimension_numbers<[1], [0], [0], [1], [0, 0, 1, 1], [], []>} : vector<16x64xf32>, vector<64x64xf32>, vector<16x64xf32> -> vector<16x64xf32>
    %431 = arith.addf %428, %430 : vector<16x64xf32>
    %cst_283 = arith.constant dense<0.000000e+00> : vector<64xf32>
    %432 = vector.multi_reduction <add>, %431, %cst_283 [0] : vector<16x64xf32> to vector<64xf32>
    %433 = vector.shape_cast %432 : vector<64xf32> to vector<1x64xf32>
    %434 = arith.mulf %431, %431 : vector<16x64xf32>
    %cst_284 = arith.constant dense<0.000000e+00> : vector<64xf32>
    %435 = vector.multi_reduction <add>, %434, %cst_284 [0] : vector<16x64xf32> to vector<64xf32>
    %436 = vector.shape_cast %435 : vector<64xf32> to vector<1x64xf32>
    %437 = tpu.concatenate %433, %436 in 0 : vector<1x64xf32>, vector<1x64xf32> -> vector<2x64xf32>
    %cst_285 = arith.constant dense<0.000000e+00> : vector<2x8xf32>
    %438 = tpu.matmul %437, %28, %cst_285 {dimension_numbers = #tpu.dot_dimension_numbers<[1], [0], [0], [1], [0, 0, 1, 1], [], []>} : vector<2x64xf32>, vector<64x8xf32>, vector<2x8xf32> -> vector<2x8xf32>
    %439 = vector.extract_strided_slice %438 {offsets = [0, 0], sizes = [1, 8], strides = [1, 1]} : vector<2x8xf32> to vector<1x8xf32>
    %cst_286 = arith.constant 7.812500e-03 : f32
    %440 = vector.broadcast %cst_286 : f32 to vector<1x8xf32>
    %441 = arith.mulf %439, %440 : vector<1x8xf32>
    %442 = vector.extract_strided_slice %438 {offsets = [1, 0], sizes = [1, 8], strides = [1, 1]} : vector<2x8xf32> to vector<1x8xf32>
    %cst_287 = arith.constant 7.812500e-03 : f32
    %443 = vector.broadcast %cst_287 : f32 to vector<1x8xf32>
    %444 = arith.mulf %442, %443 : vector<1x8xf32>
    %445 = arith.mulf %441, %441 : vector<1x8xf32>
    %446 = arith.subf %444, %445 : vector<1x8xf32>
    %c12 = arith.constant 12 : index
    %c0_288 = arith.constant 0 : index
    %447 = vector.load %arg5[%c12, %c0_288] : memref<20x8xf32, #tpu.memory_space<vmem>>, vector<1x8xf32>
    %c13 = arith.constant 13 : index
    %c0_289 = arith.constant 0 : index
    %448 = vector.load %arg5[%c13, %c0_289] : memref<20x8xf32, #tpu.memory_space<vmem>>, vector<1x8xf32>
    %cst_290 = arith.constant 9.99999974E-6 : f32
    %449 = vector.broadcast %cst_290 : f32 to vector<1x8xf32>
    %450 = arith.addf %446, %449 : vector<1x8xf32>
    %451 = math.rsqrt %450 : vector<1x8xf32>
    %452 = arith.mulf %447, %451 : vector<1x8xf32>
    %453 = arith.mulf %441, %452 : vector<1x8xf32>
    %454 = arith.subf %448, %453 : vector<1x8xf32>
    %455 = tpu.concatenate %452, %454 in 0 : vector<1x8xf32>, vector<1x8xf32> -> vector<2x8xf32>
    %cst_291 = arith.constant dense<0.000000e+00> : vector<2x64xf32>
    %456 = tpu.matmul %455, %31, %cst_291 {dimension_numbers = #tpu.dot_dimension_numbers<[1], [0], [0], [1], [0, 0, 1, 1], [], []>} : vector<2x8xf32>, vector<8x64xf32>, vector<2x64xf32> -> vector<2x64xf32>
    %457 = vector.extract_strided_slice %456 {offsets = [0, 0], sizes = [1, 64], strides = [1, 1]} : vector<2x64xf32> to vector<1x64xf32>
    %458 = vector.broadcast %457 : vector<1x64xf32> to vector<16x64xf32>
    %459 = arith.mulf %431, %458 : vector<16x64xf32>
    %460 = vector.extract_strided_slice %456 {offsets = [1, 0], sizes = [1, 64], strides = [1, 1]} : vector<2x64xf32> to vector<1x64xf32>
    %461 = vector.broadcast %460 : vector<1x64xf32> to vector<16x64xf32>
    %462 = arith.addf %459, %461 : vector<16x64xf32>
    %cst_292 = arith.constant 0.000000e+00 : f32
    %463 = vector.broadcast %cst_292 : f32 to vector<16x64xf32>
    %464 = arith.cmpf oge, %462, %463 : vector<16x64xf32>
    %cst_293 = arith.constant 0.00999999977 : f32
    %465 = vector.broadcast %cst_293 : f32 to vector<16x64xf32>
    %466 = arith.mulf %465, %462 : vector<16x64xf32>
    %467 = arith.select %464, %462, %466 : vector<16x64xi1>, vector<16x64xf32>
    %468 = vector.shape_cast %467 : vector<16x64xf32> to vector<2x8x64xf32>
    %c0_294 = arith.constant 0 : index
    %c2_295 = arith.constant 2 : index
    %c0_296 = arith.constant 0 : index
    %469 = vector.load %arg9[%c0_294, %c2_295, %c0_296] : memref<2x12x64xf32, #tpu.memory_space<vmem>>, vector<2x8x64xf32>
    tpu.vector_store %arg9[%c0_294, %c2_295, %c0_296], %468 {strides = array<i32>} : memref<2x12x64xf32, #tpu.memory_space<vmem>>, vector<2x8x64xf32>,
    %c0_297 = arith.constant 0 : index
    %c1_298 = arith.constant 1 : index
    %c0_299 = arith.constant 0 : index
    %470 = vector.load %arg9[%c0_297, %c1_298, %c0_299] : memref<2x12x64xf32, #tpu.memory_space<vmem>>, vector<2x8x64xf32>
    %471 = vector.shape_cast %470 : vector<2x8x64xf32> to vector<16x64xf32>
    %c0_300 = arith.constant 0 : index
    %c0_301 = arith.constant 0 : index
    %472 = vector.load %arg3[%c0_300, %c0_301] : memref<192x256xf32, #tpu.memory_space<vmem>>, vector<64x256xf32>
    %cst_302 = arith.constant dense<0.000000e+00> : vector<16x256xf32>
    %473 = tpu.matmul %471, %472, %cst_302 {dimension_numbers = #tpu.dot_dimension_numbers<[1], [0], [0], [1], [0, 0, 1, 1], [], []>} : vector<16x64xf32>, vector<64x256xf32>, vector<16x256xf32> -> vector<16x256xf32>
    %c0_303 = arith.constant 0 : index
    %c2_304 = arith.constant 2 : index
    %c0_305 = arith.constant 0 : index
    %474 = vector.load %arg9[%c0_303, %c2_304, %c0_305] : memref<2x12x64xf32, #tpu.memory_space<vmem>>, vector<2x8x64xf32>
    %475 = vector.shape_cast %474 : vector<2x8x64xf32> to vector<16x64xf32>
    %c64_306 = arith.constant 64 : index
    %c0_307 = arith.constant 0 : index
    %476 = vector.load %arg3[%c64_306, %c0_307] : memref<192x256xf32, #tpu.memory_space<vmem>>, vector<64x256xf32>
    %cst_308 = arith.constant dense<0.000000e+00> : vector<16x256xf32>
    %477 = tpu.matmul %475, %476, %cst_308 {dimension_numbers = #tpu.dot_dimension_numbers<[1], [0], [0], [1], [0, 0, 1, 1], [], []>} : vector<16x64xf32>, vector<64x256xf32>, vector<16x256xf32> -> vector<16x256xf32>
    %478 = arith.addf %473, %477 : vector<16x256xf32>
    %c0_309 = arith.constant 0 : index
    %c3_310 = arith.constant 3 : index
    %c0_311 = arith.constant 0 : index
    %479 = vector.load %arg9[%c0_309, %c3_310, %c0_311] : memref<2x12x64xf32, #tpu.memory_space<vmem>>, vector<2x8x64xf32>
    %480 = vector.shape_cast %479 : vector<2x8x64xf32> to vector<16x64xf32>
    %c128_312 = arith.constant 128 : index
    %c0_313 = arith.constant 0 : index
    %481 = vector.load %arg3[%c128_312, %c0_313] : memref<192x256xf32, #tpu.memory_space<vmem>>, vector<64x256xf32>
    %cst_314 = arith.constant dense<0.000000e+00> : vector<16x256xf32>
    %482 = tpu.matmul %480, %481, %cst_314 {dimension_numbers = #tpu.dot_dimension_numbers<[1], [0], [0], [1], [0, 0, 1, 1], [], []>} : vector<16x64xf32>, vector<64x256xf32>, vector<16x256xf32> -> vector<16x256xf32>
    %483 = arith.addf %478, %482 : vector<16x256xf32>
    %c0_315 = arith.constant 0 : index
    %c0_316 = arith.constant 0 : index
    %484 = vector.load %arg4[%c0_315, %c0_316] : memref<1x256xf32, #tpu.memory_space<vmem>>, vector<1x256xf32>
    %485 = vector.broadcast %484 : vector<1x256xf32> to vector<16x256xf32>
    %486 = arith.addf %483, %485 : vector<16x256xf32>
    %487 = vector.shape_cast %486 : vector<16x256xf32> to vector<2x8x256xf32>
    %c0_317 = arith.constant 0 : index
    %c1_318 = arith.constant 1 : index
    %c0_319 = arith.constant 0 : index
    %488 = vector.load %arg10[%c0_317, %c1_318, %c0_319] : memref<2x10x256xf32, #tpu.memory_space<vmem>>, vector<2x8x256xf32>
    tpu.vector_store %arg10[%c0_317, %c1_318, %c0_319], %487 {strides = array<i32>} : memref<2x10x256xf32, #tpu.memory_space<vmem>>, vector<2x8x256xf32>,
    %c0_320 = arith.constant 0 : index
    %c0_321 = arith.constant 0 : index
    %c0_322 = arith.constant 0 : index
    %489 = vector.load %arg10[%c0_320, %c0_321, %c0_322] : memref<2x10x256xf32, #tpu.memory_space<vmem>>, vector<2x8x256xf32>
    %490 = vector.shape_cast %489 : vector<2x8x256xf32> to vector<16x256xf32>
    %c960 = arith.constant 960 : index
    %c0_323 = arith.constant 0 : index
    %491 = vector.load %arg1[%c960, %c0_323] : memref<1984x128xf32, #tpu.memory_space<vmem>>, vector<256x128xf32>
    %cst_324 = arith.constant dense<0.000000e+00> : vector<16x128xf32>
    %492 = tpu.matmul %490, %491, %cst_324 {dimension_numbers = #tpu.dot_dimension_numbers<[1], [0], [0], [1], [0, 0, 1, 1], [], []>} : vector<16x256xf32>, vector<256x128xf32>, vector<16x128xf32> -> vector<16x128xf32>
    %c0_325 = arith.constant 0 : index
    %c1_326 = arith.constant 1 : index
    %c0_327 = arith.constant 0 : index
    %493 = vector.load %arg10[%c0_325, %c1_326, %c0_327] : memref<2x10x256xf32, #tpu.memory_space<vmem>>, vector<2x8x256xf32>
    %494 = vector.shape_cast %493 : vector<2x8x256xf32> to vector<16x256xf32>
    %c1216 = arith.constant 1216 : index
    %c0_328 = arith.constant 0 : index
    %495 = vector.load %arg1[%c1216, %c0_328] : memref<1984x128xf32, #tpu.memory_space<vmem>>, vector<256x128xf32>
    %cst_329 = arith.constant dense<0.000000e+00> : vector<16x128xf32>
    %496 = tpu.matmul %494, %495, %cst_329 {dimension_numbers = #tpu.dot_dimension_numbers<[1], [0], [0], [1], [0, 0, 1, 1], [], []>} : vector<16x256xf32>, vector<256x128xf32>, vector<16x128xf32> -> vector<16x128xf32>
    %497 = arith.addf %492, %496 : vector<16x128xf32>
    %c0_330 = arith.constant 0 : index
    %c1_331 = arith.constant 1 : index
    %c0_332 = arith.constant 0 : index
    %498 = vector.load %arg10[%c0_330, %c1_331, %c0_332] : memref<2x10x256xf32, #tpu.memory_space<vmem>>, vector<2x8x256xf32>
    %499 = vector.shape_cast %498 : vector<2x8x256xf32> to vector<16x256xf32>
    %c1472_333 = arith.constant 1472 : index
    %c0_334 = arith.constant 0 : index
    %500 = vector.load %arg1[%c1472_333, %c0_334] : memref<1984x128xf32, #tpu.memory_space<vmem>>, vector<256x128xf32>
    %cst_335 = arith.constant dense<0.000000e+00> : vector<16x128xf32>
    %501 = tpu.matmul %499, %500, %cst_335 {dimension_numbers = #tpu.dot_dimension_numbers<[1], [0], [0], [1], [0, 0, 1, 1], [], []>} : vector<16x256xf32>, vector<256x128xf32>, vector<16x128xf32> -> vector<16x128xf32>
    %c0_336 = arith.constant 0 : index
    %c2_337 = arith.constant 2 : index
    %c0_338 = arith.constant 0 : index
    %502 = vector.load %arg10[%c0_336, %c2_337, %c0_338] : memref<2x10x256xf32, #tpu.memory_space<vmem>>, vector<2x8x256xf32>
    %503 = vector.shape_cast %502 : vector<2x8x256xf32> to vector<16x256xf32>
    %c1728_339 = arith.constant 1728 : index
    %c0_340 = arith.constant 0 : index
    %504 = vector.load %arg1[%c1728_339, %c0_340] : memref<1984x128xf32, #tpu.memory_space<vmem>>, vector<256x128xf32>
    %cst_341 = arith.constant dense<0.000000e+00> : vector<16x128xf32>
    %505 = tpu.matmul %503, %504, %cst_341 {dimension_numbers = #tpu.dot_dimension_numbers<[1], [0], [0], [1], [0, 0, 1, 1], [], []>} : vector<16x256xf32>, vector<256x128xf32>, vector<16x128xf32> -> vector<16x128xf32>
    %506 = arith.addf %501, %505 : vector<16x128xf32>
    %cst_342 = arith.constant dense<0.000000e+00> : vector<128xf32>
    %507 = vector.multi_reduction <add>, %497, %cst_342 [0] : vector<16x128xf32> to vector<128xf32>
    %508 = vector.shape_cast %507 : vector<128xf32> to vector<1x128xf32>
    %509 = arith.mulf %497, %497 : vector<16x128xf32>
    %cst_343 = arith.constant dense<0.000000e+00> : vector<128xf32>
    %510 = vector.multi_reduction <add>, %509, %cst_343 [0] : vector<16x128xf32> to vector<128xf32>
    %511 = vector.shape_cast %510 : vector<128xf32> to vector<1x128xf32>
    %cst_344 = arith.constant dense<0.000000e+00> : vector<128xf32>
    %512 = vector.multi_reduction <add>, %506, %cst_344 [0] : vector<16x128xf32> to vector<128xf32>
    %513 = vector.shape_cast %512 : vector<128xf32> to vector<1x128xf32>
    %514 = arith.addf %508, %513 : vector<1x128xf32>
    %515 = arith.mulf %506, %506 : vector<16x128xf32>
    %cst_345 = arith.constant dense<0.000000e+00> : vector<128xf32>
    %516 = vector.multi_reduction <add>, %515, %cst_345 [0] : vector<16x128xf32> to vector<128xf32>
    %517 = vector.shape_cast %516 : vector<128xf32> to vector<1x128xf32>
    %518 = arith.addf %511, %517 : vector<1x128xf32>
    %519 = tpu.concatenate %514, %518 in 0 : vector<1x128xf32>, vector<1x128xf32> -> vector<2x128xf32>
    %cst_346 = arith.constant dense<0.000000e+00> : vector<2x8xf32>
    %520 = tpu.matmul %519, %12, %cst_346 {dimension_numbers = #tpu.dot_dimension_numbers<[1], [0], [0], [1], [0, 0, 1, 1], [], []>} : vector<2x128xf32>, vector<128x8xf32>, vector<2x8xf32> -> vector<2x8xf32>
    %521 = vector.extract_strided_slice %520 {offsets = [0, 0], sizes = [1, 8], strides = [1, 1]} : vector<2x8xf32> to vector<1x8xf32>
    %cst_347 = arith.constant 0.001953125 : f32
    %522 = vector.broadcast %cst_347 : f32 to vector<1x8xf32>
    %523 = arith.mulf %521, %522 : vector<1x8xf32>
    %524 = vector.extract_strided_slice %520 {offsets = [1, 0], sizes = [1, 8], strides = [1, 1]} : vector<2x8xf32> to vector<1x8xf32>
    %cst_348 = arith.constant 0.001953125 : f32
    %525 = vector.broadcast %cst_348 : f32 to vector<1x8xf32>
    %526 = arith.mulf %524, %525 : vector<1x8xf32>
    %527 = arith.mulf %523, %523 : vector<1x8xf32>
    %528 = arith.subf %526, %527 : vector<1x8xf32>
    %c14 = arith.constant 14 : index
    %c0_349 = arith.constant 0 : index
    %529 = vector.load %arg5[%c14, %c0_349] : memref<20x8xf32, #tpu.memory_space<vmem>>, vector<1x8xf32>
    %c15 = arith.constant 15 : index
    %c0_350 = arith.constant 0 : index
    %530 = vector.load %arg5[%c15, %c0_350] : memref<20x8xf32, #tpu.memory_space<vmem>>, vector<1x8xf32>
    %cst_351 = arith.constant 9.99999974E-6 : f32
    %531 = vector.broadcast %cst_351 : f32 to vector<1x8xf32>
    %532 = arith.addf %528, %531 : vector<1x8xf32>
    %533 = math.rsqrt %532 : vector<1x8xf32>
    %534 = arith.mulf %529, %533 : vector<1x8xf32>
    %535 = arith.mulf %523, %534 : vector<1x8xf32>
    %536 = arith.subf %530, %535 : vector<1x8xf32>
    %537 = tpu.concatenate %534, %536 in 0 : vector<1x8xf32>, vector<1x8xf32> -> vector<2x8xf32>
    %cst_352 = arith.constant dense<0.000000e+00> : vector<2x128xf32>
    %538 = tpu.matmul %537, %15, %cst_352 {dimension_numbers = #tpu.dot_dimension_numbers<[1], [0], [0], [1], [0, 0, 1, 1], [], []>} : vector<2x8xf32>, vector<8x128xf32>, vector<2x128xf32> -> vector<2x128xf32>
    %539 = vector.extract_strided_slice %538 {offsets = [0, 0], sizes = [1, 128], strides = [1, 1]} : vector<2x128xf32> to vector<1x128xf32>
    %540 = vector.broadcast %539 : vector<1x128xf32> to vector<16x128xf32>
    %541 = arith.mulf %497, %540 : vector<16x128xf32>
    %542 = vector.extract_strided_slice %538 {offsets = [1, 0], sizes = [1, 128], strides = [1, 1]} : vector<2x128xf32> to vector<1x128xf32>
    %543 = vector.broadcast %542 : vector<1x128xf32> to vector<16x128xf32>
    %544 = arith.addf %541, %543 : vector<16x128xf32>
    %545 = vector.extract_strided_slice %538 {offsets = [0, 0], sizes = [1, 128], strides = [1, 1]} : vector<2x128xf32> to vector<1x128xf32>
    %546 = vector.broadcast %545 : vector<1x128xf32> to vector<16x128xf32>
    %547 = arith.mulf %506, %546 : vector<16x128xf32>
    %548 = vector.extract_strided_slice %538 {offsets = [1, 0], sizes = [1, 128], strides = [1, 1]} : vector<2x128xf32> to vector<1x128xf32>
    %549 = vector.broadcast %548 : vector<1x128xf32> to vector<16x128xf32>
    %550 = arith.addf %547, %549 : vector<16x128xf32>
    %c0_353 = arith.constant 0 : index
    %c2_354 = arith.constant 2 : index
    %c0_355 = arith.constant 0 : index
    %551 = tpu.strided_load %arg8[%c0_353, %c2_354, %c0_355] {strides = array<i32: 1, 2, 1>} : memref<2x20x128xf32, #tpu.memory_space<vmem>>, vector<2x8x128xf32>
    %552 = vector.shape_cast %551 : vector<2x8x128xf32> to vector<16x128xf32>
    %c0_356 = arith.constant 0 : index
    %c3_357 = arith.constant 3 : index
    %c0_358 = arith.constant 0 : index
    %553 = tpu.strided_load %arg8[%c0_356, %c3_357, %c0_358] {strides = array<i32: 1, 2, 1>} : memref<2x20x128xf32, #tpu.memory_space<vmem>>, vector<2x8x128xf32>
    %554 = vector.shape_cast %553 : vector<2x8x128xf32> to vector<16x128xf32>
    %555 = arith.addf %544, %552 : vector<16x128xf32>
    %556 = arith.addf %550, %554 : vector<16x128xf32>
    %c2048 = arith.constant 2048 : index
    %c0_359 = arith.constant 0 : index
    %557 = vector.load %arg2[%c2048, %c0_359] : memref<2240x64xf32, #tpu.memory_space<vmem>>, vector<64x64xf32>
    %c0_360 = arith.constant 0 : index
    %c0_361 = arith.constant 0 : index
    %c0_362 = arith.constant 0 : index
    %558 = tpu.strided_load %arg0[%c0_360, %c0_361, %c0_362] {strides = array<i32: 1, 2, 1>} : memref<2x16x64xf32, #tpu.memory_space<vmem>>, vector<2x8x64xf32>
    %559 = vector.shape_cast %558 : vector<2x8x64xf32> to vector<16x64xf32>
    %c0_363 = arith.constant 0 : index
    %c1_364 = arith.constant 1 : index
    %c0_365 = arith.constant 0 : index
    %560 = tpu.strided_load %arg0[%c0_363, %c1_364, %c0_365] {strides = array<i32: 1, 2, 1>} : memref<2x16x64xf32, #tpu.memory_space<vmem>>, vector<2x8x64xf32>
    %561 = vector.shape_cast %560 : vector<2x8x64xf32> to vector<16x64xf32>
    %cst_366 = arith.constant dense<0.000000e+00> : vector<16x64xf32>
    %562 = tpu.matmul %559, %557, %cst_366 {dimension_numbers = #tpu.dot_dimension_numbers<[1], [0], [0], [1], [0, 0, 1, 1], [], []>} : vector<16x64xf32>, vector<64x64xf32>, vector<16x64xf32> -> vector<16x64xf32>
    %cst_367 = arith.constant dense<0.000000e+00> : vector<16x64xf32>
    %563 = tpu.matmul %561, %557, %cst_367 {dimension_numbers = #tpu.dot_dimension_numbers<[1], [0], [0], [1], [0, 0, 1, 1], [], []>} : vector<16x64xf32>, vector<64x64xf32>, vector<16x64xf32> -> vector<16x64xf32>
    %cst_368 = arith.constant dense<0.000000e+00> : vector<64xf32>
    %564 = vector.multi_reduction <add>, %562, %cst_368 [0] : vector<16x64xf32> to vector<64xf32>
    %565 = vector.shape_cast %564 : vector<64xf32> to vector<1x64xf32>
    %566 = arith.mulf %562, %562 : vector<16x64xf32>
    %cst_369 = arith.constant dense<0.000000e+00> : vector<64xf32>
    %567 = vector.multi_reduction <add>, %566, %cst_369 [0] : vector<16x64xf32> to vector<64xf32>
    %568 = vector.shape_cast %567 : vector<64xf32> to vector<1x64xf32>
    %cst_370 = arith.constant dense<0.000000e+00> : vector<64xf32>
    %569 = vector.multi_reduction <add>, %563, %cst_370 [0] : vector<16x64xf32> to vector<64xf32>
    %570 = vector.shape_cast %569 : vector<64xf32> to vector<1x64xf32>
    %571 = arith.addf %565, %570 : vector<1x64xf32>
    %572 = arith.mulf %563, %563 : vector<16x64xf32>
    %cst_371 = arith.constant dense<0.000000e+00> : vector<64xf32>
    %573 = vector.multi_reduction <add>, %572, %cst_371 [0] : vector<16x64xf32> to vector<64xf32>
    %574 = vector.shape_cast %573 : vector<64xf32> to vector<1x64xf32>
    %575 = arith.addf %568, %574 : vector<1x64xf32>
    %576 = tpu.concatenate %571, %575 in 0 : vector<1x64xf32>, vector<1x64xf32> -> vector<2x64xf32>
    %cst_372 = arith.constant dense<0.000000e+00> : vector<2x4xf32>
    %577 = tpu.matmul %576, %44, %cst_372 {dimension_numbers = #tpu.dot_dimension_numbers<[1], [0], [0], [1], [0, 0, 1, 1], [], []>} : vector<2x64xf32>, vector<64x4xf32>, vector<2x4xf32> -> vector<2x4xf32>
    %578 = vector.extract_strided_slice %577 {offsets = [0, 0], sizes = [1, 4], strides = [1, 1]} : vector<2x4xf32> to vector<1x4xf32>
    %cst_373 = arith.constant 0.001953125 : f32
    %579 = vector.broadcast %cst_373 : f32 to vector<1x4xf32>
    %580 = arith.mulf %578, %579 : vector<1x4xf32>
    %581 = vector.extract_strided_slice %577 {offsets = [1, 0], sizes = [1, 4], strides = [1, 1]} : vector<2x4xf32> to vector<1x4xf32>
    %cst_374 = arith.constant 0.001953125 : f32
    %582 = vector.broadcast %cst_374 : f32 to vector<1x4xf32>
    %583 = arith.mulf %581, %582 : vector<1x4xf32>
    %584 = arith.mulf %580, %580 : vector<1x4xf32>
    %585 = arith.subf %583, %584 : vector<1x4xf32>
    %c16 = arith.constant 16 : index
    %c0_375 = arith.constant 0 : index
    %586 = vector.load %arg5[%c16, %c0_375] : memref<20x8xf32, #tpu.memory_space<vmem>>, vector<1x4xf32>
    %c17 = arith.constant 17 : index
    %c0_376 = arith.constant 0 : index
    %587 = vector.load %arg5[%c17, %c0_376] : memref<20x8xf32, #tpu.memory_space<vmem>>, vector<1x4xf32>
    %cst_377 = arith.constant 9.99999974E-6 : f32
    %588 = vector.broadcast %cst_377 : f32 to vector<1x4xf32>
    %589 = arith.addf %585, %588 : vector<1x4xf32>
    %590 = math.rsqrt %589 : vector<1x4xf32>
    %591 = arith.mulf %586, %590 : vector<1x4xf32>
    %592 = arith.mulf %580, %591 : vector<1x4xf32>
    %593 = arith.subf %587, %592 : vector<1x4xf32>
    %594 = tpu.concatenate %591, %593 in 0 : vector<1x4xf32>, vector<1x4xf32> -> vector<2x4xf32>
    %cst_378 = arith.constant dense<0.000000e+00> : vector<2x64xf32>
    %595 = tpu.matmul %594, %47, %cst_378 {dimension_numbers = #tpu.dot_dimension_numbers<[1], [0], [0], [1], [0, 0, 1, 1], [], []>} : vector<2x4xf32>, vector<4x64xf32>, vector<2x64xf32> -> vector<2x64xf32>
    %596 = vector.extract_strided_slice %595 {offsets = [0, 0], sizes = [1, 64], strides = [1, 1]} : vector<2x64xf32> to vector<1x64xf32>
    %597 = vector.broadcast %596 : vector<1x64xf32> to vector<16x64xf32>
    %598 = arith.mulf %562, %597 : vector<16x64xf32>
    %599 = vector.extract_strided_slice %595 {offsets = [1, 0], sizes = [1, 64], strides = [1, 1]} : vector<2x64xf32> to vector<1x64xf32>
    %600 = vector.broadcast %599 : vector<1x64xf32> to vector<16x64xf32>
    %601 = arith.addf %598, %600 : vector<16x64xf32>
    %602 = vector.extract_strided_slice %595 {offsets = [0, 0], sizes = [1, 64], strides = [1, 1]} : vector<2x64xf32> to vector<1x64xf32>
    %603 = vector.broadcast %602 : vector<1x64xf32> to vector<16x64xf32>
    %604 = arith.mulf %563, %603 : vector<16x64xf32>
    %605 = vector.extract_strided_slice %595 {offsets = [1, 0], sizes = [1, 64], strides = [1, 1]} : vector<2x64xf32> to vector<1x64xf32>
    %606 = vector.broadcast %605 : vector<1x64xf32> to vector<16x64xf32>
    %607 = arith.addf %604, %606 : vector<16x64xf32>
    %c2112 = arith.constant 2112 : index
    %c0_379 = arith.constant 0 : index
    %608 = vector.load %arg2[%c2112, %c0_379] : memref<2240x64xf32, #tpu.memory_space<vmem>>, vector<128x64xf32>
    %cst_380 = arith.constant dense<0.000000e+00> : vector<16x64xf32>
    %609 = tpu.matmul %555, %608, %cst_380 {dimension_numbers = #tpu.dot_dimension_numbers<[1], [0], [0], [1], [0, 0, 1, 1], [], []>} : vector<16x128xf32>, vector<128x64xf32>, vector<16x64xf32> -> vector<16x64xf32>
    %cst_381 = arith.constant dense<0.000000e+00> : vector<16x64xf32>
    %610 = tpu.matmul %556, %608, %cst_381 {dimension_numbers = #tpu.dot_dimension_numbers<[1], [0], [0], [1], [0, 0, 1, 1], [], []>} : vector<16x128xf32>, vector<128x64xf32>, vector<16x64xf32> -> vector<16x64xf32>
    %cst_382 = arith.constant dense<0.000000e+00> : vector<64xf32>
    %611 = vector.multi_reduction <add>, %609, %cst_382 [0] : vector<16x64xf32> to vector<64xf32>
    %612 = vector.shape_cast %611 : vector<64xf32> to vector<1x64xf32>
    %613 = arith.mulf %609, %609 : vector<16x64xf32>
    %cst_383 = arith.constant dense<0.000000e+00> : vector<64xf32>
    %614 = vector.multi_reduction <add>, %613, %cst_383 [0] : vector<16x64xf32> to vector<64xf32>
    %615 = vector.shape_cast %614 : vector<64xf32> to vector<1x64xf32>
    %cst_384 = arith.constant dense<0.000000e+00> : vector<64xf32>
    %616 = vector.multi_reduction <add>, %610, %cst_384 [0] : vector<16x64xf32> to vector<64xf32>
    %617 = vector.shape_cast %616 : vector<64xf32> to vector<1x64xf32>
    %618 = arith.addf %612, %617 : vector<1x64xf32>
    %619 = arith.mulf %610, %610 : vector<16x64xf32>
    %cst_385 = arith.constant dense<0.000000e+00> : vector<64xf32>
    %620 = vector.multi_reduction <add>, %619, %cst_385 [0] : vector<16x64xf32> to vector<64xf32>
    %621 = vector.shape_cast %620 : vector<64xf32> to vector<1x64xf32>
    %622 = arith.addf %615, %621 : vector<1x64xf32>
    %623 = tpu.concatenate %618, %622 in 0 : vector<1x64xf32>, vector<1x64xf32> -> vector<2x64xf32>
    %cst_386 = arith.constant dense<0.000000e+00> : vector<2x4xf32>
    %624 = tpu.matmul %623, %44, %cst_386 {dimension_numbers = #tpu.dot_dimension_numbers<[1], [0], [0], [1], [0, 0, 1, 1], [], []>} : vector<2x64xf32>, vector<64x4xf32>, vector<2x4xf32> -> vector<2x4xf32>
    %625 = vector.extract_strided_slice %624 {offsets = [0, 0], sizes = [1, 4], strides = [1, 1]} : vector<2x4xf32> to vector<1x4xf32>
    %cst_387 = arith.constant 0.001953125 : f32
    %626 = vector.broadcast %cst_387 : f32 to vector<1x4xf32>
    %627 = arith.mulf %625, %626 : vector<1x4xf32>
    %628 = vector.extract_strided_slice %624 {offsets = [1, 0], sizes = [1, 4], strides = [1, 1]} : vector<2x4xf32> to vector<1x4xf32>
    %cst_388 = arith.constant 0.001953125 : f32
    %629 = vector.broadcast %cst_388 : f32 to vector<1x4xf32>
    %630 = arith.mulf %628, %629 : vector<1x4xf32>
    %631 = arith.mulf %627, %627 : vector<1x4xf32>
    %632 = arith.subf %630, %631 : vector<1x4xf32>
    %c18_389 = arith.constant 18 : index
    %c0_390 = arith.constant 0 : index
    %633 = vector.load %arg5[%c18_389, %c0_390] : memref<20x8xf32, #tpu.memory_space<vmem>>, vector<1x4xf32>
    %c19 = arith.constant 19 : index
    %c0_391 = arith.constant 0 : index
    %634 = vector.load %arg5[%c19, %c0_391] : memref<20x8xf32, #tpu.memory_space<vmem>>, vector<1x4xf32>
    %cst_392 = arith.constant 9.99999974E-6 : f32
    %635 = vector.broadcast %cst_392 : f32 to vector<1x4xf32>
    %636 = arith.addf %632, %635 : vector<1x4xf32>
    %637 = math.rsqrt %636 : vector<1x4xf32>
    %638 = arith.mulf %633, %637 : vector<1x4xf32>
    %639 = arith.mulf %627, %638 : vector<1x4xf32>
    %640 = arith.subf %634, %639 : vector<1x4xf32>
    %641 = tpu.concatenate %638, %640 in 0 : vector<1x4xf32>, vector<1x4xf32> -> vector<2x4xf32>
    %cst_393 = arith.constant dense<0.000000e+00> : vector<2x64xf32>
    %642 = tpu.matmul %641, %47, %cst_393 {dimension_numbers = #tpu.dot_dimension_numbers<[1], [0], [0], [1], [0, 0, 1, 1], [], []>} : vector<2x4xf32>, vector<4x64xf32>, vector<2x64xf32> -> vector<2x64xf32>
    %643 = vector.extract_strided_slice %642 {offsets = [0, 0], sizes = [1, 64], strides = [1, 1]} : vector<2x64xf32> to vector<1x64xf32>
    %644 = vector.broadcast %643 : vector<1x64xf32> to vector<16x64xf32>
    %645 = arith.mulf %609, %644 : vector<16x64xf32>
    %646 = vector.extract_strided_slice %642 {offsets = [1, 0], sizes = [1, 64], strides = [1, 1]} : vector<2x64xf32> to vector<1x64xf32>
    %647 = vector.broadcast %646 : vector<1x64xf32> to vector<16x64xf32>
    %648 = arith.addf %645, %647 : vector<16x64xf32>
    %649 = vector.extract_strided_slice %642 {offsets = [0, 0], sizes = [1, 64], strides = [1, 1]} : vector<2x64xf32> to vector<1x64xf32>
    %650 = vector.broadcast %649 : vector<1x64xf32> to vector<16x64xf32>
    %651 = arith.mulf %610, %650 : vector<16x64xf32>
    %652 = vector.extract_strided_slice %642 {offsets = [1, 0], sizes = [1, 64], strides = [1, 1]} : vector<2x64xf32> to vector<1x64xf32>
    %653 = vector.broadcast %652 : vector<1x64xf32> to vector<16x64xf32>
    %654 = arith.addf %651, %653 : vector<16x64xf32>
    %655 = arith.addf %601, %648 : vector<16x64xf32>
    %656 = arith.addf %607, %654 : vector<16x64xf32>
    %657 = tpu.concatenate %655, %656 in 1 : vector<16x64xf32>, vector<16x64xf32> -> vector<16x128xf32>
    %c0_394 = arith.constant 0 : index
    %c0_395 = arith.constant 0 : index
    %658 = vector.load %arg6[%c0_394, %c0_395] : memref<16x128xf32, #tpu.memory_space<vmem>>, vector<16x128xf32>
    tpu.vector_store %arg6[%c0_394, %c0_395], %657 {strides = array<i32>} : memref<16x128xf32, #tpu.memory_space<vmem>>, vector<16x128xf32>,
    return
  }
}

</mosaic_0001>

<llo_original>
// kernel: resblock_forward.1
$region0: #{resblock_forward.1}
  #allocation0 [shape = 'u32[]', space=smem, size = 0x4, offset = 0x4, fixed_abs, tag = 'smem constant byte address 0x4 - core index']
  #allocation1 [shape = 'u32[144,128]{1,0:T(1,128)}', space=vmem, size = 0x12000, scoped, tag = 'internal scratch']
  #allocation2 [shape = 'f32[2,20,64]{2,1,0:T(8,128)}', space=vmem, size = 0x6000, scoped, tag = 'scratch operand']
  #allocation3 [shape = 'f32[2,20,128]{2,1,0:T(8,128)}', space=vmem, size = 0x6000, scoped, tag = 'scratch operand']
  #allocation4 [shape = 'f32[2,12,64]{2,1,0:T(8,128)}', space=vmem, size = 0x4000, scoped, tag = 'scratch operand']
  #allocation5 [shape = 'f32[2,10,256]{2,1,0:T(8,128)}', space=vmem, size = 0x8000, scoped, tag = 'scratch operand']
  %s0 = inlined_call_operand.vmem [shape: f32[2,16,64], index: 0, kind: input, shape index: {}]
  %s1 = inlined_call_operand.vmem [shape: f32[1984,128], index: 1, kind: input, shape index: {}]
  %s2 = inlined_call_operand.vmem [shape: f32[2240,64], index: 2, kind: input, shape index: {}]
  %s3 = inlined_call_operand.vmem [shape: f32[192,256], index: 3, kind: input, shape index: {}]
  %s4 = inlined_call_operand.vmem [shape: f32[1,256], index: 4, kind: input, shape index: {}]
  %s5 = inlined_call_operand.vmem [shape: f32[20,8], index: 5, kind: input, shape index: {}]
  %s6 = inlined_call_operand.vmem [shape: f32[16,128], index: 6, kind: output, shape index: {}]
  %s7 = sld [smem:[#allocation0]]
  $region34: #{resblock_forward.1} parent=0
    _
  %s9 = ssub.s32 1, %s7
  %s10 = scalar_select 0, %s9, %s7
  // Predicated region
  $region2: #{resblock_forward.1} parent=0 // pred_check
    _
  $region3: #{resblock_forward.1} parent=0 // pred_check_branch
    %12 = sbr.rel (0) target = $region5
  $region4: #{resblock_forward.1} parent=0 // pred_region
    _
  $region5: #{resblock_forward.1} parent=0 // pred_fallthru
    _
  // Predicated region
  $region6: #{resblock_forward.1} parent=0 // pred_check
    _
  $region7: #{resblock_forward.1} parent=0 // pred_check_branch
    %14 = sbr.rel (0) target = $region9
  $region8: #{resblock_forward.1} parent=0 // pred_region
    _
  $region9: #{resblock_forward.1} parent=0 // pred_fallthru
    _
  // Predicated region
  $region10: #{resblock_forward.1} parent=0 // pred_check
    _
  $region11: #{resblock_forward.1} parent=0 // pred_check_branch
    %16 = sbr.rel (0) target = $region13
  $region12: #{resblock_forward.1} parent=0 // pred_region
    _
  $region13: #{resblock_forward.1} parent=0 // pred_fallthru
    _
  // Predicated region
  $region14: #{resblock_forward.1} parent=0 // pred_check
    _
  $region15: #{resblock_forward.1} parent=0 // pred_check_branch
    %18 = sbr.rel (0) target = $region17
  $region16: #{resblock_forward.1} parent=0 // pred_region
    _
  $region17: #{resblock_forward.1} parent=0 // pred_fallthru
    _
  // Predicated region
  $region18: #{resblock_forward.1} parent=0 // pred_check
    _
  $region19: #{resblock_forward.1} parent=0 // pred_check_branch
    %20 = sbr.rel (0) target = $region21
  $region20: #{resblock_forward.1} parent=0 // pred_region
    _
  $region21: #{resblock_forward.1} parent=0 // pred_fallthru
    _
  // Predicated region
  $region22: #{resblock_forward.1} parent=0 // pred_check
    _
  $region23: #{resblock_forward.1} parent=0 // pred_check_branch
    %22 = sbr.rel (0) target = $region25
  $region24: #{resblock_forward.1} parent=0 // pred_region
    _
  $region25: #{resblock_forward.1} parent=0 // pred_fallthru
    _
  %v23 = vlaneseq
  %v24 = vshrl.u32 %v23, 7
  %v25 = vadd.s32 %v24, 8
  %v26 = vadd.s32 %v24, 16
  %v27 = vadd.s32 %v24, 24
  %v28 = vadd.s32 %v24, 32
  %v29 = vadd.s32 %v24, 40
  %v30 = vadd.s32 %v24, 48
  %v31 = vadd.s32 %v24, 56
  %v32 = vadd.s32 %v24, 64
  %v33 = vadd.s32 %v24, 72
  %v34 = vadd.s32 %v24, 80
  %v35 = vadd.s32 %v24, 88
  %v36 = vadd.s32 %v24, 96
  %v37 = vadd.s32 %v24, 104
  %v38 = vadd.s32 %v24, 112
  %v39 = vadd.s32 %v24, 120
  %v40 = vlaneseq
  %v41 = vand.u32 %v40, 127
  %v42 = vand.u32 %v24, 7
  %v43 = vand.u32 %v25, 7
  %v44 = vand.u32 %v26, 7
  %v45 = vand.u32 %v27, 7
  %v46 = vand.u32 %v28, 7
  %v47 = vand.u32 %v29, 7
  %v48 = vand.u32 %v30, 7
  %v49 = vand.u32 %v31, 7
  %v50 = vand.u32 %v32, 7
  %v51 = vand.u32 %v33, 7
  %v52 = vand.u32 %v34, 7
  %v53 = vand.u32 %v35, 7
  %v54 = vand.u32 %v36, 7
  %v55 = vand.u32 %v37, 7
  %v56 = vand.u32 %v38, 7
  %v57 = vand.u32 %v39, 7
  %vm58 = vcmp.eq.s32.totalorder %v42, %v41
  %vm59 = vcmp.eq.s32.totalorder %v43, %v41
  %vm60 = vcmp.eq.s32.totalorder %v44, %v41
  %vm61 = vcmp.eq.s32.totalorder %v45, %v41
  %vm62 = vcmp.eq.s32.totalorder %v46, %v41
  %vm63 = vcmp.eq.s32.totalorder %v47, %v41
  %vm64 = vcmp.eq.s32.totalorder %v48, %v41
  %vm65 = vcmp.eq.s32.totalorder %v49, %v41
  %vm66 = vcmp.eq.s32.totalorder %v50, %v41
  %vm67 = vcmp.eq.s32.totalorder %v51, %v41
  %vm68 = vcmp.eq.s32.totalorder %v52, %v41
  %vm69 = vcmp.eq.s32.totalorder %v53, %v41
  %vm70 = vcmp.eq.s32.totalorder %v54, %v41
  %vm71 = vcmp.eq.s32.totalorder %v55, %v41
  %vm72 = vcmp.eq.s32.totalorder %v56, %v41
  %vm73 = vcmp.eq.s32.totalorder %v57, %v41
  %v74 = vand.u32 %v41, 7
  %vm75 = vcmp.eq.s32.totalorder %v74, %v24
  %v76 = vsel %vm58, 1.0, 0.0
  %v77 = vsel %vm59, 1.0, 0.0
  %v78 = vsel %vm60, 1.0, 0.0
  %v79 = vsel %vm61, 1.0, 0.0
  %v80 = vsel %vm62, 1.0, 0.0
  %v81 = vsel %vm63, 1.0, 0.0
  %v82 = vsel %vm64, 1.0, 0.0
  %v83 = vsel %vm65, 1.0, 0.0
  %v84 = vsel %vm66, 1.0, 0.0
  %v85 = vsel %vm67, 1.0, 0.0
  %v86 = vsel %vm68, 1.0, 0.0
  %v87 = vsel %vm69, 1.0, 0.0
  %v88 = vsel %vm70, 1.0, 0.0
  %v89 = vsel %vm71, 1.0, 0.0
  %v90 = vsel %vm72, 1.0, 0.0
  %v91 = vsel %vm73, 1.0, 0.0
  %v92 = vsel %vm75, 1.0, 0.0
  %v93 = vand.u32 %v24, 3
  %v94 = vand.u32 %v25, 3
  %v95 = vand.u32 %v26, 3
  %v96 = vand.u32 %v27, 3
  %v97 = vand.u32 %v28, 3
  %v98 = vand.u32 %v29, 3
  %v99 = vand.u32 %v30, 3
  %v100 = vand.u32 %v31, 3
  %vm101 = vcmp.eq.s32.totalorder %v93, %v41
  %vm102 = vcmp.eq.s32.totalorder %v94, %v41
  %vm103 = vcmp.eq.s32.totalorder %v95, %v41
  %vm104 = vcmp.eq.s32.totalorder %v96, %v41
  %vm105 = vcmp.eq.s32.totalorder %v97, %v41
  %vm106 = vcmp.eq.s32.totalorder %v98, %v41
  %vm107 = vcmp.eq.s32.totalorder %v99, %v41
  %vm108 = vcmp.eq.s32.totalorder %v100, %v41
  %v109 = vand.u32 %v41, 3
  %vm110 = vcmp.eq.s32.totalorder %v109, %v24
  %v111 = vsel %vm101, 1.0, 0.0
  %v112 = vsel %vm102, 1.0, 0.0
  %v113 = vsel %vm103, 1.0, 0.0
  %v114 = vsel %vm104, 1.0, 0.0
  %v115 = vsel %vm105, 1.0, 0.0
  %v116 = vsel %vm106, 1.0, 0.0
  %v117 = vsel %vm107, 1.0, 0.0
  %v118 = vsel %vm108, 1.0, 0.0
  %v119 = vsel %vm110, 1.0, 0.0
  %vm120 = vcmask 517120
  %121 = vst.msk [vmem:[#allocation2] sm:$0x3] %vm120, 0.0
  %122 = vst.msk [vmem:[#allocation2 + $0x18] sm:$0x3] %vm120, 0.0
  %123 = vst.msk [vmem:[#allocation2 + $0x12] sm:$0x3] %vm120, 0.0
  %124 = vst.msk [vmem:[#allocation2 + $0x2a] sm:$0x3] %vm120, 0.0
  %125 = vst [vmem:[#allocation3] sm:$0x3] 0.0
  %126 = vst [vmem:[#allocation3 + $0x18] sm:$0x3] 0.0
  %127 = vst [vmem:[#allocation3 + $0x12] sm:$0x3] 0.0
  %128 = vst [vmem:[#allocation3 + $0x2a] sm:$0x3] 0.0
  %129 = vst.msk [vmem:[#allocation4] sm:$0x3] %vm120, 0.0
  %130 = vst.msk [vmem:[#allocation4 + $0x10] sm:$0x3] %vm120, 0.0
  %131 = vst.msk [vmem:[#allocation4 + $0xa] sm:$0x3] %vm120, 0.0
  %132 = vst.msk [vmem:[#allocation4 + $0x1a] sm:$0x3] %vm120, 0.0
  %v133 = vlaneseq
  %vm134 = vcmp.ge.s32.totalorder %v133, 0
  %vm135 = vcmp.lt.s32.totalorder %v133, 256
  %vm136 = vmand %vm134, %vm135
  %137 = vst.msk [vmem:[#allocation5] ss:$8 sm:$0x3] %vm136, 0.0
  %138 = vst.msk [vmem:[#allocation5] ss:$8 sm:$0x0] %vm136, 0.0
  %s139 = scalar_lea.vmem [#allocation5], 32
  %140 = vst.msk [vmem:[%s139] ss:$8 sm:$0x3] %vm136, 0.0
  %141 = vst.msk [vmem:[%s139] ss:$8 sm:$0x0] %vm136, 0.0
  %s142 = scalar_lea.vmem [#allocation5], 17
  %143 = vst.msk [vmem:[%s142] ss:$8 sm:$0x3] %vm136, 0.0
  %144 = vst.msk [vmem:[%s142] ss:$8 sm:$0x0] %vm136, 0.0
  %s145 = scalar_lea.vmem [#allocation5], 49
  %146 = vst.msk [vmem:[%s145] ss:$8 sm:$0x3] %vm136, 0.0
  %147 = vst.msk [vmem:[%s145] ss:$8 sm:$0x0] %vm136, 0.0
  %v148 = vld [vmem:[%s0] sm:$0xff]
  %v149 = vld [vmem:[%s0 + $0x8] sm:$0xff]
  %v150 = vld [vmem:[%s0 + $0x10] sm:$0xff]
  %v151 = vld [vmem:[%s0 + $0x18] sm:$0xff]
  %vm152 = vcmask 523264
  %153 = vst.msk [vmem:[#allocation2 + $0x2] sm:$0xff] %vm152, %v148
  %154 = vst.msk [vmem:[#allocation2 + $0xa] sm:$0xff] %vm152, %v149
  %155 = vst.msk [vmem:[#allocation2 + $0x1a] sm:$0xff] %vm152, %v150
  %156 = vst.msk [vmem:[#allocation2 + $0x22] sm:$0xff] %vm152, %v151
  %v157 = vld [vmem:[#allocation2] sm:$0xff]
  %v158 = vld [vmem:[#allocation2 + $0x8] sm:$0xff]
  %v159 = vld [vmem:[#allocation2 + $0x18] sm:$0xff]
  %v160 = vld [vmem:[#allocation2 + $0x20] sm:$0xff]
  %v161 = vld [vmem:[%s1] sm:$0xff]
  %v162 = vld [vmem:[%s1 + $0x8] sm:$0xff]
  %v163 = vld [vmem:[%s1 + $0x10] sm:$0xff]
  %v164 = vld [vmem:[%s1 + $0x18] sm:$0xff]
  %v165 = vld [vmem:[%s1 + $0x20] sm:$0xff]
  %v166 = vld [vmem:[%s1 + $0x28] sm:$0xff]
  %v167 = vld [vmem:[%s1 + $0x30] sm:$0xff]
  %v168 = vld [vmem:[%s1 + $0x38] sm:$0xff]
  %v169 = vld [vmem:[#allocation2 + $0x1] sm:$0xff]
  %v170 = vld [vmem:[#allocation2 + $0x9] sm:$0xff]
  %v171 = vld [vmem:[#allocation2 + $0x19] sm:$0xff]
  %v172 = vld [vmem:[#allocation2 + $0x21] sm:$0xff]
  %v173 = vld [vmem:[%s1 + $0x40] sm:$0xff]
  %v174 = vld [vmem:[%s1 + $0x48] sm:$0xff]
  %v175 = vld [vmem:[%s1 + $0x50] sm:$0xff]
  %v176 = vld [vmem:[%s1 + $0x58] sm:$0xff]
  %v177 = vld [vmem:[%s1 + $0x60] sm:$0xff]
  %v178 = vld [vmem:[%s1 + $0x68] sm:$0xff]
  %v179 = vld [vmem:[%s1 + $0x70] sm:$0xff]
  %v180 = vld [vmem:[%s1 + $0x78] sm:$0xff]
  %v182 = vsel %vm152, %v169, 0
  %v185 = vsel %vm152, %v170, 0
  %v188 = vsel %vm152, %v171, 0
  %v191 = vsel %vm152, %v172, 0
  %193 = vmatprep.subr.mxu0 0.0
  %194 = vmatpush1.msra.mxu0 %v173
  %195 = vmatprep.subr.mxu0 0.0
  %196 = vmatpush1.msra.mxu0 %v174
  %197 = vmatprep.subr.mxu0 0.0
  %198 = vmatpush1.msra.mxu0 %v175
  %199 = vmatprep.subr.mxu0 0.0
  %200 = vmatpush1.msra.mxu0 %v176
  %201 = vmatprep.subr.mxu0 0.0
  %202 = vmatpush1.msra.mxu0 %v177
  %203 = vmatprep.subr.mxu0 0.0
  %204 = vmatpush1.msra.mxu0 %v178
  %205 = vmatprep.subr.mxu0 0.0
  %206 = vmatpush1.msra.mxu0 %v179
  %207 = vmatprep.subr.mxu0 0.0
  %208 = vmatpush1.msra.mxu0 %v180
  %209 = vmatprep.subr.mxu0 0.0
  %210 = vmatpush1.msra.mxu0 0.0
  %211 = vmatprep.subr.mxu0 0.0
  %212 = vmatpush1.msra.mxu0 0.0
  %213 = vmatprep.subr.mxu0 0.0
  %214 = vmatpush1.msra.mxu0 0.0
  %215 = vmatprep.subr.mxu0 0.0
  %216 = vmatpush1.msra.mxu0 0.0
  %217 = vmatprep.subr.mxu0 0.0
  %218 = vmatpush1.msra.mxu0 0.0
  %219 = vmatprep.subr.mxu0 0.0
  %220 = vmatpush1.msra.mxu0 0.0
  %221 = vmatprep.subr.mxu0 0.0
  %222 = vmatpush1.msra.mxu0 0.0
  %223 = vmatprep.subr.mxu0 0.0
  %224 = vmatpush1.msra.mxu0 0.0
  %225 = vmatprep.subr.mxu0 0.0
  %226 = vmatpush1.msra.mxu0 0.0
  %227 = vmatprep.subr.mxu0 0.0
  %228 = vmatpush1.msra.mxu0 0.0
  %229 = vmatprep.subr.mxu0 0.0
  %230 = vmatpush1.msra.mxu0 0.0
  %231 = vmatprep.subr.mxu0 0.0
  %232 = vmatpush1.msra.mxu0 0.0
  %233 = vmatprep.subr.mxu0 0.0
  %234 = vmatpush1.msra.mxu0 0.0
  %235 = vmatprep.subr.mxu0 0.0
  %236 = vmatpush1.msra.mxu0 0.0
  %237 = vmatprep.subr.mxu0 0.0
  %238 = vmatpush1.msra.mxu0 0.0
  %239 = vmatprep.subr.mxu0 0.0
  %240 = vmatpush1.msra.mxu0 0.0
  %241 = vmatprep.subr.mxu0 0.0
  %242 = vmatpush1.msra.mxu0 0.0
  %243 = vmatprep.subr.mxu0 0.0
  %244 = vmatpush1.msra.mxu0 0.0
  %245 = vmatprep.subr.mxu0 0.0
  %246 = vmatpush1.msra.mxu0 0.0
  %247 = vmatprep.subr.mxu0 0.0
  %248 = vmatpush1.msra.mxu0 0.0
  %249 = vmatprep.subr.mxu0 0.0
  %250 = vmatpush1.msra.mxu0 0.0
  %251 = vmatprep.subr.mxu0 0.0
  %252 = vmatpush1.msra.mxu0 0.0
  %253 = vmatprep.subr.mxu0 0.0
  %254 = vmatpush1.msra.mxu0 0.0
  %255 = vmatprep.subr.mxu0 0.0
  %256 = vmatpush1.msra.mxu0 0.0
  %257 = vmatprep.mubr.f32.mxu0 0.0
  %258 = vmatmul.mubr.f32.gmra.mrb[0].mxu0 %v182
  %v259 = vpop.f32.mrb[0].mxu0
  %v260 = vadd.f32 0.0, %v259
  %v261 = vpop.f32.mrb[0].mxu0
  %262 = vmatprep.mubr.f32.mxu0 0.0
  %263 = vmatmul.mubr.f32.gmra.mrb[0].mxu0 %v185
  %v264 = vpop.f32.mrb[0].mxu0
  %v265 = vadd.f32 0.0, %v264
  %v266 = vpop.f32.mrb[0].mxu0
  %267 = vmatprep.mubr.f32.mxu0 0.0
  %268 = vmatmul.mubr.f32.gmra.mrb[0].mxu0 %v188
  %v269 = vpop.f32.mrb[0].mxu0
  %v270 = vadd.f32 0.0, %v269
  %v271 = vpop.f32.mrb[0].mxu0
  %272 = vmatprep.mubr.f32.mxu0 0.0
  %273 = vmatmul.mubr.f32.gmra.mrb[0].mxu0 %v191
  %v274 = vpop.f32.mrb[0].mxu0
  %v275 = vadd.f32 0.0, %v274
  %v276 = vpop.f32.mrb[0].mxu0
  %277 = vdwg.mxu0
  %v279 = vsel %vm152, %v157, 0
  %v282 = vsel %vm152, %v158, 0
  %v285 = vsel %vm152, %v159, 0
  %v288 = vsel %vm152, %v160, 0
  %290 = vmatprep.subr.mxu0 0.0
  %291 = vmatpush1.msra.mxu0 %v161
  %292 = vmatprep.subr.mxu0 0.0
  %293 = vmatpush1.msra.mxu0 %v162
  %294 = vmatprep.subr.mxu0 0.0
  %295 = vmatpush1.msra.mxu0 %v163
  %296 = vmatprep.subr.mxu0 0.0
  %297 = vmatpush1.msra.mxu0 %v164
  %298 = vmatprep.subr.mxu0 0.0
  %299 = vmatpush1.msra.mxu0 %v165
  %300 = vmatprep.subr.mxu0 0.0
  %301 = vmatpush1.msra.mxu0 %v166
  %302 = vmatprep.subr.mxu0 0.0
  %303 = vmatpush1.msra.mxu0 %v167
  %304 = vmatprep.subr.mxu0 0.0
  %305 = vmatpush1.msra.mxu0 %v168
  %306 = vmatprep.subr.mxu0 0.0
  %307 = vmatpush1.msra.mxu0 0.0
  %308 = vmatprep.subr.mxu0 0.0
  %309 = vmatpush1.msra.mxu0 0.0
  %310 = vmatprep.subr.mxu0 0.0
  %311 = vmatpush1.msra.mxu0 0.0
  %312 = vmatprep.subr.mxu0 0.0
  %313 = vmatpush1.msra.mxu0 0.0
  %314 = vmatprep.subr.mxu0 0.0
  %315 = vmatpush1.msra.mxu0 0.0
  %316 = vmatprep.subr.mxu0 0.0
  %317 = vmatpush1.msra.mxu0 0.0
  %318 = vmatprep.subr.mxu0 0.0
  %319 = vmatpush1.msra.mxu0 0.0
  %320 = vmatprep.subr.mxu0 0.0
  %321 = vmatpush1.msra.mxu0 0.0
  %322 = vmatprep.subr.mxu0 0.0
  %323 = vmatpush1.msra.mxu0 0.0
  %324 = vmatprep.subr.mxu0 0.0
  %325 = vmatpush1.msra.mxu0 0.0
  %326 = vmatprep.subr.mxu0 0.0
  %327 = vmatpush1.msra.mxu0 0.0
  %328 = vmatprep.subr.mxu0 0.0
  %329 = vmatpush1.msra.mxu0 0.0
  %330 = vmatprep.subr.mxu0 0.0
  %331 = vmatpush1.msra.mxu0 0.0
  %332 = vmatprep.subr.mxu0 0.0
  %333 = vmatpush1.msra.mxu0 0.0
  %334 = vmatprep.subr.mxu0 0.0
  %335 = vmatpush1.msra.mxu0 0.0
  %336 = vmatprep.subr.mxu0 0.0
  %337 = vmatpush1.msra.mxu0 0.0
  %338 = vmatprep.subr.mxu0 0.0
  %339 = vmatpush1.msra.mxu0 0.0
  %340 = vmatprep.subr.mxu0 0.0
  %341 = vmatpush1.msra.mxu0 0.0
  %342 = vmatprep.subr.mxu0 0.0
  %343 = vmatpush1.msra.mxu0 0.0
  %344 = vmatprep.subr.mxu0 0.0
  %345 = vmatpush1.msra.mxu0 0.0
  %346 = vmatprep.subr.mxu0 0.0
  %347 = vmatpush1.msra.mxu0 0.0
  %348 = vmatprep.subr.mxu0 0.0
  %349 = vmatpush1.msra.mxu0 0.0
  %350 = vmatprep.subr.mxu0 0.0
  %351 = vmatpush1.msra.mxu0 0.0
  %352 = vmatprep.subr.mxu0 0.0
  %353 = vmatpush1.msra.mxu0 0.0
  %354 = vmatprep.mubr.f32.mxu0 0.0
  %355 = vmatmul.mubr.f32.gmra.mrb[0].mxu0 %v279
  %v356 = vpop.f32.mrb[0].mxu0
  %v357 = vadd.f32 %v260, %v356
  %v358 = vpop.f32.mrb[0].mxu0
  %359 = vmatprep.mubr.f32.mxu0 0.0
  %360 = vmatmul.mubr.f32.gmra.mrb[0].mxu0 %v282
  %v361 = vpop.f32.mrb[0].mxu0
  %v362 = vadd.f32 %v265, %v361
  %v363 = vpop.f32.mrb[0].mxu0
  %364 = vmatprep.mubr.f32.mxu0 0.0
  %365 = vmatmul.mubr.f32.gmra.mrb[0].mxu0 %v285
  %v366 = vpop.f32.mrb[0].mxu0
  %v367 = vadd.f32 %v270, %v366
  %v368 = vpop.f32.mrb[0].mxu0
  %369 = vmatprep.mubr.f32.mxu0 0.0
  %370 = vmatmul.mubr.f32.gmra.mrb[0].mxu0 %v288
  %v371 = vpop.f32.mrb[0].mxu0
  %v372 = vadd.f32 %v275, %v371
  %v373 = vpop.f32.mrb[0].mxu0
  %374 = vdwg.mxu0
  %v375 = vld [vmem:[#allocation2 + $0x2] sm:$0xff]
  %v376 = vld [vmem:[#allocation2 + $0xa] sm:$0xff]
  %v377 = vld [vmem:[#allocation2 + $0x1a] sm:$0xff]
  %v378 = vld [vmem:[#allocation2 + $0x22] sm:$0xff]
  %v379 = vld [vmem:[%s1 + $0x80] sm:$0xff]
  %v380 = vld [vmem:[%s1 + $0x88] sm:$0xff]
  %v381 = vld [vmem:[%s1 + $0x90] sm:$0xff]
  %v382 = vld [vmem:[%s1 + $0x98] sm:$0xff]
  %v383 = vld [vmem:[%s1 + $0xa0] sm:$0xff]
  %v384 = vld [vmem:[%s1 + $0xa8] sm:$0xff]
  %v385 = vld [vmem:[%s1 + $0xb0] sm:$0xff]
  %v386 = vld [vmem:[%s1 + $0xb8] sm:$0xff]
  %v388 = vsel %vm152, %v375, 0
  %v391 = vsel %vm152, %v376, 0
  %v394 = vsel %vm152, %v377, 0
  %v397 = vsel %vm152, %v378, 0
  %399 = vmatprep.subr.mxu0 0.0
  %400 = vmatpush1.msra.mxu0 %v379
  %401 = vmatprep.subr.mxu0 0.0
  %402 = vmatpush1.msra.mxu0 %v380
  %403 = vmatprep.subr.mxu0 0.0
  %404 = vmatpush1.msra.mxu0 %v381
  %405 = vmatprep.subr.mxu0 0.0
  %406 = vmatpush1.msra.mxu0 %v382
  %407 = vmatprep.subr.mxu0 0.0
  %408 = vmatpush1.msra.mxu0 %v383
  %409 = vmatprep.subr.mxu0 0.0
  %410 = vmatpush1.msra.mxu0 %v384
  %411 = vmatprep.subr.mxu0 0.0
  %412 = vmatpush1.msra.mxu0 %v385
  %413 = vmatprep.subr.mxu0 0.0
  %414 = vmatpush1.msra.mxu0 %v386
  %415 = vmatprep.subr.mxu0 0.0
  %416 = vmatpush1.msra.mxu0 0.0
  %417 = vmatprep.subr.mxu0 0.0
  %418 = vmatpush1.msra.mxu0 0.0
  %419 = vmatprep.subr.mxu0 0.0
  %420 = vmatpush1.msra.mxu0 0.0
  %421 = vmatprep.subr.mxu0 0.0
  %422 = vmatpush1.msra.mxu0 0.0
  %423 = vmatprep.subr.mxu0 0.0
  %424 = vmatpush1.msra.mxu0 0.0
  %425 = vmatprep.subr.mxu0 0.0
  %426 = vmatpush1.msra.mxu0 0.0
  %427 = vmatprep.subr.mxu0 0.0
  %428 = vmatpush1.msra.mxu0 0.0
  %429 = vmatprep.subr.mxu0 0.0
  %430 = vmatpush1.msra.mxu0 0.0
  %431 = vmatprep.subr.mxu0 0.0
  %432 = vmatpush1.msra.mxu0 0.0
  %433 = vmatprep.subr.mxu0 0.0
  %434 = vmatpush1.msra.mxu0 0.0
  %435 = vmatprep.subr.mxu0 0.0
  %436 = vmatpush1.msra.mxu0 0.0
  %437 = vmatprep.subr.mxu0 0.0
  %438 = vmatpush1.msra.mxu0 0.0
  %439 = vmatprep.subr.mxu0 0.0
  %440 = vmatpush1.msra.mxu0 0.0
  %441 = vmatprep.subr.mxu0 0.0
  %442 = vmatpush1.msra.mxu0 0.0
  %443 = vmatprep.subr.mxu0 0.0
  %444 = vmatpush1.msra.mxu0 0.0
  %445 = vmatprep.subr.mxu0 0.0
  %446 = vmatpush1.msra.mxu0 0.0
  %447 = vmatprep.subr.mxu0 0.0
  %448 = vmatpush1.msra.mxu0 0.0
  %449 = vmatprep.subr.mxu0 0.0
  %450 = vmatpush1.msra.mxu0 0.0
  %451 = vmatprep.subr.mxu0 0.0
  %452 = vmatpush1.msra.mxu0 0.0
  %453 = vmatprep.subr.mxu0 0.0
  %454 = vmatpush1.msra.mxu0 0.0
  %455 = vmatprep.subr.mxu0 0.0
  %456 = vmatpush1.msra.mxu0 0.0
  %457 = vmatprep.subr.mxu0 0.0
  %458 = vmatpush1.msra.mxu0 0.0
  %459 = vmatprep.subr.mxu0 0.0
  %460 = vmatpush1.msra.mxu0 0.0
  %461 = vmatprep.subr.mxu0 0.0
  %462 = vmatpush1.msra.mxu0 0.0
  %463 = vmatprep.mubr.f32.mxu0 0.0
  %464 = vmatmul.mubr.f32.gmra.mrb[0].mxu0 %v388
  %v465 = vpop.f32.mrb[0].mxu0
  %v466 = vadd.f32 0.0, %v465
  %v467 = vpop.f32.mrb[0].mxu0
  %468 = vmatprep.mubr.f32.mxu0 0.0
  %469 = vmatmul.mubr.f32.gmra.mrb[0].mxu0 %v391
  %v470 = vpop.f32.mrb[0].mxu0
  %v471 = vadd.f32 0.0, %v470
  %v472 = vpop.f32.mrb[0].mxu0
  %473 = vmatprep.mubr.f32.mxu0 0.0
  %474 = vmatmul.mubr.f32.gmra.mrb[0].mxu0 %v394
  %v475 = vpop.f32.mrb[0].mxu0
  %v476 = vadd.f32 0.0, %v475
  %v477 = vpop.f32.mrb[0].mxu0
  %478 = vmatprep.mubr.f32.mxu0 0.0
  %479 = vmatmul.mubr.f32.gmra.mrb[0].mxu0 %v397
  %v480 = vpop.f32.mrb[0].mxu0
  %v481 = vadd.f32 0.0, %v480
  %v482 = vpop.f32.mrb[0].mxu0
  %483 = vdwg.mxu0
  %v484 = vadd.f32 %v357, %v466
  %v485 = vadd.f32 %v362, %v471
  %v486 = vadd.f32 %v367, %v476
  %v487 = vadd.f32 %v372, %v481
  %v488 = vld [vmem:[#allocation2 + $0x3] sm:$0xff]
  %v489 = vld [vmem:[#allocation2 + $0xb] sm:$0xff]
  %v490 = vld [vmem:[#allocation2 + $0x1b] sm:$0xff]
  %v491 = vld [vmem:[#allocation2 + $0x23] sm:$0xff]
  %v492 = vld [vmem:[%s1 + $0xc0] sm:$0xff]
  %v493 = vld [vmem:[%s1 + $0xc8] sm:$0xff]
  %v494 = vld [vmem:[%s1 + $0xd0] sm:$0xff]
  %v495 = vld [vmem:[%s1 + $0xd8] sm:$0xff]
  %v496 = vld [vmem:[%s1 + $0xe0] sm:$0xff]
  %v497 = vld [vmem:[%s1 + $0xe8] sm:$0xff]
  %v498 = vld [vmem:[%s1 + $0xf0] sm:$0xff]
  %v499 = vld [vmem:[%s1 + $0xf8] sm:$0xff]
  %v501 = vsel %vm152, %v488, 0
  %v504 = vsel %vm152, %v489, 0
  %v507 = vsel %vm152, %v490, 0
  %v510 = vsel %vm152, %v491, 0
  %512 = vmatprep.subr.mxu0 0.0
  %513 = vmatpush1.msra.mxu0 %v492
  %514 = vmatprep.subr.mxu0 0.0
  %515 = vmatpush1.msra.mxu0 %v493
  %516 = vmatprep.subr.mxu0 0.0
  %517 = vmatpush1.msra.mxu0 %v494
  %518 = vmatprep.subr.mxu0 0.0
  %519 = vmatpush1.msra.mxu0 %v495
  %520 = vmatprep.subr.mxu0 0.0
  %521 = vmatpush1.msra.mxu0 %v496
  %522 = vmatprep.subr.mxu0 0.0
  %523 = vmatpush1.msra.mxu0 %v497
  %524 = vmatprep.subr.mxu0 0.0
  %525 = vmatpush1.msra.mxu0 %v498
  %526 = vmatprep.subr.mxu0 0.0
  %527 = vmatpush1.msra.mxu0 %v499
  %528 = vmatprep.subr.mxu0 0.0
  %529 = vmatpush1.msra.mxu0 0.0
  %530 = vmatprep.subr.mxu0 0.0
  %531 = vmatpush1.msra.mxu0 0.0
  %532 = vmatprep.subr.mxu0 0.0
  %533 = vmatpush1.msra.mxu0 0.0
  %534 = vmatprep.subr.mxu0 0.0
  %535 = vmatpush1.msra.mxu0 0.0
  %536 = vmatprep.subr.mxu0 0.0
  %537 = vmatpush1.msra.mxu0 0.0
  %538 = vmatprep.subr.mxu0 0.0
  %539 = vmatpush1.msra.mxu0 0.0
  %540 = vmatprep.subr.mxu0 0.0
  %541 = vmatpush1.msra.mxu0 0.0
  %542 = vmatprep.subr.mxu0 0.0
  %543 = vmatpush1.msra.mxu0 0.0
  %544 = vmatprep.subr.mxu0 0.0
  %545 = vmatpush1.msra.mxu0 0.0
  %546 = vmatprep.subr.mxu0 0.0
  %547 = vmatpush1.msra.mxu0 0.0
  %548 = vmatprep.subr.mxu0 0.0
  %549 = vmatpush1.msra.mxu0 0.0
  %550 = vmatprep.subr.mxu0 0.0
  %551 = vmatpush1.msra.mxu0 0.0
  %552 = vmatprep.subr.mxu0 0.0
  %553 = vmatpush1.msra.mxu0 0.0
  %554 = vmatprep.subr.mxu0 0.0
  %555 = vmatpush1.msra.mxu0 0.0
  %556 = vmatprep.subr.mxu0 0.0
  %557 = vmatpush1.msra.mxu0 0.0
  %558 = vmatprep.subr.mxu0 0.0
  %559 = vmatpush1.msra.mxu0 0.0
  %560 = vmatprep.subr.mxu0 0.0
  %561 = vmatpush1.msra.mxu0 0.0
  %562 = vmatprep.subr.mxu0 0.0
  %563 = vmatpush1.msra.mxu0 0.0
  %564 = vmatprep.subr.mxu0 0.0
  %565 = vmatpush1.msra.mxu0 0.0
  %566 = vmatprep.subr.mxu0 0.0
  %567 = vmatpush1.msra.mxu0 0.0
  %568 = vmatprep.subr.mxu0 0.0
  %569 = vmatpush1.msra.mxu0 0.0
  %570 = vmatprep.subr.mxu0 0.0
  %571 = vmatpush1.msra.mxu0 0.0
  %572 = vmatprep.subr.mxu0 0.0
  %573 = vmatpush1.msra.mxu0 0.0
  %574 = vmatprep.subr.mxu0 0.0
  %575 = vmatpush1.msra.mxu0 0.0
  %576 = vmatprep.mubr.f32.mxu0 0.0
  %577 = vmatmul.mubr.f32.gmra.mrb[0].mxu0 %v501
  %v578 = vpop.f32.mrb[0].mxu0
  %v579 = vadd.f32 0.0, %v578
  %v580 = vpop.f32.mrb[0].mxu0
  %581 = vmatprep.mubr.f32.mxu0 0.0
  %582 = vmatmul.mubr.f32.gmra.mrb[0].mxu0 %v504
  %v583 = vpop.f32.mrb[0].mxu0
  %v584 = vadd.f32 0.0, %v583
  %v585 = vpop.f32.mrb[0].mxu0
  %586 = vmatprep.mubr.f32.mxu0 0.0
  %587 = vmatmul.mubr.f32.gmra.mrb[0].mxu0 %v507
  %v588 = vpop.f32.mrb[0].mxu0
  %v589 = vadd.f32 0.0, %v588
  %v590 = vpop.f32.mrb[0].mxu0
  %591 = vmatprep.mubr.f32.mxu0 0.0
  %592 = vmatmul.mubr.f32.gmra.mrb[0].mxu0 %v510
  %v593 = vpop.f32.mrb[0].mxu0
  %v594 = vadd.f32 0.0, %v593
  %v595 = vpop.f32.mrb[0].mxu0
  %596 = vdwg.mxu0
  %v597 = vadd.f32 %v484, %v579
  %v598 = vadd.f32 %v485, %v584
  %v599 = vadd.f32 %v486, %v589
  %v600 = vadd.f32 %v487, %v594
  %v601 = vld [vmem:[#allocation2 + $0x4] sm:$0xff]
  %v602 = vld [vmem:[#allocation2 + $0xc] sm:$0xff]
  %v603 = vld [vmem:[#allocation2 + $0x1c] sm:$0xff]
  %v604 = vld [vmem:[#allocation2 + $0x24] sm:$0xff]
  %v605 = vld [vmem:[%s1 + $0x100] sm:$0xff]
  %v606 = vld [vmem:[%s1 + $0x108] sm:$0xff]
  %v607 = vld [vmem:[%s1 + $0x110] sm:$0xff]
  %v608 = vld [vmem:[%s1 + $0x118] sm:$0xff]
  %v609 = vld [vmem:[%s1 + $0x120] sm:$0xff]
  %v610 = vld [vmem:[%s1 + $0x128] sm:$0xff]
  %v611 = vld [vmem:[%s1 + $0x130] sm:$0xff]
  %v612 = vld [vmem:[%s1 + $0x138] sm:$0xff]
  %v614 = vsel %vm152, %v601, 0
  %v617 = vsel %vm152, %v602, 0
  %v620 = vsel %vm152, %v603, 0
  %v623 = vsel %vm152, %v604, 0
  %625 = vmatprep.subr.mxu0 0.0
  %626 = vmatpush1.msra.mxu0 %v605
  %627 = vmatprep.subr.mxu0 0.0
  %628 = vmatpush1.msra.mxu0 %v606
  %629 = vmatprep.subr.mxu0 0.0
  %630 = vmatpush1.msra.mxu0 %v607
  %631 = vmatprep.subr.mxu0 0.0
  %632 = vmatpush1.msra.mxu0 %v608
  %633 = vmatprep.subr.mxu0 0.0
  %634 = vmatpush1.msra.mxu0 %v609
  %635 = vmatprep.subr.mxu0 0.0
  %636 = vmatpush1.msra.mxu0 %v610
  %637 = vmatprep.subr.mxu0 0.0
  %638 = vmatpush1.msra.mxu0 %v611
  %639 = vmatprep.subr.mxu0 0.0
  %640 = vmatpush1.msra.mxu0 %v612
  %641 = vmatprep.subr.mxu0 0.0
  %642 = vmatpush1.msra.mxu0 0.0
  %643 = vmatprep.subr.mxu0 0.0
  %644 = vmatpush1.msra.mxu0 0.0
  %645 = vmatprep.subr.mxu0 0.0
  %646 = vmatpush1.msra.mxu0 0.0
  %647 = vmatprep.subr.mxu0 0.0
  %648 = vmatpush1.msra.mxu0 0.0
  %649 = vmatprep.subr.mxu0 0.0
  %650 = vmatpush1.msra.mxu0 0.0
  %651 = vmatprep.subr.mxu0 0.0
  %652 = vmatpush1.msra.mxu0 0.0
  %653 = vmatprep.subr.mxu0 0.0
  %654 = vmatpush1.msra.mxu0 0.0
  %655 = vmatprep.subr.mxu0 0.0
  %656 = vmatpush1.msra.mxu0 0.0
  %657 = vmatprep.subr.mxu0 0.0
  %658 = vmatpush1.msra.mxu0 0.0
  %659 = vmatprep.subr.mxu0 0.0
  %660 = vmatpush1.msra.mxu0 0.0
  %661 = vmatprep.subr.mxu0 0.0
  %662 = vmatpush1.msra.mxu0 0.0
  %663 = vmatprep.subr.mxu0 0.0
  %664 = vmatpush1.msra.mxu0 0.0
  %665 = vmatprep.subr.mxu0 0.0
  %666 = vmatpush1.msra.mxu0 0.0
  %667 = vmatprep.subr.mxu0 0.0
  %668 = vmatpush1.msra.mxu0 0.0
  %669 = vmatprep.subr.mxu0 0.0
  %670 = vmatpush1.msra.mxu0 0.0
  %671 = vmatprep.subr.mxu0 0.0
  %672 = vmatpush1.msra.mxu0 0.0
  %673 = vmatprep.subr.mxu0 0.0
  %674 = vmatpush1.msra.mxu0 0.0
  %675 = vmatprep.subr.mxu0 0.0
  %676 = vmatpush1.msra.mxu0 0.0
  %677 = vmatprep.subr.mxu0 0.0
  %678 = vmatpush1.msra.mxu0 0.0
  %679 = vmatprep.subr.mxu0 0.0
  %680 = vmatpush1.msra.mxu0 0.0
  %681 = vmatprep.subr.mxu0 0.0
  %682 = vmatpush1.msra.mxu0 0.0
  %683 = vmatprep.subr.mxu0 0.0
  %684 = vmatpush1.msra.mxu0 0.0
  %685 = vmatprep.subr.mxu0 0.0
  %686 = vmatpush1.msra.mxu0 0.0
  %687 = vmatprep.subr.mxu0 0.0
  %688 = vmatpush1.msra.mxu0 0.0
  %689 = vmatprep.mubr.f32.mxu0 0.0
  %690 = vmatmul.mubr.f32.gmra.mrb[0].mxu0 %v614
  %v691 = vpop.f32.mrb[0].mxu0
  %v692 = vadd.f32 0.0, %v691
  %v693 = vpop.f32.mrb[0].mxu0
  %694 = vmatprep.mubr.f32.mxu0 0.0
  %695 = vmatmul.mubr.f32.gmra.mrb[0].mxu0 %v617
  %v696 = vpop.f32.mrb[0].mxu0
  %v697 = vadd.f32 0.0, %v696
  %v698 = vpop.f32.mrb[0].mxu0
  %699 = vmatprep.mubr.f32.mxu0 0.0
  %700 = vmatmul.mubr.f32.gmra.mrb[0].mxu0 %v620
  %v701 = vpop.f32.mrb[0].mxu0
  %v702 = vadd.f32 0.0, %v701
  %v703 = vpop.f32.mrb[0].mxu0
  %704 = vmatprep.mubr.f32.mxu0 0.0
  %705 = vmatmul.mubr.f32.gmra.mrb[0].mxu0 %v623
  %v706 = vpop.f32.mrb[0].mxu0
  %v707 = vadd.f32 0.0, %v706
  %v708 = vpop.f32.mrb[0].mxu0
  %709 = vdwg.mxu0
  %v710 = vadd.f32 %v597, %v692
  %v711 = vadd.f32 %v598, %v697
  %v712 = vadd.f32 %v599, %v702
  %v713 = vadd.f32 %v600, %v707
  %v714 = vadd.f32 %v710, %v711
  %v715 = vadd.f32 %v714, %v712
  %v716 = vadd.f32 %v715, %v713
  %v717 = vrot.slane %v716, 4
  %v718 = vadd.f32 %v716, %v717
  %v719 = vrot.slane %v718, 2
  %v720 = vadd.f32 %v718, %v719
  %v721 = vrot.slane %v720, 1
  %v722 = vadd.f32 %v720, %v721
  %v723 = vmul.f32 %v710, %v710
  %v724 = vmul.f32 %v711, %v711
  %v725 = vmul.f32 %v712, %v712
  %v726 = vmul.f32 %v713, %v713
  %v727 = vadd.f32 %v723, %v724
  %v728 = vadd.f32 %v727, %v725
  %v729 = vadd.f32 %v728, %v726
  %v730 = vrot.slane %v729, 4
  %v731 = vadd.f32 %v729, %v730
  %v732 = vrot.slane %v731, 2
  %v733 = vadd.f32 %v731, %v732
  %v734 = vrot.slane %v733, 1
  %v735 = vadd.f32 %v733, %v734
  %vm736 = vcmask 1040384
  %v737 = vsel %vm736, %v722, %v735
  %738 = vmatprep.subr.mxu0 0.0
  %739 = vmatpush1.msra.mxu0 %v76
  %740 = vmatprep.subr.mxu0 0.0
  %741 = vmatpush1.msra.mxu0 %v77
  %742 = vmatprep.subr.mxu0 0.0
  %743 = vmatpush1.msra.mxu0 %v78
  %744 = vmatprep.subr.mxu0 0.0
  %745 = vmatpush1.msra.mxu0 %v79
  %746 = vmatprep.subr.mxu0 0.0
  %747 = vmatpush1.msra.mxu0 %v80
  %748 = vmatprep.subr.mxu0 0.0
  %749 = vmatpush1.msra.mxu0 %v81
  %750 = vmatprep.subr.mxu0 0.0
  %751 = vmatpush1.msra.mxu0 %v82
  %752 = vmatprep.subr.mxu0 0.0
  %753 = vmatpush1.msra.mxu0 %v83
  %754 = vmatprep.subr.mxu0 0.0
  %755 = vmatpush1.msra.mxu0 %v84
  %756 = vmatprep.subr.mxu0 0.0
  %757 = vmatpush1.msra.mxu0 %v85
  %758 = vmatprep.subr.mxu0 0.0
  %759 = vmatpush1.msra.mxu0 %v86
  %760 = vmatprep.subr.mxu0 0.0
  %761 = vmatpush1.msra.mxu0 %v87
  %762 = vmatprep.subr.mxu0 0.0
  %763 = vmatpush1.msra.mxu0 %v88
  %764 = vmatprep.subr.mxu0 0.0
  %765 = vmatpush1.msra.mxu0 %v89
  %766 = vmatprep.subr.mxu0 0.0
  %767 = vmatpush1.msra.mxu0 %v90
  %768 = vmatprep.subr.mxu0 0.0
  %769 = vmatpush1.msra.mxu0 %v91
  %770 = vmatprep.subr.mxu0 0.0
  %771 = vmatpush1.msra.mxu0 0.0
  %772 = vmatprep.subr.mxu0 0.0
  %773 = vmatpush1.msra.mxu0 0.0
  %774 = vmatprep.subr.mxu0 0.0
  %775 = vmatpush1.msra.mxu0 0.0
  %776 = vmatprep.subr.mxu0 0.0
  %777 = vmatpush1.msra.mxu0 0.0
  %778 = vmatprep.subr.mxu0 0.0
  %779 = vmatpush1.msra.mxu0 0.0
  %780 = vmatprep.subr.mxu0 0.0
  %781 = vmatpush1.msra.mxu0 0.0
  %782 = vmatprep.subr.mxu0 0.0
  %783 = vmatpush1.msra.mxu0 0.0
  %784 = vmatprep.subr.mxu0 0.0
  %785 = vmatpush1.msra.mxu0 0.0
  %786 = vmatprep.subr.mxu0 0.0
  %787 = vmatpush1.msra.mxu0 0.0
  %788 = vmatprep.subr.mxu0 0.0
  %789 = vmatpush1.msra.mxu0 0.0
  %790 = vmatprep.subr.mxu0 0.0
  %791 = vmatpush1.msra.mxu0 0.0
  %792 = vmatprep.subr.mxu0 0.0
  %793 = vmatpush1.msra.mxu0 0.0
  %794 = vmatprep.subr.mxu0 0.0
  %795 = vmatpush1.msra.mxu0 0.0
  %796 = vmatprep.subr.mxu0 0.0
  %797 = vmatpush1.msra.mxu0 0.0
  %798 = vmatprep.subr.mxu0 0.0
  %799 = vmatpush1.msra.mxu0 0.0
  %800 = vmatprep.subr.mxu0 0.0
  %801 = vmatpush1.msra.mxu0 0.0
  %802 = vmatprep.mubr.f32.mxu0 0.0
  %803 = vmatmul.mubr.f32.gmra.mrb[0].mxu0 %v737
  %v804 = vpop.f32.mrb[0].mxu0
  %v805 = vadd.f32 0.0, %v804
  %v806 = vpop.f32.mrb[0].mxu0
  %807 = vdwg.mxu0
  %v808 = vmul.f32 %v805, 0.001953125
  %v809 = vmul.f32 %v808, %v808
  %v811 = vrot.slane %v809, 7
  %v813 = vsub.f32 %v808, %v811
  %v814 = vld [vmem:[%s5] sm:$0x1]
  %v815 = vld [vmem:[%s5 + $0x1] sm:$0x1]
  %v816 = vadd.f32 %v813, 1e-05
  %v817 = vrsqrt.pop %v816
  %v819 = vrot.slane %v817, 1
  %v821 = vmul.f32 %v814, %v819
  %v822 = vmul.f32 %v808, %v821
  %v823 = vsub.f32 %v815, %v822
  %v825 = vrot.slane %v823, 7
  %v827 = vsel %vm736, %v821, %v825
  %vm828 = vcmask 64512
  %v830 = vsel %vm828, %v827, 0
  %832 = vmatprep.subr.mxu0 0.0
  %833 = vmatpush1.msra.mxu0 %v92
  %834 = vmatprep.subr.mxu0 0.0
  %835 = vmatpush1.msra.mxu0 0.0
  %836 = vmatprep.subr.mxu0 0.0
  %837 = vmatpush1.msra.mxu0 0.0
  %838 = vmatprep.subr.mxu0 0.0
  %839 = vmatpush1.msra.mxu0 0.0
  %840 = vmatprep.subr.mxu0 0.0
  %841 = vmatpush1.msra.mxu0 0.0
  %842 = vmatprep.subr.mxu0 0.0
  %843 = vmatpush1.msra.mxu0 0.0
  %844 = vmatprep.subr.mxu0 0.0
  %845 = vmatpush1.msra.mxu0 0.0
  %846 = vmatprep.subr.mxu0 0.0
  %847 = vmatpush1.msra.mxu0 0.0
  %848 = vmatprep.subr.mxu0 0.0
  %849 = vmatpush1.msra.mxu0 0.0
  %850 = vmatprep.subr.mxu0 0.0
  %851 = vmatpush1.msra.mxu0 0.0
  %852 = vmatprep.subr.mxu0 0.0
  %853 = vmatpush1.msra.mxu0 0.0
  %854 = vmatprep.subr.mxu0 0.0
  %855 = vmatpush1.msra.mxu0 0.0
  %856 = vmatprep.subr.mxu0 0.0
  %857 = vmatpush1.msra.mxu0 0.0
  %858 = vmatprep.subr.mxu0 0.0
  %859 = vmatpush1.msra.mxu0 0.0
  %860 = vmatprep.subr.mxu0 0.0
  %861 = vmatpush1.msra.mxu0 0.0
  %862 = vmatprep.subr.mxu0 0.0
  %863 = vmatpush1.msra.mxu0 0.0
  %864 = vmatprep.subr.mxu0 0.0
  %865 = vmatpush1.msra.mxu0 0.0
  %866 = vmatprep.subr.mxu0 0.0
  %867 = vmatpush1.msra.mxu0 0.0
  %868 = vmatprep.subr.mxu0 0.0
  %869 = vmatpush1.msra.mxu0 0.0
  %870 = vmatprep.subr.mxu0 0.0
  %871 = vmatpush1.msra.mxu0 0.0
  %872 = vmatprep.subr.mxu0 0.0
  %873 = vmatpush1.msra.mxu0 0.0
  %874 = vmatprep.subr.mxu0 0.0
  %875 = vmatpush1.msra.mxu0 0.0
  %876 = vmatprep.subr.mxu0 0.0
  %877 = vmatpush1.msra.mxu0 0.0
  %878 = vmatprep.subr.mxu0 0.0
  %879 = vmatpush1.msra.mxu0 0.0
  %880 = vmatprep.subr.mxu0 0.0
  %881 = vmatpush1.msra.mxu0 0.0
  %882 = vmatprep.subr.mxu0 0.0
  %883 = vmatpush1.msra.mxu0 0.0
  %884 = vmatprep.subr.mxu0 0.0
  %885 = vmatpush1.msra.mxu0 0.0
  %886 = vmatprep.subr.mxu0 0.0
  %887 = vmatpush1.msra.mxu0 0.0
  %888 = vmatprep.subr.mxu0 0.0
  %889 = vmatpush1.msra.mxu0 0.0
  %890 = vmatprep.subr.mxu0 0.0
  %891 = vmatpush1.msra.mxu0 0.0
  %892 = vmatprep.subr.mxu0 0.0
  %893 = vmatpush1.msra.mxu0 0.0
  %894 = vmatprep.subr.mxu0 0.0
  %895 = vmatpush1.msra.mxu0 0.0
  %896 = vmatprep.mubr.f32.mxu0 0.0
  %897 = vmatmul.mubr.f32.gmra.mrb[0].mxu0 %v830
  %v898 = vpop.f32.mrb[0].mxu0
  %v899 = vadd.f32 0.0, %v898
  %v900 = vpop.f32.mrb[0].mxu0
  %901 = vdwg.mxu0
  %v902 = vlaneseq
  %v903 = vshrl.u32 %v902, 7
  %v904 = vsub.s32 0, %v903
  %v905 = vrot.slane %v899, %v904
  %v906 = vmul.f32 %v710, %v905
  %v907 = vmul.f32 %v711, %v905
  %v908 = vmul.f32 %v712, %v905
  %v909 = vmul.f32 %v713, %v905
  %v910 = vlaneseq
  %v911 = vshrl.u32 %v910, 7
  %v912 = vsub.s32 1, %v911
  %v913 = vrot.slane %v899, %v912
  %v914 = vadd.f32 %v906, %v913
  %v915 = vadd.f32 %v907, %v913
  %v916 = vadd.f32 %v908, %v913
  %v917 = vadd.f32 %v909, %v913
  %v918 = vmax.f32 %v914, 0.0
  %v919 = vmax.f32 %v915, 0.0
  %v920 = vmax.f32 %v916, 0.0
  %v921 = vmax.f32 %v917, 0.0
  %922 = vst [vmem:[#allocation3 + $0x2] sm:$0xff] %v918
  %923 = vst [vmem:[#allocation3 + $0xa] sm:$0xff] %v919
  %924 = vst [vmem:[#allocation3 + $0x1a] sm:$0xff] %v920
  %925 = vst [vmem:[#allocation3 + $0x22] sm:$0xff] %v921
  %v926 = vld [vmem:[#allocation3] sm:$0xff]
  %v927 = vld [vmem:[#allocation3 + $0x8] sm:$0xff]
  %v928 = vld [vmem:[#allocation3 + $0x18] sm:$0xff]
  %v929 = vld [vmem:[#allocation3 + $0x20] sm:$0xff]
  %v930 = vld [vmem:[%s1 + $0x140] sm:$0xff]
  %v931 = vld [vmem:[%s1 + $0x148] sm:$0xff]
  %v932 = vld [vmem:[%s1 + $0x150] sm:$0xff]
  %v933 = vld [vmem:[%s1 + $0x158] sm:$0xff]
  %v934 = vld [vmem:[%s1 + $0x160] sm:$0xff]
  %v935 = vld [vmem:[%s1 + $0x168] sm:$0xff]
  %v936 = vld [vmem:[%s1 + $0x170] sm:$0xff]
  %v937 = vld [vmem:[%s1 + $0x178] sm:$0xff]
  %v938 = vld [vmem:[%s1 + $0x180] sm:$0xff]
  %v939 = vld [vmem:[%s1 + $0x188] sm:$0xff]
  %v940 = vld [vmem:[%s1 + $0x190] sm:$0xff]
  %v941 = vld [vmem:[%s1 + $0x198] sm:$0xff]
  %v942 = vld [vmem:[%s1 + $0x1a0] sm:$0xff]
  %v943 = vld [vmem:[%s1 + $0x1a8] sm:$0xff]
  %v944 = vld [vmem:[%s1 + $0x1b0] sm:$0xff]
  %v945 = vld [vmem:[%s1 + $0x1b8] sm:$0xff]
  %v946 = vld [vmem:[#allocation3 + $0x1] sm:$0xff]
  %v947 = vld [vmem:[#allocation3 + $0x9] sm:$0xff]
  %v948 = vld [vmem:[#allocation3 + $0x19] sm:$0xff]
  %v949 = vld [vmem:[#allocation3 + $0x21] sm:$0xff]
  %v950 = vld [vmem:[%s1 + $0x1c0] sm:$0xff]
  %v951 = vld [vmem:[%s1 + $0x1c8] sm:$0xff]
  %v952 = vld [vmem:[%s1 + $0x1d0] sm:$0xff]
  %v953 = vld [vmem:[%s1 + $0x1d8] sm:$0xff]
  %v954 = vld [vmem:[%s1 + $0x1e0] sm:$0xff]
  %v955 = vld [vmem:[%s1 + $0x1e8] sm:$0xff]
  %v956 = vld [vmem:[%s1 + $0x1f0] sm:$0xff]
  %v957 = vld [vmem:[%s1 + $0x1f8] sm:$0xff]
  %v958 = vld [vmem:[%s1 + $0x200] sm:$0xff]
  %v959 = vld [vmem:[%s1 + $0x208] sm:$0xff]
  %v960 = vld [vmem:[%s1 + $0x210] sm:$0xff]
  %v961 = vld [vmem:[%s1 + $0x218] sm:$0xff]
  %v962 = vld [vmem:[%s1 + $0x220] sm:$0xff]
  %v963 = vld [vmem:[%s1 + $0x228] sm:$0xff]
  %v964 = vld [vmem:[%s1 + $0x230] sm:$0xff]
  %v965 = vld [vmem:[%s1 + $0x238] sm:$0xff]
  %966 = vmatprep.subr.mxu0 0.0
  %967 = vmatpush1.msra.mxu0 %v950
  %968 = vmatprep.subr.mxu0 0.0
  %969 = vmatpush1.msra.mxu0 %v951
  %970 = vmatprep.subr.mxu0 0.0
  %971 = vmatpush1.msra.mxu0 %v952
  %972 = vmatprep.subr.mxu0 0.0
  %973 = vmatpush1.msra.mxu0 %v953
  %974 = vmatprep.subr.mxu0 0.0
  %975 = vmatpush1.msra.mxu0 %v954
  %976 = vmatprep.subr.mxu0 0.0
  %977 = vmatpush1.msra.mxu0 %v955
  %978 = vmatprep.subr.mxu0 0.0
  %979 = vmatpush1.msra.mxu0 %v956
  %980 = vmatprep.subr.mxu0 0.0
  %981 = vmatpush1.msra.mxu0 %v957
  %982 = vmatprep.subr.mxu0 0.0
  %983 = vmatpush1.msra.mxu0 %v958
  %984 = vmatprep.subr.mxu0 0.0
  %985 = vmatpush1.msra.mxu0 %v959
  %986 = vmatprep.subr.mxu0 0.0
  %987 = vmatpush1.msra.mxu0 %v960
  %988 = vmatprep.subr.mxu0 0.0
  %989 = vmatpush1.msra.mxu0 %v961
  %990 = vmatprep.subr.mxu0 0.0
  %991 = vmatpush1.msra.mxu0 %v962
  %992 = vmatprep.subr.mxu0 0.0
  %993 = vmatpush1.msra.mxu0 %v963
  %994 = vmatprep.subr.mxu0 0.0
  %995 = vmatpush1.msra.mxu0 %v964
  %996 = vmatprep.subr.mxu0 0.0
  %997 = vmatpush1.msra.mxu0 %v965
  %998 = vmatprep.subr.mxu0 0.0
  %999 = vmatpush1.msra.mxu0 0.0
  %1000 = vmatprep.subr.mxu0 0.0
  %1001 = vmatpush1.msra.mxu0 0.0
  %1002 = vmatprep.subr.mxu0 0.0
  %1003 = vmatpush1.msra.mxu0 0.0
  %1004 = vmatprep.subr.mxu0 0.0
  %1005 = vmatpush1.msra.mxu0 0.0
  %1006 = vmatprep.subr.mxu0 0.0
  %1007 = vmatpush1.msra.mxu0 0.0
  %1008 = vmatprep.subr.mxu0 0.0
  %1009 = vmatpush1.msra.mxu0 0.0
  %1010 = vmatprep.subr.mxu0 0.0
  %1011 = vmatpush1.msra.mxu0 0.0
  %1012 = vmatprep.subr.mxu0 0.0
  %1013 = vmatpush1.msra.mxu0 0.0
  %1014 = vmatprep.subr.mxu0 0.0
  %1015 = vmatpush1.msra.mxu0 0.0
  %1016 = vmatprep.subr.mxu0 0.0
  %1017 = vmatpush1.msra.mxu0 0.0
  %1018 = vmatprep.subr.mxu0 0.0
  %1019 = vmatpush1.msra.mxu0 0.0
  %1020 = vmatprep.subr.mxu0 0.0
  %1021 = vmatpush1.msra.mxu0 0.0
  %1022 = vmatprep.subr.mxu0 0.0
  %1023 = vmatpush1.msra.mxu0 0.0
  %1024 = vmatprep.subr.mxu0 0.0
  %1025 = vmatpush1.msra.mxu0 0.0
  %1026 = vmatprep.subr.mxu0 0.0
  %1027 = vmatpush1.msra.mxu0 0.0
  %1028 = vmatprep.subr.mxu0 0.0
  %1029 = vmatpush1.msra.mxu0 0.0
  %1030 = vmatprep.mubr.f32.mxu0 0.0
  %1031 = vmatmul.mubr.f32.gmra.mrb[0].mxu0 %v946
  %v1032 = vpop.f32.mrb[0].mxu0
  %v1033 = vadd.f32 0.0, %v1032
  %v1034 = vpop.f32.mrb[0].mxu0
  %1035 = vmatprep.mubr.f32.mxu0 0.0
  %1036 = vmatmul.mubr.f32.gmra.mrb[0].mxu0 %v947
  %v1037 = vpop.f32.mrb[0].mxu0
  %v1038 = vadd.f32 0.0, %v1037
  %v1039 = vpop.f32.mrb[0].mxu0
  %1040 = vmatprep.mubr.f32.mxu0 0.0
  %1041 = vmatmul.mubr.f32.gmra.mrb[0].mxu0 %v948
  %v1042 = vpop.f32.mrb[0].mxu0
  %v1043 = vadd.f32 0.0, %v1042
  %v1044 = vpop.f32.mrb[0].mxu0
  %1045 = vmatprep.mubr.f32.mxu0 0.0
  %1046 = vmatmul.mubr.f32.gmra.mrb[0].mxu0 %v949
  %v1047 = vpop.f32.mrb[0].mxu0
  %v1048 = vadd.f32 0.0, %v1047
  %v1049 = vpop.f32.mrb[0].mxu0
  %1050 = vdwg.mxu0
  %1051 = vmatprep.subr.mxu0 0.0
  %1052 = vmatpush1.msra.mxu0 %v930
  %1053 = vmatprep.subr.mxu0 0.0
  %1054 = vmatpush1.msra.mxu0 %v931
  %1055 = vmatprep.subr.mxu0 0.0
  %1056 = vmatpush1.msra.mxu0 %v932
  %1057 = vmatprep.subr.mxu0 0.0
  %1058 = vmatpush1.msra.mxu0 %v933
  %1059 = vmatprep.subr.mxu0 0.0
  %1060 = vmatpush1.msra.mxu0 %v934
  %1061 = vmatprep.subr.mxu0 0.0
  %1062 = vmatpush1.msra.mxu0 %v935
  %1063 = vmatprep.subr.mxu0 0.0
  %1064 = vmatpush1.msra.mxu0 %v936
  %1065 = vmatprep.subr.mxu0 0.0
  %1066 = vmatpush1.msra.mxu0 %v937
  %1067 = vmatprep.subr.mxu0 0.0
  %1068 = vmatpush1.msra.mxu0 %v938
  %1069 = vmatprep.subr.mxu0 0.0
  %1070 = vmatpush1.msra.mxu0 %v939
  %1071 = vmatprep.subr.mxu0 0.0
  %1072 = vmatpush1.msra.mxu0 %v940
  %1073 = vmatprep.subr.mxu0 0.0
  %1074 = vmatpush1.msra.mxu0 %v941
  %1075 = vmatprep.subr.mxu0 0.0
  %1076 = vmatpush1.msra.mxu0 %v942
  %1077 = vmatprep.subr.mxu0 0.0
  %1078 = vmatpush1.msra.mxu0 %v943
  %1079 = vmatprep.subr.mxu0 0.0
  %1080 = vmatpush1.msra.mxu0 %v944
  %1081 = vmatprep.subr.mxu0 0.0
  %1082 = vmatpush1.msra.mxu0 %v945
  %1083 = vmatprep.subr.mxu0 0.0
  %1084 = vmatpush1.msra.mxu0 0.0
  %1085 = vmatprep.subr.mxu0 0.0
  %1086 = vmatpush1.msra.mxu0 0.0
  %1087 = vmatprep.subr.mxu0 0.0
  %1088 = vmatpush1.msra.mxu0 0.0
  %1089 = vmatprep.subr.mxu0 0.0
  %1090 = vmatpush1.msra.mxu0 0.0
  %1091 = vmatprep.subr.mxu0 0.0
  %1092 = vmatpush1.msra.mxu0 0.0
  %1093 = vmatprep.subr.mxu0 0.0
  %1094 = vmatpush1.msra.mxu0 0.0
  %1095 = vmatprep.subr.mxu0 0.0
  %1096 = vmatpush1.msra.mxu0 0.0
  %1097 = vmatprep.subr.mxu0 0.0
  %1098 = vmatpush1.msra.mxu0 0.0
  %1099 = vmatprep.subr.mxu0 0.0
  %1100 = vmatpush1.msra.mxu0 0.0
  %1101 = vmatprep.subr.mxu0 0.0
  %1102 = vmatpush1.msra.mxu0 0.0
  %1103 = vmatprep.subr.mxu0 0.0
  %1104 = vmatpush1.msra.mxu0 0.0
  %1105 = vmatprep.subr.mxu0 0.0
  %1106 = vmatpush1.msra.mxu0 0.0
  %1107 = vmatprep.subr.mxu0 0.0
  %1108 = vmatpush1.msra.mxu0 0.0
  %1109 = vmatprep.subr.mxu0 0.0
  %1110 = vmatpush1.msra.mxu0 0.0
  %1111 = vmatprep.subr.mxu0 0.0
  %1112 = vmatpush1.msra.mxu0 0.0
  %1113 = vmatprep.subr.mxu0 0.0
  %1114 = vmatpush1.msra.mxu0 0.0
  %1115 = vmatprep.mubr.f32.mxu0 0.0
  %1116 = vmatmul.mubr.f32.gmra.mrb[0].mxu0 %v926
  %v1117 = vpop.f32.mrb[0].mxu0
  %v1118 = vadd.f32 %v1033, %v1117
  %v1119 = vpop.f32.mrb[0].mxu0
  %1120 = vmatprep.mubr.f32.mxu0 0.0
  %1121 = vmatmul.mubr.f32.gmra.mrb[0].mxu0 %v927
  %v1122 = vpop.f32.mrb[0].mxu0
  %v1123 = vadd.f32 %v1038, %v1122
  %v1124 = vpop.f32.mrb[0].mxu0
  %1125 = vmatprep.mubr.f32.mxu0 0.0
  %1126 = vmatmul.mubr.f32.gmra.mrb[0].mxu0 %v928
  %v1127 = vpop.f32.mrb[0].mxu0
  %v1128 = vadd.f32 %v1043, %v1127
  %v1129 = vpop.f32.mrb[0].mxu0
  %1130 = vmatprep.mubr.f32.mxu0 0.0
  %1131 = vmatmul.mubr.f32.gmra.mrb[0].mxu0 %v929
  %v1132 = vpop.f32.mrb[0].mxu0
  %v1133 = vadd.f32 %v1048, %v1132
  %v1134 = vpop.f32.mrb[0].mxu0
  %1135 = vdwg.mxu0
  %v1136 = vld [vmem:[#allocation3 + $0x2] sm:$0xff]
  %v1137 = vld [vmem:[#allocation3 + $0xa] sm:$0xff]
  %v1138 = vld [vmem:[#allocation3 + $0x1a] sm:$0xff]
  %v1139 = vld [vmem:[#allocation3 + $0x22] sm:$0xff]
  %v1140 = vld [vmem:[%s1 + $0x240] sm:$0xff]
  %v1141 = vld [vmem:[%s1 + $0x248] sm:$0xff]
  %v1142 = vld [vmem:[%s1 + $0x250] sm:$0xff]
  %v1143 = vld [vmem:[%s1 + $0x258] sm:$0xff]
  %v1144 = vld [vmem:[%s1 + $0x260] sm:$0xff]
  %v1145 = vld [vmem:[%s1 + $0x268] sm:$0xff]
  %v1146 = vld [vmem:[%s1 + $0x270] sm:$0xff]
  %v1147 = vld [vmem:[%s1 + $0x278] sm:$0xff]
  %v1148 = vld [vmem:[%s1 + $0x280] sm:$0xff]
  %v1149 = vld [vmem:[%s1 + $0x288] sm:$0xff]
  %v1150 = vld [vmem:[%s1 + $0x290] sm:$0xff]
  %v1151 = vld [vmem:[%s1 + $0x298] sm:$0xff]
  %v1152 = vld [vmem:[%s1 + $0x2a0] sm:$0xff]
  %v1153 = vld [vmem:[%s1 + $0x2a8] sm:$0xff]
  %v1154 = vld [vmem:[%s1 + $0x2b0] sm:$0xff]
  %v1155 = vld [vmem:[%s1 + $0x2b8] sm:$0xff]
  %1156 = vmatprep.subr.mxu0 0.0
  %1157 = vmatpush1.msra.mxu0 %v1140
  %1158 = vmatprep.subr.mxu0 0.0
  %1159 = vmatpush1.msra.mxu0 %v1141
  %1160 = vmatprep.subr.mxu0 0.0
  %1161 = vmatpush1.msra.mxu0 %v1142
  %1162 = vmatprep.subr.mxu0 0.0
  %1163 = vmatpush1.msra.mxu0 %v1143
  %1164 = vmatprep.subr.mxu0 0.0
  %1165 = vmatpush1.msra.mxu0 %v1144
  %1166 = vmatprep.subr.mxu0 0.0
  %1167 = vmatpush1.msra.mxu0 %v1145
  %1168 = vmatprep.subr.mxu0 0.0
  %1169 = vmatpush1.msra.mxu0 %v1146
  %1170 = vmatprep.subr.mxu0 0.0
  %1171 = vmatpush1.msra.mxu0 %v1147
  %1172 = vmatprep.subr.mxu0 0.0
  %1173 = vmatpush1.msra.mxu0 %v1148
  %1174 = vmatprep.subr.mxu0 0.0
  %1175 = vmatpush1.msra.mxu0 %v1149
  %1176 = vmatprep.subr.mxu0 0.0
  %1177 = vmatpush1.msra.mxu0 %v1150
  %1178 = vmatprep.subr.mxu0 0.0
  %1179 = vmatpush1.msra.mxu0 %v1151
  %1180 = vmatprep.subr.mxu0 0.0
  %1181 = vmatpush1.msra.mxu0 %v1152
  %1182 = vmatprep.subr.mxu0 0.0
  %1183 = vmatpush1.msra.mxu0 %v1153
  %1184 = vmatprep.subr.mxu0 0.0
  %1185 = vmatpush1.msra.mxu0 %v1154
  %1186 = vmatprep.subr.mxu0 0.0
  %1187 = vmatpush1.msra.mxu0 %v1155
  %1188 = vmatprep.subr.mxu0 0.0
  %1189 = vmatpush1.msra.mxu0 0.0
  %1190 = vmatprep.subr.mxu0 0.0
  %1191 = vmatpush1.msra.mxu0 0.0
  %1192 = vmatprep.subr.mxu0 0.0
  %1193 = vmatpush1.msra.mxu0 0.0
  %1194 = vmatprep.subr.mxu0 0.0
  %1195 = vmatpush1.msra.mxu0 0.0
  %1196 = vmatprep.subr.mxu0 0.0
  %1197 = vmatpush1.msra.mxu0 0.0
  %1198 = vmatprep.subr.mxu0 0.0
  %1199 = vmatpush1.msra.mxu0 0.0
  %1200 = vmatprep.subr.mxu0 0.0
  %1201 = vmatpush1.msra.mxu0 0.0
  %1202 = vmatprep.subr.mxu0 0.0
  %1203 = vmatpush1.msra.mxu0 0.0
  %1204 = vmatprep.subr.mxu0 0.0
  %1205 = vmatpush1.msra.mxu0 0.0
  %1206 = vmatprep.subr.mxu0 0.0
  %1207 = vmatpush1.msra.mxu0 0.0
  %1208 = vmatprep.subr.mxu0 0.0
  %1209 = vmatpush1.msra.mxu0 0.0
  %1210 = vmatprep.subr.mxu0 0.0
  %1211 = vmatpush1.msra.mxu0 0.0
  %1212 = vmatprep.subr.mxu0 0.0
  %1213 = vmatpush1.msra.mxu0 0.0
  %1214 = vmatprep.subr.mxu0 0.0
  %1215 = vmatpush1.msra.mxu0 0.0
  %1216 = vmatprep.subr.mxu0 0.0
  %1217 = vmatpush1.msra.mxu0 0.0
  %1218 = vmatprep.subr.mxu0 0.0
  %1219 = vmatpush1.msra.mxu0 0.0
  %1220 = vmatprep.mubr.f32.mxu0 0.0
  %1221 = vmatmul.mubr.f32.gmra.mrb[0].mxu0 %v1136
  %v1222 = vpop.f32.mrb[0].mxu0
  %v1223 = vadd.f32 0.0, %v1222
  %v1224 = vpop.f32.mrb[0].mxu0
  %1225 = vmatprep.mubr.f32.mxu0 0.0
  %1226 = vmatmul.mubr.f32.gmra.mrb[0].mxu0 %v1137
  %v1227 = vpop.f32.mrb[0].mxu0
  %v1228 = vadd.f32 0.0, %v1227
  %v1229 = vpop.f32.mrb[0].mxu0
  %1230 = vmatprep.mubr.f32.mxu0 0.0
  %1231 = vmatmul.mubr.f32.gmra.mrb[0].mxu0 %v1138
  %v1232 = vpop.f32.mrb[0].mxu0
  %v1233 = vadd.f32 0.0, %v1232
  %v1234 = vpop.f32.mrb[0].mxu0
  %1235 = vmatprep.mubr.f32.mxu0 0.0
  %1236 = vmatmul.mubr.f32.gmra.mrb[0].mxu0 %v1139
  %v1237 = vpop.f32.mrb[0].mxu0
  %v1238 = vadd.f32 0.0, %v1237
  %v1239 = vpop.f32.mrb[0].mxu0
  %1240 = vdwg.mxu0
  %v1241 = vadd.f32 %v1118, %v1223
  %v1242 = vadd.f32 %v1123, %v1228
  %v1243 = vadd.f32 %v1128, %v1233
  %v1244 = vadd.f32 %v1133, %v1238
  %v1245 = vld [vmem:[#allocation3 + $0x3] sm:$0xff]
  %v1246 = vld [vmem:[#allocation3 + $0xb] sm:$0xff]
  %v1247 = vld [vmem:[#allocation3 + $0x1b] sm:$0xff]
  %v1248 = vld [vmem:[#allocation3 + $0x23] sm:$0xff]
  %v1249 = vld [vmem:[%s1 + $0x2c0] sm:$0xff]
  %v1250 = vld [vmem:[%s1 + $0x2c8] sm:$0xff]
  %v1251 = vld [vmem:[%s1 + $0x2d0] sm:$0xff]
  %v1252 = vld [vmem:[%s1 + $0x2d8] sm:$0xff]
  %v1253 = vld [vmem:[%s1 + $0x2e0] sm:$0xff]
  %v1254 = vld [vmem:[%s1 + $0x2e8] sm:$0xff]
  %v1255 = vld [vmem:[%s1 + $0x2f0] sm:$0xff]
  %v1256 = vld [vmem:[%s1 + $0x2f8] sm:$0xff]
  %v1257 = vld [vmem:[%s1 + $0x300] sm:$0xff]
  %v1258 = vld [vmem:[%s1 + $0x308] sm:$0xff]
  %v1259 = vld [vmem:[%s1 + $0x310] sm:$0xff]
  %v1260 = vld [vmem:[%s1 + $0x318] sm:$0xff]
  %v1261 = vld [vmem:[%s1 + $0x320] sm:$0xff]
  %v1262 = vld [vmem:[%s1 + $0x328] sm:$0xff]
  %v1263 = vld [vmem:[%s1 + $0x330] sm:$0xff]
  %v1264 = vld [vmem:[%s1 + $0x338] sm:$0xff]
  %1265 = vmatprep.subr.mxu0 0.0
  %1266 = vmatpush1.msra.mxu0 %v1249
  %1267 = vmatprep.subr.mxu0 0.0
  %1268 = vmatpush1.msra.mxu0 %v1250
  %1269 = vmatprep.subr.mxu0 0.0
  %1270 = vmatpush1.msra.mxu0 %v1251
  %1271 = vmatprep.subr.mxu0 0.0
  %1272 = vmatpush1.msra.mxu0 %v1252
  %1273 = vmatprep.subr.mxu0 0.0
  %1274 = vmatpush1.msra.mxu0 %v1253
  %1275 = vmatprep.subr.mxu0 0.0
  %1276 = vmatpush1.msra.mxu0 %v1254
  %1277 = vmatprep.subr.mxu0 0.0
  %1278 = vmatpush1.msra.mxu0 %v1255
  %1279 = vmatprep.subr.mxu0 0.0
  %1280 = vmatpush1.msra.mxu0 %v1256
  %1281 = vmatprep.subr.mxu0 0.0
  %1282 = vmatpush1.msra.mxu0 %v1257
  %1283 = vmatprep.subr.mxu0 0.0
  %1284 = vmatpush1.msra.mxu0 %v1258
  %1285 = vmatprep.subr.mxu0 0.0
  %1286 = vmatpush1.msra.mxu0 %v1259
  %1287 = vmatprep.subr.mxu0 0.0
  %1288 = vmatpush1.msra.mxu0 %v1260
  %1289 = vmatprep.subr.mxu0 0.0
  %1290 = vmatpush1.msra.mxu0 %v1261
  %1291 = vmatprep.subr.mxu0 0.0
  %1292 = vmatpush1.msra.mxu0 %v1262
  %1293 = vmatprep.subr.mxu0 0.0
  %1294 = vmatpush1.msra.mxu0 %v1263
  %1295 = vmatprep.subr.mxu0 0.0
  %1296 = vmatpush1.msra.mxu0 %v1264
  %1297 = vmatprep.subr.mxu0 0.0
  %1298 = vmatpush1.msra.mxu0 0.0
  %1299 = vmatprep.subr.mxu0 0.0
  %1300 = vmatpush1.msra.mxu0 0.0
  %1301 = vmatprep.subr.mxu0 0.0
  %1302 = vmatpush1.msra.mxu0 0.0
  %1303 = vmatprep.subr.mxu0 0.0
  %1304 = vmatpush1.msra.mxu0 0.0
  %1305 = vmatprep.subr.mxu0 0.0
  %1306 = vmatpush1.msra.mxu0 0.0
  %1307 = vmatprep.subr.mxu0 0.0
  %1308 = vmatpush1.msra.mxu0 0.0
  %1309 = vmatprep.subr.mxu0 0.0
  %1310 = vmatpush1.msra.mxu0 0.0
  %1311 = vmatprep.subr.mxu0 0.0
  %1312 = vmatpush1.msra.mxu0 0.0
  %1313 = vmatprep.subr.mxu0 0.0
  %1314 = vmatpush1.msra.mxu0 0.0
  %1315 = vmatprep.subr.mxu0 0.0
  %1316 = vmatpush1.msra.mxu0 0.0
  %1317 = vmatprep.subr.mxu0 0.0
  %1318 = vmatpush1.msra.mxu0 0.0
  %1319 = vmatprep.subr.mxu0 0.0
  %1320 = vmatpush1.msra.mxu0 0.0
  %1321 = vmatprep.subr.mxu0 0.0
  %1322 = vmatpush1.msra.mxu0 0.0
  %1323 = vmatprep.subr.mxu0 0.0
  %1324 = vmatpush1.msra.mxu0 0.0
  %1325 = vmatprep.subr.mxu0 0.0
  %1326 = vmatpush1.msra.mxu0 0.0
  %1327 = vmatprep.subr.mxu0 0.0
  %1328 = vmatpush1.msra.mxu0 0.0
  %1329 = vmatprep.mubr.f32.mxu0 0.0
  %1330 = vmatmul.mubr.f32.gmra.mrb[0].mxu0 %v1245
  %v1331 = vpop.f32.mrb[0].mxu0
  %v1332 = vadd.f32 0.0, %v1331
  %v1333 = vpop.f32.mrb[0].mxu0
  %1334 = vmatprep.mubr.f32.mxu0 0.0
  %1335 = vmatmul.mubr.f32.gmra.mrb[0].mxu0 %v1246
  %v1336 = vpop.f32.mrb[0].mxu0
  %v1337 = vadd.f32 0.0, %v1336
  %v1338 = vpop.f32.mrb[0].mxu0
  %1339 = vmatprep.mubr.f32.mxu0 0.0
  %1340 = vmatmul.mubr.f32.gmra.mrb[0].mxu0 %v1247
  %v1341 = vpop.f32.mrb[0].mxu0
  %v1342 = vadd.f32 0.0, %v1341
  %v1343 = vpop.f32.mrb[0].mxu0
  %1344 = vmatprep.mubr.f32.mxu0 0.0
  %1345 = vmatmul.mubr.f32.gmra.mrb[0].mxu0 %v1248
  %v1346 = vpop.f32.mrb[0].mxu0
  %v1347 = vadd.f32 0.0, %v1346
  %v1348 = vpop.f32.mrb[0].mxu0
  %1349 = vdwg.mxu0
  %v1350 = vadd.f32 %v1241, %v1332
  %v1351 = vadd.f32 %v1242, %v1337
  %v1352 = vadd.f32 %v1243, %v1342
  %v1353 = vadd.f32 %v1244, %v1347
  %v1354 = vld [vmem:[#allocation3 + $0x4] sm:$0xff]
  %v1355 = vld [vmem:[#allocation3 + $0xc] sm:$0xff]
  %v1356 = vld [vmem:[#allocation3 + $0x1c] sm:$0xff]
  %v1357 = vld [vmem:[#allocation3 + $0x24] sm:$0xff]
  %v1358 = vld [vmem:[%s1 + $0x340] sm:$0xff]
  %v1359 = vld [vmem:[%s1 + $0x348] sm:$0xff]
  %v1360 = vld [vmem:[%s1 + $0x350] sm:$0xff]
  %v1361 = vld [vmem:[%s1 + $0x358] sm:$0xff]
  %v1362 = vld [vmem:[%s1 + $0x360] sm:$0xff]
  %v1363 = vld [vmem:[%s1 + $0x368] sm:$0xff]
  %v1364 = vld [vmem:[%s1 + $0x370] sm:$0xff]
  %v1365 = vld [vmem:[%s1 + $0x378] sm:$0xff]
  %v1366 = vld [vmem:[%s1 + $0x380] sm:$0xff]
  %v1367 = vld [vmem:[%s1 + $0x388] sm:$0xff]
  %v1368 = vld [vmem:[%s1 + $0x390] sm:$0xff]
  %v1369 = vld [vmem:[%s1 + $0x398] sm:$0xff]
  %v1370 = vld [vmem:[%s1 + $0x3a0] sm:$0xff]
  %v1371 = vld [vmem:[%s1 + $0x3a8] sm:$0xff]
  %v1372 = vld [vmem:[%s1 + $0x3b0] sm:$0xff]
  %v1373 = vld [vmem:[%s1 + $0x3b8] sm:$0xff]
  %1374 = vmatprep.subr.mxu0 0.0
  %1375 = vmatpush1.msra.mxu0 %v1358
  %1376 = vmatprep.subr.mxu0 0.0
  %1377 = vmatpush1.msra.mxu0 %v1359
  %1378 = vmatprep.subr.mxu0 0.0
  %1379 = vmatpush1.msra.mxu0 %v1360
  %1380 = vmatprep.subr.mxu0 0.0
  %1381 = vmatpush1.msra.mxu0 %v1361
  %1382 = vmatprep.subr.mxu0 0.0
  %1383 = vmatpush1.msra.mxu0 %v1362
  %1384 = vmatprep.subr.mxu0 0.0
  %1385 = vmatpush1.msra.mxu0 %v1363
  %1386 = vmatprep.subr.mxu0 0.0
  %1387 = vmatpush1.msra.mxu0 %v1364
  %1388 = vmatprep.subr.mxu0 0.0
  %1389 = vmatpush1.msra.mxu0 %v1365
  %1390 = vmatprep.subr.mxu0 0.0
  %1391 = vmatpush1.msra.mxu0 %v1366
  %1392 = vmatprep.subr.mxu0 0.0
  %1393 = vmatpush1.msra.mxu0 %v1367
  %1394 = vmatprep.subr.mxu0 0.0
  %1395 = vmatpush1.msra.mxu0 %v1368
  %1396 = vmatprep.subr.mxu0 0.0
  %1397 = vmatpush1.msra.mxu0 %v1369
  %1398 = vmatprep.subr.mxu0 0.0
  %1399 = vmatpush1.msra.mxu0 %v1370
  %1400 = vmatprep.subr.mxu0 0.0
  %1401 = vmatpush1.msra.mxu0 %v1371
  %1402 = vmatprep.subr.mxu0 0.0
  %1403 = vmatpush1.msra.mxu0 %v1372
  %1404 = vmatprep.subr.mxu0 0.0
  %1405 = vmatpush1.msra.mxu0 %v1373
  %1406 = vmatprep.subr.mxu0 0.0
  %1407 = vmatpush1.msra.mxu0 0.0
  %1408 = vmatprep.subr.mxu0 0.0
  %1409 = vmatpush1.msra.mxu0 0.0
  %1410 = vmatprep.subr.mxu0 0.0
  %1411 = vmatpush1.msra.mxu0 0.0
  %1412 = vmatprep.subr.mxu0 0.0
  %1413 = vmatpush1.msra.mxu0 0.0
  %1414 = vmatprep.subr.mxu0 0.0
  %1415 = vmatpush1.msra.mxu0 0.0
  %1416 = vmatprep.subr.mxu0 0.0
  %1417 = vmatpush1.msra.mxu0 0.0
  %1418 = vmatprep.subr.mxu0 0.0
  %1419 = vmatpush1.msra.mxu0 0.0
  %1420 = vmatprep.subr.mxu0 0.0
  %1421 = vmatpush1.msra.mxu0 0.0
  %1422 = vmatprep.subr.mxu0 0.0
  %1423 = vmatpush1.msra.mxu0 0.0
  %1424 = vmatprep.subr.mxu0 0.0
  %1425 = vmatpush1.msra.mxu0 0.0
  %1426 = vmatprep.subr.mxu0 0.0
  %1427 = vmatpush1.msra.mxu0 0.0
  %1428 = vmatprep.subr.mxu0 0.0
  %1429 = vmatpush1.msra.mxu0 0.0
  %1430 = vmatprep.subr.mxu0 0.0
  %1431 = vmatpush1.msra.mxu0 0.0
  %1432 = vmatprep.subr.mxu0 0.0
  %1433 = vmatpush1.msra.mxu0 0.0
  %1434 = vmatprep.subr.mxu0 0.0
  %1435 = vmatpush1.msra.mxu0 0.0
  %1436 = vmatprep.subr.mxu0 0.0
  %1437 = vmatpush1.msra.mxu0 0.0
  %1438 = vmatprep.mubr.f32.mxu0 0.0
  %1439 = vmatmul.mubr.f32.gmra.mrb[0].mxu0 %v1354
  %v1440 = vpop.f32.mrb[0].mxu0
  %v1441 = vadd.f32 0.0, %v1440
  %v1442 = vpop.f32.mrb[0].mxu0
  %1443 = vmatprep.mubr.f32.mxu0 0.0
  %1444 = vmatmul.mubr.f32.gmra.mrb[0].mxu0 %v1355
  %v1445 = vpop.f32.mrb[0].mxu0
  %v1446 = vadd.f32 0.0, %v1445
  %v1447 = vpop.f32.mrb[0].mxu0
  %1448 = vmatprep.mubr.f32.mxu0 0.0
  %1449 = vmatmul.mubr.f32.gmra.mrb[0].mxu0 %v1356
  %v1450 = vpop.f32.mrb[0].mxu0
  %v1451 = vadd.f32 0.0, %v1450
  %v1452 = vpop.f32.mrb[0].mxu0
  %1453 = vmatprep.mubr.f32.mxu0 0.0
  %1454 = vmatmul.mubr.f32.gmra.mrb[0].mxu0 %v1357
  %v1455 = vpop.f32.mrb[0].mxu0
  %v1456 = vadd.f32 0.0, %v1455
  %v1457 = vpop.f32.mrb[0].mxu0
  %1458 = vdwg.mxu0
  %v1459 = vadd.f32 %v1350, %v1441
  %v1460 = vadd.f32 %v1351, %v1446
  %v1461 = vadd.f32 %v1352, %v1451
  %v1462 = vadd.f32 %v1353, %v1456
  %v1463 = vadd.f32 %v1459, %v1460
  %v1464 = vadd.f32 %v1463, %v1461
  %v1465 = vadd.f32 %v1464, %v1462
  %v1466 = vrot.slane %v1465, 4
  %v1467 = vadd.f32 %v1465, %v1466
  %v1468 = vrot.slane %v1467, 2
  %v1469 = vadd.f32 %v1467, %v1468
  %v1470 = vrot.slane %v1469, 1
  %v1471 = vadd.f32 %v1469, %v1470
  %v1472 = vmul.f32 %v1459, %v1459
  %v1473 = vmul.f32 %v1460, %v1460
  %v1474 = vmul.f32 %v1461, %v1461
  %v1475 = vmul.f32 %v1462, %v1462
  %v1476 = vadd.f32 %v1472, %v1473
  %v1477 = vadd.f32 %v1476, %v1474
  %v1478 = vadd.f32 %v1477, %v1475
  %v1479 = vrot.slane %v1478, 4
  %v1480 = vadd.f32 %v1478, %v1479
  %v1481 = vrot.slane %v1480, 2
  %v1482 = vadd.f32 %v1480, %v1481
  %v1483 = vrot.slane %v1482, 1
  %v1484 = vadd.f32 %v1482, %v1483
  %v1485 = vsel %vm736, %v1471, %v1484
  %1486 = vmatprep.subr.mxu0 0.0
  %1487 = vmatpush1.msra.mxu0 %v76
  %1488 = vmatprep.subr.mxu0 0.0
  %1489 = vmatpush1.msra.mxu0 %v77
  %1490 = vmatprep.subr.mxu0 0.0
  %1491 = vmatpush1.msra.mxu0 %v78
  %1492 = vmatprep.subr.mxu0 0.0
  %1493 = vmatpush1.msra.mxu0 %v79
  %1494 = vmatprep.subr.mxu0 0.0
  %1495 = vmatpush1.msra.mxu0 %v80
  %1496 = vmatprep.subr.mxu0 0.0
  %1497 = vmatpush1.msra.mxu0 %v81
  %1498 = vmatprep.subr.mxu0 0.0
  %1499 = vmatpush1.msra.mxu0 %v82
  %1500 = vmatprep.subr.mxu0 0.0
  %1501 = vmatpush1.msra.mxu0 %v83
  %1502 = vmatprep.subr.mxu0 0.0
  %1503 = vmatpush1.msra.mxu0 %v84
  %1504 = vmatprep.subr.mxu0 0.0
  %1505 = vmatpush1.msra.mxu0 %v85
  %1506 = vmatprep.subr.mxu0 0.0
  %1507 = vmatpush1.msra.mxu0 %v86
  %1508 = vmatprep.subr.mxu0 0.0
  %1509 = vmatpush1.msra.mxu0 %v87
  %1510 = vmatprep.subr.mxu0 0.0
  %1511 = vmatpush1.msra.mxu0 %v88
  %1512 = vmatprep.subr.mxu0 0.0
  %1513 = vmatpush1.msra.mxu0 %v89
  %1514 = vmatprep.subr.mxu0 0.0
  %1515 = vmatpush1.msra.mxu0 %v90
  %1516 = vmatprep.subr.mxu0 0.0
  %1517 = vmatpush1.msra.mxu0 %v91
  %1518 = vmatprep.subr.mxu0 0.0
  %1519 = vmatpush1.msra.mxu0 0.0
  %1520 = vmatprep.subr.mxu0 0.0
  %1521 = vmatpush1.msra.mxu0 0.0
  %1522 = vmatprep.subr.mxu0 0.0
  %1523 = vmatpush1.msra.mxu0 0.0
  %1524 = vmatprep.subr.mxu0 0.0
  %1525 = vmatpush1.msra.mxu0 0.0
  %1526 = vmatprep.subr.mxu0 0.0
  %1527 = vmatpush1.msra.mxu0 0.0
  %1528 = vmatprep.subr.mxu0 0.0
  %1529 = vmatpush1.msra.mxu0 0.0
  %1530 = vmatprep.subr.mxu0 0.0
  %1531 = vmatpush1.msra.mxu0 0.0
  %1532 = vmatprep.subr.mxu0 0.0
  %1533 = vmatpush1.msra.mxu0 0.0
  %1534 = vmatprep.subr.mxu0 0.0
  %1535 = vmatpush1.msra.mxu0 0.0
  %1536 = vmatprep.subr.mxu0 0.0
  %1537 = vmatpush1.msra.mxu0 0.0
  %1538 = vmatprep.subr.mxu0 0.0
  %1539 = vmatpush1.msra.mxu0 0.0
  %1540 = vmatprep.subr.mxu0 0.0
  %1541 = vmatpush1.msra.mxu0 0.0
  %1542 = vmatprep.subr.mxu0 0.0
  %1543 = vmatpush1.msra.mxu0 0.0
  %1544 = vmatprep.subr.mxu0 0.0
  %1545 = vmatpush1.msra.mxu0 0.0
  %1546 = vmatprep.subr.mxu0 0.0
  %1547 = vmatpush1.msra.mxu0 0.0
  %1548 = vmatprep.subr.mxu0 0.0
  %1549 = vmatpush1.msra.mxu0 0.0
  %1550 = vmatprep.mubr.f32.mxu0 0.0
  %1551 = vmatmul.mubr.f32.gmra.mrb[0].mxu0 %v1485
  %v1552 = vpop.f32.mrb[0].mxu0
  %v1553 = vadd.f32 0.0, %v1552
  %v1554 = vpop.f32.mrb[0].mxu0
  %1555 = vdwg.mxu0
  %v1556 = vmul.f32 %v1553, 0.001953125
  %v1557 = vmul.f32 %v1556, %v1556
  %v1559 = vrot.slane %v1557, 7
  %v1561 = vsub.f32 %v1556, %v1559
  %v1562 = vld [vmem:[%s5 + $0x2] sm:$0x1]
  %v1563 = vld [vmem:[%s5 + $0x3] sm:$0x1]
  %v1564 = vadd.f32 %v1561, 1e-05
  %v1565 = vrsqrt.pop %v1564
  %v1567 = vrot.slane %v1565, 1
  %v1569 = vmul.f32 %v1562, %v1567
  %v1570 = vmul.f32 %v1556, %v1569
  %v1571 = vsub.f32 %v1563, %v1570
  %v1573 = vrot.slane %v1571, 7
  %v1575 = vsel %vm736, %v1569, %v1573
  %v1577 = vsel %vm828, %v1575, 0
  %1579 = vmatprep.subr.mxu0 0.0
  %1580 = vmatpush1.msra.mxu0 %v92
  %1581 = vmatprep.subr.mxu0 0.0
  %1582 = vmatpush1.msra.mxu0 0.0
  %1583 = vmatprep.subr.mxu0 0.0
  %1584 = vmatpush1.msra.mxu0 0.0
  %1585 = vmatprep.subr.mxu0 0.0
  %1586 = vmatpush1.msra.mxu0 0.0
  %1587 = vmatprep.subr.mxu0 0.0
  %1588 = vmatpush1.msra.mxu0 0.0
  %1589 = vmatprep.subr.mxu0 0.0
  %1590 = vmatpush1.msra.mxu0 0.0
  %1591 = vmatprep.subr.mxu0 0.0
  %1592 = vmatpush1.msra.mxu0 0.0
  %1593 = vmatprep.subr.mxu0 0.0
  %1594 = vmatpush1.msra.mxu0 0.0
  %1595 = vmatprep.subr.mxu0 0.0
  %1596 = vmatpush1.msra.mxu0 0.0
  %1597 = vmatprep.subr.mxu0 0.0
  %1598 = vmatpush1.msra.mxu0 0.0
  %1599 = vmatprep.subr.mxu0 0.0
  %1600 = vmatpush1.msra.mxu0 0.0
  %1601 = vmatprep.subr.mxu0 0.0
  %1602 = vmatpush1.msra.mxu0 0.0
  %1603 = vmatprep.subr.mxu0 0.0
  %1604 = vmatpush1.msra.mxu0 0.0
  %1605 = vmatprep.subr.mxu0 0.0
  %1606 = vmatpush1.msra.mxu0 0.0
  %1607 = vmatprep.subr.mxu0 0.0
  %1608 = vmatpush1.msra.mxu0 0.0
  %1609 = vmatprep.subr.mxu0 0.0
  %1610 = vmatpush1.msra.mxu0 0.0
  %1611 = vmatprep.subr.mxu0 0.0
  %1612 = vmatpush1.msra.mxu0 0.0
  %1613 = vmatprep.subr.mxu0 0.0
  %1614 = vmatpush1.msra.mxu0 0.0
  %1615 = vmatprep.subr.mxu0 0.0
  %1616 = vmatpush1.msra.mxu0 0.0
  %1617 = vmatprep.subr.mxu0 0.0
  %1618 = vmatpush1.msra.mxu0 0.0
  %1619 = vmatprep.subr.mxu0 0.0
  %1620 = vmatpush1.msra.mxu0 0.0
  %1621 = vmatprep.subr.mxu0 0.0
  %1622 = vmatpush1.msra.mxu0 0.0
  %1623 = vmatprep.subr.mxu0 0.0
  %1624 = vmatpush1.msra.mxu0 0.0
  %1625 = vmatprep.subr.mxu0 0.0
  %1626 = vmatpush1.msra.mxu0 0.0
  %1627 = vmatprep.subr.mxu0 0.0
  %1628 = vmatpush1.msra.mxu0 0.0
  %1629 = vmatprep.subr.mxu0 0.0
  %1630 = vmatpush1.msra.mxu0 0.0
  %1631 = vmatprep.subr.mxu0 0.0
  %1632 = vmatpush1.msra.mxu0 0.0
  %1633 = vmatprep.subr.mxu0 0.0
  %1634 = vmatpush1.msra.mxu0 0.0
  %1635 = vmatprep.subr.mxu0 0.0
  %1636 = vmatpush1.msra.mxu0 0.0
  %1637 = vmatprep.subr.mxu0 0.0
  %1638 = vmatpush1.msra.mxu0 0.0
  %1639 = vmatprep.subr.mxu0 0.0
  %1640 = vmatpush1.msra.mxu0 0.0
  %1641 = vmatprep.subr.mxu0 0.0
  %1642 = vmatpush1.msra.mxu0 0.0
  %1643 = vmatprep.mubr.f32.mxu0 0.0
  %1644 = vmatmul.mubr.f32.gmra.mrb[0].mxu0 %v1577
  %v1645 = vpop.f32.mrb[0].mxu0
  %v1646 = vadd.f32 0.0, %v1645
  %v1647 = vpop.f32.mrb[0].mxu0
  %1648 = vdwg.mxu0
  %v1649 = vlaneseq
  %v1650 = vshrl.u32 %v1649, 7
  %v1651 = vsub.s32 0, %v1650
  %v1652 = vrot.slane %v1646, %v1651
  %v1653 = vmul.f32 %v1459, %v1652
  %v1654 = vmul.f32 %v1460, %v1652
  %v1655 = vmul.f32 %v1461, %v1652
  %v1656 = vmul.f32 %v1462, %v1652
  %v1657 = vlaneseq
  %v1658 = vshrl.u32 %v1657, 7
  %v1659 = vsub.s32 1, %v1658
  %v1660 = vrot.slane %v1646, %v1659
  %v1661 = vadd.f32 %v1653, %v1660
  %v1662 = vadd.f32 %v1654, %v1660
  %v1663 = vadd.f32 %v1655, %v1660
  %v1664 = vadd.f32 %v1656, %v1660
  %vm1665 = vcmp.ge.f32.partialorder %v1661, 0.0
  %vm1666 = vcmp.ge.f32.partialorder %v1662, 0.0
  %vm1667 = vcmp.ge.f32.partialorder %v1663, 0.0
  %vm1668 = vcmp.ge.f32.partialorder %v1664, 0.0
  %v1669 = vmul.f32 %v1661, 0.01
  %v1670 = vmul.f32 %v1662, 0.01
  %v1671 = vmul.f32 %v1663, 0.01
  %v1672 = vmul.f32 %v1664, 0.01
  %v1673 = vsel %vm1665, %v1661, %v1669
  %v1674 = vsel %vm1666, %v1662, %v1670
  %v1675 = vsel %vm1667, %v1663, %v1671
  %v1676 = vsel %vm1668, %v1664, %v1672
  %1677 = vst [vmem:[#allocation3 + $0x2] sm:$0xff] %v1673
  %1678 = vst [vmem:[#allocation3 + $0xa] sm:$0xff] %v1674
  %1679 = vst [vmem:[#allocation3 + $0x1a] sm:$0xff] %v1675
  %1680 = vst [vmem:[#allocation3 + $0x22] sm:$0xff] %v1676
  %v1681 = vld [vmem:[#allocation3] ss:$2 sm:$0xff]
  %s1682 = scalar_lea.vmem [#allocation3], 24
  %v1683 = vld [vmem:[%s1682] ss:$2 sm:$0xff]
  %v1684 = vld [vmem:[%s2] sm:$0xff]
  %v1685 = vld [vmem:[%s2 + $0x8] sm:$0xff]
  %v1686 = vld [vmem:[%s2 + $0x10] sm:$0xff]
  %v1687 = vld [vmem:[%s2 + $0x18] sm:$0xff]
  %v1688 = vld [vmem:[%s2 + $0x20] sm:$0xff]
  %v1689 = vld [vmem:[%s2 + $0x28] sm:$0xff]
  %v1690 = vld [vmem:[%s2 + $0x30] sm:$0xff]
  %v1691 = vld [vmem:[%s2 + $0x38] sm:$0xff]
  %v1692 = vld [vmem:[%s2 + $0x40] sm:$0xff]
  %v1693 = vld [vmem:[%s2 + $0x48] sm:$0xff]
  %v1694 = vld [vmem:[%s2 + $0x50] sm:$0xff]
  %v1695 = vld [vmem:[%s2 + $0x58] sm:$0xff]
  %v1696 = vld [vmem:[%s2 + $0x60] sm:$0xff]
  %v1697 = vld [vmem:[%s2 + $0x68] sm:$0xff]
  %v1698 = vld [vmem:[%s2 + $0x70] sm:$0xff]
  %v1699 = vld [vmem:[%s2 + $0x78] sm:$0xff]
  %s1700 = scalar_lea.vmem [#allocation3], 1
  %v1701 = vld [vmem:[%s1700] ss:$2 sm:$0xff]
  %s1702 = scalar_lea.vmem [#allocation3], 25
  %v1703 = vld [vmem:[%s1702] ss:$2 sm:$0xff]
  %v1704 = vld [vmem:[%s2 + $0x80] sm:$0xff]
  %v1705 = vld [vmem:[%s2 + $0x88] sm:$0xff]
  %v1706 = vld [vmem:[%s2 + $0x90] sm:$0xff]
  %v1707 = vld [vmem:[%s2 + $0x98] sm:$0xff]
  %v1708 = vld [vmem:[%s2 + $0xa0] sm:$0xff]
  %v1709 = vld [vmem:[%s2 + $0xa8] sm:$0xff]
  %v1710 = vld [vmem:[%s2 + $0xb0] sm:$0xff]
  %v1711 = vld [vmem:[%s2 + $0xb8] sm:$0xff]
  %v1712 = vld [vmem:[%s2 + $0xc0] sm:$0xff]
  %v1713 = vld [vmem:[%s2 + $0xc8] sm:$0xff]
  %v1714 = vld [vmem:[%s2 + $0xd0] sm:$0xff]
  %v1715 = vld [vmem:[%s2 + $0xd8] sm:$0xff]
  %v1716 = vld [vmem:[%s2 + $0xe0] sm:$0xff]
  %v1717 = vld [vmem:[%s2 + $0xe8] sm:$0xff]
  %v1718 = vld [vmem:[%s2 + $0xf0] sm:$0xff]
  %v1719 = vld [vmem:[%s2 + $0xf8] sm:$0xff]
  %1720 = vmatprep.subr.mxu0 0.0
  %1721 = vmatpush1.msra.mxu0 %v1704
  %1722 = vmatprep.subr.mxu0 0.0
  %1723 = vmatpush1.msra.mxu0 %v1705
  %1724 = vmatprep.subr.mxu0 0.0
  %1725 = vmatpush1.msra.mxu0 %v1706
  %1726 = vmatprep.subr.mxu0 0.0
  %1727 = vmatpush1.msra.mxu0 %v1707
  %1728 = vmatprep.subr.mxu0 0.0
  %1729 = vmatpush1.msra.mxu0 %v1708
  %1730 = vmatprep.subr.mxu0 0.0
  %1731 = vmatpush1.msra.mxu0 %v1709
  %1732 = vmatprep.subr.mxu0 0.0
  %1733 = vmatpush1.msra.mxu0 %v1710
  %1734 = vmatprep.subr.mxu0 0.0
  %1735 = vmatpush1.msra.mxu0 %v1711
  %1736 = vmatprep.subr.mxu0 0.0
  %1737 = vmatpush1.msra.mxu0 %v1712
  %1738 = vmatprep.subr.mxu0 0.0
  %1739 = vmatpush1.msra.mxu0 %v1713
  %1740 = vmatprep.subr.mxu0 0.0
  %1741 = vmatpush1.msra.mxu0 %v1714
  %1742 = vmatprep.subr.mxu0 0.0
  %1743 = vmatpush1.msra.mxu0 %v1715
  %1744 = vmatprep.subr.mxu0 0.0
  %1745 = vmatpush1.msra.mxu0 %v1716
  %1746 = vmatprep.subr.mxu0 0.0
  %1747 = vmatpush1.msra.mxu0 %v1717
  %1748 = vmatprep.subr.mxu0 0.0
  %1749 = vmatpush1.msra.mxu0 %v1718
  %1750 = vmatprep.subr.mxu0 0.0
  %1751 = vmatpush1.msra.mxu0 %v1719
  %1752 = vmatprep.subr.mxu0 0.0
  %1753 = vmatpush1.msra.mxu0 0.0
  %1754 = vmatprep.subr.mxu0 0.0
  %1755 = vmatpush1.msra.mxu0 0.0
  %1756 = vmatprep.subr.mxu0 0.0
  %1757 = vmatpush1.msra.mxu0 0.0
  %1758 = vmatprep.subr.mxu0 0.0
  %1759 = vmatpush1.msra.mxu0 0.0
  %1760 = vmatprep.subr.mxu0 0.0
  %1761 = vmatpush1.msra.mxu0 0.0
  %1762 = vmatprep.subr.mxu0 0.0
  %1763 = vmatpush1.msra.mxu0 0.0
  %1764 = vmatprep.subr.mxu0 0.0
  %1765 = vmatpush1.msra.mxu0 0.0
  %1766 = vmatprep.subr.mxu0 0.0
  %1767 = vmatpush1.msra.mxu0 0.0
  %1768 = vmatprep.subr.mxu0 0.0
  %1769 = vmatpush1.msra.mxu0 0.0
  %1770 = vmatprep.subr.mxu0 0.0
  %1771 = vmatpush1.msra.mxu0 0.0
  %1772 = vmatprep.subr.mxu0 0.0
  %1773 = vmatpush1.msra.mxu0 0.0
  %1774 = vmatprep.subr.mxu0 0.0
  %1775 = vmatpush1.msra.mxu0 0.0
  %1776 = vmatprep.subr.mxu0 0.0
  %1777 = vmatpush1.msra.mxu0 0.0
  %1778 = vmatprep.subr.mxu0 0.0
  %1779 = vmatpush1.msra.mxu0 0.0
  %1780 = vmatprep.subr.mxu0 0.0
  %1781 = vmatpush1.msra.mxu0 0.0
  %1782 = vmatprep.subr.mxu0 0.0
  %1783 = vmatpush1.msra.mxu0 0.0
  %1784 = vmatprep.mubr.f32.mxu0 0.0
  %1785 = vmatmul.mubr.f32.gmra.mrb[0].mxu0 %v1701
  %v1786 = vpop.f32.mrb[0].mxu0
  %v1787 = vadd.f32 0.0, %v1786
  %v1788 = vpop.f32.mrb[0].mxu0
  %1789 = vmatprep.mubr.f32.mxu0 0.0
  %1790 = vmatmul.mubr.f32.gmra.mrb[0].mxu0 %v1703
  %v1791 = vpop.f32.mrb[0].mxu0
  %v1792 = vadd.f32 0.0, %v1791
  %v1793 = vpop.f32.mrb[0].mxu0
  %1794 = vdwg.mxu0
  %1795 = vmatprep.subr.mxu0 0.0
  %1796 = vmatpush1.msra.mxu0 %v1684
  %1797 = vmatprep.subr.mxu0 0.0
  %1798 = vmatpush1.msra.mxu0 %v1685
  %1799 = vmatprep.subr.mxu0 0.0
  %1800 = vmatpush1.msra.mxu0 %v1686
  %1801 = vmatprep.subr.mxu0 0.0
  %1802 = vmatpush1.msra.mxu0 %v1687
  %1803 = vmatprep.subr.mxu0 0.0
  %1804 = vmatpush1.msra.mxu0 %v1688
  %1805 = vmatprep.subr.mxu0 0.0
  %1806 = vmatpush1.msra.mxu0 %v1689
  %1807 = vmatprep.subr.mxu0 0.0
  %1808 = vmatpush1.msra.mxu0 %v1690
  %1809 = vmatprep.subr.mxu0 0.0
  %1810 = vmatpush1.msra.mxu0 %v1691
  %1811 = vmatprep.subr.mxu0 0.0
  %1812 = vmatpush1.msra.mxu0 %v1692
  %1813 = vmatprep.subr.mxu0 0.0
  %1814 = vmatpush1.msra.mxu0 %v1693
  %1815 = vmatprep.subr.mxu0 0.0
  %1816 = vmatpush1.msra.mxu0 %v1694
  %1817 = vmatprep.subr.mxu0 0.0
  %1818 = vmatpush1.msra.mxu0 %v1695
  %1819 = vmatprep.subr.mxu0 0.0
  %1820 = vmatpush1.msra.mxu0 %v1696
  %1821 = vmatprep.subr.mxu0 0.0
  %1822 = vmatpush1.msra.mxu0 %v1697
  %1823 = vmatprep.subr.mxu0 0.0
  %1824 = vmatpush1.msra.mxu0 %v1698
  %1825 = vmatprep.subr.mxu0 0.0
  %1826 = vmatpush1.msra.mxu0 %v1699
  %1827 = vmatprep.subr.mxu0 0.0
  %1828 = vmatpush1.msra.mxu0 0.0
  %1829 = vmatprep.subr.mxu0 0.0
  %1830 = vmatpush1.msra.mxu0 0.0
  %1831 = vmatprep.subr.mxu0 0.0
  %1832 = vmatpush1.msra.mxu0 0.0
  %1833 = vmatprep.subr.mxu0 0.0
  %1834 = vmatpush1.msra.mxu0 0.0
  %1835 = vmatprep.subr.mxu0 0.0
  %1836 = vmatpush1.msra.mxu0 0.0
  %1837 = vmatprep.subr.mxu0 0.0
  %1838 = vmatpush1.msra.mxu0 0.0
  %1839 = vmatprep.subr.mxu0 0.0
  %1840 = vmatpush1.msra.mxu0 0.0
  %1841 = vmatprep.subr.mxu0 0.0
  %1842 = vmatpush1.msra.mxu0 0.0
  %1843 = vmatprep.subr.mxu0 0.0
  %1844 = vmatpush1.msra.mxu0 0.0
  %1845 = vmatprep.subr.mxu0 0.0
  %1846 = vmatpush1.msra.mxu0 0.0
  %1847 = vmatprep.subr.mxu0 0.0
  %1848 = vmatpush1.msra.mxu0 0.0
  %1849 = vmatprep.subr.mxu0 0.0
  %1850 = vmatpush1.msra.mxu0 0.0
  %1851 = vmatprep.subr.mxu0 0.0
  %1852 = vmatpush1.msra.mxu0 0.0
  %1853 = vmatprep.subr.mxu0 0.0
  %1854 = vmatpush1.msra.mxu0 0.0
  %1855 = vmatprep.subr.mxu0 0.0
  %1856 = vmatpush1.msra.mxu0 0.0
  %1857 = vmatprep.subr.mxu0 0.0
  %1858 = vmatpush1.msra.mxu0 0.0
  %1859 = vmatprep.mubr.f32.mxu0 0.0
  %1860 = vmatmul.mubr.f32.gmra.mrb[0].mxu0 %v1681
  %v1861 = vpop.f32.mrb[0].mxu0
  %v1862 = vadd.f32 %v1787, %v1861
  %v1863 = vpop.f32.mrb[0].mxu0
  %1864 = vmatprep.mubr.f32.mxu0 0.0
  %1865 = vmatmul.mubr.f32.gmra.mrb[0].mxu0 %v1683
  %v1866 = vpop.f32.mrb[0].mxu0
  %v1867 = vadd.f32 %v1792, %v1866
  %v1868 = vpop.f32.mrb[0].mxu0
  %1869 = vdwg.mxu0
  %s1870 = scalar_lea.vmem [#allocation3], 2
  %v1871 = vld [vmem:[%s1870] ss:$2 sm:$0xff]
  %s1872 = scalar_lea.vmem [#allocation3], 26
  %v1873 = vld [vmem:[%s1872] ss:$2 sm:$0xff]
  %v1874 = vld [vmem:[%s2 + $0x100] sm:$0xff]
  %v1875 = vld [vmem:[%s2 + $0x108] sm:$0xff]
  %v1876 = vld [vmem:[%s2 + $0x110] sm:$0xff]
  %v1877 = vld [vmem:[%s2 + $0x118] sm:$0xff]
  %v1878 = vld [vmem:[%s2 + $0x120] sm:$0xff]
  %v1879 = vld [vmem:[%s2 + $0x128] sm:$0xff]
  %v1880 = vld [vmem:[%s2 + $0x130] sm:$0xff]
  %v1881 = vld [vmem:[%s2 + $0x138] sm:$0xff]
  %v1882 = vld [vmem:[%s2 + $0x140] sm:$0xff]
  %v1883 = vld [vmem:[%s2 + $0x148] sm:$0xff]
  %v1884 = vld [vmem:[%s2 + $0x150] sm:$0xff]
  %v1885 = vld [vmem:[%s2 + $0x158] sm:$0xff]
  %v1886 = vld [vmem:[%s2 + $0x160] sm:$0xff]
  %v1887 = vld [vmem:[%s2 + $0x168] sm:$0xff]
  %v1888 = vld [vmem:[%s2 + $0x170] sm:$0xff]
  %v1889 = vld [vmem:[%s2 + $0x178] sm:$0xff]
  %1890 = vmatprep.subr.mxu0 0.0
  %1891 = vmatpush1.msra.mxu0 %v1874
  %1892 = vmatprep.subr.mxu0 0.0
  %1893 = vmatpush1.msra.mxu0 %v1875
  %1894 = vmatprep.subr.mxu0 0.0
  %1895 = vmatpush1.msra.mxu0 %v1876
  %1896 = vmatprep.subr.mxu0 0.0
  %1897 = vmatpush1.msra.mxu0 %v1877
  %1898 = vmatprep.subr.mxu0 0.0
  %1899 = vmatpush1.msra.mxu0 %v1878
  %1900 = vmatprep.subr.mxu0 0.0
  %1901 = vmatpush1.msra.mxu0 %v1879
  %1902 = vmatprep.subr.mxu0 0.0
  %1903 = vmatpush1.msra.mxu0 %v1880
  %1904 = vmatprep.subr.mxu0 0.0
  %1905 = vmatpush1.msra.mxu0 %v1881
  %1906 = vmatprep.subr.mxu0 0.0
  %1907 = vmatpush1.msra.mxu0 %v1882
  %1908 = vmatprep.subr.mxu0 0.0
  %1909 = vmatpush1.msra.mxu0 %v1883
  %1910 = vmatprep.subr.mxu0 0.0
  %1911 = vmatpush1.msra.mxu0 %v1884
  %1912 = vmatprep.subr.mxu0 0.0
  %1913 = vmatpush1.msra.mxu0 %v1885
  %1914 = vmatprep.subr.mxu0 0.0
  %1915 = vmatpush1.msra.mxu0 %v1886
  %1916 = vmatprep.subr.mxu0 0.0
  %1917 = vmatpush1.msra.mxu0 %v1887
  %1918 = vmatprep.subr.mxu0 0.0
  %1919 = vmatpush1.msra.mxu0 %v1888
  %1920 = vmatprep.subr.mxu0 0.0
  %1921 = vmatpush1.msra.mxu0 %v1889
  %1922 = vmatprep.subr.mxu0 0.0
  %1923 = vmatpush1.msra.mxu0 0.0
  %1924 = vmatprep.subr.mxu0 0.0
  %1925 = vmatpush1.msra.mxu0 0.0
  %1926 = vmatprep.subr.mxu0 0.0
  %1927 = vmatpush1.msra.mxu0 0.0
  %1928 = vmatprep.subr.mxu0 0.0
  %1929 = vmatpush1.msra.mxu0 0.0
  %1930 = vmatprep.subr.mxu0 0.0
  %1931 = vmatpush1.msra.mxu0 0.0
  %1932 = vmatprep.subr.mxu0 0.0
  %1933 = vmatpush1.msra.mxu0 0.0
  %1934 = vmatprep.subr.mxu0 0.0
  %1935 = vmatpush1.msra.mxu0 0.0
  %1936 = vmatprep.subr.mxu0 0.0
  %1937 = vmatpush1.msra.mxu0 0.0
  %1938 = vmatprep.subr.mxu0 0.0
  %1939 = vmatpush1.msra.mxu0 0.0
  %1940 = vmatprep.subr.mxu0 0.0
  %1941 = vmatpush1.msra.mxu0 0.0
  %1942 = vmatprep.subr.mxu0 0.0
  %1943 = vmatpush1.msra.mxu0 0.0
  %1944 = vmatprep.subr.mxu0 0.0
  %1945 = vmatpush1.msra.mxu0 0.0
  %1946 = vmatprep.subr.mxu0 0.0
  %1947 = vmatpush1.msra.mxu0 0.0
  %1948 = vmatprep.subr.mxu0 0.0
  %1949 = vmatpush1.msra.mxu0 0.0
  %1950 = vmatprep.subr.mxu0 0.0
  %1951 = vmatpush1.msra.mxu0 0.0
  %1952 = vmatprep.subr.mxu0 0.0
  %1953 = vmatpush1.msra.mxu0 0.0
  %1954 = vmatprep.mubr.f32.mxu0 0.0
  %1955 = vmatmul.mubr.f32.gmra.mrb[0].mxu0 %v1871
  %v1956 = vpop.f32.mrb[0].mxu0
  %v1957 = vadd.f32 0.0, %v1956
  %v1958 = vpop.f32.mrb[0].mxu0
  %1959 = vmatprep.mubr.f32.mxu0 0.0
  %1960 = vmatmul.mubr.f32.gmra.mrb[0].mxu0 %v1873
  %v1961 = vpop.f32.mrb[0].mxu0
  %v1962 = vadd.f32 0.0, %v1961
  %v1963 = vpop.f32.mrb[0].mxu0
  %1964 = vdwg.mxu0
  %v1965 = vadd.f32 %v1862, %v1957
  %v1966 = vadd.f32 %v1867, %v1962
  %s1967 = scalar_lea.vmem [#allocation3], 3
  %v1968 = vld [vmem:[%s1967] ss:$2 sm:$0xff]
  %s1969 = scalar_lea.vmem [#allocation3], 27
  %v1970 = vld [vmem:[%s1969] ss:$2 sm:$0xff]
  %v1971 = vld [vmem:[%s2 + $0x180] sm:$0xff]
  %v1972 = vld [vmem:[%s2 + $0x188] sm:$0xff]
  %v1973 = vld [vmem:[%s2 + $0x190] sm:$0xff]
  %v1974 = vld [vmem:[%s2 + $0x198] sm:$0xff]
  %v1975 = vld [vmem:[%s2 + $0x1a0] sm:$0xff]
  %v1976 = vld [vmem:[%s2 + $0x1a8] sm:$0xff]
  %v1977 = vld [vmem:[%s2 + $0x1b0] sm:$0xff]
  %v1978 = vld [vmem:[%s2 + $0x1b8] sm:$0xff]
  %v1979 = vld [vmem:[%s2 + $0x1c0] sm:$0xff]
  %v1980 = vld [vmem:[%s2 + $0x1c8] sm:$0xff]
  %v1981 = vld [vmem:[%s2 + $0x1d0] sm:$0xff]
  %v1982 = vld [vmem:[%s2 + $0x1d8] sm:$0xff]
  %v1983 = vld [vmem:[%s2 + $0x1e0] sm:$0xff]
  %v1984 = vld [vmem:[%s2 + $0x1e8] sm:$0xff]
  %v1985 = vld [vmem:[%s2 + $0x1f0] sm:$0xff]
  %v1986 = vld [vmem:[%s2 + $0x1f8] sm:$0xff]
  %1987 = vmatprep.subr.mxu0 0.0
  %1988 = vmatpush1.msra.mxu0 %v1971
  %1989 = vmatprep.subr.mxu0 0.0
  %1990 = vmatpush1.msra.mxu0 %v1972
  %1991 = vmatprep.subr.mxu0 0.0
  %1992 = vmatpush1.msra.mxu0 %v1973
  %1993 = vmatprep.subr.mxu0 0.0
  %1994 = vmatpush1.msra.mxu0 %v1974
  %1995 = vmatprep.subr.mxu0 0.0
  %1996 = vmatpush1.msra.mxu0 %v1975
  %1997 = vmatprep.subr.mxu0 0.0
  %1998 = vmatpush1.msra.mxu0 %v1976
  %1999 = vmatprep.subr.mxu0 0.0
  %2000 = vmatpush1.msra.mxu0 %v1977
  %2001 = vmatprep.subr.mxu0 0.0
  %2002 = vmatpush1.msra.mxu0 %v1978
  %2003 = vmatprep.subr.mxu0 0.0
  %2004 = vmatpush1.msra.mxu0 %v1979
  %2005 = vmatprep.subr.mxu0 0.0
  %2006 = vmatpush1.msra.mxu0 %v1980
  %2007 = vmatprep.subr.mxu0 0.0
  %2008 = vmatpush1.msra.mxu0 %v1981
  %2009 = vmatprep.subr.mxu0 0.0
  %2010 = vmatpush1.msra.mxu0 %v1982
  %2011 = vmatprep.subr.mxu0 0.0
  %2012 = vmatpush1.msra.mxu0 %v1983
  %2013 = vmatprep.subr.mxu0 0.0
  %2014 = vmatpush1.msra.mxu0 %v1984
  %2015 = vmatprep.subr.mxu0 0.0
  %2016 = vmatpush1.msra.mxu0 %v1985
  %2017 = vmatprep.subr.mxu0 0.0
  %2018 = vmatpush1.msra.mxu0 %v1986
  %2019 = vmatprep.subr.mxu0 0.0
  %2020 = vmatpush1.msra.mxu0 0.0
  %2021 = vmatprep.subr.mxu0 0.0
  %2022 = vmatpush1.msra.mxu0 0.0
  %2023 = vmatprep.subr.mxu0 0.0
  %2024 = vmatpush1.msra.mxu0 0.0
  %2025 = vmatprep.subr.mxu0 0.0
  %2026 = vmatpush1.msra.mxu0 0.0
  %2027 = vmatprep.subr.mxu0 0.0
  %2028 = vmatpush1.msra.mxu0 0.0
  %2029 = vmatprep.subr.mxu0 0.0
  %2030 = vmatpush1.msra.mxu0 0.0
  %2031 = vmatprep.subr.mxu0 0.0
  %2032 = vmatpush1.msra.mxu0 0.0
  %2033 = vmatprep.subr.mxu0 0.0
  %2034 = vmatpush1.msra.mxu0 0.0
  %2035 = vmatprep.subr.mxu0 0.0
  %2036 = vmatpush1.msra.mxu0 0.0
  %2037 = vmatprep.subr.mxu0 0.0
  %2038 = vmatpush1.msra.mxu0 0.0
  %2039 = vmatprep.subr.mxu0 0.0
  %2040 = vmatpush1.msra.mxu0 0.0
  %2041 = vmatprep.subr.mxu0 0.0
  %2042 = vmatpush1.msra.mxu0 0.0
  %2043 = vmatprep.subr.mxu0 0.0
  %2044 = vmatpush1.msra.mxu0 0.0
  %2045 = vmatprep.subr.mxu0 0.0
  %2046 = vmatpush1.msra.mxu0 0.0
  %2047 = vmatprep.subr.mxu0 0.0
  %2048 = vmatpush1.msra.mxu0 0.0
  %2049 = vmatprep.subr.mxu0 0.0
  %2050 = vmatpush1.msra.mxu0 0.0
  %2051 = vmatprep.mubr.f32.mxu0 0.0
  %2052 = vmatmul.mubr.f32.gmra.mrb[0].mxu0 %v1968
  %v2053 = vpop.f32.mrb[0].mxu0
  %v2054 = vadd.f32 0.0, %v2053
  %v2055 = vpop.f32.mrb[0].mxu0
  %2056 = vmatprep.mubr.f32.mxu0 0.0
  %2057 = vmatmul.mubr.f32.gmra.mrb[0].mxu0 %v1970
  %v2058 = vpop.f32.mrb[0].mxu0
  %v2059 = vadd.f32 0.0, %v2058
  %v2060 = vpop.f32.mrb[0].mxu0
  %2061 = vdwg.mxu0
  %v2062 = vadd.f32 %v1965, %v2054
  %v2063 = vadd.f32 %v1966, %v2059
  %s2064 = scalar_lea.vmem [#allocation3], 4
  %v2065 = vld [vmem:[%s2064] ss:$2 sm:$0xff]
  %s2066 = scalar_lea.vmem [#allocation3], 28
  %v2067 = vld [vmem:[%s2066] ss:$2 sm:$0xff]
  %v2068 = vld [vmem:[%s2 + $0x200] sm:$0xff]
  %v2069 = vld [vmem:[%s2 + $0x208] sm:$0xff]
  %v2070 = vld [vmem:[%s2 + $0x210] sm:$0xff]
  %v2071 = vld [vmem:[%s2 + $0x218] sm:$0xff]
  %v2072 = vld [vmem:[%s2 + $0x220] sm:$0xff]
  %v2073 = vld [vmem:[%s2 + $0x228] sm:$0xff]
  %v2074 = vld [vmem:[%s2 + $0x230] sm:$0xff]
  %v2075 = vld [vmem:[%s2 + $0x238] sm:$0xff]
  %v2076 = vld [vmem:[%s2 + $0x240] sm:$0xff]
  %v2077 = vld [vmem:[%s2 + $0x248] sm:$0xff]
  %v2078 = vld [vmem:[%s2 + $0x250] sm:$0xff]
  %v2079 = vld [vmem:[%s2 + $0x258] sm:$0xff]
  %v2080 = vld [vmem:[%s2 + $0x260] sm:$0xff]
  %v2081 = vld [vmem:[%s2 + $0x268] sm:$0xff]
  %v2082 = vld [vmem:[%s2 + $0x270] sm:$0xff]
  %v2083 = vld [vmem:[%s2 + $0x278] sm:$0xff]
  %2084 = vmatprep.subr.mxu0 0.0
  %2085 = vmatpush1.msra.mxu0 %v2068
  %2086 = vmatprep.subr.mxu0 0.0
  %2087 = vmatpush1.msra.mxu0 %v2069
  %2088 = vmatprep.subr.mxu0 0.0
  %2089 = vmatpush1.msra.mxu0 %v2070
  %2090 = vmatprep.subr.mxu0 0.0
  %2091 = vmatpush1.msra.mxu0 %v2071
  %2092 = vmatprep.subr.mxu0 0.0
  %2093 = vmatpush1.msra.mxu0 %v2072
  %2094 = vmatprep.subr.mxu0 0.0
  %2095 = vmatpush1.msra.mxu0 %v2073
  %2096 = vmatprep.subr.mxu0 0.0
  %2097 = vmatpush1.msra.mxu0 %v2074
  %2098 = vmatprep.subr.mxu0 0.0
  %2099 = vmatpush1.msra.mxu0 %v2075
  %2100 = vmatprep.subr.mxu0 0.0
  %2101 = vmatpush1.msra.mxu0 %v2076
  %2102 = vmatprep.subr.mxu0 0.0
  %2103 = vmatpush1.msra.mxu0 %v2077
  %2104 = vmatprep.subr.mxu0 0.0
  %2105 = vmatpush1.msra.mxu0 %v2078
  %2106 = vmatprep.subr.mxu0 0.0
  %2107 = vmatpush1.msra.mxu0 %v2079
  %2108 = vmatprep.subr.mxu0 0.0
  %2109 = vmatpush1.msra.mxu0 %v2080
  %2110 = vmatprep.subr.mxu0 0.0
  %2111 = vmatpush1.msra.mxu0 %v2081
  %2112 = vmatprep.subr.mxu0 0.0
  %2113 = vmatpush1.msra.mxu0 %v2082
  %2114 = vmatprep.subr.mxu0 0.0
  %2115 = vmatpush1.msra.mxu0 %v2083
  %2116 = vmatprep.subr.mxu0 0.0
  %2117 = vmatpush1.msra.mxu0 0.0
  %2118 = vmatprep.subr.mxu0 0.0
  %2119 = vmatpush1.msra.mxu0 0.0
  %2120 = vmatprep.subr.mxu0 0.0
  %2121 = vmatpush1.msra.mxu0 0.0
  %2122 = vmatprep.subr.mxu0 0.0
  %2123 = vmatpush1.msra.mxu0 0.0
  %2124 = vmatprep.subr.mxu0 0.0
  %2125 = vmatpush1.msra.mxu0 0.0
  %2126 = vmatprep.subr.mxu0 0.0
  %2127 = vmatpush1.msra.mxu0 0.0
  %2128 = vmatprep.subr.mxu0 0.0
  %2129 = vmatpush1.msra.mxu0 0.0
  %2130 = vmatprep.subr.mxu0 0.0
  %2131 = vmatpush1.msra.mxu0 0.0
  %2132 = vmatprep.subr.mxu0 0.0
  %2133 = vmatpush1.msra.mxu0 0.0
  %2134 = vmatprep.subr.mxu0 0.0
  %2135 = vmatpush1.msra.mxu0 0.0
  %2136 = vmatprep.subr.mxu0 0.0
  %2137 = vmatpush1.msra.mxu0 0.0
  %2138 = vmatprep.subr.mxu0 0.0
  %2139 = vmatpush1.msra.mxu0 0.0
  %2140 = vmatprep.subr.mxu0 0.0
  %2141 = vmatpush1.msra.mxu0 0.0
  %2142 = vmatprep.subr.mxu0 0.0
  %2143 = vmatpush1.msra.mxu0 0.0
  %2144 = vmatprep.subr.mxu0 0.0
  %2145 = vmatpush1.msra.mxu0 0.0
  %2146 = vmatprep.subr.mxu0 0.0
  %2147 = vmatpush1.msra.mxu0 0.0
  %2148 = vmatprep.mubr.f32.mxu0 0.0
  %2149 = vmatmul.mubr.f32.gmra.mrb[0].mxu0 %v2065
  %v2150 = vpop.f32.mrb[0].mxu0
  %v2151 = vadd.f32 0.0, %v2150
  %v2152 = vpop.f32.mrb[0].mxu0
  %2153 = vmatprep.mubr.f32.mxu0 0.0
  %2154 = vmatmul.mubr.f32.gmra.mrb[0].mxu0 %v2067
  %v2155 = vpop.f32.mrb[0].mxu0
  %v2156 = vadd.f32 0.0, %v2155
  %v2157 = vpop.f32.mrb[0].mxu0
  %2158 = vdwg.mxu0
  %v2159 = vadd.f32 %v2062, %v2151
  %v2160 = vadd.f32 %v2063, %v2156
  %v2161 = vsel %vm152, %v2159, 0.0
  %v2162 = vsel %vm152, %v2160, 0.0
  %v2163 = vadd.f32 %v2161, %v2162
  %v2164 = vrot.slane %v2163, 4
  %v2165 = vadd.f32 %v2163, %v2164
  %v2166 = vrot.slane %v2165, 2
  %v2167 = vadd.f32 %v2165, %v2166
  %v2168 = vrot.slane %v2167, 1
  %v2169 = vadd.f32 %v2167, %v2168
  %v2170 = vmul.f32 %v2159, %v2159
  %v2171 = vmul.f32 %v2160, %v2160
  %v2172 = vsel %vm152, %v2170, 0.0
  %v2173 = vsel %vm152, %v2171, 0.0
  %v2174 = vadd.f32 %v2172, %v2173
  %v2175 = vrot.slane %v2174, 4
  %v2176 = vadd.f32 %v2174, %v2175
  %v2177 = vrot.slane %v2176, 2
  %v2178 = vadd.f32 %v2176, %v2177
  %v2179 = vrot.slane %v2178, 1
  %v2180 = vadd.f32 %v2178, %v2179
  %v2181 = vsel %vm736, %v2169, %v2180
  %v2183 = vsel %vm152, %v2181, 0
  %2185 = vmatprep.subr.mxu0 0.0
  %2186 = vmatpush1.msra.mxu0 %v76
  %2187 = vmatprep.subr.mxu0 0.0
  %2188 = vmatpush1.msra.mxu0 %v77
  %2189 = vmatprep.subr.mxu0 0.0
  %2190 = vmatpush1.msra.mxu0 %v78
  %2191 = vmatprep.subr.mxu0 0.0
  %2192 = vmatpush1.msra.mxu0 %v79
  %2193 = vmatprep.subr.mxu0 0.0
  %2194 = vmatpush1.msra.mxu0 %v80
  %2195 = vmatprep.subr.mxu0 0.0
  %2196 = vmatpush1.msra.mxu0 %v81
  %2197 = vmatprep.subr.mxu0 0.0
  %2198 = vmatpush1.msra.mxu0 %v82
  %2199 = vmatprep.subr.mxu0 0.0
  %2200 = vmatpush1.msra.mxu0 %v83
  %2201 = vmatprep.subr.mxu0 0.0
  %2202 = vmatpush1.msra.mxu0 0.0
  %2203 = vmatprep.subr.mxu0 0.0
  %2204 = vmatpush1.msra.mxu0 0.0
  %2205 = vmatprep.subr.mxu0 0.0
  %2206 = vmatpush1.msra.mxu0 0.0
  %2207 = vmatprep.subr.mxu0 0.0
  %2208 = vmatpush1.msra.mxu0 0.0
  %2209 = vmatprep.subr.mxu0 0.0
  %2210 = vmatpush1.msra.mxu0 0.0
  %2211 = vmatprep.subr.mxu0 0.0
  %2212 = vmatpush1.msra.mxu0 0.0
  %2213 = vmatprep.subr.mxu0 0.0
  %2214 = vmatpush1.msra.mxu0 0.0
  %2215 = vmatprep.subr.mxu0 0.0
  %2216 = vmatpush1.msra.mxu0 0.0
  %2217 = vmatprep.subr.mxu0 0.0
  %2218 = vmatpush1.msra.mxu0 0.0
  %2219 = vmatprep.subr.mxu0 0.0
  %2220 = vmatpush1.msra.mxu0 0.0
  %2221 = vmatprep.subr.mxu0 0.0
  %2222 = vmatpush1.msra.mxu0 0.0
  %2223 = vmatprep.subr.mxu0 0.0
  %2224 = vmatpush1.msra.mxu0 0.0
  %2225 = vmatprep.subr.mxu0 0.0
  %2226 = vmatpush1.msra.mxu0 0.0
  %2227 = vmatprep.subr.mxu0 0.0
  %2228 = vmatpush1.msra.mxu0 0.0
  %2229 = vmatprep.subr.mxu0 0.0
  %2230 = vmatpush1.msra.mxu0 0.0
  %2231 = vmatprep.subr.mxu0 0.0
  %2232 = vmatpush1.msra.mxu0 0.0
  %2233 = vmatprep.subr.mxu0 0.0
  %2234 = vmatpush1.msra.mxu0 0.0
  %2235 = vmatprep.subr.mxu0 0.0
  %2236 = vmatpush1.msra.mxu0 0.0
  %2237 = vmatprep.subr.mxu0 0.0
  %2238 = vmatpush1.msra.mxu0 0.0
  %2239 = vmatprep.subr.mxu0 0.0
  %2240 = vmatpush1.msra.mxu0 0.0
  %2241 = vmatprep.subr.mxu0 0.0
  %2242 = vmatpush1.msra.mxu0 0.0
  %2243 = vmatprep.subr.mxu0 0.0
  %2244 = vmatpush1.msra.mxu0 0.0
  %2245 = vmatprep.subr.mxu0 0.0
  %2246 = vmatpush1.msra.mxu0 0.0
  %2247 = vmatprep.subr.mxu0 0.0
  %2248 = vmatpush1.msra.mxu0 0.0
  %2249 = vmatprep.mubr.f32.mxu0 0.0
  %2250 = vmatmul.mubr.f32.gmra.mrb[0].mxu0 %v2183
  %v2251 = vpop.f32.mrb[0].mxu0
  %v2252 = vadd.f32 0.0, %v2251
  %v2253 = vpop.f32.mrb[0].mxu0
  %2254 = vdwg.mxu0
  %v2255 = vmul.f32 %v2252, 0.0078125
  %v2256 = vmul.f32 %v2255, %v2255
  %v2258 = vrot.slane %v2256, 7
  %v2260 = vsub.f32 %v2255, %v2258
  %v2261 = vld [vmem:[%s5 + $0x4] sm:$0x1]
  %v2262 = vld [vmem:[%s5 + $0x5] sm:$0x1]
  %v2263 = vadd.f32 %v2260, 1e-05
  %v2264 = vrsqrt.pop %v2263
  %v2266 = vrot.slane %v2264, 1
  %v2268 = vmul.f32 %v2261, %v2266
  %v2269 = vmul.f32 %v2255, %v2268
  %v2270 = vsub.f32 %v2262, %v2269
  %v2272 = vrot.slane %v2270, 7
  %v2274 = vsel %vm736, %v2268, %v2272
  %v2276 = vsel %vm828, %v2274, 0
  %2278 = vmatprep.subr.mxu0 0.0
  %2279 = vmatpush1.msra.mxu0 %v92
  %2280 = vmatprep.subr.mxu0 0.0
  %2281 = vmatpush1.msra.mxu0 0.0
  %2282 = vmatprep.subr.mxu0 0.0
  %2283 = vmatpush1.msra.mxu0 0.0
  %2284 = vmatprep.subr.mxu0 0.0
  %2285 = vmatpush1.msra.mxu0 0.0
  %2286 = vmatprep.subr.mxu0 0.0
  %2287 = vmatpush1.msra.mxu0 0.0
  %2288 = vmatprep.subr.mxu0 0.0
  %2289 = vmatpush1.msra.mxu0 0.0
  %2290 = vmatprep.subr.mxu0 0.0
  %2291 = vmatpush1.msra.mxu0 0.0
  %2292 = vmatprep.subr.mxu0 0.0
  %2293 = vmatpush1.msra.mxu0 0.0
  %2294 = vmatprep.subr.mxu0 0.0
  %2295 = vmatpush1.msra.mxu0 0.0
  %2296 = vmatprep.subr.mxu0 0.0
  %2297 = vmatpush1.msra.mxu0 0.0
  %2298 = vmatprep.subr.mxu0 0.0
  %2299 = vmatpush1.msra.mxu0 0.0
  %2300 = vmatprep.subr.mxu0 0.0
  %2301 = vmatpush1.msra.mxu0 0.0
  %2302 = vmatprep.subr.mxu0 0.0
  %2303 = vmatpush1.msra.mxu0 0.0
  %2304 = vmatprep.subr.mxu0 0.0
  %2305 = vmatpush1.msra.mxu0 0.0
  %2306 = vmatprep.subr.mxu0 0.0
  %2307 = vmatpush1.msra.mxu0 0.0
  %2308 = vmatprep.subr.mxu0 0.0
  %2309 = vmatpush1.msra.mxu0 0.0
  %2310 = vmatprep.subr.mxu0 0.0
  %2311 = vmatpush1.msra.mxu0 0.0
  %2312 = vmatprep.subr.mxu0 0.0
  %2313 = vmatpush1.msra.mxu0 0.0
  %2314 = vmatprep.subr.mxu0 0.0
  %2315 = vmatpush1.msra.mxu0 0.0
  %2316 = vmatprep.subr.mxu0 0.0
  %2317 = vmatpush1.msra.mxu0 0.0
  %2318 = vmatprep.subr.mxu0 0.0
  %2319 = vmatpush1.msra.mxu0 0.0
  %2320 = vmatprep.subr.mxu0 0.0
  %2321 = vmatpush1.msra.mxu0 0.0
  %2322 = vmatprep.subr.mxu0 0.0
  %2323 = vmatpush1.msra.mxu0 0.0
  %2324 = vmatprep.subr.mxu0 0.0
  %2325 = vmatpush1.msra.mxu0 0.0
  %2326 = vmatprep.subr.mxu0 0.0
  %2327 = vmatpush1.msra.mxu0 0.0
  %2328 = vmatprep.subr.mxu0 0.0
  %2329 = vmatpush1.msra.mxu0 0.0
  %2330 = vmatprep.subr.mxu0 0.0
  %2331 = vmatpush1.msra.mxu0 0.0
  %2332 = vmatprep.subr.mxu0 0.0
  %2333 = vmatpush1.msra.mxu0 0.0
  %2334 = vmatprep.subr.mxu0 0.0
  %2335 = vmatpush1.msra.mxu0 0.0
  %2336 = vmatprep.subr.mxu0 0.0
  %2337 = vmatpush1.msra.mxu0 0.0
  %2338 = vmatprep.subr.mxu0 0.0
  %2339 = vmatpush1.msra.mxu0 0.0
  %2340 = vmatprep.subr.mxu0 0.0
  %2341 = vmatpush1.msra.mxu0 0.0
  %2342 = vmatprep.mubr.f32.mxu0 0.0
  %2343 = vmatmul.mubr.f32.gmra.mrb[0].mxu0 %v2276
  %v2344 = vpop.f32.mrb[0].mxu0
  %v2345 = vadd.f32 0.0, %v2344
  %v2346 = vpop.f32.mrb[0].mxu0
  %2347 = vdwg.mxu0
  %v2348 = vlaneseq
  %v2349 = vshrl.u32 %v2348, 7
  %v2350 = vsub.s32 0, %v2349
  %v2351 = vrot.slane %v2345, %v2350
  %v2352 = vmul.f32 %v2159, %v2351
  %v2353 = vmul.f32 %v2160, %v2351
  %v2354 = vlaneseq
  %v2355 = vshrl.u32 %v2354, 7
  %v2356 = vsub.s32 1, %v2355
  %v2357 = vrot.slane %v2345, %v2356
  %v2358 = vadd.f32 %v2352, %v2357
  %v2359 = vadd.f32 %v2353, %v2357
  %vm2360 = vcmp.ge.f32.partialorder %v2358, 0.0
  %vm2361 = vcmp.ge.f32.partialorder %v2359, 0.0
  %v2362 = vmul.f32 %v2358, 0.01
  %v2363 = vmul.f32 %v2359, 0.01
  %v2364 = vsel %vm2360, %v2358, %v2362
  %v2365 = vsel %vm2361, %v2359, %v2363
  %v2366 = vld [vmem:[%s2 + $0x280] sm:$0xff]
  %v2367 = vld [vmem:[%s2 + $0x288] sm:$0xff]
  %v2368 = vld [vmem:[%s2 + $0x290] sm:$0xff]
  %v2369 = vld [vmem:[%s2 + $0x298] sm:$0xff]
  %v2370 = vld [vmem:[%s2 + $0x2a0] sm:$0xff]
  %v2371 = vld [vmem:[%s2 + $0x2a8] sm:$0xff]
  %v2372 = vld [vmem:[%s2 + $0x2b0] sm:$0xff]
  %v2373 = vld [vmem:[%s2 + $0x2b8] sm:$0xff]
  %v2374 = vld [vmem:[%s2 + $0x2c0] sm:$0xff]
  %v2375 = vld [vmem:[%s2 + $0x2c8] sm:$0xff]
  %v2376 = vld [vmem:[%s2 + $0x2d0] sm:$0xff]
  %v2377 = vld [vmem:[%s2 + $0x2d8] sm:$0xff]
  %v2378 = vld [vmem:[%s2 + $0x2e0] sm:$0xff]
  %v2379 = vld [vmem:[%s2 + $0x2e8] sm:$0xff]
  %v2380 = vld [vmem:[%s2 + $0x2f0] sm:$0xff]
  %v2381 = vld [vmem:[%s2 + $0x2f8] sm:$0xff]
  %v2382 = vld [vmem:[%s2 + $0x300] sm:$0xff]
  %v2383 = vld [vmem:[%s2 + $0x308] sm:$0xff]
  %v2384 = vld [vmem:[%s2 + $0x310] sm:$0xff]
  %v2385 = vld [vmem:[%s2 + $0x318] sm:$0xff]
  %v2386 = vld [vmem:[%s2 + $0x320] sm:$0xff]
  %v2387 = vld [vmem:[%s2 + $0x328] sm:$0xff]
  %v2388 = vld [vmem:[%s2 + $0x330] sm:$0xff]
  %v2389 = vld [vmem:[%s2 + $0x338] sm:$0xff]
  %v2390 = vld [vmem:[%s2 + $0x340] sm:$0xff]
  %v2391 = vld [vmem:[%s2 + $0x348] sm:$0xff]
  %v2392 = vld [vmem:[%s2 + $0x350] sm:$0xff]
  %v2393 = vld [vmem:[%s2 + $0x358] sm:$0xff]
  %v2394 = vld [vmem:[%s2 + $0x360] sm:$0xff]
  %v2395 = vld [vmem:[%s2 + $0x368] sm:$0xff]
  %v2396 = vld [vmem:[%s2 + $0x370] sm:$0xff]
  %v2397 = vld [vmem:[%s2 + $0x378] sm:$0xff]
  %2398 = vmatprep.subr.mxu0 0.0
  %2399 = vmatpush1.msra.mxu0 %v2382
  %2400 = vmatprep.subr.mxu0 0.0
  %2401 = vmatpush1.msra.mxu0 %v2383
  %2402 = vmatprep.subr.mxu0 0.0
  %2403 = vmatpush1.msra.mxu0 %v2384
  %2404 = vmatprep.subr.mxu0 0.0
  %2405 = vmatpush1.msra.mxu0 %v2385
  %2406 = vmatprep.subr.mxu0 0.0
  %2407 = vmatpush1.msra.mxu0 %v2386
  %2408 = vmatprep.subr.mxu0 0.0
  %2409 = vmatpush1.msra.mxu0 %v2387
  %2410 = vmatprep.subr.mxu0 0.0
  %2411 = vmatpush1.msra.mxu0 %v2388
  %2412 = vmatprep.subr.mxu0 0.0
  %2413 = vmatpush1.msra.mxu0 %v2389
  %2414 = vmatprep.subr.mxu0 0.0
  %2415 = vmatpush1.msra.mxu0 %v2390
  %2416 = vmatprep.subr.mxu0 0.0
  %2417 = vmatpush1.msra.mxu0 %v2391
  %2418 = vmatprep.subr.mxu0 0.0
  %2419 = vmatpush1.msra.mxu0 %v2392
  %2420 = vmatprep.subr.mxu0 0.0
  %2421 = vmatpush1.msra.mxu0 %v2393
  %2422 = vmatprep.subr.mxu0 0.0
  %2423 = vmatpush1.msra.mxu0 %v2394
  %2424 = vmatprep.subr.mxu0 0.0
  %2425 = vmatpush1.msra.mxu0 %v2395
  %2426 = vmatprep.subr.mxu0 0.0
  %2427 = vmatpush1.msra.mxu0 %v2396
  %2428 = vmatprep.subr.mxu0 0.0
  %2429 = vmatpush1.msra.mxu0 %v2397
  %2430 = vmatprep.subr.mxu0 0.0
  %2431 = vmatpush1.msra.mxu0 0.0
  %2432 = vmatprep.subr.mxu0 0.0
  %2433 = vmatpush1.msra.mxu0 0.0
  %2434 = vmatprep.subr.mxu0 0.0
  %2435 = vmatpush1.msra.mxu0 0.0
  %2436 = vmatprep.subr.mxu0 0.0
  %2437 = vmatpush1.msra.mxu0 0.0
  %2438 = vmatprep.subr.mxu0 0.0
  %2439 = vmatpush1.msra.mxu0 0.0
  %2440 = vmatprep.subr.mxu0 0.0
  %2441 = vmatpush1.msra.mxu0 0.0
  %2442 = vmatprep.subr.mxu0 0.0
  %2443 = vmatpush1.msra.mxu0 0.0
  %2444 = vmatprep.subr.mxu0 0.0
  %2445 = vmatpush1.msra.mxu0 0.0
  %2446 = vmatprep.subr.mxu0 0.0
  %2447 = vmatpush1.msra.mxu0 0.0
  %2448 = vmatprep.subr.mxu0 0.0
  %2449 = vmatpush1.msra.mxu0 0.0
  %2450 = vmatprep.subr.mxu0 0.0
  %2451 = vmatpush1.msra.mxu0 0.0
  %2452 = vmatprep.subr.mxu0 0.0
  %2453 = vmatpush1.msra.mxu0 0.0
  %2454 = vmatprep.subr.mxu0 0.0
  %2455 = vmatpush1.msra.mxu0 0.0
  %2456 = vmatprep.subr.mxu0 0.0
  %2457 = vmatpush1.msra.mxu0 0.0
  %2458 = vmatprep.subr.mxu0 0.0
  %2459 = vmatpush1.msra.mxu0 0.0
  %2460 = vmatprep.subr.mxu0 0.0
  %2461 = vmatpush1.msra.mxu0 0.0
  %2462 = vmatprep.mubr.f32.mxu0 0.0
  %2463 = vmatmul.mubr.f32.gmra.mrb[0].mxu0 %v1701
  %v2464 = vpop.f32.mrb[0].mxu0
  %v2465 = vadd.f32 0.0, %v2464
  %v2466 = vpop.f32.mrb[0].mxu0
  %2467 = vmatprep.mubr.f32.mxu0 0.0
  %2468 = vmatmul.mubr.f32.gmra.mrb[0].mxu0 %v1703
  %v2469 = vpop.f32.mrb[0].mxu0
  %v2470 = vadd.f32 0.0, %v2469
  %v2471 = vpop.f32.mrb[0].mxu0
  %2472 = vdwg.mxu0
  %2473 = vmatprep.subr.mxu0 0.0
  %2474 = vmatpush1.msra.mxu0 %v2366
  %2475 = vmatprep.subr.mxu0 0.0
  %2476 = vmatpush1.msra.mxu0 %v2367
  %2477 = vmatprep.subr.mxu0 0.0
  %2478 = vmatpush1.msra.mxu0 %v2368
  %2479 = vmatprep.subr.mxu0 0.0
  %2480 = vmatpush1.msra.mxu0 %v2369
  %2481 = vmatprep.subr.mxu0 0.0
  %2482 = vmatpush1.msra.mxu0 %v2370
  %2483 = vmatprep.subr.mxu0 0.0
  %2484 = vmatpush1.msra.mxu0 %v2371
  %2485 = vmatprep.subr.mxu0 0.0
  %2486 = vmatpush1.msra.mxu0 %v2372
  %2487 = vmatprep.subr.mxu0 0.0
  %2488 = vmatpush1.msra.mxu0 %v2373
  %2489 = vmatprep.subr.mxu0 0.0
  %2490 = vmatpush1.msra.mxu0 %v2374
  %2491 = vmatprep.subr.mxu0 0.0
  %2492 = vmatpush1.msra.mxu0 %v2375
  %2493 = vmatprep.subr.mxu0 0.0
  %2494 = vmatpush1.msra.mxu0 %v2376
  %2495 = vmatprep.subr.mxu0 0.0
  %2496 = vmatpush1.msra.mxu0 %v2377
  %2497 = vmatprep.subr.mxu0 0.0
  %2498 = vmatpush1.msra.mxu0 %v2378
  %2499 = vmatprep.subr.mxu0 0.0
  %2500 = vmatpush1.msra.mxu0 %v2379
  %2501 = vmatprep.subr.mxu0 0.0
  %2502 = vmatpush1.msra.mxu0 %v2380
  %2503 = vmatprep.subr.mxu0 0.0
  %2504 = vmatpush1.msra.mxu0 %v2381
  %2505 = vmatprep.subr.mxu0 0.0
  %2506 = vmatpush1.msra.mxu0 0.0
  %2507 = vmatprep.subr.mxu0 0.0
  %2508 = vmatpush1.msra.mxu0 0.0
  %2509 = vmatprep.subr.mxu0 0.0
  %2510 = vmatpush1.msra.mxu0 0.0
  %2511 = vmatprep.subr.mxu0 0.0
  %2512 = vmatpush1.msra.mxu0 0.0
  %2513 = vmatprep.subr.mxu0 0.0
  %2514 = vmatpush1.msra.mxu0 0.0
  %2515 = vmatprep.subr.mxu0 0.0
  %2516 = vmatpush1.msra.mxu0 0.0
  %2517 = vmatprep.subr.mxu0 0.0
  %2518 = vmatpush1.msra.mxu0 0.0
  %2519 = vmatprep.subr.mxu0 0.0
  %2520 = vmatpush1.msra.mxu0 0.0
  %2521 = vmatprep.subr.mxu0 0.0
  %2522 = vmatpush1.msra.mxu0 0.0
  %2523 = vmatprep.subr.mxu0 0.0
  %2524 = vmatpush1.msra.mxu0 0.0
  %2525 = vmatprep.subr.mxu0 0.0
  %2526 = vmatpush1.msra.mxu0 0.0
  %2527 = vmatprep.subr.mxu0 0.0
  %2528 = vmatpush1.msra.mxu0 0.0
  %2529 = vmatprep.subr.mxu0 0.0
  %2530 = vmatpush1.msra.mxu0 0.0
  %2531 = vmatprep.subr.mxu0 0.0
  %2532 = vmatpush1.msra.mxu0 0.0
  %2533 = vmatprep.subr.mxu0 0.0
  %2534 = vmatpush1.msra.mxu0 0.0
  %2535 = vmatprep.subr.mxu0 0.0
  %2536 = vmatpush1.msra.mxu0 0.0
  %2537 = vmatprep.mubr.f32.mxu0 0.0
  %2538 = vmatmul.mubr.f32.gmra.mrb[0].mxu0 %v1681
  %v2539 = vpop.f32.mrb[0].mxu0
  %v2540 = vadd.f32 %v2465, %v2539
  %v2541 = vpop.f32.mrb[0].mxu0
  %2542 = vmatprep.mubr.f32.mxu0 0.0
  %2543 = vmatmul.mubr.f32.gmra.mrb[0].mxu0 %v1683
  %v2544 = vpop.f32.mrb[0].mxu0
  %v2545 = vadd.f32 %v2470, %v2544
  %v2546 = vpop.f32.mrb[0].mxu0
  %2547 = vdwg.mxu0
  %v2548 = vld [vmem:[%s2 + $0x380] sm:$0xff]
  %v2549 = vld [vmem:[%s2 + $0x388] sm:$0xff]
  %v2550 = vld [vmem:[%s2 + $0x390] sm:$0xff]
  %v2551 = vld [vmem:[%s2 + $0x398] sm:$0xff]
  %v2552 = vld [vmem:[%s2 + $0x3a0] sm:$0xff]
  %v2553 = vld [vmem:[%s2 + $0x3a8] sm:$0xff]
  %v2554 = vld [vmem:[%s2 + $0x3b0] sm:$0xff]
  %v2555 = vld [vmem:[%s2 + $0x3b8] sm:$0xff]
  %v2556 = vld [vmem:[%s2 + $0x3c0] sm:$0xff]
  %v2557 = vld [vmem:[%s2 + $0x3c8] sm:$0xff]
  %v2558 = vld [vmem:[%s2 + $0x3d0] sm:$0xff]
  %v2559 = vld [vmem:[%s2 + $0x3d8] sm:$0xff]
  %v2560 = vld [vmem:[%s2 + $0x3e0] sm:$0xff]
  %v2561 = vld [vmem:[%s2 + $0x3e8] sm:$0xff]
  %v2562 = vld [vmem:[%s2 + $0x3f0] sm:$0xff]
  %v2563 = vld [vmem:[%s2 + $0x3f8] sm:$0xff]
  %2564 = vmatprep.subr.mxu0 0.0
  %2565 = vmatpush1.msra.mxu0 %v2548
  %2566 = vmatprep.subr.mxu0 0.0
  %2567 = vmatpush1.msra.mxu0 %v2549
  %2568 = vmatprep.subr.mxu0 0.0
  %2569 = vmatpush1.msra.mxu0 %v2550
  %2570 = vmatprep.subr.mxu0 0.0
  %2571 = vmatpush1.msra.mxu0 %v2551
  %2572 = vmatprep.subr.mxu0 0.0
  %2573 = vmatpush1.msra.mxu0 %v2552
  %2574 = vmatprep.subr.mxu0 0.0
  %2575 = vmatpush1.msra.mxu0 %v2553
  %2576 = vmatprep.subr.mxu0 0.0
  %2577 = vmatpush1.msra.mxu0 %v2554
  %2578 = vmatprep.subr.mxu0 0.0
  %2579 = vmatpush1.msra.mxu0 %v2555
  %2580 = vmatprep.subr.mxu0 0.0
  %2581 = vmatpush1.msra.mxu0 %v2556
  %2582 = vmatprep.subr.mxu0 0.0
  %2583 = vmatpush1.msra.mxu0 %v2557
  %2584 = vmatprep.subr.mxu0 0.0
  %2585 = vmatpush1.msra.mxu0 %v2558
  %2586 = vmatprep.subr.mxu0 0.0
  %2587 = vmatpush1.msra.mxu0 %v2559
  %2588 = vmatprep.subr.mxu0 0.0
  %2589 = vmatpush1.msra.mxu0 %v2560
  %2590 = vmatprep.subr.mxu0 0.0
  %2591 = vmatpush1.msra.mxu0 %v2561
  %2592 = vmatprep.subr.mxu0 0.0
  %2593 = vmatpush1.msra.mxu0 %v2562
  %2594 = vmatprep.subr.mxu0 0.0
  %2595 = vmatpush1.msra.mxu0 %v2563
  %2596 = vmatprep.subr.mxu0 0.0
  %2597 = vmatpush1.msra.mxu0 0.0
  %2598 = vmatprep.subr.mxu0 0.0
  %2599 = vmatpush1.msra.mxu0 0.0
  %2600 = vmatprep.subr.mxu0 0.0
  %2601 = vmatpush1.msra.mxu0 0.0
  %2602 = vmatprep.subr.mxu0 0.0
  %2603 = vmatpush1.msra.mxu0 0.0
  %2604 = vmatprep.subr.mxu0 0.0
  %2605 = vmatpush1.msra.mxu0 0.0
  %2606 = vmatprep.subr.mxu0 0.0
  %2607 = vmatpush1.msra.mxu0 0.0
  %2608 = vmatprep.subr.mxu0 0.0
  %2609 = vmatpush1.msra.mxu0 0.0
  %2610 = vmatprep.subr.mxu0 0.0
  %2611 = vmatpush1.msra.mxu0 0.0
  %2612 = vmatprep.subr.mxu0 0.0
  %2613 = vmatpush1.msra.mxu0 0.0
  %2614 = vmatprep.subr.mxu0 0.0
  %2615 = vmatpush1.msra.mxu0 0.0
  %2616 = vmatprep.subr.mxu0 0.0
  %2617 = vmatpush1.msra.mxu0 0.0
  %2618 = vmatprep.subr.mxu0 0.0
  %2619 = vmatpush1.msra.mxu0 0.0
  %2620 = vmatprep.subr.mxu0 0.0
  %2621 = vmatpush1.msra.mxu0 0.0
  %2622 = vmatprep.subr.mxu0 0.0
  %2623 = vmatpush1.msra.mxu0 0.0
  %2624 = vmatprep.subr.mxu0 0.0
  %2625 = vmatpush1.msra.mxu0 0.0
  %2626 = vmatprep.subr.mxu0 0.0
  %2627 = vmatpush1.msra.mxu0 0.0
  %2628 = vmatprep.mubr.f32.mxu0 0.0
  %2629 = vmatmul.mubr.f32.gmra.mrb[0].mxu0 %v1871
  %v2630 = vpop.f32.mrb[0].mxu0
  %v2631 = vadd.f32 0.0, %v2630
  %v2632 = vpop.f32.mrb[0].mxu0
  %2633 = vmatprep.mubr.f32.mxu0 0.0
  %2634 = vmatmul.mubr.f32.gmra.mrb[0].mxu0 %v1873
  %v2635 = vpop.f32.mrb[0].mxu0
  %v2636 = vadd.f32 0.0, %v2635
  %v2637 = vpop.f32.mrb[0].mxu0
  %2638 = vdwg.mxu0
  %v2639 = vadd.f32 %v2540, %v2631
  %v2640 = vadd.f32 %v2545, %v2636
  %v2641 = vld [vmem:[%s2 + $0x400] sm:$0xff]
  %v2642 = vld [vmem:[%s2 + $0x408] sm:$0xff]
  %v2643 = vld [vmem:[%s2 + $0x410] sm:$0xff]
  %v2644 = vld [vmem:[%s2 + $0x418] sm:$0xff]
  %v2645 = vld [vmem:[%s2 + $0x420] sm:$0xff]
  %v2646 = vld [vmem:[%s2 + $0x428] sm:$0xff]
  %v2647 = vld [vmem:[%s2 + $0x430] sm:$0xff]
  %v2648 = vld [vmem:[%s2 + $0x438] sm:$0xff]
  %v2649 = vld [vmem:[%s2 + $0x440] sm:$0xff]
  %v2650 = vld [vmem:[%s2 + $0x448] sm:$0xff]
  %v2651 = vld [vmem:[%s2 + $0x450] sm:$0xff]
  %v2652 = vld [vmem:[%s2 + $0x458] sm:$0xff]
  %v2653 = vld [vmem:[%s2 + $0x460] sm:$0xff]
  %v2654 = vld [vmem:[%s2 + $0x468] sm:$0xff]
  %v2655 = vld [vmem:[%s2 + $0x470] sm:$0xff]
  %v2656 = vld [vmem:[%s2 + $0x478] sm:$0xff]
  %2657 = vmatprep.subr.mxu0 0.0
  %2658 = vmatpush1.msra.mxu0 %v2641
  %2659 = vmatprep.subr.mxu0 0.0
  %2660 = vmatpush1.msra.mxu0 %v2642
  %2661 = vmatprep.subr.mxu0 0.0
  %2662 = vmatpush1.msra.mxu0 %v2643
  %2663 = vmatprep.subr.mxu0 0.0
  %2664 = vmatpush1.msra.mxu0 %v2644
  %2665 = vmatprep.subr.mxu0 0.0
  %2666 = vmatpush1.msra.mxu0 %v2645
  %2667 = vmatprep.subr.mxu0 0.0
  %2668 = vmatpush1.msra.mxu0 %v2646
  %2669 = vmatprep.subr.mxu0 0.0
  %2670 = vmatpush1.msra.mxu0 %v2647
  %2671 = vmatprep.subr.mxu0 0.0
  %2672 = vmatpush1.msra.mxu0 %v2648
  %2673 = vmatprep.subr.mxu0 0.0
  %2674 = vmatpush1.msra.mxu0 %v2649
  %2675 = vmatprep.subr.mxu0 0.0
  %2676 = vmatpush1.msra.mxu0 %v2650
  %2677 = vmatprep.subr.mxu0 0.0
  %2678 = vmatpush1.msra.mxu0 %v2651
  %2679 = vmatprep.subr.mxu0 0.0
  %2680 = vmatpush1.msra.mxu0 %v2652
  %2681 = vmatprep.subr.mxu0 0.0
  %2682 = vmatpush1.msra.mxu0 %v2653
  %2683 = vmatprep.subr.mxu0 0.0
  %2684 = vmatpush1.msra.mxu0 %v2654
  %2685 = vmatprep.subr.mxu0 0.0
  %2686 = vmatpush1.msra.mxu0 %v2655
  %2687 = vmatprep.subr.mxu0 0.0
  %2688 = vmatpush1.msra.mxu0 %v2656
  %2689 = vmatprep.subr.mxu0 0.0
  %2690 = vmatpush1.msra.mxu0 0.0
  %2691 = vmatprep.subr.mxu0 0.0
  %2692 = vmatpush1.msra.mxu0 0.0
  %2693 = vmatprep.subr.mxu0 0.0
  %2694 = vmatpush1.msra.mxu0 0.0
  %2695 = vmatprep.subr.mxu0 0.0
  %2696 = vmatpush1.msra.mxu0 0.0
  %2697 = vmatprep.subr.mxu0 0.0
  %2698 = vmatpush1.msra.mxu0 0.0
  %2699 = vmatprep.subr.mxu0 0.0
  %2700 = vmatpush1.msra.mxu0 0.0
  %2701 = vmatprep.subr.mxu0 0.0
  %2702 = vmatpush1.msra.mxu0 0.0
  %2703 = vmatprep.subr.mxu0 0.0
  %2704 = vmatpush1.msra.mxu0 0.0
  %2705 = vmatprep.subr.mxu0 0.0
  %2706 = vmatpush1.msra.mxu0 0.0
  %2707 = vmatprep.subr.mxu0 0.0
  %2708 = vmatpush1.msra.mxu0 0.0
  %2709 = vmatprep.subr.mxu0 0.0
  %2710 = vmatpush1.msra.mxu0 0.0
  %2711 = vmatprep.subr.mxu0 0.0
  %2712 = vmatpush1.msra.mxu0 0.0
  %2713 = vmatprep.subr.mxu0 0.0
  %2714 = vmatpush1.msra.mxu0 0.0
  %2715 = vmatprep.subr.mxu0 0.0
  %2716 = vmatpush1.msra.mxu0 0.0
  %2717 = vmatprep.subr.mxu0 0.0
  %2718 = vmatpush1.msra.mxu0 0.0
  %2719 = vmatprep.subr.mxu0 0.0
  %2720 = vmatpush1.msra.mxu0 0.0
  %2721 = vmatprep.mubr.f32.mxu0 0.0
  %2722 = vmatmul.mubr.f32.gmra.mrb[0].mxu0 %v1968
  %v2723 = vpop.f32.mrb[0].mxu0
  %v2724 = vadd.f32 0.0, %v2723
  %v2725 = vpop.f32.mrb[0].mxu0
  %2726 = vmatprep.mubr.f32.mxu0 0.0
  %2727 = vmatmul.mubr.f32.gmra.mrb[0].mxu0 %v1970
  %v2728 = vpop.f32.mrb[0].mxu0
  %v2729 = vadd.f32 0.0, %v2728
  %v2730 = vpop.f32.mrb[0].mxu0
  %2731 = vdwg.mxu0
  %v2732 = vadd.f32 %v2639, %v2724
  %v2733 = vadd.f32 %v2640, %v2729
  %v2734 = vld [vmem:[%s2 + $0x480] sm:$0xff]
  %v2735 = vld [vmem:[%s2 + $0x488] sm:$0xff]
  %v2736 = vld [vmem:[%s2 + $0x490] sm:$0xff]
  %v2737 = vld [vmem:[%s2 + $0x498] sm:$0xff]
  %v2738 = vld [vmem:[%s2 + $0x4a0] sm:$0xff]
  %v2739 = vld [vmem:[%s2 + $0x4a8] sm:$0xff]
  %v2740 = vld [vmem:[%s2 + $0x4b0] sm:$0xff]
  %v2741 = vld [vmem:[%s2 + $0x4b8] sm:$0xff]
  %v2742 = vld [vmem:[%s2 + $0x4c0] sm:$0xff]
  %v2743 = vld [vmem:[%s2 + $0x4c8] sm:$0xff]
  %v2744 = vld [vmem:[%s2 + $0x4d0] sm:$0xff]
  %v2745 = vld [vmem:[%s2 + $0x4d8] sm:$0xff]
  %v2746 = vld [vmem:[%s2 + $0x4e0] sm:$0xff]
  %v2747 = vld [vmem:[%s2 + $0x4e8] sm:$0xff]
  %v2748 = vld [vmem:[%s2 + $0x4f0] sm:$0xff]
  %v2749 = vld [vmem:[%s2 + $0x4f8] sm:$0xff]
  %2750 = vmatprep.subr.mxu0 0.0
  %2751 = vmatpush1.msra.mxu0 %v2734
  %2752 = vmatprep.subr.mxu0 0.0
  %2753 = vmatpush1.msra.mxu0 %v2735
  %2754 = vmatprep.subr.mxu0 0.0
  %2755 = vmatpush1.msra.mxu0 %v2736
  %2756 = vmatprep.subr.mxu0 0.0
  %2757 = vmatpush1.msra.mxu0 %v2737
  %2758 = vmatprep.subr.mxu0 0.0
  %2759 = vmatpush1.msra.mxu0 %v2738
  %2760 = vmatprep.subr.mxu0 0.0
  %2761 = vmatpush1.msra.mxu0 %v2739
  %2762 = vmatprep.subr.mxu0 0.0
  %2763 = vmatpush1.msra.mxu0 %v2740
  %2764 = vmatprep.subr.mxu0 0.0
  %2765 = vmatpush1.msra.mxu0 %v2741
  %2766 = vmatprep.subr.mxu0 0.0
  %2767 = vmatpush1.msra.mxu0 %v2742
  %2768 = vmatprep.subr.mxu0 0.0
  %2769 = vmatpush1.msra.mxu0 %v2743
  %2770 = vmatprep.subr.mxu0 0.0
  %2771 = vmatpush1.msra.mxu0 %v2744
  %2772 = vmatprep.subr.mxu0 0.0
  %2773 = vmatpush1.msra.mxu0 %v2745
  %2774 = vmatprep.subr.mxu0 0.0
  %2775 = vmatpush1.msra.mxu0 %v2746
  %2776 = vmatprep.subr.mxu0 0.0
  %2777 = vmatpush1.msra.mxu0 %v2747
  %2778 = vmatprep.subr.mxu0 0.0
  %2779 = vmatpush1.msra.mxu0 %v2748
  %2780 = vmatprep.subr.mxu0 0.0
  %2781 = vmatpush1.msra.mxu0 %v2749
  %2782 = vmatprep.subr.mxu0 0.0
  %2783 = vmatpush1.msra.mxu0 0.0
  %2784 = vmatprep.subr.mxu0 0.0
  %2785 = vmatpush1.msra.mxu0 0.0
  %2786 = vmatprep.subr.mxu0 0.0
  %2787 = vmatpush1.msra.mxu0 0.0
  %2788 = vmatprep.subr.mxu0 0.0
  %2789 = vmatpush1.msra.mxu0 0.0
  %2790 = vmatprep.subr.mxu0 0.0
  %2791 = vmatpush1.msra.mxu0 0.0
  %2792 = vmatprep.subr.mxu0 0.0
  %2793 = vmatpush1.msra.mxu0 0.0
  %2794 = vmatprep.subr.mxu0 0.0
  %2795 = vmatpush1.msra.mxu0 0.0
  %2796 = vmatprep.subr.mxu0 0.0
  %2797 = vmatpush1.msra.mxu0 0.0
  %2798 = vmatprep.subr.mxu0 0.0
  %2799 = vmatpush1.msra.mxu0 0.0
  %2800 = vmatprep.subr.mxu0 0.0
  %2801 = vmatpush1.msra.mxu0 0.0
  %2802 = vmatprep.subr.mxu0 0.0
  %2803 = vmatpush1.msra.mxu0 0.0
  %2804 = vmatprep.subr.mxu0 0.0
  %2805 = vmatpush1.msra.mxu0 0.0
  %2806 = vmatprep.subr.mxu0 0.0
  %2807 = vmatpush1.msra.mxu0 0.0
  %2808 = vmatprep.subr.mxu0 0.0
  %2809 = vmatpush1.msra.mxu0 0.0
  %2810 = vmatprep.subr.mxu0 0.0
  %2811 = vmatpush1.msra.mxu0 0.0
  %2812 = vmatprep.subr.mxu0 0.0
  %2813 = vmatpush1.msra.mxu0 0.0
  %2814 = vmatprep.mubr.f32.mxu0 0.0
  %2815 = vmatmul.mubr.f32.gmra.mrb[0].mxu0 %v2065
  %v2816 = vpop.f32.mrb[0].mxu0
  %v2817 = vadd.f32 0.0, %v2816
  %v2818 = vpop.f32.mrb[0].mxu0
  %2819 = vmatprep.mubr.f32.mxu0 0.0
  %2820 = vmatmul.mubr.f32.gmra.mrb[0].mxu0 %v2067
  %v2821 = vpop.f32.mrb[0].mxu0
  %v2822 = vadd.f32 0.0, %v2821
  %v2823 = vpop.f32.mrb[0].mxu0
  %2824 = vdwg.mxu0
  %v2825 = vadd.f32 %v2732, %v2817
  %v2826 = vadd.f32 %v2733, %v2822
  %v2827 = vsel %vm152, %v2825, 0.0
  %v2828 = vsel %vm152, %v2826, 0.0
  %v2829 = vadd.f32 %v2827, %v2828
  %v2830 = vrot.slane %v2829, 4
  %v2831 = vadd.f32 %v2829, %v2830
  %v2832 = vrot.slane %v2831, 2
  %v2833 = vadd.f32 %v2831, %v2832
  %v2834 = vrot.slane %v2833, 1
  %v2835 = vadd.f32 %v2833, %v2834
  %v2836 = vmul.f32 %v2825, %v2825
  %v2837 = vmul.f32 %v2826, %v2826
  %v2838 = vsel %vm152, %v2836, 0.0
  %v2839 = vsel %vm152, %v2837, 0.0
  %v2840 = vadd.f32 %v2838, %v2839
  %v2841 = vrot.slane %v2840, 4
  %v2842 = vadd.f32 %v2840, %v2841
  %v2843 = vrot.slane %v2842, 2
  %v2844 = vadd.f32 %v2842, %v2843
  %v2845 = vrot.slane %v2844, 1
  %v2846 = vadd.f32 %v2844, %v2845
  %v2847 = vsel %vm736, %v2835, %v2846
  %v2849 = vsel %vm152, %v2847, 0
  %2851 = vmatprep.subr.mxu0 0.0
  %2852 = vmatpush1.msra.mxu0 %v76
  %2853 = vmatprep.subr.mxu0 0.0
  %2854 = vmatpush1.msra.mxu0 %v77
  %2855 = vmatprep.subr.mxu0 0.0
  %2856 = vmatpush1.msra.mxu0 %v78
  %2857 = vmatprep.subr.mxu0 0.0
  %2858 = vmatpush1.msra.mxu0 %v79
  %2859 = vmatprep.subr.mxu0 0.0
  %2860 = vmatpush1.msra.mxu0 %v80
  %2861 = vmatprep.subr.mxu0 0.0
  %2862 = vmatpush1.msra.mxu0 %v81
  %2863 = vmatprep.subr.mxu0 0.0
  %2864 = vmatpush1.msra.mxu0 %v82
  %2865 = vmatprep.subr.mxu0 0.0
  %2866 = vmatpush1.msra.mxu0 %v83
  %2867 = vmatprep.subr.mxu0 0.0
  %2868 = vmatpush1.msra.mxu0 0.0
  %2869 = vmatprep.subr.mxu0 0.0
  %2870 = vmatpush1.msra.mxu0 0.0
  %2871 = vmatprep.subr.mxu0 0.0
  %2872 = vmatpush1.msra.mxu0 0.0
  %2873 = vmatprep.subr.mxu0 0.0
  %2874 = vmatpush1.msra.mxu0 0.0
  %2875 = vmatprep.subr.mxu0 0.0
  %2876 = vmatpush1.msra.mxu0 0.0
  %2877 = vmatprep.subr.mxu0 0.0
  %2878 = vmatpush1.msra.mxu0 0.0
  %2879 = vmatprep.subr.mxu0 0.0
  %2880 = vmatpush1.msra.mxu0 0.0
  %2881 = vmatprep.subr.mxu0 0.0
  %2882 = vmatpush1.msra.mxu0 0.0
  %2883 = vmatprep.subr.mxu0 0.0
  %2884 = vmatpush1.msra.mxu0 0.0
  %2885 = vmatprep.subr.mxu0 0.0
  %2886 = vmatpush1.msra.mxu0 0.0
  %2887 = vmatprep.subr.mxu0 0.0
  %2888 = vmatpush1.msra.mxu0 0.0
  %2889 = vmatprep.subr.mxu0 0.0
  %2890 = vmatpush1.msra.mxu0 0.0
  %2891 = vmatprep.subr.mxu0 0.0
  %2892 = vmatpush1.msra.mxu0 0.0
  %2893 = vmatprep.subr.mxu0 0.0
  %2894 = vmatpush1.msra.mxu0 0.0
  %2895 = vmatprep.subr.mxu0 0.0
  %2896 = vmatpush1.msra.mxu0 0.0
  %2897 = vmatprep.subr.mxu0 0.0
  %2898 = vmatpush1.msra.mxu0 0.0
  %2899 = vmatprep.subr.mxu0 0.0
  %2900 = vmatpush1.msra.mxu0 0.0
  %2901 = vmatprep.subr.mxu0 0.0
  %2902 = vmatpush1.msra.mxu0 0.0
  %2903 = vmatprep.subr.mxu0 0.0
  %2904 = vmatpush1.msra.mxu0 0.0
  %2905 = vmatprep.subr.mxu0 0.0
  %2906 = vmatpush1.msra.mxu0 0.0
  %2907 = vmatprep.subr.mxu0 0.0
  %2908 = vmatpush1.msra.mxu0 0.0
  %2909 = vmatprep.subr.mxu0 0.0
  %2910 = vmatpush1.msra.mxu0 0.0
  %2911 = vmatprep.subr.mxu0 0.0
  %2912 = vmatpush1.msra.mxu0 0.0
  %2913 = vmatprep.subr.mxu0 0.0
  %2914 = vmatpush1.msra.mxu0 0.0
  %2915 = vmatprep.mubr.f32.mxu0 0.0
  %2916 = vmatmul.mubr.f32.gmra.mrb[0].mxu0 %v2849
  %v2917 = vpop.f32.mrb[0].mxu0
  %v2918 = vadd.f32 0.0, %v2917
  %v2919 = vpop.f32.mrb[0].mxu0
  %2920 = vdwg.mxu0
  %v2921 = vmul.f32 %v2918, 0.0078125
  %v2922 = vmul.f32 %v2921, %v2921
  %v2924 = vrot.slane %v2922, 7
  %v2926 = vsub.f32 %v2921, %v2924
  %v2927 = vld [vmem:[%s5 + $0x6] sm:$0x1]
  %v2928 = vld [vmem:[%s5 + $0x7] sm:$0x1]
  %v2929 = vadd.f32 %v2926, 1e-05
  %v2930 = vrsqrt.pop %v2929
  %v2932 = vrot.slane %v2930, 1
  %v2934 = vmul.f32 %v2927, %v2932
  %v2935 = vmul.f32 %v2921, %v2934
  %v2936 = vsub.f32 %v2928, %v2935
  %v2938 = vrot.slane %v2936, 7
  %v2940 = vsel %vm736, %v2934, %v2938
  %v2942 = vsel %vm828, %v2940, 0
  %2944 = vmatprep.subr.mxu0 0.0
  %2945 = vmatpush1.msra.mxu0 %v92
  %2946 = vmatprep.subr.mxu0 0.0
  %2947 = vmatpush1.msra.mxu0 0.0
  %2948 = vmatprep.subr.mxu0 0.0
  %2949 = vmatpush1.msra.mxu0 0.0
  %2950 = vmatprep.subr.mxu0 0.0
  %2951 = vmatpush1.msra.mxu0 0.0
  %2952 = vmatprep.subr.mxu0 0.0
  %2953 = vmatpush1.msra.mxu0 0.0
  %2954 = vmatprep.subr.mxu0 0.0
  %2955 = vmatpush1.msra.mxu0 0.0
  %2956 = vmatprep.subr.mxu0 0.0
  %2957 = vmatpush1.msra.mxu0 0.0
  %2958 = vmatprep.subr.mxu0 0.0
  %2959 = vmatpush1.msra.mxu0 0.0
  %2960 = vmatprep.subr.mxu0 0.0
  %2961 = vmatpush1.msra.mxu0 0.0
  %2962 = vmatprep.subr.mxu0 0.0
  %2963 = vmatpush1.msra.mxu0 0.0
  %2964 = vmatprep.subr.mxu0 0.0
  %2965 = vmatpush1.msra.mxu0 0.0
  %2966 = vmatprep.subr.mxu0 0.0
  %2967 = vmatpush1.msra.mxu0 0.0
  %2968 = vmatprep.subr.mxu0 0.0
  %2969 = vmatpush1.msra.mxu0 0.0
  %2970 = vmatprep.subr.mxu0 0.0
  %2971 = vmatpush1.msra.mxu0 0.0
  %2972 = vmatprep.subr.mxu0 0.0
  %2973 = vmatpush1.msra.mxu0 0.0
  %2974 = vmatprep.subr.mxu0 0.0
  %2975 = vmatpush1.msra.mxu0 0.0
  %2976 = vmatprep.subr.mxu0 0.0
  %2977 = vmatpush1.msra.mxu0 0.0
  %2978 = vmatprep.subr.mxu0 0.0
  %2979 = vmatpush1.msra.mxu0 0.0
  %2980 = vmatprep.subr.mxu0 0.0
  %2981 = vmatpush1.msra.mxu0 0.0
  %2982 = vmatprep.subr.mxu0 0.0
  %2983 = vmatpush1.msra.mxu0 0.0
  %2984 = vmatprep.subr.mxu0 0.0
  %2985 = vmatpush1.msra.mxu0 0.0
  %2986 = vmatprep.subr.mxu0 0.0
  %2987 = vmatpush1.msra.mxu0 0.0
  %2988 = vmatprep.subr.mxu0 0.0
  %2989 = vmatpush1.msra.mxu0 0.0
  %2990 = vmatprep.subr.mxu0 0.0
  %2991 = vmatpush1.msra.mxu0 0.0
  %2992 = vmatprep.subr.mxu0 0.0
  %2993 = vmatpush1.msra.mxu0 0.0
  %2994 = vmatprep.subr.mxu0 0.0
  %2995 = vmatpush1.msra.mxu0 0.0
  %2996 = vmatprep.subr.mxu0 0.0
  %2997 = vmatpush1.msra.mxu0 0.0
  %2998 = vmatprep.subr.mxu0 0.0
  %2999 = vmatpush1.msra.mxu0 0.0
  %3000 = vmatprep.subr.mxu0 0.0
  %3001 = vmatpush1.msra.mxu0 0.0
  %3002 = vmatprep.subr.mxu0 0.0
  %3003 = vmatpush1.msra.mxu0 0.0
  %3004 = vmatprep.subr.mxu0 0.0
  %3005 = vmatpush1.msra.mxu0 0.0
  %3006 = vmatprep.subr.mxu0 0.0
  %3007 = vmatpush1.msra.mxu0 0.0
  %3008 = vmatprep.mubr.f32.mxu0 0.0
  %3009 = vmatmul.mubr.f32.gmra.mrb[0].mxu0 %v2942
  %v3010 = vpop.f32.mrb[0].mxu0
  %v3011 = vadd.f32 0.0, %v3010
  %v3012 = vpop.f32.mrb[0].mxu0
  %3013 = vdwg.mxu0
  %v3014 = vlaneseq
  %v3015 = vshrl.u32 %v3014, 7
  %v3016 = vsub.s32 0, %v3015
  %v3017 = vrot.slane %v3011, %v3016
  %v3018 = vmul.f32 %v2825, %v3017
  %v3019 = vmul.f32 %v2826, %v3017
  %v3020 = vlaneseq
  %v3021 = vshrl.u32 %v3020, 7
  %v3022 = vsub.s32 1, %v3021
  %v3023 = vrot.slane %v3011, %v3022
  %v3024 = vadd.f32 %v3018, %v3023
  %v3025 = vadd.f32 %v3019, %v3023
  %vm3026 = vcmp.ge.f32.partialorder %v3024, 0.0
  %vm3027 = vcmp.ge.f32.partialorder %v3025, 0.0
  %v3028 = vmul.f32 %v3024, 0.01
  %v3029 = vmul.f32 %v3025, 0.01
  %v3030 = vsel %vm3026, %v3024, %v3028
  %v3031 = vsel %vm3027, %v3025, %v3029
  %3032 = vst.msk [vmem:[#allocation4 + $0x2] sm:$0xff] %vm152, %v3030
  %3033 = vst.msk [vmem:[#allocation4 + $0x12] sm:$0xff] %vm152, %v3031
  %v3034 = vld [vmem:[#allocation4] sm:$0xff]
  %v3035 = vld [vmem:[#allocation4 + $0x10] sm:$0xff]
  %v3036 = vld [vmem:[%s2 + $0x500] sm:$0xff]
  %v3037 = vld [vmem:[%s2 + $0x508] sm:$0xff]
  %v3038 = vld [vmem:[%s2 + $0x510] sm:$0xff]
  %v3039 = vld [vmem:[%s2 + $0x518] sm:$0xff]
  %v3040 = vld [vmem:[%s2 + $0x520] sm:$0xff]
  %v3041 = vld [vmem:[%s2 + $0x528] sm:$0xff]
  %v3042 = vld [vmem:[%s2 + $0x530] sm:$0xff]
  %v3043 = vld [vmem:[%s2 + $0x538] sm:$0xff]
  %v3044 = vld [vmem:[#allocation4 + $0x1] sm:$0xff]
  %v3045 = vld [vmem:[#allocation4 + $0x11] sm:$0xff]
  %v3046 = vld [vmem:[%s2 + $0x540] sm:$0xff]
  %v3047 = vld [vmem:[%s2 + $0x548] sm:$0xff]
  %v3048 = vld [vmem:[%s2 + $0x550] sm:$0xff]
  %v3049 = vld [vmem:[%s2 + $0x558] sm:$0xff]
  %v3050 = vld [vmem:[%s2 + $0x560] sm:$0xff]
  %v3051 = vld [vmem:[%s2 + $0x568] sm:$0xff]
  %v3052 = vld [vmem:[%s2 + $0x570] sm:$0xff]
  %v3053 = vld [vmem:[%s2 + $0x578] sm:$0xff]
  %v3055 = vsel %vm152, %v3044, 0
  %v3058 = vsel %vm152, %v3045, 0
  %3060 = vmatprep.subr.mxu0 0.0
  %3061 = vmatpush1.msra.mxu0 %v3046
  %3062 = vmatprep.subr.mxu0 0.0
  %3063 = vmatpush1.msra.mxu0 %v3047
  %3064 = vmatprep.subr.mxu0 0.0
  %3065 = vmatpush1.msra.mxu0 %v3048
  %3066 = vmatprep.subr.mxu0 0.0
  %3067 = vmatpush1.msra.mxu0 %v3049
  %3068 = vmatprep.subr.mxu0 0.0
  %3069 = vmatpush1.msra.mxu0 %v3050
  %3070 = vmatprep.subr.mxu0 0.0
  %3071 = vmatpush1.msra.mxu0 %v3051
  %3072 = vmatprep.subr.mxu0 0.0
  %3073 = vmatpush1.msra.mxu0 %v3052
  %3074 = vmatprep.subr.mxu0 0.0
  %3075 = vmatpush1.msra.mxu0 %v3053
  %3076 = vmatprep.subr.mxu0 0.0
  %3077 = vmatpush1.msra.mxu0 0.0
  %3078 = vmatprep.subr.mxu0 0.0
  %3079 = vmatpush1.msra.mxu0 0.0
  %3080 = vmatprep.subr.mxu0 0.0
  %3081 = vmatpush1.msra.mxu0 0.0
  %3082 = vmatprep.subr.mxu0 0.0
  %3083 = vmatpush1.msra.mxu0 0.0
  %3084 = vmatprep.subr.mxu0 0.0
  %3085 = vmatpush1.msra.mxu0 0.0
  %3086 = vmatprep.subr.mxu0 0.0
  %3087 = vmatpush1.msra.mxu0 0.0
  %3088 = vmatprep.subr.mxu0 0.0
  %3089 = vmatpush1.msra.mxu0 0.0
  %3090 = vmatprep.subr.mxu0 0.0
  %3091 = vmatpush1.msra.mxu0 0.0
  %3092 = vmatprep.subr.mxu0 0.0
  %3093 = vmatpush1.msra.mxu0 0.0
  %3094 = vmatprep.subr.mxu0 0.0
  %3095 = vmatpush1.msra.mxu0 0.0
  %3096 = vmatprep.subr.mxu0 0.0
  %3097 = vmatpush1.msra.mxu0 0.0
  %3098 = vmatprep.subr.mxu0 0.0
  %3099 = vmatpush1.msra.mxu0 0.0
  %3100 = vmatprep.subr.mxu0 0.0
  %3101 = vmatpush1.msra.mxu0 0.0
  %3102 = vmatprep.subr.mxu0 0.0
  %3103 = vmatpush1.msra.mxu0 0.0
  %3104 = vmatprep.subr.mxu0 0.0
  %3105 = vmatpush1.msra.mxu0 0.0
  %3106 = vmatprep.subr.mxu0 0.0
  %3107 = vmatpush1.msra.mxu0 0.0
  %3108 = vmatprep.subr.mxu0 0.0
  %3109 = vmatpush1.msra.mxu0 0.0
  %3110 = vmatprep.subr.mxu0 0.0
  %3111 = vmatpush1.msra.mxu0 0.0
  %3112 = vmatprep.subr.mxu0 0.0
  %3113 = vmatpush1.msra.mxu0 0.0
  %3114 = vmatprep.subr.mxu0 0.0
  %3115 = vmatpush1.msra.mxu0 0.0
  %3116 = vmatprep.subr.mxu0 0.0
  %3117 = vmatpush1.msra.mxu0 0.0
  %3118 = vmatprep.subr.mxu0 0.0
  %3119 = vmatpush1.msra.mxu0 0.0
  %3120 = vmatprep.subr.mxu0 0.0
  %3121 = vmatpush1.msra.mxu0 0.0
  %3122 = vmatprep.subr.mxu0 0.0
  %3123 = vmatpush1.msra.mxu0 0.0
  %3124 = vmatprep.mubr.f32.mxu0 0.0
  %3125 = vmatmul.mubr.f32.gmra.mrb[0].mxu0 %v3055
  %v3126 = vpop.f32.mrb[0].mxu0
  %v3127 = vadd.f32 0.0, %v3126
  %v3128 = vpop.f32.mrb[0].mxu0
  %3129 = vmatprep.mubr.f32.mxu0 0.0
  %3130 = vmatmul.mubr.f32.gmra.mrb[0].mxu0 %v3058
  %v3131 = vpop.f32.mrb[0].mxu0
  %v3132 = vadd.f32 0.0, %v3131
  %v3133 = vpop.f32.mrb[0].mxu0
  %3134 = vdwg.mxu0
  %v3136 = vsel %vm152, %v3034, 0
  %v3139 = vsel %vm152, %v3035, 0
  %3141 = vmatprep.subr.mxu0 0.0
  %3142 = vmatpush1.msra.mxu0 %v3036
  %3143 = vmatprep.subr.mxu0 0.0
  %3144 = vmatpush1.msra.mxu0 %v3037
  %3145 = vmatprep.subr.mxu0 0.0
  %3146 = vmatpush1.msra.mxu0 %v3038
  %3147 = vmatprep.subr.mxu0 0.0
  %3148 = vmatpush1.msra.mxu0 %v3039
  %3149 = vmatprep.subr.mxu0 0.0
  %3150 = vmatpush1.msra.mxu0 %v3040
  %3151 = vmatprep.subr.mxu0 0.0
  %3152 = vmatpush1.msra.mxu0 %v3041
  %3153 = vmatprep.subr.mxu0 0.0
  %3154 = vmatpush1.msra.mxu0 %v3042
  %3155 = vmatprep.subr.mxu0 0.0
  %3156 = vmatpush1.msra.mxu0 %v3043
  %3157 = vmatprep.subr.mxu0 0.0
  %3158 = vmatpush1.msra.mxu0 0.0
  %3159 = vmatprep.subr.mxu0 0.0
  %3160 = vmatpush1.msra.mxu0 0.0
  %3161 = vmatprep.subr.mxu0 0.0
  %3162 = vmatpush1.msra.mxu0 0.0
  %3163 = vmatprep.subr.mxu0 0.0
  %3164 = vmatpush1.msra.mxu0 0.0
  %3165 = vmatprep.subr.mxu0 0.0
  %3166 = vmatpush1.msra.mxu0 0.0
  %3167 = vmatprep.subr.mxu0 0.0
  %3168 = vmatpush1.msra.mxu0 0.0
  %3169 = vmatprep.subr.mxu0 0.0
  %3170 = vmatpush1.msra.mxu0 0.0
  %3171 = vmatprep.subr.mxu0 0.0
  %3172 = vmatpush1.msra.mxu0 0.0
  %3173 = vmatprep.subr.mxu0 0.0
  %3174 = vmatpush1.msra.mxu0 0.0
  %3175 = vmatprep.subr.mxu0 0.0
  %3176 = vmatpush1.msra.mxu0 0.0
  %3177 = vmatprep.subr.mxu0 0.0
  %3178 = vmatpush1.msra.mxu0 0.0
  %3179 = vmatprep.subr.mxu0 0.0
  %3180 = vmatpush1.msra.mxu0 0.0
  %3181 = vmatprep.subr.mxu0 0.0
  %3182 = vmatpush1.msra.mxu0 0.0
  %3183 = vmatprep.subr.mxu0 0.0
  %3184 = vmatpush1.msra.mxu0 0.0
  %3185 = vmatprep.subr.mxu0 0.0
  %3186 = vmatpush1.msra.mxu0 0.0
  %3187 = vmatprep.subr.mxu0 0.0
  %3188 = vmatpush1.msra.mxu0 0.0
  %3189 = vmatprep.subr.mxu0 0.0
  %3190 = vmatpush1.msra.mxu0 0.0
  %3191 = vmatprep.subr.mxu0 0.0
  %3192 = vmatpush1.msra.mxu0 0.0
  %3193 = vmatprep.subr.mxu0 0.0
  %3194 = vmatpush1.msra.mxu0 0.0
  %3195 = vmatprep.subr.mxu0 0.0
  %3196 = vmatpush1.msra.mxu0 0.0
  %3197 = vmatprep.subr.mxu0 0.0
  %3198 = vmatpush1.msra.mxu0 0.0
  %3199 = vmatprep.subr.mxu0 0.0
  %3200 = vmatpush1.msra.mxu0 0.0
  %3201 = vmatprep.subr.mxu0 0.0
  %3202 = vmatpush1.msra.mxu0 0.0
  %3203 = vmatprep.subr.mxu0 0.0
  %3204 = vmatpush1.msra.mxu0 0.0
  %3205 = vmatprep.mubr.f32.mxu0 0.0
  %3206 = vmatmul.mubr.f32.gmra.mrb[0].mxu0 %v3136
  %v3207 = vpop.f32.mrb[0].mxu0
  %v3208 = vadd.f32 %v3127, %v3207
  %v3209 = vpop.f32.mrb[0].mxu0
  %3210 = vmatprep.mubr.f32.mxu0 0.0
  %3211 = vmatmul.mubr.f32.gmra.mrb[0].mxu0 %v3139
  %v3212 = vpop.f32.mrb[0].mxu0
  %v3213 = vadd.f32 %v3132, %v3212
  %v3214 = vpop.f32.mrb[0].mxu0
  %3215 = vdwg.mxu0
  %v3216 = vld [vmem:[#allocation4 + $0x2] sm:$0xff]
  %v3217 = vld [vmem:[#allocation4 + $0x12] sm:$0xff]
  %v3218 = vld [vmem:[%s2 + $0x580] sm:$0xff]
  %v3219 = vld [vmem:[%s2 + $0x588] sm:$0xff]
  %v3220 = vld [vmem:[%s2 + $0x590] sm:$0xff]
  %v3221 = vld [vmem:[%s2 + $0x598] sm:$0xff]
  %v3222 = vld [vmem:[%s2 + $0x5a0] sm:$0xff]
  %v3223 = vld [vmem:[%s2 + $0x5a8] sm:$0xff]
  %v3224 = vld [vmem:[%s2 + $0x5b0] sm:$0xff]
  %v3225 = vld [vmem:[%s2 + $0x5b8] sm:$0xff]
  %v3227 = vsel %vm152, %v3216, 0
  %v3230 = vsel %vm152, %v3217, 0
  %3232 = vmatprep.subr.mxu0 0.0
  %3233 = vmatpush1.msra.mxu0 %v3218
  %3234 = vmatprep.subr.mxu0 0.0
  %3235 = vmatpush1.msra.mxu0 %v3219
  %3236 = vmatprep.subr.mxu0 0.0
  %3237 = vmatpush1.msra.mxu0 %v3220
  %3238 = vmatprep.subr.mxu0 0.0
  %3239 = vmatpush1.msra.mxu0 %v3221
  %3240 = vmatprep.subr.mxu0 0.0
  %3241 = vmatpush1.msra.mxu0 %v3222
  %3242 = vmatprep.subr.mxu0 0.0
  %3243 = vmatpush1.msra.mxu0 %v3223
  %3244 = vmatprep.subr.mxu0 0.0
  %3245 = vmatpush1.msra.mxu0 %v3224
  %3246 = vmatprep.subr.mxu0 0.0
  %3247 = vmatpush1.msra.mxu0 %v3225
  %3248 = vmatprep.subr.mxu0 0.0
  %3249 = vmatpush1.msra.mxu0 0.0
  %3250 = vmatprep.subr.mxu0 0.0
  %3251 = vmatpush1.msra.mxu0 0.0
  %3252 = vmatprep.subr.mxu0 0.0
  %3253 = vmatpush1.msra.mxu0 0.0
  %3254 = vmatprep.subr.mxu0 0.0
  %3255 = vmatpush1.msra.mxu0 0.0
  %3256 = vmatprep.subr.mxu0 0.0
  %3257 = vmatpush1.msra.mxu0 0.0
  %3258 = vmatprep.subr.mxu0 0.0
  %3259 = vmatpush1.msra.mxu0 0.0
  %3260 = vmatprep.subr.mxu0 0.0
  %3261 = vmatpush1.msra.mxu0 0.0
  %3262 = vmatprep.subr.mxu0 0.0
  %3263 = vmatpush1.msra.mxu0 0.0
  %3264 = vmatprep.subr.mxu0 0.0
  %3265 = vmatpush1.msra.mxu0 0.0
  %3266 = vmatprep.subr.mxu0 0.0
  %3267 = vmatpush1.msra.mxu0 0.0
  %3268 = vmatprep.subr.mxu0 0.0
  %3269 = vmatpush1.msra.mxu0 0.0
  %3270 = vmatprep.subr.mxu0 0.0
  %3271 = vmatpush1.msra.mxu0 0.0
  %3272 = vmatprep.subr.mxu0 0.0
  %3273 = vmatpush1.msra.mxu0 0.0
  %3274 = vmatprep.subr.mxu0 0.0
  %3275 = vmatpush1.msra.mxu0 0.0
  %3276 = vmatprep.subr.mxu0 0.0
  %3277 = vmatpush1.msra.mxu0 0.0
  %3278 = vmatprep.subr.mxu0 0.0
  %3279 = vmatpush1.msra.mxu0 0.0
  %3280 = vmatprep.subr.mxu0 0.0
  %3281 = vmatpush1.msra.mxu0 0.0
  %3282 = vmatprep.subr.mxu0 0.0
  %3283 = vmatpush1.msra.mxu0 0.0
  %3284 = vmatprep.subr.mxu0 0.0
  %3285 = vmatpush1.msra.mxu0 0.0
  %3286 = vmatprep.subr.mxu0 0.0
  %3287 = vmatpush1.msra.mxu0 0.0
  %3288 = vmatprep.subr.mxu0 0.0
  %3289 = vmatpush1.msra.mxu0 0.0
  %3290 = vmatprep.subr.mxu0 0.0
  %3291 = vmatpush1.msra.mxu0 0.0
  %3292 = vmatprep.subr.mxu0 0.0
  %3293 = vmatpush1.msra.mxu0 0.0
  %3294 = vmatprep.subr.mxu0 0.0
  %3295 = vmatpush1.msra.mxu0 0.0
  %3296 = vmatprep.mubr.f32.mxu0 0.0
  %3297 = vmatmul.mubr.f32.gmra.mrb[0].mxu0 %v3227
  %v3298 = vpop.f32.mrb[0].mxu0
  %v3299 = vadd.f32 0.0, %v3298
  %v3300 = vpop.f32.mrb[0].mxu0
  %3301 = vmatprep.mubr.f32.mxu0 0.0
  %3302 = vmatmul.mubr.f32.gmra.mrb[0].mxu0 %v3230
  %v3303 = vpop.f32.mrb[0].mxu0
  %v3304 = vadd.f32 0.0, %v3303
  %v3305 = vpop.f32.mrb[0].mxu0
  %3306 = vdwg.mxu0
  %v3307 = vadd.f32 %v3208, %v3299
  %v3308 = vadd.f32 %v3213, %v3304
  %v3309 = vld [vmem:[#allocation4 + $0x3] sm:$0xff]
  %v3310 = vld [vmem:[#allocation4 + $0x13] sm:$0xff]
  %v3311 = vld [vmem:[%s2 + $0x5c0] sm:$0xff]
  %v3312 = vld [vmem:[%s2 + $0x5c8] sm:$0xff]
  %v3313 = vld [vmem:[%s2 + $0x5d0] sm:$0xff]
  %v3314 = vld [vmem:[%s2 + $0x5d8] sm:$0xff]
  %v3315 = vld [vmem:[%s2 + $0x5e0] sm:$0xff]
  %v3316 = vld [vmem:[%s2 + $0x5e8] sm:$0xff]
  %v3317 = vld [vmem:[%s2 + $0x5f0] sm:$0xff]
  %v3318 = vld [vmem:[%s2 + $0x5f8] sm:$0xff]
  %v3320 = vsel %vm152, %v3309, 0
  %v3323 = vsel %vm152, %v3310, 0
  %3325 = vmatprep.subr.mxu0 0.0
  %3326 = vmatpush1.msra.mxu0 %v3311
  %3327 = vmatprep.subr.mxu0 0.0
  %3328 = vmatpush1.msra.mxu0 %v3312
  %3329 = vmatprep.subr.mxu0 0.0
  %3330 = vmatpush1.msra.mxu0 %v3313
  %3331 = vmatprep.subr.mxu0 0.0
  %3332 = vmatpush1.msra.mxu0 %v3314
  %3333 = vmatprep.subr.mxu0 0.0
  %3334 = vmatpush1.msra.mxu0 %v3315
  %3335 = vmatprep.subr.mxu0 0.0
  %3336 = vmatpush1.msra.mxu0 %v3316
  %3337 = vmatprep.subr.mxu0 0.0
  %3338 = vmatpush1.msra.mxu0 %v3317
  %3339 = vmatprep.subr.mxu0 0.0
  %3340 = vmatpush1.msra.mxu0 %v3318
  %3341 = vmatprep.subr.mxu0 0.0
  %3342 = vmatpush1.msra.mxu0 0.0
  %3343 = vmatprep.subr.mxu0 0.0
  %3344 = vmatpush1.msra.mxu0 0.0
  %3345 = vmatprep.subr.mxu0 0.0
  %3346 = vmatpush1.msra.mxu0 0.0
  %3347 = vmatprep.subr.mxu0 0.0
  %3348 = vmatpush1.msra.mxu0 0.0
  %3349 = vmatprep.subr.mxu0 0.0
  %3350 = vmatpush1.msra.mxu0 0.0
  %3351 = vmatprep.subr.mxu0 0.0
  %3352 = vmatpush1.msra.mxu0 0.0
  %3353 = vmatprep.subr.mxu0 0.0
  %3354 = vmatpush1.msra.mxu0 0.0
  %3355 = vmatprep.subr.mxu0 0.0
  %3356 = vmatpush1.msra.mxu0 0.0
  %3357 = vmatprep.subr.mxu0 0.0
  %3358 = vmatpush1.msra.mxu0 0.0
  %3359 = vmatprep.subr.mxu0 0.0
  %3360 = vmatpush1.msra.mxu0 0.0
  %3361 = vmatprep.subr.mxu0 0.0
  %3362 = vmatpush1.msra.mxu0 0.0
  %3363 = vmatprep.subr.mxu0 0.0
  %3364 = vmatpush1.msra.mxu0 0.0
  %3365 = vmatprep.subr.mxu0 0.0
  %3366 = vmatpush1.msra.mxu0 0.0
  %3367 = vmatprep.subr.mxu0 0.0
  %3368 = vmatpush1.msra.mxu0 0.0
  %3369 = vmatprep.subr.mxu0 0.0
  %3370 = vmatpush1.msra.mxu0 0.0
  %3371 = vmatprep.subr.mxu0 0.0
  %3372 = vmatpush1.msra.mxu0 0.0
  %3373 = vmatprep.subr.mxu0 0.0
  %3374 = vmatpush1.msra.mxu0 0.0
  %3375 = vmatprep.subr.mxu0 0.0
  %3376 = vmatpush1.msra.mxu0 0.0
  %3377 = vmatprep.subr.mxu0 0.0
  %3378 = vmatpush1.msra.mxu0 0.0
  %3379 = vmatprep.subr.mxu0 0.0
  %3380 = vmatpush1.msra.mxu0 0.0
  %3381 = vmatprep.subr.mxu0 0.0
  %3382 = vmatpush1.msra.mxu0 0.0
  %3383 = vmatprep.subr.mxu0 0.0
  %3384 = vmatpush1.msra.mxu0 0.0
  %3385 = vmatprep.subr.mxu0 0.0
  %3386 = vmatpush1.msra.mxu0 0.0
  %3387 = vmatprep.subr.mxu0 0.0
  %3388 = vmatpush1.msra.mxu0 0.0
  %3389 = vmatprep.mubr.f32.mxu0 0.0
  %3390 = vmatmul.mubr.f32.gmra.mrb[0].mxu0 %v3320
  %v3391 = vpop.f32.mrb[0].mxu0
  %v3392 = vadd.f32 0.0, %v3391
  %v3393 = vpop.f32.mrb[0].mxu0
  %3394 = vmatprep.mubr.f32.mxu0 0.0
  %3395 = vmatmul.mubr.f32.gmra.mrb[0].mxu0 %v3323
  %v3396 = vpop.f32.mrb[0].mxu0
  %v3397 = vadd.f32 0.0, %v3396
  %v3398 = vpop.f32.mrb[0].mxu0
  %3399 = vdwg.mxu0
  %v3400 = vadd.f32 %v3307, %v3392
  %v3401 = vadd.f32 %v3308, %v3397
  %v3402 = vld [vmem:[#allocation4 + $0x4] sm:$0xff]
  %v3403 = vld [vmem:[#allocation4 + $0x14] sm:$0xff]
  %v3404 = vld [vmem:[%s2 + $0x600] sm:$0xff]
  %v3405 = vld [vmem:[%s2 + $0x608] sm:$0xff]
  %v3406 = vld [vmem:[%s2 + $0x610] sm:$0xff]
  %v3407 = vld [vmem:[%s2 + $0x618] sm:$0xff]
  %v3408 = vld [vmem:[%s2 + $0x620] sm:$0xff]
  %v3409 = vld [vmem:[%s2 + $0x628] sm:$0xff]
  %v3410 = vld [vmem:[%s2 + $0x630] sm:$0xff]
  %v3411 = vld [vmem:[%s2 + $0x638] sm:$0xff]
  %v3413 = vsel %vm152, %v3402, 0
  %v3416 = vsel %vm152, %v3403, 0
  %3418 = vmatprep.subr.mxu0 0.0
  %3419 = vmatpush1.msra.mxu0 %v3404
  %3420 = vmatprep.subr.mxu0 0.0
  %3421 = vmatpush1.msra.mxu0 %v3405
  %3422 = vmatprep.subr.mxu0 0.0
  %3423 = vmatpush1.msra.mxu0 %v3406
  %3424 = vmatprep.subr.mxu0 0.0
  %3425 = vmatpush1.msra.mxu0 %v3407
  %3426 = vmatprep.subr.mxu0 0.0
  %3427 = vmatpush1.msra.mxu0 %v3408
  %3428 = vmatprep.subr.mxu0 0.0
  %3429 = vmatpush1.msra.mxu0 %v3409
  %3430 = vmatprep.subr.mxu0 0.0
  %3431 = vmatpush1.msra.mxu0 %v3410
  %3432 = vmatprep.subr.mxu0 0.0
  %3433 = vmatpush1.msra.mxu0 %v3411
  %3434 = vmatprep.subr.mxu0 0.0
  %3435 = vmatpush1.msra.mxu0 0.0
  %3436 = vmatprep.subr.mxu0 0.0
  %3437 = vmatpush1.msra.mxu0 0.0
  %3438 = vmatprep.subr.mxu0 0.0
  %3439 = vmatpush1.msra.mxu0 0.0
  %3440 = vmatprep.subr.mxu0 0.0
  %3441 = vmatpush1.msra.mxu0 0.0
  %3442 = vmatprep.subr.mxu0 0.0
  %3443 = vmatpush1.msra.mxu0 0.0
  %3444 = vmatprep.subr.mxu0 0.0
  %3445 = vmatpush1.msra.mxu0 0.0
  %3446 = vmatprep.subr.mxu0 0.0
  %3447 = vmatpush1.msra.mxu0 0.0
  %3448 = vmatprep.subr.mxu0 0.0
  %3449 = vmatpush1.msra.mxu0 0.0
  %3450 = vmatprep.subr.mxu0 0.0
  %3451 = vmatpush1.msra.mxu0 0.0
  %3452 = vmatprep.subr.mxu0 0.0
  %3453 = vmatpush1.msra.mxu0 0.0
  %3454 = vmatprep.subr.mxu0 0.0
  %3455 = vmatpush1.msra.mxu0 0.0
  %3456 = vmatprep.subr.mxu0 0.0
  %3457 = vmatpush1.msra.mxu0 0.0
  %3458 = vmatprep.subr.mxu0 0.0
  %3459 = vmatpush1.msra.mxu0 0.0
  %3460 = vmatprep.subr.mxu0 0.0
  %3461 = vmatpush1.msra.mxu0 0.0
  %3462 = vmatprep.subr.mxu0 0.0
  %3463 = vmatpush1.msra.mxu0 0.0
  %3464 = vmatprep.subr.mxu0 0.0
  %3465 = vmatpush1.msra.mxu0 0.0
  %3466 = vmatprep.subr.mxu0 0.0
  %3467 = vmatpush1.msra.mxu0 0.0
  %3468 = vmatprep.subr.mxu0 0.0
  %3469 = vmatpush1.msra.mxu0 0.0
  %3470 = vmatprep.subr.mxu0 0.0
  %3471 = vmatpush1.msra.mxu0 0.0
  %3472 = vmatprep.subr.mxu0 0.0
  %3473 = vmatpush1.msra.mxu0 0.0
  %3474 = vmatprep.subr.mxu0 0.0
  %3475 = vmatpush1.msra.mxu0 0.0
  %3476 = vmatprep.subr.mxu0 0.0
  %3477 = vmatpush1.msra.mxu0 0.0
  %3478 = vmatprep.subr.mxu0 0.0
  %3479 = vmatpush1.msra.mxu0 0.0
  %3480 = vmatprep.subr.mxu0 0.0
  %3481 = vmatpush1.msra.mxu0 0.0
  %3482 = vmatprep.mubr.f32.mxu0 0.0
  %3483 = vmatmul.mubr.f32.gmra.mrb[0].mxu0 %v3413
  %v3484 = vpop.f32.mrb[0].mxu0
  %v3485 = vadd.f32 0.0, %v3484
  %v3486 = vpop.f32.mrb[0].mxu0
  %3487 = vmatprep.mubr.f32.mxu0 0.0
  %3488 = vmatmul.mubr.f32.gmra.mrb[0].mxu0 %v3416
  %v3489 = vpop.f32.mrb[0].mxu0
  %v3490 = vadd.f32 0.0, %v3489
  %v3491 = vpop.f32.mrb[0].mxu0
  %3492 = vdwg.mxu0
  %v3493 = vadd.f32 %v3400, %v3485
  %v3494 = vadd.f32 %v3401, %v3490
  %v3495 = vsel %vm152, %v3493, 0.0
  %v3496 = vsel %vm152, %v3494, 0.0
  %v3497 = vadd.f32 %v3495, %v3496
  %v3498 = vrot.slane %v3497, 4
  %v3499 = vadd.f32 %v3497, %v3498
  %v3500 = vrot.slane %v3499, 2
  %v3501 = vadd.f32 %v3499, %v3500
  %v3502 = vrot.slane %v3501, 1
  %v3503 = vadd.f32 %v3501, %v3502
  %v3504 = vmul.f32 %v3493, %v3493
  %v3505 = vmul.f32 %v3494, %v3494
  %v3506 = vsel %vm152, %v3504, 0.0
  %v3507 = vsel %vm152, %v3505, 0.0
  %v3508 = vadd.f32 %v3506, %v3507
  %v3509 = vrot.slane %v3508, 4
  %v3510 = vadd.f32 %v3508, %v3509
  %v3511 = vrot.slane %v3510, 2
  %v3512 = vadd.f32 %v3510, %v3511
  %v3513 = vrot.slane %v3512, 1
  %v3514 = vadd.f32 %v3512, %v3513
  %v3515 = vsel %vm736, %v3503, %v3514
  %v3517 = vsel %vm152, %v3515, 0
  %3519 = vmatprep.subr.mxu0 0.0
  %3520 = vmatpush1.msra.mxu0 %v76
  %3521 = vmatprep.subr.mxu0 0.0
  %3522 = vmatpush1.msra.mxu0 %v77
  %3523 = vmatprep.subr.mxu0 0.0
  %3524 = vmatpush1.msra.mxu0 %v78
  %3525 = vmatprep.subr.mxu0 0.0
  %3526 = vmatpush1.msra.mxu0 %v79
  %3527 = vmatprep.subr.mxu0 0.0
  %3528 = vmatpush1.msra.mxu0 %v80
  %3529 = vmatprep.subr.mxu0 0.0
  %3530 = vmatpush1.msra.mxu0 %v81
  %3531 = vmatprep.subr.mxu0 0.0
  %3532 = vmatpush1.msra.mxu0 %v82
  %3533 = vmatprep.subr.mxu0 0.0
  %3534 = vmatpush1.msra.mxu0 %v83
  %3535 = vmatprep.subr.mxu0 0.0
  %3536 = vmatpush1.msra.mxu0 0.0
  %3537 = vmatprep.subr.mxu0 0.0
  %3538 = vmatpush1.msra.mxu0 0.0
  %3539 = vmatprep.subr.mxu0 0.0
  %3540 = vmatpush1.msra.mxu0 0.0
  %3541 = vmatprep.subr.mxu0 0.0
  %3542 = vmatpush1.msra.mxu0 0.0
  %3543 = vmatprep.subr.mxu0 0.0
  %3544 = vmatpush1.msra.mxu0 0.0
  %3545 = vmatprep.subr.mxu0 0.0
  %3546 = vmatpush1.msra.mxu0 0.0
  %3547 = vmatprep.subr.mxu0 0.0
  %3548 = vmatpush1.msra.mxu0 0.0
  %3549 = vmatprep.subr.mxu0 0.0
  %3550 = vmatpush1.msra.mxu0 0.0
  %3551 = vmatprep.subr.mxu0 0.0
  %3552 = vmatpush1.msra.mxu0 0.0
  %3553 = vmatprep.subr.mxu0 0.0
  %3554 = vmatpush1.msra.mxu0 0.0
  %3555 = vmatprep.subr.mxu0 0.0
  %3556 = vmatpush1.msra.mxu0 0.0
  %3557 = vmatprep.subr.mxu0 0.0
  %3558 = vmatpush1.msra.mxu0 0.0
  %3559 = vmatprep.subr.mxu0 0.0
  %3560 = vmatpush1.msra.mxu0 0.0
  %3561 = vmatprep.subr.mxu0 0.0
  %3562 = vmatpush1.msra.mxu0 0.0
  %3563 = vmatprep.subr.mxu0 0.0
  %3564 = vmatpush1.msra.mxu0 0.0
  %3565 = vmatprep.subr.mxu0 0.0
  %3566 = vmatpush1.msra.mxu0 0.0
  %3567 = vmatprep.subr.mxu0 0.0
  %3568 = vmatpush1.msra.mxu0 0.0
  %3569 = vmatprep.subr.mxu0 0.0
  %3570 = vmatpush1.msra.mxu0 0.0
  %3571 = vmatprep.subr.mxu0 0.0
  %3572 = vmatpush1.msra.mxu0 0.0
  %3573 = vmatprep.subr.mxu0 0.0
  %3574 = vmatpush1.msra.mxu0 0.0
  %3575 = vmatprep.subr.mxu0 0.0
  %3576 = vmatpush1.msra.mxu0 0.0
  %3577 = vmatprep.subr.mxu0 0.0
  %3578 = vmatpush1.msra.mxu0 0.0
  %3579 = vmatprep.subr.mxu0 0.0
  %3580 = vmatpush1.msra.mxu0 0.0
  %3581 = vmatprep.subr.mxu0 0.0
  %3582 = vmatpush1.msra.mxu0 0.0
  %3583 = vmatprep.mubr.f32.mxu0 0.0
  %3584 = vmatmul.mubr.f32.gmra.mrb[0].mxu0 %v3517
  %v3585 = vpop.f32.mrb[0].mxu0
  %v3586 = vadd.f32 0.0, %v3585
  %v3587 = vpop.f32.mrb[0].mxu0
  %3588 = vdwg.mxu0
  %v3589 = vmul.f32 %v3586, 0.0078125
  %v3590 = vmul.f32 %v3589, %v3589
  %v3592 = vrot.slane %v3590, 7
  %v3594 = vsub.f32 %v3589, %v3592
  %v3595 = vld [vmem:[%s5 + $0x8] sm:$0x1]
  %v3596 = vld [vmem:[%s5 + $0x9] sm:$0x1]
  %v3597 = vadd.f32 %v3594, 1e-05
  %v3598 = vrsqrt.pop %v3597
  %v3600 = vrot.slane %v3598, 1
  %v3602 = vmul.f32 %v3595, %v3600
  %v3603 = vmul.f32 %v3589, %v3602
  %v3604 = vsub.f32 %v3596, %v3603
  %v3606 = vrot.slane %v3604, 7
  %v3608 = vsel %vm736, %v3602, %v3606
  %v3610 = vsel %vm828, %v3608, 0
  %3612 = vmatprep.subr.mxu0 0.0
  %3613 = vmatpush1.msra.mxu0 %v92
  %3614 = vmatprep.subr.mxu0 0.0
  %3615 = vmatpush1.msra.mxu0 0.0
  %3616 = vmatprep.subr.mxu0 0.0
  %3617 = vmatpush1.msra.mxu0 0.0
  %3618 = vmatprep.subr.mxu0 0.0
  %3619 = vmatpush1.msra.mxu0 0.0
  %3620 = vmatprep.subr.mxu0 0.0
  %3621 = vmatpush1.msra.mxu0 0.0
  %3622 = vmatprep.subr.mxu0 0.0
  %3623 = vmatpush1.msra.mxu0 0.0
  %3624 = vmatprep.subr.mxu0 0.0
  %3625 = vmatpush1.msra.mxu0 0.0
  %3626 = vmatprep.subr.mxu0 0.0
  %3627 = vmatpush1.msra.mxu0 0.0
  %3628 = vmatprep.subr.mxu0 0.0
  %3629 = vmatpush1.msra.mxu0 0.0
  %3630 = vmatprep.subr.mxu0 0.0
  %3631 = vmatpush1.msra.mxu0 0.0
  %3632 = vmatprep.subr.mxu0 0.0
  %3633 = vmatpush1.msra.mxu0 0.0
  %3634 = vmatprep.subr.mxu0 0.0
  %3635 = vmatpush1.msra.mxu0 0.0
  %3636 = vmatprep.subr.mxu0 0.0
  %3637 = vmatpush1.msra.mxu0 0.0
  %3638 = vmatprep.subr.mxu0 0.0
  %3639 = vmatpush1.msra.mxu0 0.0
  %3640 = vmatprep.subr.mxu0 0.0
  %3641 = vmatpush1.msra.mxu0 0.0
  %3642 = vmatprep.subr.mxu0 0.0
  %3643 = vmatpush1.msra.mxu0 0.0
  %3644 = vmatprep.subr.mxu0 0.0
  %3645 = vmatpush1.msra.mxu0 0.0
  %3646 = vmatprep.subr.mxu0 0.0
  %3647 = vmatpush1.msra.mxu0 0.0
  %3648 = vmatprep.subr.mxu0 0.0
  %3649 = vmatpush1.msra.mxu0 0.0
  %3650 = vmatprep.subr.mxu0 0.0
  %3651 = vmatpush1.msra.mxu0 0.0
  %3652 = vmatprep.subr.mxu0 0.0
  %3653 = vmatpush1.msra.mxu0 0.0
  %3654 = vmatprep.subr.mxu0 0.0
  %3655 = vmatpush1.msra.mxu0 0.0
  %3656 = vmatprep.subr.mxu0 0.0
  %3657 = vmatpush1.msra.mxu0 0.0
  %3658 = vmatprep.subr.mxu0 0.0
  %3659 = vmatpush1.msra.mxu0 0.0
  %3660 = vmatprep.subr.mxu0 0.0
  %3661 = vmatpush1.msra.mxu0 0.0
  %3662 = vmatprep.subr.mxu0 0.0
  %3663 = vmatpush1.msra.mxu0 0.0
  %3664 = vmatprep.subr.mxu0 0.0
  %3665 = vmatpush1.msra.mxu0 0.0
  %3666 = vmatprep.subr.mxu0 0.0
  %3667 = vmatpush1.msra.mxu0 0.0
  %3668 = vmatprep.subr.mxu0 0.0
  %3669 = vmatpush1.msra.mxu0 0.0
  %3670 = vmatprep.subr.mxu0 0.0
  %3671 = vmatpush1.msra.mxu0 0.0
  %3672 = vmatprep.subr.mxu0 0.0
  %3673 = vmatpush1.msra.mxu0 0.0
  %3674 = vmatprep.subr.mxu0 0.0
  %3675 = vmatpush1.msra.mxu0 0.0
  %3676 = vmatprep.mubr.f32.mxu0 0.0
  %3677 = vmatmul.mubr.f32.gmra.mrb[0].mxu0 %v3610
  %v3678 = vpop.f32.mrb[0].mxu0
  %v3679 = vadd.f32 0.0, %v3678
  %v3680 = vpop.f32.mrb[0].mxu0
  %3681 = vdwg.mxu0
  %v3682 = vlaneseq
  %v3683 = vshrl.u32 %v3682, 7
  %v3684 = vsub.s32 0, %v3683
  %v3685 = vrot.slane %v3679, %v3684
  %v3686 = vmul.f32 %v3493, %v3685
  %v3687 = vmul.f32 %v3494, %v3685
  %v3688 = vlaneseq
  %v3689 = vshrl.u32 %v3688, 7
  %v3690 = vsub.s32 1, %v3689
  %v3691 = vrot.slane %v3679, %v3690
  %v3692 = vadd.f32 %v3686, %v3691
  %v3693 = vadd.f32 %v3687, %v3691
  %vm3694 = vcmp.ge.f32.partialorder %v3692, 0.0
  %vm3695 = vcmp.ge.f32.partialorder %v3693, 0.0
  %v3696 = vmul.f32 %v3692, 0.01
  %v3697 = vmul.f32 %v3693, 0.01
  %v3698 = vsel %vm3694, %v3692, %v3696
  %v3699 = vsel %vm3695, %v3693, %v3697
  %3700 = vst.msk [vmem:[#allocation4 + $0x2] sm:$0xff] %vm152, %v3698
  %3701 = vst.msk [vmem:[#allocation4 + $0x12] sm:$0xff] %vm152, %v3699
  %v3702 = vld [vmem:[#allocation4] sm:$0xff]
  %v3703 = vld [vmem:[#allocation4 + $0x10] sm:$0xff]
  %v3704 = vld [vmem:[%s2 + $0x640] sm:$0xff]
  %v3705 = vld [vmem:[%s2 + $0x648] sm:$0xff]
  %v3706 = vld [vmem:[%s2 + $0x650] sm:$0xff]
  %v3707 = vld [vmem:[%s2 + $0x658] sm:$0xff]
  %v3708 = vld [vmem:[%s2 + $0x660] sm:$0xff]
  %v3709 = vld [vmem:[%s2 + $0x668] sm:$0xff]
  %v3710 = vld [vmem:[%s2 + $0x670] sm:$0xff]
  %v3711 = vld [vmem:[%s2 + $0x678] sm:$0xff]
  %v3712 = vld [vmem:[#allocation4 + $0x1] sm:$0xff]
  %v3713 = vld [vmem:[#allocation4 + $0x11] sm:$0xff]
  %v3714 = vld [vmem:[%s2 + $0x680] sm:$0xff]
  %v3715 = vld [vmem:[%s2 + $0x688] sm:$0xff]
  %v3716 = vld [vmem:[%s2 + $0x690] sm:$0xff]
  %v3717 = vld [vmem:[%s2 + $0x698] sm:$0xff]
  %v3718 = vld [vmem:[%s2 + $0x6a0] sm:$0xff]
  %v3719 = vld [vmem:[%s2 + $0x6a8] sm:$0xff]
  %v3720 = vld [vmem:[%s2 + $0x6b0] sm:$0xff]
  %v3721 = vld [vmem:[%s2 + $0x6b8] sm:$0xff]
  %v3723 = vsel %vm152, %v3712, 0
  %v3726 = vsel %vm152, %v3713, 0
  %3728 = vmatprep.subr.mxu0 0.0
  %3729 = vmatpush1.msra.mxu0 %v3714
  %3730 = vmatprep.subr.mxu0 0.0
  %3731 = vmatpush1.msra.mxu0 %v3715
  %3732 = vmatprep.subr.mxu0 0.0
  %3733 = vmatpush1.msra.mxu0 %v3716
  %3734 = vmatprep.subr.mxu0 0.0
  %3735 = vmatpush1.msra.mxu0 %v3717
  %3736 = vmatprep.subr.mxu0 0.0
  %3737 = vmatpush1.msra.mxu0 %v3718
  %3738 = vmatprep.subr.mxu0 0.0
  %3739 = vmatpush1.msra.mxu0 %v3719
  %3740 = vmatprep.subr.mxu0 0.0
  %3741 = vmatpush1.msra.mxu0 %v3720
  %3742 = vmatprep.subr.mxu0 0.0
  %3743 = vmatpush1.msra.mxu0 %v3721
  %3744 = vmatprep.subr.mxu0 0.0
  %3745 = vmatpush1.msra.mxu0 0.0
  %3746 = vmatprep.subr.mxu0 0.0
  %3747 = vmatpush1.msra.mxu0 0.0
  %3748 = vmatprep.subr.mxu0 0.0
  %3749 = vmatpush1.msra.mxu0 0.0
  %3750 = vmatprep.subr.mxu0 0.0
  %3751 = vmatpush1.msra.mxu0 0.0
  %3752 = vmatprep.subr.mxu0 0.0
  %3753 = vmatpush1.msra.mxu0 0.0
  %3754 = vmatprep.subr.mxu0 0.0
  %3755 = vmatpush1.msra.mxu0 0.0
  %3756 = vmatprep.subr.mxu0 0.0
  %3757 = vmatpush1.msra.mxu0 0.0
  %3758 = vmatprep.subr.mxu0 0.0
  %3759 = vmatpush1.msra.mxu0 0.0
  %3760 = vmatprep.subr.mxu0 0.0
  %3761 = vmatpush1.msra.mxu0 0.0
  %3762 = vmatprep.subr.mxu0 0.0
  %3763 = vmatpush1.msra.mxu0 0.0
  %3764 = vmatprep.subr.mxu0 0.0
  %3765 = vmatpush1.msra.mxu0 0.0
  %3766 = vmatprep.subr.mxu0 0.0
  %3767 = vmatpush1.msra.mxu0 0.0
  %3768 = vmatprep.subr.mxu0 0.0
  %3769 = vmatpush1.msra.mxu0 0.0
  %3770 = vmatprep.subr.mxu0 0.0
  %3771 = vmatpush1.msra.mxu0 0.0
  %3772 = vmatprep.subr.mxu0 0.0
  %3773 = vmatpush1.msra.mxu0 0.0
  %3774 = vmatprep.subr.mxu0 0.0
  %3775 = vmatpush1.msra.mxu0 0.0
  %3776 = vmatprep.subr.mxu0 0.0
  %3777 = vmatpush1.msra.mxu0 0.0
  %3778 = vmatprep.subr.mxu0 0.0
  %3779 = vmatpush1.msra.mxu0 0.0
  %3780 = vmatprep.subr.mxu0 0.0
  %3781 = vmatpush1.msra.mxu0 0.0
  %3782 = vmatprep.subr.mxu0 0.0
  %3783 = vmatpush1.msra.mxu0 0.0
  %3784 = vmatprep.subr.mxu0 0.0
  %3785 = vmatpush1.msra.mxu0 0.0
  %3786 = vmatprep.subr.mxu0 0.0
  %3787 = vmatpush1.msra.mxu0 0.0
  %3788 = vmatprep.subr.mxu0 0.0
  %3789 = vmatpush1.msra.mxu0 0.0
  %3790 = vmatprep.subr.mxu0 0.0
  %3791 = vmatpush1.msra.mxu0 0.0
  %3792 = vmatprep.mubr.f32.mxu0 0.0
  %3793 = vmatmul.mubr.f32.gmra.mrb[0].mxu0 %v3723
  %v3794 = vpop.f32.mrb[0].mxu0
  %v3795 = vadd.f32 0.0, %v3794
  %v3796 = vpop.f32.mrb[0].mxu0
  %3797 = vmatprep.mubr.f32.mxu0 0.0
  %3798 = vmatmul.mubr.f32.gmra.mrb[0].mxu0 %v3726
  %v3799 = vpop.f32.mrb[0].mxu0
  %v3800 = vadd.f32 0.0, %v3799
  %v3801 = vpop.f32.mrb[0].mxu0
  %3802 = vdwg.mxu0
  %v3804 = vsel %vm152, %v3702, 0
  %v3807 = vsel %vm152, %v3703, 0
  %3809 = vmatprep.subr.mxu0 0.0
  %3810 = vmatpush1.msra.mxu0 %v3704
  %3811 = vmatprep.subr.mxu0 0.0
  %3812 = vmatpush1.msra.mxu0 %v3705
  %3813 = vmatprep.subr.mxu0 0.0
  %3814 = vmatpush1.msra.mxu0 %v3706
  %3815 = vmatprep.subr.mxu0 0.0
  %3816 = vmatpush1.msra.mxu0 %v3707
  %3817 = vmatprep.subr.mxu0 0.0
  %3818 = vmatpush1.msra.mxu0 %v3708
  %3819 = vmatprep.subr.mxu0 0.0
  %3820 = vmatpush1.msra.mxu0 %v3709
  %3821 = vmatprep.subr.mxu0 0.0
  %3822 = vmatpush1.msra.mxu0 %v3710
  %3823 = vmatprep.subr.mxu0 0.0
  %3824 = vmatpush1.msra.mxu0 %v3711
  %3825 = vmatprep.subr.mxu0 0.0
  %3826 = vmatpush1.msra.mxu0 0.0
  %3827 = vmatprep.subr.mxu0 0.0
  %3828 = vmatpush1.msra.mxu0 0.0
  %3829 = vmatprep.subr.mxu0 0.0
  %3830 = vmatpush1.msra.mxu0 0.0
  %3831 = vmatprep.subr.mxu0 0.0
  %3832 = vmatpush1.msra.mxu0 0.0
  %3833 = vmatprep.subr.mxu0 0.0
  %3834 = vmatpush1.msra.mxu0 0.0
  %3835 = vmatprep.subr.mxu0 0.0
  %3836 = vmatpush1.msra.mxu0 0.0
  %3837 = vmatprep.subr.mxu0 0.0
  %3838 = vmatpush1.msra.mxu0 0.0
  %3839 = vmatprep.subr.mxu0 0.0
  %3840 = vmatpush1.msra.mxu0 0.0
  %3841 = vmatprep.subr.mxu0 0.0
  %3842 = vmatpush1.msra.mxu0 0.0
  %3843 = vmatprep.subr.mxu0 0.0
  %3844 = vmatpush1.msra.mxu0 0.0
  %3845 = vmatprep.subr.mxu0 0.0
  %3846 = vmatpush1.msra.mxu0 0.0
  %3847 = vmatprep.subr.mxu0 0.0
  %3848 = vmatpush1.msra.mxu0 0.0
  %3849 = vmatprep.subr.mxu0 0.0
  %3850 = vmatpush1.msra.mxu0 0.0
  %3851 = vmatprep.subr.mxu0 0.0
  %3852 = vmatpush1.msra.mxu0 0.0
  %3853 = vmatprep.subr.mxu0 0.0
  %3854 = vmatpush1.msra.mxu0 0.0
  %3855 = vmatprep.subr.mxu0 0.0
  %3856 = vmatpush1.msra.mxu0 0.0
  %3857 = vmatprep.subr.mxu0 0.0
  %3858 = vmatpush1.msra.mxu0 0.0
  %3859 = vmatprep.subr.mxu0 0.0
  %3860 = vmatpush1.msra.mxu0 0.0
  %3861 = vmatprep.subr.mxu0 0.0
  %3862 = vmatpush1.msra.mxu0 0.0
  %3863 = vmatprep.subr.mxu0 0.0
  %3864 = vmatpush1.msra.mxu0 0.0
  %3865 = vmatprep.subr.mxu0 0.0
  %3866 = vmatpush1.msra.mxu0 0.0
  %3867 = vmatprep.subr.mxu0 0.0
  %3868 = vmatpush1.msra.mxu0 0.0
  %3869 = vmatprep.subr.mxu0 0.0
  %3870 = vmatpush1.msra.mxu0 0.0
  %3871 = vmatprep.subr.mxu0 0.0
  %3872 = vmatpush1.msra.mxu0 0.0
  %3873 = vmatprep.mubr.f32.mxu0 0.0
  %3874 = vmatmul.mubr.f32.gmra.mrb[0].mxu0 %v3804
  %v3875 = vpop.f32.mrb[0].mxu0
  %v3876 = vadd.f32 %v3795, %v3875
  %v3877 = vpop.f32.mrb[0].mxu0
  %3878 = vmatprep.mubr.f32.mxu0 0.0
  %3879 = vmatmul.mubr.f32.gmra.mrb[0].mxu0 %v3807
  %v3880 = vpop.f32.mrb[0].mxu0
  %v3881 = vadd.f32 %v3800, %v3880
  %v3882 = vpop.f32.mrb[0].mxu0
  %3883 = vdwg.mxu0
  %v3884 = vld [vmem:[#allocation4 + $0x2] sm:$0xff]
  %v3885 = vld [vmem:[#allocation4 + $0x12] sm:$0xff]
  %v3886 = vld [vmem:[%s2 + $0x6c0] sm:$0xff]
  %v3887 = vld [vmem:[%s2 + $0x6c8] sm:$0xff]
  %v3888 = vld [vmem:[%s2 + $0x6d0] sm:$0xff]
  %v3889 = vld [vmem:[%s2 + $0x6d8] sm:$0xff]
  %v3890 = vld [vmem:[%s2 + $0x6e0] sm:$0xff]
  %v3891 = vld [vmem:[%s2 + $0x6e8] sm:$0xff]
  %v3892 = vld [vmem:[%s2 + $0x6f0] sm:$0xff]
  %v3893 = vld [vmem:[%s2 + $0x6f8] sm:$0xff]
  %v3895 = vsel %vm152, %v3884, 0
  %v3898 = vsel %vm152, %v3885, 0
  %3900 = vmatprep.subr.mxu0 0.0
  %3901 = vmatpush1.msra.mxu0 %v3886
  %3902 = vmatprep.subr.mxu0 0.0
  %3903 = vmatpush1.msra.mxu0 %v3887
  %3904 = vmatprep.subr.mxu0 0.0
  %3905 = vmatpush1.msra.mxu0 %v3888
  %3906 = vmatprep.subr.mxu0 0.0
  %3907 = vmatpush1.msra.mxu0 %v3889
  %3908 = vmatprep.subr.mxu0 0.0
  %3909 = vmatpush1.msra.mxu0 %v3890
  %3910 = vmatprep.subr.mxu0 0.0
  %3911 = vmatpush1.msra.mxu0 %v3891
  %3912 = vmatprep.subr.mxu0 0.0
  %3913 = vmatpush1.msra.mxu0 %v3892
  %3914 = vmatprep.subr.mxu0 0.0
  %3915 = vmatpush1.msra.mxu0 %v3893
  %3916 = vmatprep.subr.mxu0 0.0
  %3917 = vmatpush1.msra.mxu0 0.0
  %3918 = vmatprep.subr.mxu0 0.0
  %3919 = vmatpush1.msra.mxu0 0.0
  %3920 = vmatprep.subr.mxu0 0.0
  %3921 = vmatpush1.msra.mxu0 0.0
  %3922 = vmatprep.subr.mxu0 0.0
  %3923 = vmatpush1.msra.mxu0 0.0
  %3924 = vmatprep.subr.mxu0 0.0
  %3925 = vmatpush1.msra.mxu0 0.0
  %3926 = vmatprep.subr.mxu0 0.0
  %3927 = vmatpush1.msra.mxu0 0.0
  %3928 = vmatprep.subr.mxu0 0.0
  %3929 = vmatpush1.msra.mxu0 0.0
  %3930 = vmatprep.subr.mxu0 0.0
  %3931 = vmatpush1.msra.mxu0 0.0
  %3932 = vmatprep.subr.mxu0 0.0
  %3933 = vmatpush1.msra.mxu0 0.0
  %3934 = vmatprep.subr.mxu0 0.0
  %3935 = vmatpush1.msra.mxu0 0.0
  %3936 = vmatprep.subr.mxu0 0.0
  %3937 = vmatpush1.msra.mxu0 0.0
  %3938 = vmatprep.subr.mxu0 0.0
  %3939 = vmatpush1.msra.mxu0 0.0
  %3940 = vmatprep.subr.mxu0 0.0
  %3941 = vmatpush1.msra.mxu0 0.0
  %3942 = vmatprep.subr.mxu0 0.0
  %3943 = vmatpush1.msra.mxu0 0.0
  %3944 = vmatprep.subr.mxu0 0.0
  %3945 = vmatpush1.msra.mxu0 0.0
  %3946 = vmatprep.subr.mxu0 0.0
  %3947 = vmatpush1.msra.mxu0 0.0
  %3948 = vmatprep.subr.mxu0 0.0
  %3949 = vmatpush1.msra.mxu0 0.0
  %3950 = vmatprep.subr.mxu0 0.0
  %3951 = vmatpush1.msra.mxu0 0.0
  %3952 = vmatprep.subr.mxu0 0.0
  %3953 = vmatpush1.msra.mxu0 0.0
  %3954 = vmatprep.subr.mxu0 0.0
  %3955 = vmatpush1.msra.mxu0 0.0
  %3956 = vmatprep.subr.mxu0 0.0
  %3957 = vmatpush1.msra.mxu0 0.0
  %3958 = vmatprep.subr.mxu0 0.0
  %3959 = vmatpush1.msra.mxu0 0.0
  %3960 = vmatprep.subr.mxu0 0.0
  %3961 = vmatpush1.msra.mxu0 0.0
  %3962 = vmatprep.subr.mxu0 0.0
  %3963 = vmatpush1.msra.mxu0 0.0
  %3964 = vmatprep.mubr.f32.mxu0 0.0
  %3965 = vmatmul.mubr.f32.gmra.mrb[0].mxu0 %v3895
  %v3966 = vpop.f32.mrb[0].mxu0
  %v3967 = vadd.f32 0.0, %v3966
  %v3968 = vpop.f32.mrb[0].mxu0
  %3969 = vmatprep.mubr.f32.mxu0 0.0
  %3970 = vmatmul.mubr.f32.gmra.mrb[0].mxu0 %v3898
  %v3971 = vpop.f32.mrb[0].mxu0
  %v3972 = vadd.f32 0.0, %v3971
  %v3973 = vpop.f32.mrb[0].mxu0
  %3974 = vdwg.mxu0
  %v3975 = vadd.f32 %v3876, %v3967
  %v3976 = vadd.f32 %v3881, %v3972
  %v3977 = vld [vmem:[#allocation4 + $0x3] sm:$0xff]
  %v3978 = vld [vmem:[#allocation4 + $0x13] sm:$0xff]
  %v3979 = vld [vmem:[%s2 + $0x700] sm:$0xff]
  %v3980 = vld [vmem:[%s2 + $0x708] sm:$0xff]
  %v3981 = vld [vmem:[%s2 + $0x710] sm:$0xff]
  %v3982 = vld [vmem:[%s2 + $0x718] sm:$0xff]
  %v3983 = vld [vmem:[%s2 + $0x720] sm:$0xff]
  %v3984 = vld [vmem:[%s2 + $0x728] sm:$0xff]
  %v3985 = vld [vmem:[%s2 + $0x730] sm:$0xff]
  %v3986 = vld [vmem:[%s2 + $0x738] sm:$0xff]
  %v3988 = vsel %vm152, %v3977, 0
  %v3991 = vsel %vm152, %v3978, 0
  %3993 = vmatprep.subr.mxu0 0.0
  %3994 = vmatpush1.msra.mxu0 %v3979
  %3995 = vmatprep.subr.mxu0 0.0
  %3996 = vmatpush1.msra.mxu0 %v3980
  %3997 = vmatprep.subr.mxu0 0.0
  %3998 = vmatpush1.msra.mxu0 %v3981
  %3999 = vmatprep.subr.mxu0 0.0
  %4000 = vmatpush1.msra.mxu0 %v3982
  %4001 = vmatprep.subr.mxu0 0.0
  %4002 = vmatpush1.msra.mxu0 %v3983
  %4003 = vmatprep.subr.mxu0 0.0
  %4004 = vmatpush1.msra.mxu0 %v3984
  %4005 = vmatprep.subr.mxu0 0.0
  %4006 = vmatpush1.msra.mxu0 %v3985
  %4007 = vmatprep.subr.mxu0 0.0
  %4008 = vmatpush1.msra.mxu0 %v3986
  %4009 = vmatprep.subr.mxu0 0.0
  %4010 = vmatpush1.msra.mxu0 0.0
  %4011 = vmatprep.subr.mxu0 0.0
  %4012 = vmatpush1.msra.mxu0 0.0
  %4013 = vmatprep.subr.mxu0 0.0
  %4014 = vmatpush1.msra.mxu0 0.0
  %4015 = vmatprep.subr.mxu0 0.0
  %4016 = vmatpush1.msra.mxu0 0.0
  %4017 = vmatprep.subr.mxu0 0.0
  %4018 = vmatpush1.msra.mxu0 0.0
  %4019 = vmatprep.subr.mxu0 0.0
  %4020 = vmatpush1.msra.mxu0 0.0
  %4021 = vmatprep.subr.mxu0 0.0
  %4022 = vmatpush1.msra.mxu0 0.0
  %4023 = vmatprep.subr.mxu0 0.0
  %4024 = vmatpush1.msra.mxu0 0.0
  %4025 = vmatprep.subr.mxu0 0.0
  %4026 = vmatpush1.msra.mxu0 0.0
  %4027 = vmatprep.subr.mxu0 0.0
  %4028 = vmatpush1.msra.mxu0 0.0
  %4029 = vmatprep.subr.mxu0 0.0
  %4030 = vmatpush1.msra.mxu0 0.0
  %4031 = vmatprep.subr.mxu0 0.0
  %4032 = vmatpush1.msra.mxu0 0.0
  %4033 = vmatprep.subr.mxu0 0.0
  %4034 = vmatpush1.msra.mxu0 0.0
  %4035 = vmatprep.subr.mxu0 0.0
  %4036 = vmatpush1.msra.mxu0 0.0
  %4037 = vmatprep.subr.mxu0 0.0
  %4038 = vmatpush1.msra.mxu0 0.0
  %4039 = vmatprep.subr.mxu0 0.0
  %4040 = vmatpush1.msra.mxu0 0.0
  %4041 = vmatprep.subr.mxu0 0.0
  %4042 = vmatpush1.msra.mxu0 0.0
  %4043 = vmatprep.subr.mxu0 0.0
  %4044 = vmatpush1.msra.mxu0 0.0
  %4045 = vmatprep.subr.mxu0 0.0
  %4046 = vmatpush1.msra.mxu0 0.0
  %4047 = vmatprep.subr.mxu0 0.0
  %4048 = vmatpush1.msra.mxu0 0.0
  %4049 = vmatprep.subr.mxu0 0.0
  %4050 = vmatpush1.msra.mxu0 0.0
  %4051 = vmatprep.subr.mxu0 0.0
  %4052 = vmatpush1.msra.mxu0 0.0
  %4053 = vmatprep.subr.mxu0 0.0
  %4054 = vmatpush1.msra.mxu0 0.0
  %4055 = vmatprep.subr.mxu0 0.0
  %4056 = vmatpush1.msra.mxu0 0.0
  %4057 = vmatprep.mubr.f32.mxu0 0.0
  %4058 = vmatmul.mubr.f32.gmra.mrb[0].mxu0 %v3988
  %v4059 = vpop.f32.mrb[0].mxu0
  %v4060 = vadd.f32 0.0, %v4059
  %v4061 = vpop.f32.mrb[0].mxu0
  %4062 = vmatprep.mubr.f32.mxu0 0.0
  %4063 = vmatmul.mubr.f32.gmra.mrb[0].mxu0 %v3991
  %v4064 = vpop.f32.mrb[0].mxu0
  %v4065 = vadd.f32 0.0, %v4064
  %v4066 = vpop.f32.mrb[0].mxu0
  %4067 = vdwg.mxu0
  %v4068 = vadd.f32 %v3975, %v4060
  %v4069 = vadd.f32 %v3976, %v4065
  %v4070 = vld [vmem:[#allocation4 + $0x4] sm:$0xff]
  %v4071 = vld [vmem:[#allocation4 + $0x14] sm:$0xff]
  %v4072 = vld [vmem:[%s2 + $0x740] sm:$0xff]
  %v4073 = vld [vmem:[%s2 + $0x748] sm:$0xff]
  %v4074 = vld [vmem:[%s2 + $0x750] sm:$0xff]
  %v4075 = vld [vmem:[%s2 + $0x758] sm:$0xff]
  %v4076 = vld [vmem:[%s2 + $0x760] sm:$0xff]
  %v4077 = vld [vmem:[%s2 + $0x768] sm:$0xff]
  %v4078 = vld [vmem:[%s2 + $0x770] sm:$0xff]
  %v4079 = vld [vmem:[%s2 + $0x778] sm:$0xff]
  %v4081 = vsel %vm152, %v4070, 0
  %v4084 = vsel %vm152, %v4071, 0
  %4086 = vmatprep.subr.mxu0 0.0
  %4087 = vmatpush1.msra.mxu0 %v4072
  %4088 = vmatprep.subr.mxu0 0.0
  %4089 = vmatpush1.msra.mxu0 %v4073
  %4090 = vmatprep.subr.mxu0 0.0
  %4091 = vmatpush1.msra.mxu0 %v4074
  %4092 = vmatprep.subr.mxu0 0.0
  %4093 = vmatpush1.msra.mxu0 %v4075
  %4094 = vmatprep.subr.mxu0 0.0
  %4095 = vmatpush1.msra.mxu0 %v4076
  %4096 = vmatprep.subr.mxu0 0.0
  %4097 = vmatpush1.msra.mxu0 %v4077
  %4098 = vmatprep.subr.mxu0 0.0
  %4099 = vmatpush1.msra.mxu0 %v4078
  %4100 = vmatprep.subr.mxu0 0.0
  %4101 = vmatpush1.msra.mxu0 %v4079
  %4102 = vmatprep.subr.mxu0 0.0
  %4103 = vmatpush1.msra.mxu0 0.0
  %4104 = vmatprep.subr.mxu0 0.0
  %4105 = vmatpush1.msra.mxu0 0.0
  %4106 = vmatprep.subr.mxu0 0.0
  %4107 = vmatpush1.msra.mxu0 0.0
  %4108 = vmatprep.subr.mxu0 0.0
  %4109 = vmatpush1.msra.mxu0 0.0
  %4110 = vmatprep.subr.mxu0 0.0
  %4111 = vmatpush1.msra.mxu0 0.0
  %4112 = vmatprep.subr.mxu0 0.0
  %4113 = vmatpush1.msra.mxu0 0.0
  %4114 = vmatprep.subr.mxu0 0.0
  %4115 = vmatpush1.msra.mxu0 0.0
  %4116 = vmatprep.subr.mxu0 0.0
  %4117 = vmatpush1.msra.mxu0 0.0
  %4118 = vmatprep.subr.mxu0 0.0
  %4119 = vmatpush1.msra.mxu0 0.0
  %4120 = vmatprep.subr.mxu0 0.0
  %4121 = vmatpush1.msra.mxu0 0.0
  %4122 = vmatprep.subr.mxu0 0.0
  %4123 = vmatpush1.msra.mxu0 0.0
  %4124 = vmatprep.subr.mxu0 0.0
  %4125 = vmatpush1.msra.mxu0 0.0
  %4126 = vmatprep.subr.mxu0 0.0
  %4127 = vmatpush1.msra.mxu0 0.0
  %4128 = vmatprep.subr.mxu0 0.0
  %4129 = vmatpush1.msra.mxu0 0.0
  %4130 = vmatprep.subr.mxu0 0.0
  %4131 = vmatpush1.msra.mxu0 0.0
  %4132 = vmatprep.subr.mxu0 0.0
  %4133 = vmatpush1.msra.mxu0 0.0
  %4134 = vmatprep.subr.mxu0 0.0
  %4135 = vmatpush1.msra.mxu0 0.0
  %4136 = vmatprep.subr.mxu0 0.0
  %4137 = vmatpush1.msra.mxu0 0.0
  %4138 = vmatprep.subr.mxu0 0.0
  %4139 = vmatpush1.msra.mxu0 0.0
  %4140 = vmatprep.subr.mxu0 0.0
  %4141 = vmatpush1.msra.mxu0 0.0
  %4142 = vmatprep.subr.mxu0 0.0
  %4143 = vmatpush1.msra.mxu0 0.0
  %4144 = vmatprep.subr.mxu0 0.0
  %4145 = vmatpush1.msra.mxu0 0.0
  %4146 = vmatprep.subr.mxu0 0.0
  %4147 = vmatpush1.msra.mxu0 0.0
  %4148 = vmatprep.subr.mxu0 0.0
  %4149 = vmatpush1.msra.mxu0 0.0
  %4150 = vmatprep.mubr.f32.mxu0 0.0
  %4151 = vmatmul.mubr.f32.gmra.mrb[0].mxu0 %v4081
  %v4152 = vpop.f32.mrb[0].mxu0
  %v4153 = vadd.f32 0.0, %v4152
  %v4154 = vpop.f32.mrb[0].mxu0
  %4155 = vmatprep.mubr.f32.mxu0 0.0
  %4156 = vmatmul.mubr.f32.gmra.mrb[0].mxu0 %v4084
  %v4157 = vpop.f32.mrb[0].mxu0
  %v4158 = vadd.f32 0.0, %v4157
  %v4159 = vpop.f32.mrb[0].mxu0
  %4160 = vdwg.mxu0
  %v4161 = vadd.f32 %v4068, %v4153
  %v4162 = vadd.f32 %v4069, %v4158
  %v4163 = vsel %vm152, %v4161, 0.0
  %v4164 = vsel %vm152, %v4162, 0.0
  %v4165 = vadd.f32 %v4163, %v4164
  %v4166 = vrot.slane %v4165, 4
  %v4167 = vadd.f32 %v4165, %v4166
  %v4168 = vrot.slane %v4167, 2
  %v4169 = vadd.f32 %v4167, %v4168
  %v4170 = vrot.slane %v4169, 1
  %v4171 = vadd.f32 %v4169, %v4170
  %v4172 = vmul.f32 %v4161, %v4161
  %v4173 = vmul.f32 %v4162, %v4162
  %v4174 = vsel %vm152, %v4172, 0.0
  %v4175 = vsel %vm152, %v4173, 0.0
  %v4176 = vadd.f32 %v4174, %v4175
  %v4177 = vrot.slane %v4176, 4
  %v4178 = vadd.f32 %v4176, %v4177
  %v4179 = vrot.slane %v4178, 2
  %v4180 = vadd.f32 %v4178, %v4179
  %v4181 = vrot.slane %v4180, 1
  %v4182 = vadd.f32 %v4180, %v4181
  %v4183 = vsel %vm736, %v4171, %v4182
  %v4185 = vsel %vm152, %v4183, 0
  %4187 = vmatprep.subr.mxu0 0.0
  %4188 = vmatpush1.msra.mxu0 %v76
  %4189 = vmatprep.subr.mxu0 0.0
  %4190 = vmatpush1.msra.mxu0 %v77
  %4191 = vmatprep.subr.mxu0 0.0
  %4192 = vmatpush1.msra.mxu0 %v78
  %4193 = vmatprep.subr.mxu0 0.0
  %4194 = vmatpush1.msra.mxu0 %v79
  %4195 = vmatprep.subr.mxu0 0.0
  %4196 = vmatpush1.msra.mxu0 %v80
  %4197 = vmatprep.subr.mxu0 0.0
  %4198 = vmatpush1.msra.mxu0 %v81
  %4199 = vmatprep.subr.mxu0 0.0
  %4200 = vmatpush1.msra.mxu0 %v82
  %4201 = vmatprep.subr.mxu0 0.0
  %4202 = vmatpush1.msra.mxu0 %v83
  %4203 = vmatprep.subr.mxu0 0.0
  %4204 = vmatpush1.msra.mxu0 0.0
  %4205 = vmatprep.subr.mxu0 0.0
  %4206 = vmatpush1.msra.mxu0 0.0
  %4207 = vmatprep.subr.mxu0 0.0
  %4208 = vmatpush1.msra.mxu0 0.0
  %4209 = vmatprep.subr.mxu0 0.0
  %4210 = vmatpush1.msra.mxu0 0.0
  %4211 = vmatprep.subr.mxu0 0.0
  %4212 = vmatpush1.msra.mxu0 0.0
  %4213 = vmatprep.subr.mxu0 0.0
  %4214 = vmatpush1.msra.mxu0 0.0
  %4215 = vmatprep.subr.mxu0 0.0
  %4216 = vmatpush1.msra.mxu0 0.0
  %4217 = vmatprep.subr.mxu0 0.0
  %4218 = vmatpush1.msra.mxu0 0.0
  %4219 = vmatprep.subr.mxu0 0.0
  %4220 = vmatpush1.msra.mxu0 0.0
  %4221 = vmatprep.subr.mxu0 0.0
  %4222 = vmatpush1.msra.mxu0 0.0
  %4223 = vmatprep.subr.mxu0 0.0
  %4224 = vmatpush1.msra.mxu0 0.0
  %4225 = vmatprep.subr.mxu0 0.0
  %4226 = vmatpush1.msra.mxu0 0.0
  %4227 = vmatprep.subr.mxu0 0.0
  %4228 = vmatpush1.msra.mxu0 0.0
  %4229 = vmatprep.subr.mxu0 0.0
  %4230 = vmatpush1.msra.mxu0 0.0
  %4231 = vmatprep.subr.mxu0 0.0
  %4232 = vmatpush1.msra.mxu0 0.0
  %4233 = vmatprep.subr.mxu0 0.0
  %4234 = vmatpush1.msra.mxu0 0.0
  %4235 = vmatprep.subr.mxu0 0.0
  %4236 = vmatpush1.msra.mxu0 0.0
  %4237 = vmatprep.subr.mxu0 0.0
  %4238 = vmatpush1.msra.mxu0 0.0
  %4239 = vmatprep.subr.mxu0 0.0
  %4240 = vmatpush1.msra.mxu0 0.0
  %4241 = vmatprep.subr.mxu0 0.0
  %4242 = vmatpush1.msra.mxu0 0.0
  %4243 = vmatprep.subr.mxu0 0.0
  %4244 = vmatpush1.msra.mxu0 0.0
  %4245 = vmatprep.subr.mxu0 0.0
  %4246 = vmatpush1.msra.mxu0 0.0
  %4247 = vmatprep.subr.mxu0 0.0
  %4248 = vmatpush1.msra.mxu0 0.0
  %4249 = vmatprep.subr.mxu0 0.0
  %4250 = vmatpush1.msra.mxu0 0.0
  %4251 = vmatprep.mubr.f32.mxu0 0.0
  %4252 = vmatmul.mubr.f32.gmra.mrb[0].mxu0 %v4185
  %v4253 = vpop.f32.mrb[0].mxu0
  %v4254 = vadd.f32 0.0, %v4253
  %v4255 = vpop.f32.mrb[0].mxu0
  %4256 = vdwg.mxu0
  %v4257 = vmul.f32 %v4254, 0.0078125
  %v4258 = vmul.f32 %v4257, %v4257
  %v4260 = vrot.slane %v4258, 7
  %v4262 = vsub.f32 %v4257, %v4260
  %v4263 = vld [vmem:[%s5 + $0xa] sm:$0x1]
  %v4264 = vld [vmem:[%s5 + $0xb] sm:$0x1]
  %v4265 = vadd.f32 %v4262, 1e-05
  %v4266 = vrsqrt.pop %v4265
  %v4268 = vrot.slane %v4266, 1
  %v4270 = vmul.f32 %v4263, %v4268
  %v4271 = vmul.f32 %v4257, %v4270
  %v4272 = vsub.f32 %v4264, %v4271
  %v4274 = vrot.slane %v4272, 7
  %v4276 = vsel %vm736, %v4270, %v4274
  %v4278 = vsel %vm828, %v4276, 0
  %4280 = vmatprep.subr.mxu0 0.0
  %4281 = vmatpush1.msra.mxu0 %v92
  %4282 = vmatprep.subr.mxu0 0.0
  %4283 = vmatpush1.msra.mxu0 0.0
  %4284 = vmatprep.subr.mxu0 0.0
  %4285 = vmatpush1.msra.mxu0 0.0
  %4286 = vmatprep.subr.mxu0 0.0
  %4287 = vmatpush1.msra.mxu0 0.0
  %4288 = vmatprep.subr.mxu0 0.0
  %4289 = vmatpush1.msra.mxu0 0.0
  %4290 = vmatprep.subr.mxu0 0.0
  %4291 = vmatpush1.msra.mxu0 0.0
  %4292 = vmatprep.subr.mxu0 0.0
  %4293 = vmatpush1.msra.mxu0 0.0
  %4294 = vmatprep.subr.mxu0 0.0
  %4295 = vmatpush1.msra.mxu0 0.0
  %4296 = vmatprep.subr.mxu0 0.0
  %4297 = vmatpush1.msra.mxu0 0.0
  %4298 = vmatprep.subr.mxu0 0.0
  %4299 = vmatpush1.msra.mxu0 0.0
  %4300 = vmatprep.subr.mxu0 0.0
  %4301 = vmatpush1.msra.mxu0 0.0
  %4302 = vmatprep.subr.mxu0 0.0
  %4303 = vmatpush1.msra.mxu0 0.0
  %4304 = vmatprep.subr.mxu0 0.0
  %4305 = vmatpush1.msra.mxu0 0.0
  %4306 = vmatprep.subr.mxu0 0.0
  %4307 = vmatpush1.msra.mxu0 0.0
  %4308 = vmatprep.subr.mxu0 0.0
  %4309 = vmatpush1.msra.mxu0 0.0
  %4310 = vmatprep.subr.mxu0 0.0
  %4311 = vmatpush1.msra.mxu0 0.0
  %4312 = vmatprep.subr.mxu0 0.0
  %4313 = vmatpush1.msra.mxu0 0.0
  %4314 = vmatprep.subr.mxu0 0.0
  %4315 = vmatpush1.msra.mxu0 0.0
  %4316 = vmatprep.subr.mxu0 0.0
  %4317 = vmatpush1.msra.mxu0 0.0
  %4318 = vmatprep.subr.mxu0 0.0
  %4319 = vmatpush1.msra.mxu0 0.0
  %4320 = vmatprep.subr.mxu0 0.0
  %4321 = vmatpush1.msra.mxu0 0.0
  %4322 = vmatprep.subr.mxu0 0.0
  %4323 = vmatpush1.msra.mxu0 0.0
  %4324 = vmatprep.subr.mxu0 0.0
  %4325 = vmatpush1.msra.mxu0 0.0
  %4326 = vmatprep.subr.mxu0 0.0
  %4327 = vmatpush1.msra.mxu0 0.0
  %4328 = vmatprep.subr.mxu0 0.0
  %4329 = vmatpush1.msra.mxu0 0.0
  %4330 = vmatprep.subr.mxu0 0.0
  %4331 = vmatpush1.msra.mxu0 0.0
  %4332 = vmatprep.subr.mxu0 0.0
  %4333 = vmatpush1.msra.mxu0 0.0
  %4334 = vmatprep.subr.mxu0 0.0
  %4335 = vmatpush1.msra.mxu0 0.0
  %4336 = vmatprep.subr.mxu0 0.0
  %4337 = vmatpush1.msra.mxu0 0.0
  %4338 = vmatprep.subr.mxu0 0.0
  %4339 = vmatpush1.msra.mxu0 0.0
  %4340 = vmatprep.subr.mxu0 0.0
  %4341 = vmatpush1.msra.mxu0 0.0
  %4342 = vmatprep.subr.mxu0 0.0
  %4343 = vmatpush1.msra.mxu0 0.0
  %4344 = vmatprep.mubr.f32.mxu0 0.0
  %4345 = vmatmul.mubr.f32.gmra.mrb[0].mxu0 %v4278
  %v4346 = vpop.f32.mrb[0].mxu0
  %v4347 = vadd.f32 0.0, %v4346
  %v4348 = vpop.f32.mrb[0].mxu0
  %4349 = vdwg.mxu0
  %v4350 = vlaneseq
  %v4351 = vshrl.u32 %v4350, 7
  %v4352 = vsub.s32 0, %v4351
  %v4353 = vrot.slane %v4347, %v4352
  %v4354 = vmul.f32 %v4161, %v4353
  %v4355 = vmul.f32 %v4162, %v4353
  %v4356 = vlaneseq
  %v4357 = vshrl.u32 %v4356, 7
  %v4358 = vsub.s32 1, %v4357
  %v4359 = vrot.slane %v4347, %v4358
  %v4360 = vadd.f32 %v4354, %v4359
  %v4361 = vadd.f32 %v4355, %v4359
  %vm4362 = vcmp.ge.f32.partialorder %v4360, 0.0
  %vm4363 = vcmp.ge.f32.partialorder %v4361, 0.0
  %v4364 = vmul.f32 %v4360, 0.01
  %v4365 = vmul.f32 %v4361, 0.01
  %v4366 = vsel %vm4362, %v4360, %v4364
  %v4367 = vsel %vm4363, %v4361, %v4365
  %v4368 = vld [vmem:[%s2 + $0x780] sm:$0xff]
  %v4369 = vld [vmem:[%s2 + $0x788] sm:$0xff]
  %v4370 = vld [vmem:[%s2 + $0x790] sm:$0xff]
  %v4371 = vld [vmem:[%s2 + $0x798] sm:$0xff]
  %v4372 = vld [vmem:[%s2 + $0x7a0] sm:$0xff]
  %v4373 = vld [vmem:[%s2 + $0x7a8] sm:$0xff]
  %v4374 = vld [vmem:[%s2 + $0x7b0] sm:$0xff]
  %v4375 = vld [vmem:[%s2 + $0x7b8] sm:$0xff]
  %v4376 = vld [vmem:[%s2 + $0x7c0] sm:$0xff]
  %v4377 = vld [vmem:[%s2 + $0x7c8] sm:$0xff]
  %v4378 = vld [vmem:[%s2 + $0x7d0] sm:$0xff]
  %v4379 = vld [vmem:[%s2 + $0x7d8] sm:$0xff]
  %v4380 = vld [vmem:[%s2 + $0x7e0] sm:$0xff]
  %v4381 = vld [vmem:[%s2 + $0x7e8] sm:$0xff]
  %v4382 = vld [vmem:[%s2 + $0x7f0] sm:$0xff]
  %v4383 = vld [vmem:[%s2 + $0x7f8] sm:$0xff]
  %v4385 = vsel %vm152, %v4366, 0
  %v4388 = vsel %vm152, %v4367, 0
  %4390 = vmatprep.subr.mxu0 0.0
  %4391 = vmatpush1.msra.mxu0 %v4376
  %4392 = vmatprep.subr.mxu0 0.0
  %4393 = vmatpush1.msra.mxu0 %v4377
  %4394 = vmatprep.subr.mxu0 0.0
  %4395 = vmatpush1.msra.mxu0 %v4378
  %4396 = vmatprep.subr.mxu0 0.0
  %4397 = vmatpush1.msra.mxu0 %v4379
  %4398 = vmatprep.subr.mxu0 0.0
  %4399 = vmatpush1.msra.mxu0 %v4380
  %4400 = vmatprep.subr.mxu0 0.0
  %4401 = vmatpush1.msra.mxu0 %v4381
  %4402 = vmatprep.subr.mxu0 0.0
  %4403 = vmatpush1.msra.mxu0 %v4382
  %4404 = vmatprep.subr.mxu0 0.0
  %4405 = vmatpush1.msra.mxu0 %v4383
  %4406 = vmatprep.subr.mxu0 0.0
  %4407 = vmatpush1.msra.mxu0 0.0
  %4408 = vmatprep.subr.mxu0 0.0
  %4409 = vmatpush1.msra.mxu0 0.0
  %4410 = vmatprep.subr.mxu0 0.0
  %4411 = vmatpush1.msra.mxu0 0.0
  %4412 = vmatprep.subr.mxu0 0.0
  %4413 = vmatpush1.msra.mxu0 0.0
  %4414 = vmatprep.subr.mxu0 0.0
  %4415 = vmatpush1.msra.mxu0 0.0
  %4416 = vmatprep.subr.mxu0 0.0
  %4417 = vmatpush1.msra.mxu0 0.0
  %4418 = vmatprep.subr.mxu0 0.0
  %4419 = vmatpush1.msra.mxu0 0.0
  %4420 = vmatprep.subr.mxu0 0.0
  %4421 = vmatpush1.msra.mxu0 0.0
  %4422 = vmatprep.subr.mxu0 0.0
  %4423 = vmatpush1.msra.mxu0 0.0
  %4424 = vmatprep.subr.mxu0 0.0
  %4425 = vmatpush1.msra.mxu0 0.0
  %4426 = vmatprep.subr.mxu0 0.0
  %4427 = vmatpush1.msra.mxu0 0.0
  %4428 = vmatprep.subr.mxu0 0.0
  %4429 = vmatpush1.msra.mxu0 0.0
  %4430 = vmatprep.subr.mxu0 0.0
  %4431 = vmatpush1.msra.mxu0 0.0
  %4432 = vmatprep.subr.mxu0 0.0
  %4433 = vmatpush1.msra.mxu0 0.0
  %4434 = vmatprep.subr.mxu0 0.0
  %4435 = vmatpush1.msra.mxu0 0.0
  %4436 = vmatprep.subr.mxu0 0.0
  %4437 = vmatpush1.msra.mxu0 0.0
  %4438 = vmatprep.subr.mxu0 0.0
  %4439 = vmatpush1.msra.mxu0 0.0
  %4440 = vmatprep.subr.mxu0 0.0
  %4441 = vmatpush1.msra.mxu0 0.0
  %4442 = vmatprep.subr.mxu0 0.0
  %4443 = vmatpush1.msra.mxu0 0.0
  %4444 = vmatprep.subr.mxu0 0.0
  %4445 = vmatpush1.msra.mxu0 0.0
  %4446 = vmatprep.subr.mxu0 0.0
  %4447 = vmatpush1.msra.mxu0 0.0
  %4448 = vmatprep.subr.mxu0 0.0
  %4449 = vmatpush1.msra.mxu0 0.0
  %4450 = vmatprep.subr.mxu0 0.0
  %4451 = vmatpush1.msra.mxu0 0.0
  %4452 = vmatprep.subr.mxu0 0.0
  %4453 = vmatpush1.msra.mxu0 0.0
  %4454 = vmatprep.mubr.f32.mxu0 0.0
  %4455 = vmatmul.mubr.f32.gmra.mrb[0].mxu0 %v4385
  %v4456 = vpop.f32.mrb[0].mxu0
  %v4457 = vadd.f32 0.0, %v4456
  %v4458 = vpop.f32.mrb[0].mxu0
  %4459 = vmatprep.mubr.f32.mxu0 0.0
  %4460 = vmatmul.mubr.f32.gmra.mrb[0].mxu0 %v4388
  %v4461 = vpop.f32.mrb[0].mxu0
  %v4462 = vadd.f32 0.0, %v4461
  %v4463 = vpop.f32.mrb[0].mxu0
  %4464 = vdwg.mxu0
  %v4466 = vsel %vm152, %v2364, 0
  %v4469 = vsel %vm152, %v2365, 0
  %4471 = vmatprep.subr.mxu0 0.0
  %4472 = vmatpush1.msra.mxu0 %v4368
  %4473 = vmatprep.subr.mxu0 0.0
  %4474 = vmatpush1.msra.mxu0 %v4369
  %4475 = vmatprep.subr.mxu0 0.0
  %4476 = vmatpush1.msra.mxu0 %v4370
  %4477 = vmatprep.subr.mxu0 0.0
  %4478 = vmatpush1.msra.mxu0 %v4371
  %4479 = vmatprep.subr.mxu0 0.0
  %4480 = vmatpush1.msra.mxu0 %v4372
  %4481 = vmatprep.subr.mxu0 0.0
  %4482 = vmatpush1.msra.mxu0 %v4373
  %4483 = vmatprep.subr.mxu0 0.0
  %4484 = vmatpush1.msra.mxu0 %v4374
  %4485 = vmatprep.subr.mxu0 0.0
  %4486 = vmatpush1.msra.mxu0 %v4375
  %4487 = vmatprep.subr.mxu0 0.0
  %4488 = vmatpush1.msra.mxu0 0.0
  %4489 = vmatprep.subr.mxu0 0.0
  %4490 = vmatpush1.msra.mxu0 0.0
  %4491 = vmatprep.subr.mxu0 0.0
  %4492 = vmatpush1.msra.mxu0 0.0
  %4493 = vmatprep.subr.mxu0 0.0
  %4494 = vmatpush1.msra.mxu0 0.0
  %4495 = vmatprep.subr.mxu0 0.0
  %4496 = vmatpush1.msra.mxu0 0.0
  %4497 = vmatprep.subr.mxu0 0.0
  %4498 = vmatpush1.msra.mxu0 0.0
  %4499 = vmatprep.subr.mxu0 0.0
  %4500 = vmatpush1.msra.mxu0 0.0
  %4501 = vmatprep.subr.mxu0 0.0
  %4502 = vmatpush1.msra.mxu0 0.0
  %4503 = vmatprep.subr.mxu0 0.0
  %4504 = vmatpush1.msra.mxu0 0.0
  %4505 = vmatprep.subr.mxu0 0.0
  %4506 = vmatpush1.msra.mxu0 0.0
  %4507 = vmatprep.subr.mxu0 0.0
  %4508 = vmatpush1.msra.mxu0 0.0
  %4509 = vmatprep.subr.mxu0 0.0
  %4510 = vmatpush1.msra.mxu0 0.0
  %4511 = vmatprep.subr.mxu0 0.0
  %4512 = vmatpush1.msra.mxu0 0.0
  %4513 = vmatprep.subr.mxu0 0.0
  %4514 = vmatpush1.msra.mxu0 0.0
  %4515 = vmatprep.subr.mxu0 0.0
  %4516 = vmatpush1.msra.mxu0 0.0
  %4517 = vmatprep.subr.mxu0 0.0
  %4518 = vmatpush1.msra.mxu0 0.0
  %4519 = vmatprep.subr.mxu0 0.0
  %4520 = vmatpush1.msra.mxu0 0.0
  %4521 = vmatprep.subr.mxu0 0.0
  %4522 = vmatpush1.msra.mxu0 0.0
  %4523 = vmatprep.subr.mxu0 0.0
  %4524 = vmatpush1.msra.mxu0 0.0
  %4525 = vmatprep.subr.mxu0 0.0
  %4526 = vmatpush1.msra.mxu0 0.0
  %4527 = vmatprep.subr.mxu0 0.0
  %4528 = vmatpush1.msra.mxu0 0.0
  %4529 = vmatprep.subr.mxu0 0.0
  %4530 = vmatpush1.msra.mxu0 0.0
  %4531 = vmatprep.subr.mxu0 0.0
  %4532 = vmatpush1.msra.mxu0 0.0
  %4533 = vmatprep.subr.mxu0 0.0
  %4534 = vmatpush1.msra.mxu0 0.0
  %4535 = vmatprep.mubr.f32.mxu0 0.0
  %4536 = vmatmul.mubr.f32.gmra.mrb[0].mxu0 %v4466
  %v4537 = vpop.f32.mrb[0].mxu0
  %v4538 = vadd.f32 %v4457, %v4537
  %v4539 = vpop.f32.mrb[0].mxu0
  %4540 = vmatprep.mubr.f32.mxu0 0.0
  %4541 = vmatmul.mubr.f32.gmra.mrb[0].mxu0 %v4469
  %v4542 = vpop.f32.mrb[0].mxu0
  %v4543 = vadd.f32 %v4462, %v4542
  %v4544 = vpop.f32.mrb[0].mxu0
  %4545 = vdwg.mxu0
  %v4546 = vsel %vm152, %v4538, 0.0
  %v4547 = vsel %vm152, %v4543, 0.0
  %v4548 = vadd.f32 %v4546, %v4547
  %v4549 = vrot.slane %v4548, 4
  %v4550 = vadd.f32 %v4548, %v4549
  %v4551 = vrot.slane %v4550, 2
  %v4552 = vadd.f32 %v4550, %v4551
  %v4553 = vrot.slane %v4552, 1
  %v4554 = vadd.f32 %v4552, %v4553
  %v4555 = vmul.f32 %v4538, %v4538
  %v4556 = vmul.f32 %v4543, %v4543
  %v4557 = vsel %vm152, %v4555, 0.0
  %v4558 = vsel %vm152, %v4556, 0.0
  %v4559 = vadd.f32 %v4557, %v4558
  %v4560 = vrot.slane %v4559, 4
  %v4561 = vadd.f32 %v4559, %v4560
  %v4562 = vrot.slane %v4561, 2
  %v4563 = vadd.f32 %v4561, %v4562
  %v4564 = vrot.slane %v4563, 1
  %v4565 = vadd.f32 %v4563, %v4564
  %v4566 = vsel %vm736, %v4554, %v4565
  %v4568 = vsel %vm152, %v4566, 0
  %4570 = vmatprep.subr.mxu0 0.0
  %4571 = vmatpush1.msra.mxu0 %v76
  %4572 = vmatprep.subr.mxu0 0.0
  %4573 = vmatpush1.msra.mxu0 %v77
  %4574 = vmatprep.subr.mxu0 0.0
  %4575 = vmatpush1.msra.mxu0 %v78
  %4576 = vmatprep.subr.mxu0 0.0
  %4577 = vmatpush1.msra.mxu0 %v79
  %4578 = vmatprep.subr.mxu0 0.0
  %4579 = vmatpush1.msra.mxu0 %v80
  %4580 = vmatprep.subr.mxu0 0.0
  %4581 = vmatpush1.msra.mxu0 %v81
  %4582 = vmatprep.subr.mxu0 0.0
  %4583 = vmatpush1.msra.mxu0 %v82
  %4584 = vmatprep.subr.mxu0 0.0
  %4585 = vmatpush1.msra.mxu0 %v83
  %4586 = vmatprep.subr.mxu0 0.0
  %4587 = vmatpush1.msra.mxu0 0.0
  %4588 = vmatprep.subr.mxu0 0.0
  %4589 = vmatpush1.msra.mxu0 0.0
  %4590 = vmatprep.subr.mxu0 0.0
  %4591 = vmatpush1.msra.mxu0 0.0
  %4592 = vmatprep.subr.mxu0 0.0
  %4593 = vmatpush1.msra.mxu0 0.0
  %4594 = vmatprep.subr.mxu0 0.0
  %4595 = vmatpush1.msra.mxu0 0.0
  %4596 = vmatprep.subr.mxu0 0.0
  %4597 = vmatpush1.msra.mxu0 0.0
  %4598 = vmatprep.subr.mxu0 0.0
  %4599 = vmatpush1.msra.mxu0 0.0
  %4600 = vmatprep.subr.mxu0 0.0
  %4601 = vmatpush1.msra.mxu0 0.0
  %4602 = vmatprep.subr.mxu0 0.0
  %4603 = vmatpush1.msra.mxu0 0.0
  %4604 = vmatprep.subr.mxu0 0.0
  %4605 = vmatpush1.msra.mxu0 0.0
  %4606 = vmatprep.subr.mxu0 0.0
  %4607 = vmatpush1.msra.mxu0 0.0
  %4608 = vmatprep.subr.mxu0 0.0
  %4609 = vmatpush1.msra.mxu0 0.0
  %4610 = vmatprep.subr.mxu0 0.0
  %4611 = vmatpush1.msra.mxu0 0.0
  %4612 = vmatprep.subr.mxu0 0.0
  %4613 = vmatpush1.msra.mxu0 0.0
  %4614 = vmatprep.subr.mxu0 0.0
  %4615 = vmatpush1.msra.mxu0 0.0
  %4616 = vmatprep.subr.mxu0 0.0
  %4617 = vmatpush1.msra.mxu0 0.0
  %4618 = vmatprep.subr.mxu0 0.0
  %4619 = vmatpush1.msra.mxu0 0.0
  %4620 = vmatprep.subr.mxu0 0.0
  %4621 = vmatpush1.msra.mxu0 0.0
  %4622 = vmatprep.subr.mxu0 0.0
  %4623 = vmatpush1.msra.mxu0 0.0
  %4624 = vmatprep.subr.mxu0 0.0
  %4625 = vmatpush1.msra.mxu0 0.0
  %4626 = vmatprep.subr.mxu0 0.0
  %4627 = vmatpush1.msra.mxu0 0.0
  %4628 = vmatprep.subr.mxu0 0.0
  %4629 = vmatpush1.msra.mxu0 0.0
  %4630 = vmatprep.subr.mxu0 0.0
  %4631 = vmatpush1.msra.mxu0 0.0
  %4632 = vmatprep.subr.mxu0 0.0
  %4633 = vmatpush1.msra.mxu0 0.0
  %4634 = vmatprep.mubr.f32.mxu0 0.0
  %4635 = vmatmul.mubr.f32.gmra.mrb[0].mxu0 %v4568
  %v4636 = vpop.f32.mrb[0].mxu0
  %v4637 = vadd.f32 0.0, %v4636
  %v4638 = vpop.f32.mrb[0].mxu0
  %4639 = vdwg.mxu0
  %v4640 = vmul.f32 %v4637, 0.0078125
  %v4641 = vmul.f32 %v4640, %v4640
  %v4643 = vrot.slane %v4641, 7
  %v4645 = vsub.f32 %v4640, %v4643
  %v4646 = vld [vmem:[%s5 + $0xc] sm:$0x1]
  %v4647 = vld [vmem:[%s5 + $0xd] sm:$0x1]
  %v4648 = vadd.f32 %v4645, 1e-05
  %v4649 = vrsqrt.pop %v4648
  %v4651 = vrot.slane %v4649, 1
  %v4653 = vmul.f32 %v4646, %v4651
  %v4654 = vmul.f32 %v4640, %v4653
  %v4655 = vsub.f32 %v4647, %v4654
  %v4657 = vrot.slane %v4655, 7
  %v4659 = vsel %vm736, %v4653, %v4657
  %v4661 = vsel %vm828, %v4659, 0
  %4663 = vmatprep.subr.mxu0 0.0
  %4664 = vmatpush1.msra.mxu0 %v92
  %4665 = vmatprep.subr.mxu0 0.0
  %4666 = vmatpush1.msra.mxu0 0.0
  %4667 = vmatprep.subr.mxu0 0.0
  %4668 = vmatpush1.msra.mxu0 0.0
  %4669 = vmatprep.subr.mxu0 0.0
  %4670 = vmatpush1.msra.mxu0 0.0
  %4671 = vmatprep.subr.mxu0 0.0
  %4672 = vmatpush1.msra.mxu0 0.0
  %4673 = vmatprep.subr.mxu0 0.0
  %4674 = vmatpush1.msra.mxu0 0.0
  %4675 = vmatprep.subr.mxu0 0.0
  %4676 = vmatpush1.msra.mxu0 0.0
  %4677 = vmatprep.subr.mxu0 0.0
  %4678 = vmatpush1.msra.mxu0 0.0
  %4679 = vmatprep.subr.mxu0 0.0
  %4680 = vmatpush1.msra.mxu0 0.0
  %4681 = vmatprep.subr.mxu0 0.0
  %4682 = vmatpush1.msra.mxu0 0.0
  %4683 = vmatprep.subr.mxu0 0.0
  %4684 = vmatpush1.msra.mxu0 0.0
  %4685 = vmatprep.subr.mxu0 0.0
  %4686 = vmatpush1.msra.mxu0 0.0
  %4687 = vmatprep.subr.mxu0 0.0
  %4688 = vmatpush1.msra.mxu0 0.0
  %4689 = vmatprep.subr.mxu0 0.0
  %4690 = vmatpush1.msra.mxu0 0.0
  %4691 = vmatprep.subr.mxu0 0.0
  %4692 = vmatpush1.msra.mxu0 0.0
  %4693 = vmatprep.subr.mxu0 0.0
  %4694 = vmatpush1.msra.mxu0 0.0
  %4695 = vmatprep.subr.mxu0 0.0
  %4696 = vmatpush1.msra.mxu0 0.0
  %4697 = vmatprep.subr.mxu0 0.0
  %4698 = vmatpush1.msra.mxu0 0.0
  %4699 = vmatprep.subr.mxu0 0.0
  %4700 = vmatpush1.msra.mxu0 0.0
  %4701 = vmatprep.subr.mxu0 0.0
  %4702 = vmatpush1.msra.mxu0 0.0
  %4703 = vmatprep.subr.mxu0 0.0
  %4704 = vmatpush1.msra.mxu0 0.0
  %4705 = vmatprep.subr.mxu0 0.0
  %4706 = vmatpush1.msra.mxu0 0.0
  %4707 = vmatprep.subr.mxu0 0.0
  %4708 = vmatpush1.msra.mxu0 0.0
  %4709 = vmatprep.subr.mxu0 0.0
  %4710 = vmatpush1.msra.mxu0 0.0
  %4711 = vmatprep.subr.mxu0 0.0
  %4712 = vmatpush1.msra.mxu0 0.0
  %4713 = vmatprep.subr.mxu0 0.0
  %4714 = vmatpush1.msra.mxu0 0.0
  %4715 = vmatprep.subr.mxu0 0.0
  %4716 = vmatpush1.msra.mxu0 0.0
  %4717 = vmatprep.subr.mxu0 0.0
  %4718 = vmatpush1.msra.mxu0 0.0
  %4719 = vmatprep.subr.mxu0 0.0
  %4720 = vmatpush1.msra.mxu0 0.0
  %4721 = vmatprep.subr.mxu0 0.0
  %4722 = vmatpush1.msra.mxu0 0.0
  %4723 = vmatprep.subr.mxu0 0.0
  %4724 = vmatpush1.msra.mxu0 0.0
  %4725 = vmatprep.subr.mxu0 0.0
  %4726 = vmatpush1.msra.mxu0 0.0
  %4727 = vmatprep.mubr.f32.mxu0 0.0
  %4728 = vmatmul.mubr.f32.gmra.mrb[0].mxu0 %v4661
  %v4729 = vpop.f32.mrb[0].mxu0
  %v4730 = vadd.f32 0.0, %v4729
  %v4731 = vpop.f32.mrb[0].mxu0
  %4732 = vdwg.mxu0
  %v4733 = vlaneseq
  %v4734 = vshrl.u32 %v4733, 7
  %v4735 = vsub.s32 0, %v4734
  %v4736 = vrot.slane %v4730, %v4735
  %v4737 = vmul.f32 %v4538, %v4736
  %v4738 = vmul.f32 %v4543, %v4736
  %v4739 = vlaneseq
  %v4740 = vshrl.u32 %v4739, 7
  %v4741 = vsub.s32 1, %v4740
  %v4742 = vrot.slane %v4730, %v4741
  %v4743 = vadd.f32 %v4737, %v4742
  %v4744 = vadd.f32 %v4738, %v4742
  %vm4745 = vcmp.ge.f32.partialorder %v4743, 0.0
  %vm4746 = vcmp.ge.f32.partialorder %v4744, 0.0
  %v4747 = vmul.f32 %v4743, 0.01
  %v4748 = vmul.f32 %v4744, 0.01
  %v4749 = vsel %vm4745, %v4743, %v4747
  %v4750 = vsel %vm4746, %v4744, %v4748
  %4751 = vst.msk [vmem:[#allocation4 + $0x2] sm:$0xff] %vm152, %v4749
  %4752 = vst.msk [vmem:[#allocation4 + $0x12] sm:$0xff] %vm152, %v4750
  %v4753 = vld [vmem:[#allocation4 + $0x1] sm:$0xff]
  %v4754 = vld [vmem:[#allocation4 + $0x11] sm:$0xff]
  %v4755 = vld [vmem:[%s3] sm:$0xff]
  %v4756 = vld [vmem:[%s3 + $0x8] sm:$0xff]
  %v4757 = vld [vmem:[%s3 + $0x10] sm:$0xff]
  %v4758 = vld [vmem:[%s3 + $0x18] sm:$0xff]
  %v4759 = vld [vmem:[%s3 + $0x20] sm:$0xff]
  %v4760 = vld [vmem:[%s3 + $0x28] sm:$0xff]
  %v4761 = vld [vmem:[%s3 + $0x30] sm:$0xff]
  %v4762 = vld [vmem:[%s3 + $0x38] sm:$0xff]
  %v4763 = vld [vmem:[%s3 + $0x40] sm:$0xff]
  %v4764 = vld [vmem:[%s3 + $0x48] sm:$0xff]
  %v4765 = vld [vmem:[%s3 + $0x50] sm:$0xff]
  %v4766 = vld [vmem:[%s3 + $0x58] sm:$0xff]
  %v4767 = vld [vmem:[%s3 + $0x60] sm:$0xff]
  %v4768 = vld [vmem:[%s3 + $0x68] sm:$0xff]
  %v4769 = vld [vmem:[%s3 + $0x70] sm:$0xff]
  %v4770 = vld [vmem:[%s3 + $0x78] sm:$0xff]
  %v4771 = vld [vmem:[#allocation4 + $0x2] sm:$0xff]
  %v4772 = vld [vmem:[#allocation4 + $0x12] sm:$0xff]
  %v4773 = vld [vmem:[%s3 + $0x80] sm:$0xff]
  %v4774 = vld [vmem:[%s3 + $0x88] sm:$0xff]
  %v4775 = vld [vmem:[%s3 + $0x90] sm:$0xff]
  %v4776 = vld [vmem:[%s3 + $0x98] sm:$0xff]
  %v4777 = vld [vmem:[%s3 + $0xa0] sm:$0xff]
  %v4778 = vld [vmem:[%s3 + $0xa8] sm:$0xff]
  %v4779 = vld [vmem:[%s3 + $0xb0] sm:$0xff]
  %v4780 = vld [vmem:[%s3 + $0xb8] sm:$0xff]
  %v4781 = vld [vmem:[%s3 + $0xc0] sm:$0xff]
  %v4782 = vld [vmem:[%s3 + $0xc8] sm:$0xff]
  %v4783 = vld [vmem:[%s3 + $0xd0] sm:$0xff]
  %v4784 = vld [vmem:[%s3 + $0xd8] sm:$0xff]
  %v4785 = vld [vmem:[%s3 + $0xe0] sm:$0xff]
  %v4786 = vld [vmem:[%s3 + $0xe8] sm:$0xff]
  %v4787 = vld [vmem:[%s3 + $0xf0] sm:$0xff]
  %v4788 = vld [vmem:[%s3 + $0xf8] sm:$0xff]
  %v4790 = vsel %vm152, %v4771, 0
  %v4793 = vsel %vm152, %v4772, 0
  %4795 = vmatprep.subr.mxu0 %v4774
  %4796 = vmatpush1.msra.mxu0 %v4773
  %4797 = vmatprep.subr.mxu0 %v4776
  %4798 = vmatpush1.msra.mxu0 %v4775
  %4799 = vmatprep.subr.mxu0 %v4778
  %4800 = vmatpush1.msra.mxu0 %v4777
  %4801 = vmatprep.subr.mxu0 %v4780
  %4802 = vmatpush1.msra.mxu0 %v4779
  %4803 = vmatprep.subr.mxu0 %v4782
  %4804 = vmatpush1.msra.mxu0 %v4781
  %4805 = vmatprep.subr.mxu0 %v4784
  %4806 = vmatpush1.msra.mxu0 %v4783
  %4807 = vmatprep.subr.mxu0 %v4786
  %4808 = vmatpush1.msra.mxu0 %v4785
  %4809 = vmatprep.subr.mxu0 %v4788
  %4810 = vmatpush1.msra.mxu0 %v4787
  %4811 = vmatprep.subr.mxu0 0.0
  %4812 = vmatpush1.msra.mxu0 0.0
  %4813 = vmatprep.subr.mxu0 0.0
  %4814 = vmatpush1.msra.mxu0 0.0
  %4815 = vmatprep.subr.mxu0 0.0
  %4816 = vmatpush1.msra.mxu0 0.0
  %4817 = vmatprep.subr.mxu0 0.0
  %4818 = vmatpush1.msra.mxu0 0.0
  %4819 = vmatprep.subr.mxu0 0.0
  %4820 = vmatpush1.msra.mxu0 0.0
  %4821 = vmatprep.subr.mxu0 0.0
  %4822 = vmatpush1.msra.mxu0 0.0
  %4823 = vmatprep.subr.mxu0 0.0
  %4824 = vmatpush1.msra.mxu0 0.0
  %4825 = vmatprep.subr.mxu0 0.0
  %4826 = vmatpush1.msra.mxu0 0.0
  %4827 = vmatprep.subr.mxu0 0.0
  %4828 = vmatpush1.msra.mxu0 0.0
  %4829 = vmatprep.subr.mxu0 0.0
  %4830 = vmatpush1.msra.mxu0 0.0
  %4831 = vmatprep.subr.mxu0 0.0
  %4832 = vmatpush1.msra.mxu0 0.0
  %4833 = vmatprep.subr.mxu0 0.0
  %4834 = vmatpush1.msra.mxu0 0.0
  %4835 = vmatprep.subr.mxu0 0.0
  %4836 = vmatpush1.msra.mxu0 0.0
  %4837 = vmatprep.subr.mxu0 0.0
  %4838 = vmatpush1.msra.mxu0 0.0
  %4839 = vmatprep.subr.mxu0 0.0
  %4840 = vmatpush1.msra.mxu0 0.0
  %4841 = vmatprep.subr.mxu0 0.0
  %4842 = vmatpush1.msra.mxu0 0.0
  %4843 = vmatprep.subr.mxu0 0.0
  %4844 = vmatpush1.msra.mxu0 0.0
  %4845 = vmatprep.subr.mxu0 0.0
  %4846 = vmatpush1.msra.mxu0 0.0
  %4847 = vmatprep.subr.mxu0 0.0
  %4848 = vmatpush1.msra.mxu0 0.0
  %4849 = vmatprep.subr.mxu0 0.0
  %4850 = vmatpush1.msra.mxu0 0.0
  %4851 = vmatprep.subr.mxu0 0.0
  %4852 = vmatpush1.msra.mxu0 0.0
  %4853 = vmatprep.subr.mxu0 0.0
  %4854 = vmatpush1.msra.mxu0 0.0
  %4855 = vmatprep.subr.mxu0 0.0
  %4856 = vmatpush1.msra.mxu0 0.0
  %4857 = vmatprep.subr.mxu0 0.0
  %4858 = vmatpush1.msra.mxu0 0.0
  %4859 = vmatprep.mubr.f32.mxu0 0.0
  %4860 = vmatmul.mubr.f32.gmra.mrb[0].mxu0 %v4790
  %v4861 = vpop.f32.mrb[0].mxu0
  %v4862 = vadd.f32 0.0, %v4861
  %v4863 = vpop.f32.mrb[0].mxu0
  %v4864 = vadd.f32 0.0, %v4863
  %4865 = vmatprep.mubr.f32.mxu0 0.0
  %4866 = vmatmul.mubr.f32.gmra.mrb[0].mxu0 %v4793
  %v4867 = vpop.f32.mrb[0].mxu0
  %v4868 = vadd.f32 0.0, %v4867
  %v4869 = vpop.f32.mrb[0].mxu0
  %v4870 = vadd.f32 0.0, %v4869
  %4871 = vdwg.mxu0
  %v4873 = vsel %vm152, %v4753, 0
  %v4876 = vsel %vm152, %v4754, 0
  %4878 = vmatprep.subr.mxu0 %v4756
  %4879 = vmatpush1.msra.mxu0 %v4755
  %4880 = vmatprep.subr.mxu0 %v4758
  %4881 = vmatpush1.msra.mxu0 %v4757
  %4882 = vmatprep.subr.mxu0 %v4760
  %4883 = vmatpush1.msra.mxu0 %v4759
  %4884 = vmatprep.subr.mxu0 %v4762
  %4885 = vmatpush1.msra.mxu0 %v4761
  %4886 = vmatprep.subr.mxu0 %v4764
  %4887 = vmatpush1.msra.mxu0 %v4763
  %4888 = vmatprep.subr.mxu0 %v4766
  %4889 = vmatpush1.msra.mxu0 %v4765
  %4890 = vmatprep.subr.mxu0 %v4768
  %4891 = vmatpush1.msra.mxu0 %v4767
  %4892 = vmatprep.subr.mxu0 %v4770
  %4893 = vmatpush1.msra.mxu0 %v4769
  %4894 = vmatprep.subr.mxu0 0.0
  %4895 = vmatpush1.msra.mxu0 0.0
  %4896 = vmatprep.subr.mxu0 0.0
  %4897 = vmatpush1.msra.mxu0 0.0
  %4898 = vmatprep.subr.mxu0 0.0
  %4899 = vmatpush1.msra.mxu0 0.0
  %4900 = vmatprep.subr.mxu0 0.0
  %4901 = vmatpush1.msra.mxu0 0.0
  %4902 = vmatprep.subr.mxu0 0.0
  %4903 = vmatpush1.msra.mxu0 0.0
  %4904 = vmatprep.subr.mxu0 0.0
  %4905 = vmatpush1.msra.mxu0 0.0
  %4906 = vmatprep.subr.mxu0 0.0
  %4907 = vmatpush1.msra.mxu0 0.0
  %4908 = vmatprep.subr.mxu0 0.0
  %4909 = vmatpush1.msra.mxu0 0.0
  %4910 = vmatprep.subr.mxu0 0.0
  %4911 = vmatpush1.msra.mxu0 0.0
  %4912 = vmatprep.subr.mxu0 0.0
  %4913 = vmatpush1.msra.mxu0 0.0
  %4914 = vmatprep.subr.mxu0 0.0
  %4915 = vmatpush1.msra.mxu0 0.0
  %4916 = vmatprep.subr.mxu0 0.0
  %4917 = vmatpush1.msra.mxu0 0.0
  %4918 = vmatprep.subr.mxu0 0.0
  %4919 = vmatpush1.msra.mxu0 0.0
  %4920 = vmatprep.subr.mxu0 0.0
  %4921 = vmatpush1.msra.mxu0 0.0
  %4922 = vmatprep.subr.mxu0 0.0
  %4923 = vmatpush1.msra.mxu0 0.0
  %4924 = vmatprep.subr.mxu0 0.0
  %4925 = vmatpush1.msra.mxu0 0.0
  %4926 = vmatprep.subr.mxu0 0.0
  %4927 = vmatpush1.msra.mxu0 0.0
  %4928 = vmatprep.subr.mxu0 0.0
  %4929 = vmatpush1.msra.mxu0 0.0
  %4930 = vmatprep.subr.mxu0 0.0
  %4931 = vmatpush1.msra.mxu0 0.0
  %4932 = vmatprep.subr.mxu0 0.0
  %4933 = vmatpush1.msra.mxu0 0.0
  %4934 = vmatprep.subr.mxu0 0.0
  %4935 = vmatpush1.msra.mxu0 0.0
  %4936 = vmatprep.subr.mxu0 0.0
  %4937 = vmatpush1.msra.mxu0 0.0
  %4938 = vmatprep.subr.mxu0 0.0
  %4939 = vmatpush1.msra.mxu0 0.0
  %4940 = vmatprep.subr.mxu0 0.0
  %4941 = vmatpush1.msra.mxu0 0.0
  %4942 = vmatprep.mubr.f32.mxu0 0.0
  %4943 = vmatmul.mubr.f32.gmra.mrb[0].mxu0 %v4873
  %v4944 = vpop.f32.mrb[0].mxu0
  %v4945 = vadd.f32 %v4862, %v4944
  %v4946 = vpop.f32.mrb[0].mxu0
  %v4947 = vadd.f32 %v4864, %v4946
  %4948 = vmatprep.mubr.f32.mxu0 0.0
  %4949 = vmatmul.mubr.f32.gmra.mrb[0].mxu0 %v4876
  %v4950 = vpop.f32.mrb[0].mxu0
  %v4951 = vadd.f32 %v4868, %v4950
  %v4952 = vpop.f32.mrb[0].mxu0
  %v4953 = vadd.f32 %v4870, %v4952
  %4954 = vdwg.mxu0
  %v4955 = vld [vmem:[#allocation4 + $0x3] sm:$0xff]
  %v4956 = vld [vmem:[#allocation4 + $0x13] sm:$0xff]
  %v4957 = vld [vmem:[%s3 + $0x100] sm:$0xff]
  %v4958 = vld [vmem:[%s3 + $0x108] sm:$0xff]
  %v4959 = vld [vmem:[%s3 + $0x110] sm:$0xff]
  %v4960 = vld [vmem:[%s3 + $0x118] sm:$0xff]
  %v4961 = vld [vmem:[%s3 + $0x120] sm:$0xff]
  %v4962 = vld [vmem:[%s3 + $0x128] sm:$0xff]
  %v4963 = vld [vmem:[%s3 + $0x130] sm:$0xff]
  %v4964 = vld [vmem:[%s3 + $0x138] sm:$0xff]
  %v4965 = vld [vmem:[%s3 + $0x140] sm:$0xff]
  %v4966 = vld [vmem:[%s3 + $0x148] sm:$0xff]
  %v4967 = vld [vmem:[%s3 + $0x150] sm:$0xff]
  %v4968 = vld [vmem:[%s3 + $0x158] sm:$0xff]
  %v4969 = vld [vmem:[%s3 + $0x160] sm:$0xff]
  %v4970 = vld [vmem:[%s3 + $0x168] sm:$0xff]
  %v4971 = vld [vmem:[%s3 + $0x170] sm:$0xff]
  %v4972 = vld [vmem:[%s3 + $0x178] sm:$0xff]
  %v4974 = vsel %vm152, %v4955, 0
  %v4977 = vsel %vm152, %v4956, 0
  %4979 = vmatprep.subr.mxu0 %v4958
  %4980 = vmatpush1.msra.mxu0 %v4957
  %4981 = vmatprep.subr.mxu0 %v4960
  %4982 = vmatpush1.msra.mxu0 %v4959
  %4983 = vmatprep.subr.mxu0 %v4962
  %4984 = vmatpush1.msra.mxu0 %v4961
  %4985 = vmatprep.subr.mxu0 %v4964
  %4986 = vmatpush1.msra.mxu0 %v4963
  %4987 = vmatprep.subr.mxu0 %v4966
  %4988 = vmatpush1.msra.mxu0 %v4965
  %4989 = vmatprep.subr.mxu0 %v4968
  %4990 = vmatpush1.msra.mxu0 %v4967
  %4991 = vmatprep.subr.mxu0 %v4970
  %4992 = vmatpush1.msra.mxu0 %v4969
  %4993 = vmatprep.subr.mxu0 %v4972
  %4994 = vmatpush1.msra.mxu0 %v4971
  %4995 = vmatprep.subr.mxu0 0.0
  %4996 = vmatpush1.msra.mxu0 0.0
  %4997 = vmatprep.subr.mxu0 0.0
  %4998 = vmatpush1.msra.mxu0 0.0
  %4999 = vmatprep.subr.mxu0 0.0
  %5000 = vmatpush1.msra.mxu0 0.0
  %5001 = vmatprep.subr.mxu0 0.0
  %5002 = vmatpush1.msra.mxu0 0.0
  %5003 = vmatprep.subr.mxu0 0.0
  %5004 = vmatpush1.msra.mxu0 0.0
  %5005 = vmatprep.subr.mxu0 0.0
  %5006 = vmatpush1.msra.mxu0 0.0
  %5007 = vmatprep.subr.mxu0 0.0
  %5008 = vmatpush1.msra.mxu0 0.0
  %5009 = vmatprep.subr.mxu0 0.0
  %5010 = vmatpush1.msra.mxu0 0.0
  %5011 = vmatprep.subr.mxu0 0.0
  %5012 = vmatpush1.msra.mxu0 0.0
  %5013 = vmatprep.subr.mxu0 0.0
  %5014 = vmatpush1.msra.mxu0 0.0
  %5015 = vmatprep.subr.mxu0 0.0
  %5016 = vmatpush1.msra.mxu0 0.0
  %5017 = vmatprep.subr.mxu0 0.0
  %5018 = vmatpush1.msra.mxu0 0.0
  %5019 = vmatprep.subr.mxu0 0.0
  %5020 = vmatpush1.msra.mxu0 0.0
  %5021 = vmatprep.subr.mxu0 0.0
  %5022 = vmatpush1.msra.mxu0 0.0
  %5023 = vmatprep.subr.mxu0 0.0
  %5024 = vmatpush1.msra.mxu0 0.0
  %5025 = vmatprep.subr.mxu0 0.0
  %5026 = vmatpush1.msra.mxu0 0.0
  %5027 = vmatprep.subr.mxu0 0.0
  %5028 = vmatpush1.msra.mxu0 0.0
  %5029 = vmatprep.subr.mxu0 0.0
  %5030 = vmatpush1.msra.mxu0 0.0
  %5031 = vmatprep.subr.mxu0 0.0
  %5032 = vmatpush1.msra.mxu0 0.0
  %5033 = vmatprep.subr.mxu0 0.0
  %5034 = vmatpush1.msra.mxu0 0.0
  %5035 = vmatprep.subr.mxu0 0.0
  %5036 = vmatpush1.msra.mxu0 0.0
  %5037 = vmatprep.subr.mxu0 0.0
  %5038 = vmatpush1.msra.mxu0 0.0
  %5039 = vmatprep.subr.mxu0 0.0
  %5040 = vmatpush1.msra.mxu0 0.0
  %5041 = vmatprep.subr.mxu0 0.0
  %5042 = vmatpush1.msra.mxu0 0.0
  %5043 = vmatprep.mubr.f32.mxu0 0.0
  %5044 = vmatmul.mubr.f32.gmra.mrb[0].mxu0 %v4974
  %v5045 = vpop.f32.mrb[0].mxu0
  %v5046 = vadd.f32 0.0, %v5045
  %v5047 = vpop.f32.mrb[0].mxu0
  %v5048 = vadd.f32 0.0, %v5047
  %5049 = vmatprep.mubr.f32.mxu0 0.0
  %5050 = vmatmul.mubr.f32.gmra.mrb[0].mxu0 %v4977
  %v5051 = vpop.f32.mrb[0].mxu0
  %v5052 = vadd.f32 0.0, %v5051
  %v5053 = vpop.f32.mrb[0].mxu0
  %v5054 = vadd.f32 0.0, %v5053
  %5055 = vdwg.mxu0
  %v5056 = vadd.f32 %v4945, %v5046
  %v5057 = vadd.f32 %v4947, %v5048
  %v5058 = vadd.f32 %v4951, %v5052
  %v5059 = vadd.f32 %v4953, %v5054
  %v5060 = vld [vmem:[%s4] sm:$0x3]
  %v5062 = vlaneseq
  %v5063 = vshrl.u32 %v5062, 7
  %v5064 = vsub.s32 0, %v5063
  %v5065 = vrot.slane %v5060, %v5064
  %v5066 = vlaneseq
  %v5067 = vshrl.u32 %v5066, 7
  %v5068 = vsub.s32 1, %v5067
  %v5069 = vrot.slane %v5060, %v5068
  %v5072 = vadd.f32 %v5056, %v5065
  %v5073 = vadd.f32 %v5057, %v5069
  %v5074 = vadd.f32 %v5058, %v5065
  %v5075 = vadd.f32 %v5059, %v5069
  %v5080 = vrot.slane %v5072, 7
  %v5081 = vrot.slane %v5073, 7
  %v5082 = vrot.slane %v5074, 7
  %v5083 = vrot.slane %v5075, 7
  %5088 = vst [vmem:[#allocation5] sm:$0xfe] %v5080
  %5089 = vst [vmem:[#allocation5 + $0x8] sm:$0xfe] %v5081
  %5090 = vst [vmem:[#allocation5 + $0x10] sm:$0x1] %v5080
  %5091 = vst [vmem:[#allocation5 + $0x18] sm:$0x1] %v5081
  %5092 = vst [vmem:[#allocation5 + $0x20] sm:$0xfe] %v5082
  %5093 = vst [vmem:[#allocation5 + $0x28] sm:$0xfe] %v5083
  %5094 = vst [vmem:[#allocation5 + $0x30] sm:$0x1] %v5082
  %5095 = vst [vmem:[#allocation5 + $0x38] sm:$0x1] %v5083
  %v5096 = vld [vmem:[#allocation5] sm:$0xff]
  %v5097 = vld [vmem:[#allocation5 + $0x8] sm:$0xff]
  %v5098 = vld [vmem:[#allocation5 + $0x20] sm:$0xff]
  %v5099 = vld [vmem:[#allocation5 + $0x28] sm:$0xff]
  %v5100 = vld [vmem:[%s1 + $0x3c0] sm:$0xff]
  %v5101 = vld [vmem:[%s1 + $0x3c8] sm:$0xff]
  %v5102 = vld [vmem:[%s1 + $0x3d0] sm:$0xff]
  %v5103 = vld [vmem:[%s1 + $0x3d8] sm:$0xff]
  %v5104 = vld [vmem:[%s1 + $0x3e0] sm:$0xff]
  %v5105 = vld [vmem:[%s1 + $0x3e8] sm:$0xff]
  %v5106 = vld [vmem:[%s1 + $0x3f0] sm:$0xff]
  %v5107 = vld [vmem:[%s1 + $0x3f8] sm:$0xff]
  %v5108 = vld [vmem:[%s1 + $0x400] sm:$0xff]
  %v5109 = vld [vmem:[%s1 + $0x408] sm:$0xff]
  %v5110 = vld [vmem:[%s1 + $0x410] sm:$0xff]
  %v5111 = vld [vmem:[%s1 + $0x418] sm:$0xff]
  %v5112 = vld [vmem:[%s1 + $0x420] sm:$0xff]
  %v5113 = vld [vmem:[%s1 + $0x428] sm:$0xff]
  %v5114 = vld [vmem:[%s1 + $0x430] sm:$0xff]
  %v5115 = vld [vmem:[%s1 + $0x438] sm:$0xff]
  %v5116 = vld [vmem:[%s1 + $0x440] sm:$0xff]
  %v5117 = vld [vmem:[%s1 + $0x448] sm:$0xff]
  %v5118 = vld [vmem:[%s1 + $0x450] sm:$0xff]
  %v5119 = vld [vmem:[%s1 + $0x458] sm:$0xff]
  %v5120 = vld [vmem:[%s1 + $0x460] sm:$0xff]
  %v5121 = vld [vmem:[%s1 + $0x468] sm:$0xff]
  %v5122 = vld [vmem:[%s1 + $0x470] sm:$0xff]
  %v5123 = vld [vmem:[%s1 + $0x478] sm:$0xff]
  %v5124 = vld [vmem:[%s1 + $0x480] sm:$0xff]
  %v5125 = vld [vmem:[%s1 + $0x488] sm:$0xff]
  %v5126 = vld [vmem:[%s1 + $0x490] sm:$0xff]
  %v5127 = vld [vmem:[%s1 + $0x498] sm:$0xff]
  %v5128 = vld [vmem:[%s1 + $0x4a0] sm:$0xff]
  %v5129 = vld [vmem:[%s1 + $0x4a8] sm:$0xff]
  %v5130 = vld [vmem:[%s1 + $0x4b0] sm:$0xff]
  %v5131 = vld [vmem:[%s1 + $0x4b8] sm:$0xff]
  %v5132 = vld [vmem:[#allocation5] sm:$0xfe]
  %v5133 = vld [vmem:[#allocation5 + $0x8] sm:$0xfe]
  %v5134 = vld [vmem:[#allocation5 + $0x10] sm:$0x1]
  %v5135 = vld [vmem:[#allocation5 + $0x18] sm:$0x1]
  %v5136 = vld [vmem:[#allocation5 + $0x20] sm:$0xfe]
  %v5137 = vld [vmem:[#allocation5 + $0x28] sm:$0xfe]
  %v5138 = vld [vmem:[#allocation5 + $0x30] sm:$0x1]
  %v5139 = vld [vmem:[#allocation5 + $0x38] sm:$0x1]
  %vm5148 = vcmask 1046528
  %v5149 = vrot.slane %v5132, 1
  %v5150 = vrot.slane %v5134, 1
  %v5151 = vsel %vm5148, %v5149, %v5150
  %v5152 = vrot.slane %v5133, 1
  %v5153 = vrot.slane %v5135, 1
  %v5154 = vsel %vm5148, %v5152, %v5153
  %v5155 = vrot.slane %v5136, 1
  %v5156 = vrot.slane %v5138, 1
  %v5157 = vsel %vm5148, %v5155, %v5156
  %v5158 = vrot.slane %v5137, 1
  %v5159 = vrot.slane %v5139, 1
  %v5160 = vsel %vm5148, %v5158, %v5159
  %v5165 = vld [vmem:[%s1 + $0x4c0] sm:$0xff]
  %v5166 = vld [vmem:[%s1 + $0x4c8] sm:$0xff]
  %v5167 = vld [vmem:[%s1 + $0x4d0] sm:$0xff]
  %v5168 = vld [vmem:[%s1 + $0x4d8] sm:$0xff]
  %v5169 = vld [vmem:[%s1 + $0x4e0] sm:$0xff]
  %v5170 = vld [vmem:[%s1 + $0x4e8] sm:$0xff]
  %v5171 = vld [vmem:[%s1 + $0x4f0] sm:$0xff]
  %v5172 = vld [vmem:[%s1 + $0x4f8] sm:$0xff]
  %v5173 = vld [vmem:[%s1 + $0x500] sm:$0xff]
  %v5174 = vld [vmem:[%s1 + $0x508] sm:$0xff]
  %v5175 = vld [vmem:[%s1 + $0x510] sm:$0xff]
  %v5176 = vld [vmem:[%s1 + $0x518] sm:$0xff]
  %v5177 = vld [vmem:[%s1 + $0x520] sm:$0xff]
  %v5178 = vld [vmem:[%s1 + $0x528] sm:$0xff]
  %v5179 = vld [vmem:[%s1 + $0x530] sm:$0xff]
  %v5180 = vld [vmem:[%s1 + $0x538] sm:$0xff]
  %v5181 = vld [vmem:[%s1 + $0x540] sm:$0xff]
  %v5182 = vld [vmem:[%s1 + $0x548] sm:$0xff]
  %v5183 = vld [vmem:[%s1 + $0x550] sm:$0xff]
  %v5184 = vld [vmem:[%s1 + $0x558] sm:$0xff]
  %v5185 = vld [vmem:[%s1 + $0x560] sm:$0xff]
  %v5186 = vld [vmem:[%s1 + $0x568] sm:$0xff]
  %v5187 = vld [vmem:[%s1 + $0x570] sm:$0xff]
  %v5188 = vld [vmem:[%s1 + $0x578] sm:$0xff]
  %v5189 = vld [vmem:[%s1 + $0x580] sm:$0xff]
  %v5190 = vld [vmem:[%s1 + $0x588] sm:$0xff]
  %v5191 = vld [vmem:[%s1 + $0x590] sm:$0xff]
  %v5192 = vld [vmem:[%s1 + $0x598] sm:$0xff]
  %v5193 = vld [vmem:[%s1 + $0x5a0] sm:$0xff]
  %v5194 = vld [vmem:[%s1 + $0x5a8] sm:$0xff]
  %v5195 = vld [vmem:[%s1 + $0x5b0] sm:$0xff]
  %v5196 = vld [vmem:[%s1 + $0x5b8] sm:$0xff]
  %5197 = vmatprep.subr.mxu0 0.0
  %5198 = vmatpush1.msra.mxu0 %v5165
  %5199 = vmatprep.subr.mxu0 0.0
  %5200 = vmatpush1.msra.mxu0 %v5166
  %5201 = vmatprep.subr.mxu0 0.0
  %5202 = vmatpush1.msra.mxu0 %v5167
  %5203 = vmatprep.subr.mxu0 0.0
  %5204 = vmatpush1.msra.mxu0 %v5168
  %5205 = vmatprep.subr.mxu0 0.0
  %5206 = vmatpush1.msra.mxu0 %v5169
  %5207 = vmatprep.subr.mxu0 0.0
  %5208 = vmatpush1.msra.mxu0 %v5170
  %5209 = vmatprep.subr.mxu0 0.0
  %5210 = vmatpush1.msra.mxu0 %v5171
  %5211 = vmatprep.subr.mxu0 0.0
  %5212 = vmatpush1.msra.mxu0 %v5172
  %5213 = vmatprep.subr.mxu0 0.0
  %5214 = vmatpush1.msra.mxu0 %v5173
  %5215 = vmatprep.subr.mxu0 0.0
  %5216 = vmatpush1.msra.mxu0 %v5174
  %5217 = vmatprep.subr.mxu0 0.0
  %5218 = vmatpush1.msra.mxu0 %v5175
  %5219 = vmatprep.subr.mxu0 0.0
  %5220 = vmatpush1.msra.mxu0 %v5176
  %5221 = vmatprep.subr.mxu0 0.0
  %5222 = vmatpush1.msra.mxu0 %v5177
  %5223 = vmatprep.subr.mxu0 0.0
  %5224 = vmatpush1.msra.mxu0 %v5178
  %5225 = vmatprep.subr.mxu0 0.0
  %5226 = vmatpush1.msra.mxu0 %v5179
  %5227 = vmatprep.subr.mxu0 0.0
  %5228 = vmatpush1.msra.mxu0 %v5180
  %5229 = vmatprep.subr.mxu0 0.0
  %5230 = vmatpush1.msra.mxu0 %v5181
  %5231 = vmatprep.subr.mxu0 0.0
  %5232 = vmatpush1.msra.mxu0 %v5182
  %5233 = vmatprep.subr.mxu0 0.0
  %5234 = vmatpush1.msra.mxu0 %v5183
  %5235 = vmatprep.subr.mxu0 0.0
  %5236 = vmatpush1.msra.mxu0 %v5184
  %5237 = vmatprep.subr.mxu0 0.0
  %5238 = vmatpush1.msra.mxu0 %v5185
  %5239 = vmatprep.subr.mxu0 0.0
  %5240 = vmatpush1.msra.mxu0 %v5186
  %5241 = vmatprep.subr.mxu0 0.0
  %5242 = vmatpush1.msra.mxu0 %v5187
  %5243 = vmatprep.subr.mxu0 0.0
  %5244 = vmatpush1.msra.mxu0 %v5188
  %5245 = vmatprep.subr.mxu0 0.0
  %5246 = vmatpush1.msra.mxu0 %v5189
  %5247 = vmatprep.subr.mxu0 0.0
  %5248 = vmatpush1.msra.mxu0 %v5190
  %5249 = vmatprep.subr.mxu0 0.0
  %5250 = vmatpush1.msra.mxu0 %v5191
  %5251 = vmatprep.subr.mxu0 0.0
  %5252 = vmatpush1.msra.mxu0 %v5192
  %5253 = vmatprep.subr.mxu0 0.0
  %5254 = vmatpush1.msra.mxu0 %v5193
  %5255 = vmatprep.subr.mxu0 0.0
  %5256 = vmatpush1.msra.mxu0 %v5194
  %5257 = vmatprep.subr.mxu0 0.0
  %5258 = vmatpush1.msra.mxu0 %v5195
  %5259 = vmatprep.subr.mxu0 0.0
  %5260 = vmatpush1.msra.mxu0 %v5196
  %5261 = vmatprep.mubr.f32.mxu0 %v5154
  %5262 = vmatmul.mubr.f32.gmra.mrb[0].mxu0 %v5151
  %v5263 = vpop.f32.mrb[0].mxu0
  %v5264 = vadd.f32 0.0, %v5263
  %v5265 = vpop.f32.mrb[0].mxu0
  %5266 = vmatprep.mubr.f32.mxu0 %v5160
  %5267 = vmatmul.mubr.f32.gmra.mrb[0].mxu0 %v5157
  %v5268 = vpop.f32.mrb[0].mxu0
  %v5269 = vadd.f32 0.0, %v5268
  %v5270 = vpop.f32.mrb[0].mxu0
  %5271 = vdwg.mxu0
  %5272 = vmatprep.subr.mxu0 0.0
  %5273 = vmatpush1.msra.mxu0 %v5100
  %5274 = vmatprep.subr.mxu0 0.0
  %5275 = vmatpush1.msra.mxu0 %v5101
  %5276 = vmatprep.subr.mxu0 0.0
  %5277 = vmatpush1.msra.mxu0 %v5102
  %5278 = vmatprep.subr.mxu0 0.0
  %5279 = vmatpush1.msra.mxu0 %v5103
  %5280 = vmatprep.subr.mxu0 0.0
  %5281 = vmatpush1.msra.mxu0 %v5104
  %5282 = vmatprep.subr.mxu0 0.0
  %5283 = vmatpush1.msra.mxu0 %v5105
  %5284 = vmatprep.subr.mxu0 0.0
  %5285 = vmatpush1.msra.mxu0 %v5106
  %5286 = vmatprep.subr.mxu0 0.0
  %5287 = vmatpush1.msra.mxu0 %v5107
  %5288 = vmatprep.subr.mxu0 0.0
  %5289 = vmatpush1.msra.mxu0 %v5108
  %5290 = vmatprep.subr.mxu0 0.0
  %5291 = vmatpush1.msra.mxu0 %v5109
  %5292 = vmatprep.subr.mxu0 0.0
  %5293 = vmatpush1.msra.mxu0 %v5110
  %5294 = vmatprep.subr.mxu0 0.0
  %5295 = vmatpush1.msra.mxu0 %v5111
  %5296 = vmatprep.subr.mxu0 0.0
  %5297 = vmatpush1.msra.mxu0 %v5112
  %5298 = vmatprep.subr.mxu0 0.0
  %5299 = vmatpush1.msra.mxu0 %v5113
  %5300 = vmatprep.subr.mxu0 0.0
  %5301 = vmatpush1.msra.mxu0 %v5114
  %5302 = vmatprep.subr.mxu0 0.0
  %5303 = vmatpush1.msra.mxu0 %v5115
  %5304 = vmatprep.subr.mxu0 0.0
  %5305 = vmatpush1.msra.mxu0 %v5116
  %5306 = vmatprep.subr.mxu0 0.0
  %5307 = vmatpush1.msra.mxu0 %v5117
  %5308 = vmatprep.subr.mxu0 0.0
  %5309 = vmatpush1.msra.mxu0 %v5118
  %5310 = vmatprep.subr.mxu0 0.0
  %5311 = vmatpush1.msra.mxu0 %v5119
  %5312 = vmatprep.subr.mxu0 0.0
  %5313 = vmatpush1.msra.mxu0 %v5120
  %5314 = vmatprep.subr.mxu0 0.0
  %5315 = vmatpush1.msra.mxu0 %v5121
  %5316 = vmatprep.subr.mxu0 0.0
  %5317 = vmatpush1.msra.mxu0 %v5122
  %5318 = vmatprep.subr.mxu0 0.0
  %5319 = vmatpush1.msra.mxu0 %v5123
  %5320 = vmatprep.subr.mxu0 0.0
  %5321 = vmatpush1.msra.mxu0 %v5124
  %5322 = vmatprep.subr.mxu0 0.0
  %5323 = vmatpush1.msra.mxu0 %v5125
  %5324 = vmatprep.subr.mxu0 0.0
  %5325 = vmatpush1.msra.mxu0 %v5126
  %5326 = vmatprep.subr.mxu0 0.0
  %5327 = vmatpush1.msra.mxu0 %v5127
  %5328 = vmatprep.subr.mxu0 0.0
  %5329 = vmatpush1.msra.mxu0 %v5128
  %5330 = vmatprep.subr.mxu0 0.0
  %5331 = vmatpush1.msra.mxu0 %v5129
  %5332 = vmatprep.subr.mxu0 0.0
  %5333 = vmatpush1.msra.mxu0 %v5130
  %5334 = vmatprep.subr.mxu0 0.0
  %5335 = vmatpush1.msra.mxu0 %v5131
  %5336 = vmatprep.mubr.f32.mxu0 %v5097
  %5337 = vmatmul.mubr.f32.gmra.mrb[0].mxu0 %v5096
  %v5338 = vpop.f32.mrb[0].mxu0
  %v5339 = vadd.f32 %v5264, %v5338
  %v5340 = vpop.f32.mrb[0].mxu0
  %5341 = vmatprep.mubr.f32.mxu0 %v5099
  %5342 = vmatmul.mubr.f32.gmra.mrb[0].mxu0 %v5098
  %v5343 = vpop.f32.mrb[0].mxu0
  %v5344 = vadd.f32 %v5269, %v5343
  %v5345 = vpop.f32.mrb[0].mxu0
  %5346 = vdwg.mxu0
  %v5347 = vld [vmem:[%s1 + $0x5c0] sm:$0xff]
  %v5348 = vld [vmem:[%s1 + $0x5c8] sm:$0xff]
  %v5349 = vld [vmem:[%s1 + $0x5d0] sm:$0xff]
  %v5350 = vld [vmem:[%s1 + $0x5d8] sm:$0xff]
  %v5351 = vld [vmem:[%s1 + $0x5e0] sm:$0xff]
  %v5352 = vld [vmem:[%s1 + $0x5e8] sm:$0xff]
  %v5353 = vld [vmem:[%s1 + $0x5f0] sm:$0xff]
  %v5354 = vld [vmem:[%s1 + $0x5f8] sm:$0xff]
  %v5355 = vld [vmem:[%s1 + $0x600] sm:$0xff]
  %v5356 = vld [vmem:[%s1 + $0x608] sm:$0xff]
  %v5357 = vld [vmem:[%s1 + $0x610] sm:$0xff]
  %v5358 = vld [vmem:[%s1 + $0x618] sm:$0xff]
  %v5359 = vld [vmem:[%s1 + $0x620] sm:$0xff]
  %v5360 = vld [vmem:[%s1 + $0x628] sm:$0xff]
  %v5361 = vld [vmem:[%s1 + $0x630] sm:$0xff]
  %v5362 = vld [vmem:[%s1 + $0x638] sm:$0xff]
  %v5363 = vld [vmem:[%s1 + $0x640] sm:$0xff]
  %v5364 = vld [vmem:[%s1 + $0x648] sm:$0xff]
  %v5365 = vld [vmem:[%s1 + $0x650] sm:$0xff]
  %v5366 = vld [vmem:[%s1 + $0x658] sm:$0xff]
  %v5367 = vld [vmem:[%s1 + $0x660] sm:$0xff]
  %v5368 = vld [vmem:[%s1 + $0x668] sm:$0xff]
  %v5369 = vld [vmem:[%s1 + $0x670] sm:$0xff]
  %v5370 = vld [vmem:[%s1 + $0x678] sm:$0xff]
  %v5371 = vld [vmem:[%s1 + $0x680] sm:$0xff]
  %v5372 = vld [vmem:[%s1 + $0x688] sm:$0xff]
  %v5373 = vld [vmem:[%s1 + $0x690] sm:$0xff]
  %v5374 = vld [vmem:[%s1 + $0x698] sm:$0xff]
  %v5375 = vld [vmem:[%s1 + $0x6a0] sm:$0xff]
  %v5376 = vld [vmem:[%s1 + $0x6a8] sm:$0xff]
  %v5377 = vld [vmem:[%s1 + $0x6b0] sm:$0xff]
  %v5378 = vld [vmem:[%s1 + $0x6b8] sm:$0xff]
  %v5379 = vld [vmem:[#allocation5] sm:$0xfc]
  %v5380 = vld [vmem:[#allocation5 + $0x8] sm:$0xfc]
  %v5381 = vld [vmem:[#allocation5 + $0x10] sm:$0x3]
  %v5382 = vld [vmem:[#allocation5 + $0x18] sm:$0x3]
  %v5383 = vld [vmem:[#allocation5 + $0x20] sm:$0xfc]
  %v5384 = vld [vmem:[#allocation5 + $0x28] sm:$0xfc]
  %v5385 = vld [vmem:[#allocation5 + $0x30] sm:$0x3]
  %v5386 = vld [vmem:[#allocation5 + $0x38] sm:$0x3]
  %vm5395 = vcmask 1045504
  %v5396 = vrot.slane %v5379, 2
  %v5397 = vrot.slane %v5381, 2
  %v5398 = vsel %vm5395, %v5396, %v5397
  %v5399 = vrot.slane %v5380, 2
  %v5400 = vrot.slane %v5382, 2
  %v5401 = vsel %vm5395, %v5399, %v5400
  %v5402 = vrot.slane %v5383, 2
  %v5403 = vrot.slane %v5385, 2
  %v5404 = vsel %vm5395, %v5402, %v5403
  %v5405 = vrot.slane %v5384, 2
  %v5406 = vrot.slane %v5386, 2
  %v5407 = vsel %vm5395, %v5405, %v5406
  %v5412 = vld [vmem:[%s1 + $0x6c0] sm:$0xff]
  %v5413 = vld [vmem:[%s1 + $0x6c8] sm:$0xff]
  %v5414 = vld [vmem:[%s1 + $0x6d0] sm:$0xff]
  %v5415 = vld [vmem:[%s1 + $0x6d8] sm:$0xff]
  %v5416 = vld [vmem:[%s1 + $0x6e0] sm:$0xff]
  %v5417 = vld [vmem:[%s1 + $0x6e8] sm:$0xff]
  %v5418 = vld [vmem:[%s1 + $0x6f0] sm:$0xff]
  %v5419 = vld [vmem:[%s1 + $0x6f8] sm:$0xff]
  %v5420 = vld [vmem:[%s1 + $0x700] sm:$0xff]
  %v5421 = vld [vmem:[%s1 + $0x708] sm:$0xff]
  %v5422 = vld [vmem:[%s1 + $0x710] sm:$0xff]
  %v5423 = vld [vmem:[%s1 + $0x718] sm:$0xff]
  %v5424 = vld [vmem:[%s1 + $0x720] sm:$0xff]
  %v5425 = vld [vmem:[%s1 + $0x728] sm:$0xff]
  %v5426 = vld [vmem:[%s1 + $0x730] sm:$0xff]
  %v5427 = vld [vmem:[%s1 + $0x738] sm:$0xff]
  %v5428 = vld [vmem:[%s1 + $0x740] sm:$0xff]
  %v5429 = vld [vmem:[%s1 + $0x748] sm:$0xff]
  %v5430 = vld [vmem:[%s1 + $0x750] sm:$0xff]
  %v5431 = vld [vmem:[%s1 + $0x758] sm:$0xff]
  %v5432 = vld [vmem:[%s1 + $0x760] sm:$0xff]
  %v5433 = vld [vmem:[%s1 + $0x768] sm:$0xff]
  %v5434 = vld [vmem:[%s1 + $0x770] sm:$0xff]
  %v5435 = vld [vmem:[%s1 + $0x778] sm:$0xff]
  %v5436 = vld [vmem:[%s1 + $0x780] sm:$0xff]
  %v5437 = vld [vmem:[%s1 + $0x788] sm:$0xff]
  %v5438 = vld [vmem:[%s1 + $0x790] sm:$0xff]
  %v5439 = vld [vmem:[%s1 + $0x798] sm:$0xff]
  %v5440 = vld [vmem:[%s1 + $0x7a0] sm:$0xff]
  %v5441 = vld [vmem:[%s1 + $0x7a8] sm:$0xff]
  %v5442 = vld [vmem:[%s1 + $0x7b0] sm:$0xff]
  %v5443 = vld [vmem:[%s1 + $0x7b8] sm:$0xff]
  %5444 = vmatprep.subr.mxu0 0.0
  %5445 = vmatpush1.msra.mxu0 %v5412
  %5446 = vmatprep.subr.mxu0 0.0
  %5447 = vmatpush1.msra.mxu0 %v5413
  %5448 = vmatprep.subr.mxu0 0.0
  %5449 = vmatpush1.msra.mxu0 %v5414
  %5450 = vmatprep.subr.mxu0 0.0
  %5451 = vmatpush1.msra.mxu0 %v5415
  %5452 = vmatprep.subr.mxu0 0.0
  %5453 = vmatpush1.msra.mxu0 %v5416
  %5454 = vmatprep.subr.mxu0 0.0
  %5455 = vmatpush1.msra.mxu0 %v5417
  %5456 = vmatprep.subr.mxu0 0.0
  %5457 = vmatpush1.msra.mxu0 %v5418
  %5458 = vmatprep.subr.mxu0 0.0
  %5459 = vmatpush1.msra.mxu0 %v5419
  %5460 = vmatprep.subr.mxu0 0.0
  %5461 = vmatpush1.msra.mxu0 %v5420
  %5462 = vmatprep.subr.mxu0 0.0
  %5463 = vmatpush1.msra.mxu0 %v5421
  %5464 = vmatprep.subr.mxu0 0.0
  %5465 = vmatpush1.msra.mxu0 %v5422
  %5466 = vmatprep.subr.mxu0 0.0
  %5467 = vmatpush1.msra.mxu0 %v5423
  %5468 = vmatprep.subr.mxu0 0.0
  %5469 = vmatpush1.msra.mxu0 %v5424
  %5470 = vmatprep.subr.mxu0 0.0
  %5471 = vmatpush1.msra.mxu0 %v5425
  %5472 = vmatprep.subr.mxu0 0.0
  %5473 = vmatpush1.msra.mxu0 %v5426
  %5474 = vmatprep.subr.mxu0 0.0
  %5475 = vmatpush1.msra.mxu0 %v5427
  %5476 = vmatprep.subr.mxu0 0.0
  %5477 = vmatpush1.msra.mxu0 %v5428
  %5478 = vmatprep.subr.mxu0 0.0
  %5479 = vmatpush1.msra.mxu0 %v5429
  %5480 = vmatprep.subr.mxu0 0.0
  %5481 = vmatpush1.msra.mxu0 %v5430
  %5482 = vmatprep.subr.mxu0 0.0
  %5483 = vmatpush1.msra.mxu0 %v5431
  %5484 = vmatprep.subr.mxu0 0.0
  %5485 = vmatpush1.msra.mxu0 %v5432
  %5486 = vmatprep.subr.mxu0 0.0
  %5487 = vmatpush1.msra.mxu0 %v5433
  %5488 = vmatprep.subr.mxu0 0.0
  %5489 = vmatpush1.msra.mxu0 %v5434
  %5490 = vmatprep.subr.mxu0 0.0
  %5491 = vmatpush1.msra.mxu0 %v5435
  %5492 = vmatprep.subr.mxu0 0.0
  %5493 = vmatpush1.msra.mxu0 %v5436
  %5494 = vmatprep.subr.mxu0 0.0
  %5495 = vmatpush1.msra.mxu0 %v5437
  %5496 = vmatprep.subr.mxu0 0.0
  %5497 = vmatpush1.msra.mxu0 %v5438
  %5498 = vmatprep.subr.mxu0 0.0
  %5499 = vmatpush1.msra.mxu0 %v5439
  %5500 = vmatprep.subr.mxu0 0.0
  %5501 = vmatpush1.msra.mxu0 %v5440
  %5502 = vmatprep.subr.mxu0 0.0
  %5503 = vmatpush1.msra.mxu0 %v5441
  %5504 = vmatprep.subr.mxu0 0.0
  %5505 = vmatpush1.msra.mxu0 %v5442
  %5506 = vmatprep.subr.mxu0 0.0
  %5507 = vmatpush1.msra.mxu0 %v5443
  %5508 = vmatprep.mubr.f32.mxu0 %v5401
  %5509 = vmatmul.mubr.f32.gmra.mrb[0].mxu0 %v5398
  %v5510 = vpop.f32.mrb[0].mxu0
  %v5511 = vadd.f32 0.0, %v5510
  %v5512 = vpop.f32.mrb[0].mxu0
  %5513 = vmatprep.mubr.f32.mxu0 %v5407
  %5514 = vmatmul.mubr.f32.gmra.mrb[0].mxu0 %v5404
  %v5515 = vpop.f32.mrb[0].mxu0
  %v5516 = vadd.f32 0.0, %v5515
  %v5517 = vpop.f32.mrb[0].mxu0
  %5518 = vdwg.mxu0
  %5519 = vmatprep.subr.mxu0 0.0
  %5520 = vmatpush1.msra.mxu0 %v5347
  %5521 = vmatprep.subr.mxu0 0.0
  %5522 = vmatpush1.msra.mxu0 %v5348
  %5523 = vmatprep.subr.mxu0 0.0
  %5524 = vmatpush1.msra.mxu0 %v5349
  %5525 = vmatprep.subr.mxu0 0.0
  %5526 = vmatpush1.msra.mxu0 %v5350
  %5527 = vmatprep.subr.mxu0 0.0
  %5528 = vmatpush1.msra.mxu0 %v5351
  %5529 = vmatprep.subr.mxu0 0.0
  %5530 = vmatpush1.msra.mxu0 %v5352
  %5531 = vmatprep.subr.mxu0 0.0
  %5532 = vmatpush1.msra.mxu0 %v5353
  %5533 = vmatprep.subr.mxu0 0.0
  %5534 = vmatpush1.msra.mxu0 %v5354
  %5535 = vmatprep.subr.mxu0 0.0
  %5536 = vmatpush1.msra.mxu0 %v5355
  %5537 = vmatprep.subr.mxu0 0.0
  %5538 = vmatpush1.msra.mxu0 %v5356
  %5539 = vmatprep.subr.mxu0 0.0
  %5540 = vmatpush1.msra.mxu0 %v5357
  %5541 = vmatprep.subr.mxu0 0.0
  %5542 = vmatpush1.msra.mxu0 %v5358
  %5543 = vmatprep.subr.mxu0 0.0
  %5544 = vmatpush1.msra.mxu0 %v5359
  %5545 = vmatprep.subr.mxu0 0.0
  %5546 = vmatpush1.msra.mxu0 %v5360
  %5547 = vmatprep.subr.mxu0 0.0
  %5548 = vmatpush1.msra.mxu0 %v5361
  %5549 = vmatprep.subr.mxu0 0.0
  %5550 = vmatpush1.msra.mxu0 %v5362
  %5551 = vmatprep.subr.mxu0 0.0
  %5552 = vmatpush1.msra.mxu0 %v5363
  %5553 = vmatprep.subr.mxu0 0.0
  %5554 = vmatpush1.msra.mxu0 %v5364
  %5555 = vmatprep.subr.mxu0 0.0
  %5556 = vmatpush1.msra.mxu0 %v5365
  %5557 = vmatprep.subr.mxu0 0.0
  %5558 = vmatpush1.msra.mxu0 %v5366
  %5559 = vmatprep.subr.mxu0 0.0
  %5560 = vmatpush1.msra.mxu0 %v5367
  %5561 = vmatprep.subr.mxu0 0.0
  %5562 = vmatpush1.msra.mxu0 %v5368
  %5563 = vmatprep.subr.mxu0 0.0
  %5564 = vmatpush1.msra.mxu0 %v5369
  %5565 = vmatprep.subr.mxu0 0.0
  %5566 = vmatpush1.msra.mxu0 %v5370
  %5567 = vmatprep.subr.mxu0 0.0
  %5568 = vmatpush1.msra.mxu0 %v5371
  %5569 = vmatprep.subr.mxu0 0.0
  %5570 = vmatpush1.msra.mxu0 %v5372
  %5571 = vmatprep.subr.mxu0 0.0
  %5572 = vmatpush1.msra.mxu0 %v5373
  %5573 = vmatprep.subr.mxu0 0.0
  %5574 = vmatpush1.msra.mxu0 %v5374
  %5575 = vmatprep.subr.mxu0 0.0
  %5576 = vmatpush1.msra.mxu0 %v5375
  %5577 = vmatprep.subr.mxu0 0.0
  %5578 = vmatpush1.msra.mxu0 %v5376
  %5579 = vmatprep.subr.mxu0 0.0
  %5580 = vmatpush1.msra.mxu0 %v5377
  %5581 = vmatprep.subr.mxu0 0.0
  %5582 = vmatpush1.msra.mxu0 %v5378
  %5583 = vmatprep.mubr.f32.mxu0 %v5154
  %5584 = vmatmul.mubr.f32.gmra.mrb[0].mxu0 %v5151
  %v5585 = vpop.f32.mrb[0].mxu0
  %v5586 = vadd.f32 %v5511, %v5585
  %v5587 = vpop.f32.mrb[0].mxu0
  %5588 = vmatprep.mubr.f32.mxu0 %v5160
  %5589 = vmatmul.mubr.f32.gmra.mrb[0].mxu0 %v5157
  %v5590 = vpop.f32.mrb[0].mxu0
  %v5591 = vadd.f32 %v5516, %v5590
  %v5592 = vpop.f32.mrb[0].mxu0
  %5593 = vdwg.mxu0
  %v5594 = vadd.f32 %v5339, %v5344
  %v5595 = vrot.slane %v5594, 4
  %v5596 = vadd.f32 %v5594, %v5595
  %v5597 = vrot.slane %v5596, 2
  %v5598 = vadd.f32 %v5596, %v5597
  %v5599 = vrot.slane %v5598, 1
  %v5600 = vadd.f32 %v5598, %v5599
  %v5601 = vmul.f32 %v5339, %v5339
  %v5602 = vmul.f32 %v5344, %v5344
  %v5603 = vadd.f32 %v5601, %v5602
  %v5604 = vrot.slane %v5603, 4
  %v5605 = vadd.f32 %v5603, %v5604
  %v5606 = vrot.slane %v5605, 2
  %v5607 = vadd.f32 %v5605, %v5606
  %v5608 = vrot.slane %v5607, 1
  %v5609 = vadd.f32 %v5607, %v5608
  %v5610 = vadd.f32 %v5586, %v5591
  %v5611 = vrot.slane %v5610, 4
  %v5612 = vadd.f32 %v5610, %v5611
  %v5613 = vrot.slane %v5612, 2
  %v5614 = vadd.f32 %v5612, %v5613
  %v5615 = vrot.slane %v5614, 1
  %v5616 = vadd.f32 %v5614, %v5615
  %v5617 = vadd.f32 %v5600, %v5616
  %v5618 = vmul.f32 %v5586, %v5586
  %v5619 = vmul.f32 %v5591, %v5591
  %v5620 = vadd.f32 %v5618, %v5619
  %v5621 = vrot.slane %v5620, 4
  %v5622 = vadd.f32 %v5620, %v5621
  %v5623 = vrot.slane %v5622, 2
  %v5624 = vadd.f32 %v5622, %v5623
  %v5625 = vrot.slane %v5624, 1
  %v5626 = vadd.f32 %v5624, %v5625
  %v5627 = vadd.f32 %v5609, %v5626
  %v5628 = vsel %vm736, %v5617, %v5627
  %5629 = vmatprep.subr.mxu0 0.0
  %5630 = vmatpush1.msra.mxu0 %v76
  %5631 = vmatprep.subr.mxu0 0.0
  %5632 = vmatpush1.msra.mxu0 %v77
  %5633 = vmatprep.subr.mxu0 0.0
  %5634 = vmatpush1.msra.mxu0 %v78
  %5635 = vmatprep.subr.mxu0 0.0
  %5636 = vmatpush1.msra.mxu0 %v79
  %5637 = vmatprep.subr.mxu0 0.0
  %5638 = vmatpush1.msra.mxu0 %v80
  %5639 = vmatprep.subr.mxu0 0.0
  %5640 = vmatpush1.msra.mxu0 %v81
  %5641 = vmatprep.subr.mxu0 0.0
  %5642 = vmatpush1.msra.mxu0 %v82
  %5643 = vmatprep.subr.mxu0 0.0
  %5644 = vmatpush1.msra.mxu0 %v83
  %5645 = vmatprep.subr.mxu0 0.0
  %5646 = vmatpush1.msra.mxu0 %v84
  %5647 = vmatprep.subr.mxu0 0.0
  %5648 = vmatpush1.msra.mxu0 %v85
  %5649 = vmatprep.subr.mxu0 0.0
  %5650 = vmatpush1.msra.mxu0 %v86
  %5651 = vmatprep.subr.mxu0 0.0
  %5652 = vmatpush1.msra.mxu0 %v87
  %5653 = vmatprep.subr.mxu0 0.0
  %5654 = vmatpush1.msra.mxu0 %v88
  %5655 = vmatprep.subr.mxu0 0.0
  %5656 = vmatpush1.msra.mxu0 %v89
  %5657 = vmatprep.subr.mxu0 0.0
  %5658 = vmatpush1.msra.mxu0 %v90
  %5659 = vmatprep.subr.mxu0 0.0
  %5660 = vmatpush1.msra.mxu0 %v91
  %5661 = vmatprep.subr.mxu0 0.0
  %5662 = vmatpush1.msra.mxu0 0.0
  %5663 = vmatprep.subr.mxu0 0.0
  %5664 = vmatpush1.msra.mxu0 0.0
  %5665 = vmatprep.subr.mxu0 0.0
  %5666 = vmatpush1.msra.mxu0 0.0
  %5667 = vmatprep.subr.mxu0 0.0
  %5668 = vmatpush1.msra.mxu0 0.0
  %5669 = vmatprep.subr.mxu0 0.0
  %5670 = vmatpush1.msra.mxu0 0.0
  %5671 = vmatprep.subr.mxu0 0.0
  %5672 = vmatpush1.msra.mxu0 0.0
  %5673 = vmatprep.subr.mxu0 0.0
  %5674 = vmatpush1.msra.mxu0 0.0
  %5675 = vmatprep.subr.mxu0 0.0
  %5676 = vmatpush1.msra.mxu0 0.0
  %5677 = vmatprep.subr.mxu0 0.0
  %5678 = vmatpush1.msra.mxu0 0.0
  %5679 = vmatprep.subr.mxu0 0.0
  %5680 = vmatpush1.msra.mxu0 0.0
  %5681 = vmatprep.subr.mxu0 0.0
  %5682 = vmatpush1.msra.mxu0 0.0
  %5683 = vmatprep.subr.mxu0 0.0
  %5684 = vmatpush1.msra.mxu0 0.0
  %5685 = vmatprep.subr.mxu0 0.0
  %5686 = vmatpush1.msra.mxu0 0.0
  %5687 = vmatprep.subr.mxu0 0.0
  %5688 = vmatpush1.msra.mxu0 0.0
  %5689 = vmatprep.subr.mxu0 0.0
  %5690 = vmatpush1.msra.mxu0 0.0
  %5691 = vmatprep.subr.mxu0 0.0
  %5692 = vmatpush1.msra.mxu0 0.0
  %5693 = vmatprep.mubr.f32.mxu0 0.0
  %5694 = vmatmul.mubr.f32.gmra.mrb[0].mxu0 %v5628
  %v5695 = vpop.f32.mrb[0].mxu0
  %v5696 = vadd.f32 0.0, %v5695
  %v5697 = vpop.f32.mrb[0].mxu0
  %5698 = vdwg.mxu0
  %v5699 = vmul.f32 %v5696, 0.001953125
  %v5700 = vmul.f32 %v5699, %v5699
  %v5702 = vrot.slane %v5700, 7
  %v5704 = vsub.f32 %v5699, %v5702
  %v5705 = vld [vmem:[%s5 + $0xe] sm:$0x1]
  %v5706 = vld [vmem:[%s5 + $0xf] sm:$0x1]
  %v5707 = vadd.f32 %v5704, 1e-05
  %v5708 = vrsqrt.pop %v5707
  %v5710 = vrot.slane %v5708, 1
  %v5712 = vmul.f32 %v5705, %v5710
  %v5713 = vmul.f32 %v5699, %v5712
  %v5714 = vsub.f32 %v5706, %v5713
  %v5716 = vrot.slane %v5714, 7
  %v5718 = vsel %vm736, %v5712, %v5716
  %v5720 = vsel %vm828, %v5718, 0
  %5722 = vmatprep.subr.mxu0 0.0
  %5723 = vmatpush1.msra.mxu0 %v92
  %5724 = vmatprep.subr.mxu0 0.0
  %5725 = vmatpush1.msra.mxu0 0.0
  %5726 = vmatprep.subr.mxu0 0.0
  %5727 = vmatpush1.msra.mxu0 0.0
  %5728 = vmatprep.subr.mxu0 0.0
  %5729 = vmatpush1.msra.mxu0 0.0
  %5730 = vmatprep.subr.mxu0 0.0
  %5731 = vmatpush1.msra.mxu0 0.0
  %5732 = vmatprep.subr.mxu0 0.0
  %5733 = vmatpush1.msra.mxu0 0.0
  %5734 = vmatprep.subr.mxu0 0.0
  %5735 = vmatpush1.msra.mxu0 0.0
  %5736 = vmatprep.subr.mxu0 0.0
  %5737 = vmatpush1.msra.mxu0 0.0
  %5738 = vmatprep.subr.mxu0 0.0
  %5739 = vmatpush1.msra.mxu0 0.0
  %5740 = vmatprep.subr.mxu0 0.0
  %5741 = vmatpush1.msra.mxu0 0.0
  %5742 = vmatprep.subr.mxu0 0.0
  %5743 = vmatpush1.msra.mxu0 0.0
  %5744 = vmatprep.subr.mxu0 0.0
  %5745 = vmatpush1.msra.mxu0 0.0
  %5746 = vmatprep.subr.mxu0 0.0
  %5747 = vmatpush1.msra.mxu0 0.0
  %5748 = vmatprep.subr.mxu0 0.0
  %5749 = vmatpush1.msra.mxu0 0.0
  %5750 = vmatprep.subr.mxu0 0.0
  %5751 = vmatpush1.msra.mxu0 0.0
  %5752 = vmatprep.subr.mxu0 0.0
  %5753 = vmatpush1.msra.mxu0 0.0
  %5754 = vmatprep.subr.mxu0 0.0
  %5755 = vmatpush1.msra.mxu0 0.0
  %5756 = vmatprep.subr.mxu0 0.0
  %5757 = vmatpush1.msra.mxu0 0.0
  %5758 = vmatprep.subr.mxu0 0.0
  %5759 = vmatpush1.msra.mxu0 0.0
  %5760 = vmatprep.subr.mxu0 0.0
  %5761 = vmatpush1.msra.mxu0 0.0
  %5762 = vmatprep.subr.mxu0 0.0
  %5763 = vmatpush1.msra.mxu0 0.0
  %5764 = vmatprep.subr.mxu0 0.0
  %5765 = vmatpush1.msra.mxu0 0.0
  %5766 = vmatprep.subr.mxu0 0.0
  %5767 = vmatpush1.msra.mxu0 0.0
  %5768 = vmatprep.subr.mxu0 0.0
  %5769 = vmatpush1.msra.mxu0 0.0
  %5770 = vmatprep.subr.mxu0 0.0
  %5771 = vmatpush1.msra.mxu0 0.0
  %5772 = vmatprep.subr.mxu0 0.0
  %5773 = vmatpush1.msra.mxu0 0.0
  %5774 = vmatprep.subr.mxu0 0.0
  %5775 = vmatpush1.msra.mxu0 0.0
  %5776 = vmatprep.subr.mxu0 0.0
  %5777 = vmatpush1.msra.mxu0 0.0
  %5778 = vmatprep.subr.mxu0 0.0
  %5779 = vmatpush1.msra.mxu0 0.0
  %5780 = vmatprep.subr.mxu0 0.0
  %5781 = vmatpush1.msra.mxu0 0.0
  %5782 = vmatprep.subr.mxu0 0.0
  %5783 = vmatpush1.msra.mxu0 0.0
  %5784 = vmatprep.subr.mxu0 0.0
  %5785 = vmatpush1.msra.mxu0 0.0
  %5786 = vmatprep.mubr.f32.mxu0 0.0
  %5787 = vmatmul.mubr.f32.gmra.mrb[0].mxu0 %v5720
  %v5788 = vpop.f32.mrb[0].mxu0
  %v5789 = vadd.f32 0.0, %v5788
  %v5790 = vpop.f32.mrb[0].mxu0
  %5791 = vdwg.mxu0
  %v5792 = vlaneseq
  %v5793 = vshrl.u32 %v5792, 7
  %v5794 = vsub.s32 0, %v5793
  %v5795 = vrot.slane %v5789, %v5794
  %v5796 = vmul.f32 %v5339, %v5795
  %v5797 = vmul.f32 %v5344, %v5795
  %v5798 = vlaneseq
  %v5799 = vshrl.u32 %v5798, 7
  %v5800 = vsub.s32 1, %v5799
  %v5801 = vrot.slane %v5789, %v5800
  %v5802 = vadd.f32 %v5796, %v5801
  %v5803 = vadd.f32 %v5797, %v5801
  %v5804 = vmul.f32 %v5586, %v5795
  %v5805 = vmul.f32 %v5591, %v5795
  %v5806 = vadd.f32 %v5804, %v5801
  %v5807 = vadd.f32 %v5805, %v5801
  %v5808 = vld [vmem:[%s1870] ss:$2 sm:$0xff]
  %v5809 = vld [vmem:[%s1872] ss:$2 sm:$0xff]
  %v5810 = vld [vmem:[%s1967] ss:$2 sm:$0xff]
  %v5811 = vld [vmem:[%s1969] ss:$2 sm:$0xff]
  %v5812 = vadd.f32 %v5802, %v5808
  %v5813 = vadd.f32 %v5803, %v5809
  %v5814 = vadd.f32 %v5806, %v5810
  %v5815 = vadd.f32 %v5807, %v5811
  %v5816 = vld [vmem:[%s2 + $0x800] sm:$0xff]
  %v5817 = vld [vmem:[%s2 + $0x808] sm:$0xff]
  %v5818 = vld [vmem:[%s2 + $0x810] sm:$0xff]
  %v5819 = vld [vmem:[%s2 + $0x818] sm:$0xff]
  %v5820 = vld [vmem:[%s2 + $0x820] sm:$0xff]
  %v5821 = vld [vmem:[%s2 + $0x828] sm:$0xff]
  %v5822 = vld [vmem:[%s2 + $0x830] sm:$0xff]
  %v5823 = vld [vmem:[%s2 + $0x838] sm:$0xff]
  %v5824 = vld [vmem:[%s0] ss:$2 sm:$0xff]
  %s5825 = scalar_lea.vmem %s0, 16
  %v5826 = vld [vmem:[%s5825] ss:$2 sm:$0xff]
  %s5827 = scalar_lea.vmem %s0, 1
  %v5828 = vld [vmem:[%s5827] ss:$2 sm:$0xff]
  %s5829 = scalar_lea.vmem %s0, 17
  %v5830 = vld [vmem:[%s5829] ss:$2 sm:$0xff]
  %v5832 = vsel %vm152, %v5824, 0
  %v5835 = vsel %vm152, %v5826, 0
  %5837 = vmatprep.subr.mxu0 0.0
  %5838 = vmatpush1.msra.mxu0 %v5816
  %5839 = vmatprep.subr.mxu0 0.0
  %5840 = vmatpush1.msra.mxu0 %v5817
  %5841 = vmatprep.subr.mxu0 0.0
  %5842 = vmatpush1.msra.mxu0 %v5818
  %5843 = vmatprep.subr.mxu0 0.0
  %5844 = vmatpush1.msra.mxu0 %v5819
  %5845 = vmatprep.subr.mxu0 0.0
  %5846 = vmatpush1.msra.mxu0 %v5820
  %5847 = vmatprep.subr.mxu0 0.0
  %5848 = vmatpush1.msra.mxu0 %v5821
  %5849 = vmatprep.subr.mxu0 0.0
  %5850 = vmatpush1.msra.mxu0 %v5822
  %5851 = vmatprep.subr.mxu0 0.0
  %5852 = vmatpush1.msra.mxu0 %v5823
  %5853 = vmatprep.subr.mxu0 0.0
  %5854 = vmatpush1.msra.mxu0 0.0
  %5855 = vmatprep.subr.mxu0 0.0
  %5856 = vmatpush1.msra.mxu0 0.0
  %5857 = vmatprep.subr.mxu0 0.0
  %5858 = vmatpush1.msra.mxu0 0.0
  %5859 = vmatprep.subr.mxu0 0.0
  %5860 = vmatpush1.msra.mxu0 0.0
  %5861 = vmatprep.subr.mxu0 0.0
  %5862 = vmatpush1.msra.mxu0 0.0
  %5863 = vmatprep.subr.mxu0 0.0
  %5864 = vmatpush1.msra.mxu0 0.0
  %5865 = vmatprep.subr.mxu0 0.0
  %5866 = vmatpush1.msra.mxu0 0.0
  %5867 = vmatprep.subr.mxu0 0.0
  %5868 = vmatpush1.msra.mxu0 0.0
  %5869 = vmatprep.subr.mxu0 0.0
  %5870 = vmatpush1.msra.mxu0 0.0
  %5871 = vmatprep.subr.mxu0 0.0
  %5872 = vmatpush1.msra.mxu0 0.0
  %5873 = vmatprep.subr.mxu0 0.0
  %5874 = vmatpush1.msra.mxu0 0.0
  %5875 = vmatprep.subr.mxu0 0.0
  %5876 = vmatpush1.msra.mxu0 0.0
  %5877 = vmatprep.subr.mxu0 0.0
  %5878 = vmatpush1.msra.mxu0 0.0
  %5879 = vmatprep.subr.mxu0 0.0
  %5880 = vmatpush1.msra.mxu0 0.0
  %5881 = vmatprep.subr.mxu0 0.0
  %5882 = vmatpush1.msra.mxu0 0.0
  %5883 = vmatprep.subr.mxu0 0.0
  %5884 = vmatpush1.msra.mxu0 0.0
  %5885 = vmatprep.subr.mxu0 0.0
  %5886 = vmatpush1.msra.mxu0 0.0
  %5887 = vmatprep.subr.mxu0 0.0
  %5888 = vmatpush1.msra.mxu0 0.0
  %5889 = vmatprep.subr.mxu0 0.0
  %5890 = vmatpush1.msra.mxu0 0.0
  %5891 = vmatprep.subr.mxu0 0.0
  %5892 = vmatpush1.msra.mxu0 0.0
  %5893 = vmatprep.subr.mxu0 0.0
  %5894 = vmatpush1.msra.mxu0 0.0
  %5895 = vmatprep.subr.mxu0 0.0
  %5896 = vmatpush1.msra.mxu0 0.0
  %5897 = vmatprep.subr.mxu0 0.0
  %5898 = vmatpush1.msra.mxu0 0.0
  %5899 = vmatprep.subr.mxu0 0.0
  %5900 = vmatpush1.msra.mxu0 0.0
  %5901 = vmatprep.mubr.f32.mxu0 0.0
  %5902 = vmatmul.mubr.f32.gmra.mrb[0].mxu0 %v5832
  %v5903 = vpop.f32.mrb[0].mxu0
  %v5904 = vadd.f32 0.0, %v5903
  %v5905 = vpop.f32.mrb[0].mxu0
  %5906 = vmatprep.mubr.f32.mxu0 0.0
  %5907 = vmatmul.mubr.f32.gmra.mrb[0].mxu0 %v5835
  %v5908 = vpop.f32.mrb[0].mxu0
  %v5909 = vadd.f32 0.0, %v5908
  %v5910 = vpop.f32.mrb[0].mxu0
  %5911 = vdwg.mxu0
  %v5913 = vsel %vm152, %v5828, 0
  %v5916 = vsel %vm152, %v5830, 0
  %5918 = vmatprep.subr.mxu0 0.0
  %5919 = vmatpush1.msra.mxu0 %v5816
  %5920 = vmatprep.subr.mxu0 0.0
  %5921 = vmatpush1.msra.mxu0 %v5817
  %5922 = vmatprep.subr.mxu0 0.0
  %5923 = vmatpush1.msra.mxu0 %v5818
  %5924 = vmatprep.subr.mxu0 0.0
  %5925 = vmatpush1.msra.mxu0 %v5819
  %5926 = vmatprep.subr.mxu0 0.0
  %5927 = vmatpush1.msra.mxu0 %v5820
  %5928 = vmatprep.subr.mxu0 0.0
  %5929 = vmatpush1.msra.mxu0 %v5821
  %5930 = vmatprep.subr.mxu0 0.0
  %5931 = vmatpush1.msra.mxu0 %v5822
  %5932 = vmatprep.subr.mxu0 0.0
  %5933 = vmatpush1.msra.mxu0 %v5823
  %5934 = vmatprep.subr.mxu0 0.0
  %5935 = vmatpush1.msra.mxu0 0.0
  %5936 = vmatprep.subr.mxu0 0.0
  %5937 = vmatpush1.msra.mxu0 0.0
  %5938 = vmatprep.subr.mxu0 0.0
  %5939 = vmatpush1.msra.mxu0 0.0
  %5940 = vmatprep.subr.mxu0 0.0
  %5941 = vmatpush1.msra.mxu0 0.0
  %5942 = vmatprep.subr.mxu0 0.0
  %5943 = vmatpush1.msra.mxu0 0.0
  %5944 = vmatprep.subr.mxu0 0.0
  %5945 = vmatpush1.msra.mxu0 0.0
  %5946 = vmatprep.subr.mxu0 0.0
  %5947 = vmatpush1.msra.mxu0 0.0
  %5948 = vmatprep.subr.mxu0 0.0
  %5949 = vmatpush1.msra.mxu0 0.0
  %5950 = vmatprep.subr.mxu0 0.0
  %5951 = vmatpush1.msra.mxu0 0.0
  %5952 = vmatprep.subr.mxu0 0.0
  %5953 = vmatpush1.msra.mxu0 0.0
  %5954 = vmatprep.subr.mxu0 0.0
  %5955 = vmatpush1.msra.mxu0 0.0
  %5956 = vmatprep.subr.mxu0 0.0
  %5957 = vmatpush1.msra.mxu0 0.0
  %5958 = vmatprep.subr.mxu0 0.0
  %5959 = vmatpush1.msra.mxu0 0.0
  %5960 = vmatprep.subr.mxu0 0.0
  %5961 = vmatpush1.msra.mxu0 0.0
  %5962 = vmatprep.subr.mxu0 0.0
  %5963 = vmatpush1.msra.mxu0 0.0
  %5964 = vmatprep.subr.mxu0 0.0
  %5965 = vmatpush1.msra.mxu0 0.0
  %5966 = vmatprep.subr.mxu0 0.0
  %5967 = vmatpush1.msra.mxu0 0.0
  %5968 = vmatprep.subr.mxu0 0.0
  %5969 = vmatpush1.msra.mxu0 0.0
  %5970 = vmatprep.subr.mxu0 0.0
  %5971 = vmatpush1.msra.mxu0 0.0
  %5972 = vmatprep.subr.mxu0 0.0
  %5973 = vmatpush1.msra.mxu0 0.0
  %5974 = vmatprep.subr.mxu0 0.0
  %5975 = vmatpush1.msra.mxu0 0.0
  %5976 = vmatprep.subr.mxu0 0.0
  %5977 = vmatpush1.msra.mxu0 0.0
  %5978 = vmatprep.subr.mxu0 0.0
  %5979 = vmatpush1.msra.mxu0 0.0
  %5980 = vmatprep.subr.mxu0 0.0
  %5981 = vmatpush1.msra.mxu0 0.0
  %5982 = vmatprep.mubr.f32.mxu0 0.0
  %5983 = vmatmul.mubr.f32.gmra.mrb[0].mxu0 %v5913
  %v5984 = vpop.f32.mrb[0].mxu0
  %v5985 = vadd.f32 0.0, %v5984
  %v5986 = vpop.f32.mrb[0].mxu0
  %5987 = vmatprep.mubr.f32.mxu0 0.0
  %5988 = vmatmul.mubr.f32.gmra.mrb[0].mxu0 %v5916
  %v5989 = vpop.f32.mrb[0].mxu0
  %v5990 = vadd.f32 0.0, %v5989
  %v5991 = vpop.f32.mrb[0].mxu0
  %5992 = vdwg.mxu0
  %v5993 = vsel %vm152, %v5904, 0.0
  %v5994 = vsel %vm152, %v5909, 0.0
  %v5995 = vadd.f32 %v5993, %v5994
  %v5996 = vrot.slane %v5995, 4
  %v5997 = vadd.f32 %v5995, %v5996
  %v5998 = vrot.slane %v5997, 2
  %v5999 = vadd.f32 %v5997, %v5998
  %v6000 = vrot.slane %v5999, 1
  %v6001 = vadd.f32 %v5999, %v6000
  %v6002 = vmul.f32 %v5904, %v5904
  %v6003 = vmul.f32 %v5909, %v5909
  %v6004 = vsel %vm152, %v6002, 0.0
  %v6005 = vsel %vm152, %v6003, 0.0
  %v6006 = vadd.f32 %v6004, %v6005
  %v6007 = vrot.slane %v6006, 4
  %v6008 = vadd.f32 %v6006, %v6007
  %v6009 = vrot.slane %v6008, 2
  %v6010 = vadd.f32 %v6008, %v6009
  %v6011 = vrot.slane %v6010, 1
  %v6012 = vadd.f32 %v6010, %v6011
  %v6013 = vsel %vm152, %v5985, 0.0
  %v6014 = vsel %vm152, %v5990, 0.0
  %v6015 = vadd.f32 %v6013, %v6014
  %v6016 = vrot.slane %v6015, 4
  %v6017 = vadd.f32 %v6015, %v6016
  %v6018 = vrot.slane %v6017, 2
  %v6019 = vadd.f32 %v6017, %v6018
  %v6020 = vrot.slane %v6019, 1
  %v6021 = vadd.f32 %v6019, %v6020
  %v6022 = vadd.f32 %v6001, %v6021
  %v6023 = vmul.f32 %v5985, %v5985
  %v6024 = vmul.f32 %v5990, %v5990
  %v6025 = vsel %vm152, %v6023, 0.0
  %v6026 = vsel %vm152, %v6024, 0.0
  %v6027 = vadd.f32 %v6025, %v6026
  %v6028 = vrot.slane %v6027, 4
  %v6029 = vadd.f32 %v6027, %v6028
  %v6030 = vrot.slane %v6029, 2
  %v6031 = vadd.f32 %v6029, %v6030
  %v6032 = vrot.slane %v6031, 1
  %v6033 = vadd.f32 %v6031, %v6032
  %v6034 = vadd.f32 %v6012, %v6033
  %v6035 = vsel %vm736, %v6022, %v6034
  %v6037 = vsel %vm152, %v6035, 0
  %6039 = vmatprep.subr.mxu0 0.0
  %6040 = vmatpush1.msra.mxu0 %v111
  %6041 = vmatprep.subr.mxu0 0.0
  %6042 = vmatpush1.msra.mxu0 %v112
  %6043 = vmatprep.subr.mxu0 0.0
  %6044 = vmatpush1.msra.mxu0 %v113
  %6045 = vmatprep.subr.mxu0 0.0
  %6046 = vmatpush1.msra.mxu0 %v114
  %6047 = vmatprep.subr.mxu0 0.0
  %6048 = vmatpush1.msra.mxu0 %v115
  %6049 = vmatprep.subr.mxu0 0.0
  %6050 = vmatpush1.msra.mxu0 %v116
  %6051 = vmatprep.subr.mxu0 0.0
  %6052 = vmatpush1.msra.mxu0 %v117
  %6053 = vmatprep.subr.mxu0 0.0
  %6054 = vmatpush1.msra.mxu0 %v118
  %6055 = vmatprep.subr.mxu0 0.0
  %6056 = vmatpush1.msra.mxu0 0.0
  %6057 = vmatprep.subr.mxu0 0.0
  %6058 = vmatpush1.msra.mxu0 0.0
  %6059 = vmatprep.subr.mxu0 0.0
  %6060 = vmatpush1.msra.mxu0 0.0
  %6061 = vmatprep.subr.mxu0 0.0
  %6062 = vmatpush1.msra.mxu0 0.0
  %6063 = vmatprep.subr.mxu0 0.0
  %6064 = vmatpush1.msra.mxu0 0.0
  %6065 = vmatprep.subr.mxu0 0.0
  %6066 = vmatpush1.msra.mxu0 0.0
  %6067 = vmatprep.subr.mxu0 0.0
  %6068 = vmatpush1.msra.mxu0 0.0
  %6069 = vmatprep.subr.mxu0 0.0
  %6070 = vmatpush1.msra.mxu0 0.0
  %6071 = vmatprep.subr.mxu0 0.0
  %6072 = vmatpush1.msra.mxu0 0.0
  %6073 = vmatprep.subr.mxu0 0.0
  %6074 = vmatpush1.msra.mxu0 0.0
  %6075 = vmatprep.subr.mxu0 0.0
  %6076 = vmatpush1.msra.mxu0 0.0
  %6077 = vmatprep.subr.mxu0 0.0
  %6078 = vmatpush1.msra.mxu0 0.0
  %6079 = vmatprep.subr.mxu0 0.0
  %6080 = vmatpush1.msra.mxu0 0.0
  %6081 = vmatprep.subr.mxu0 0.0
  %6082 = vmatpush1.msra.mxu0 0.0
  %6083 = vmatprep.subr.mxu0 0.0
  %6084 = vmatpush1.msra.mxu0 0.0
  %6085 = vmatprep.subr.mxu0 0.0
  %6086 = vmatpush1.msra.mxu0 0.0
  %6087 = vmatprep.subr.mxu0 0.0
  %6088 = vmatpush1.msra.mxu0 0.0
  %6089 = vmatprep.subr.mxu0 0.0
  %6090 = vmatpush1.msra.mxu0 0.0
  %6091 = vmatprep.subr.mxu0 0.0
  %6092 = vmatpush1.msra.mxu0 0.0
  %6093 = vmatprep.subr.mxu0 0.0
  %6094 = vmatpush1.msra.mxu0 0.0
  %6095 = vmatprep.subr.mxu0 0.0
  %6096 = vmatpush1.msra.mxu0 0.0
  %6097 = vmatprep.subr.mxu0 0.0
  %6098 = vmatpush1.msra.mxu0 0.0
  %6099 = vmatprep.subr.mxu0 0.0
  %6100 = vmatpush1.msra.mxu0 0.0
  %6101 = vmatprep.subr.mxu0 0.0
  %6102 = vmatpush1.msra.mxu0 0.0
  %6103 = vmatprep.mubr.f32.mxu0 0.0
  %6104 = vmatmul.mubr.f32.gmra.mrb[0].mxu0 %v6037
  %v6105 = vpop.f32.mrb[0].mxu0
  %v6106 = vadd.f32 0.0, %v6105
  %v6107 = vpop.f32.mrb[0].mxu0
  %6108 = vdwg.mxu0
  %v6109 = vmul.f32 %v6106, 0.001953125
  %v6110 = vmul.f32 %v6109, %v6109
  %v6112 = vrot.slane %v6110, 7
  %v6114 = vsub.f32 %v6109, %v6112
  %v6115 = vld [vmem:[%s5 + $0x10] sm:$0x1]
  %v6116 = vld [vmem:[%s5 + $0x11] sm:$0x1]
  %v6117 = vadd.f32 %v6114, 1e-05
  %v6118 = vrsqrt.pop %v6117
  %v6120 = vrot.slane %v6118, 1
  %v6122 = vmul.f32 %v6115, %v6120
  %v6123 = vmul.f32 %v6109, %v6122
  %v6124 = vsub.f32 %v6116, %v6123
  %v6126 = vrot.slane %v6124, 7
  %v6128 = vsel %vm736, %v6122, %v6126
  %vm6129 = vcmask 31744
  %v6131 = vsel %vm6129, %v6128, 0
  %vm6133 = vcmask 1043456
  %v6135 = vsel %vm6133, %v119, 0
  %6137 = vmatprep.subr.mxu0 0.0
  %6138 = vmatpush1.msra.mxu0 %v6135
  %6139 = vmatprep.subr.mxu0 0.0
  %6140 = vmatpush1.msra.mxu0 0.0
  %6141 = vmatprep.subr.mxu0 0.0
  %6142 = vmatpush1.msra.mxu0 0.0
  %6143 = vmatprep.subr.mxu0 0.0
  %6144 = vmatpush1.msra.mxu0 0.0
  %6145 = vmatprep.subr.mxu0 0.0
  %6146 = vmatpush1.msra.mxu0 0.0
  %6147 = vmatprep.subr.mxu0 0.0
  %6148 = vmatpush1.msra.mxu0 0.0
  %6149 = vmatprep.subr.mxu0 0.0
  %6150 = vmatpush1.msra.mxu0 0.0
  %6151 = vmatprep.subr.mxu0 0.0
  %6152 = vmatpush1.msra.mxu0 0.0
  %6153 = vmatprep.subr.mxu0 0.0
  %6154 = vmatpush1.msra.mxu0 0.0
  %6155 = vmatprep.subr.mxu0 0.0
  %6156 = vmatpush1.msra.mxu0 0.0
  %6157 = vmatprep.subr.mxu0 0.0
  %6158 = vmatpush1.msra.mxu0 0.0
  %6159 = vmatprep.subr.mxu0 0.0
  %6160 = vmatpush1.msra.mxu0 0.0
  %6161 = vmatprep.subr.mxu0 0.0
  %6162 = vmatpush1.msra.mxu0 0.0
  %6163 = vmatprep.subr.mxu0 0.0
  %6164 = vmatpush1.msra.mxu0 0.0
  %6165 = vmatprep.subr.mxu0 0.0
  %6166 = vmatpush1.msra.mxu0 0.0
  %6167 = vmatprep.subr.mxu0 0.0
  %6168 = vmatpush1.msra.mxu0 0.0
  %6169 = vmatprep.subr.mxu0 0.0
  %6170 = vmatpush1.msra.mxu0 0.0
  %6171 = vmatprep.subr.mxu0 0.0
  %6172 = vmatpush1.msra.mxu0 0.0
  %6173 = vmatprep.subr.mxu0 0.0
  %6174 = vmatpush1.msra.mxu0 0.0
  %6175 = vmatprep.subr.mxu0 0.0
  %6176 = vmatpush1.msra.mxu0 0.0
  %6177 = vmatprep.subr.mxu0 0.0
  %6178 = vmatpush1.msra.mxu0 0.0
  %6179 = vmatprep.subr.mxu0 0.0
  %6180 = vmatpush1.msra.mxu0 0.0
  %6181 = vmatprep.subr.mxu0 0.0
  %6182 = vmatpush1.msra.mxu0 0.0
  %6183 = vmatprep.subr.mxu0 0.0
  %6184 = vmatpush1.msra.mxu0 0.0
  %6185 = vmatprep.subr.mxu0 0.0
  %6186 = vmatpush1.msra.mxu0 0.0
  %6187 = vmatprep.subr.mxu0 0.0
  %6188 = vmatpush1.msra.mxu0 0.0
  %6189 = vmatprep.subr.mxu0 0.0
  %6190 = vmatpush1.msra.mxu0 0.0
  %6191 = vmatprep.subr.mxu0 0.0
  %6192 = vmatpush1.msra.mxu0 0.0
  %6193 = vmatprep.subr.mxu0 0.0
  %6194 = vmatpush1.msra.mxu0 0.0
  %6195 = vmatprep.subr.mxu0 0.0
  %6196 = vmatpush1.msra.mxu0 0.0
  %6197 = vmatprep.subr.mxu0 0.0
  %6198 = vmatpush1.msra.mxu0 0.0
  %6199 = vmatprep.subr.mxu0 0.0
  %6200 = vmatpush1.msra.mxu0 0.0
  %6201 = vmatprep.mubr.f32.mxu0 0.0
  %6202 = vmatmul.mubr.f32.gmra.mrb[0].mxu0 %v6131
  %v6203 = vpop.f32.mrb[0].mxu0
  %v6204 = vadd.f32 0.0, %v6203
  %v6205 = vpop.f32.mrb[0].mxu0
  %6206 = vdwg.mxu0
  %v6207 = vlaneseq
  %v6208 = vshrl.u32 %v6207, 7
  %v6209 = vsub.s32 0, %v6208
  %v6210 = vrot.slane %v6204, %v6209
  %v6211 = vmul.f32 %v5904, %v6210
  %v6212 = vmul.f32 %v5909, %v6210
  %v6213 = vlaneseq
  %v6214 = vshrl.u32 %v6213, 7
  %v6215 = vsub.s32 1, %v6214
  %v6216 = vrot.slane %v6204, %v6215
  %v6217 = vadd.f32 %v6211, %v6216
  %v6218 = vadd.f32 %v6212, %v6216
  %v6219 = vmul.f32 %v5985, %v6210
  %v6220 = vmul.f32 %v5990, %v6210
  %v6221 = vadd.f32 %v6219, %v6216
  %v6222 = vadd.f32 %v6220, %v6216
  %v6223 = vld [vmem:[%s2 + $0x840] sm:$0xff]
  %v6224 = vld [vmem:[%s2 + $0x848] sm:$0xff]
  %v6225 = vld [vmem:[%s2 + $0x850] sm:$0xff]
  %v6226 = vld [vmem:[%s2 + $0x858] sm:$0xff]
  %v6227 = vld [vmem:[%s2 + $0x860] sm:$0xff]
  %v6228 = vld [vmem:[%s2 + $0x868] sm:$0xff]
  %v6229 = vld [vmem:[%s2 + $0x870] sm:$0xff]
  %v6230 = vld [vmem:[%s2 + $0x878] sm:$0xff]
  %v6231 = vld [vmem:[%s2 + $0x880] sm:$0xff]
  %v6232 = vld [vmem:[%s2 + $0x888] sm:$0xff]
  %v6233 = vld [vmem:[%s2 + $0x890] sm:$0xff]
  %v6234 = vld [vmem:[%s2 + $0x898] sm:$0xff]
  %v6235 = vld [vmem:[%s2 + $0x8a0] sm:$0xff]
  %v6236 = vld [vmem:[%s2 + $0x8a8] sm:$0xff]
  %v6237 = vld [vmem:[%s2 + $0x8b0] sm:$0xff]
  %v6238 = vld [vmem:[%s2 + $0x8b8] sm:$0xff]
  %6239 = vmatprep.subr.mxu0 0.0
  %6240 = vmatpush1.msra.mxu0 %v6223
  %6241 = vmatprep.subr.mxu0 0.0
  %6242 = vmatpush1.msra.mxu0 %v6224
  %6243 = vmatprep.subr.mxu0 0.0
  %6244 = vmatpush1.msra.mxu0 %v6225
  %6245 = vmatprep.subr.mxu0 0.0
  %6246 = vmatpush1.msra.mxu0 %v6226
  %6247 = vmatprep.subr.mxu0 0.0
  %6248 = vmatpush1.msra.mxu0 %v6227
  %6249 = vmatprep.subr.mxu0 0.0
  %6250 = vmatpush1.msra.mxu0 %v6228
  %6251 = vmatprep.subr.mxu0 0.0
  %6252 = vmatpush1.msra.mxu0 %v6229
  %6253 = vmatprep.subr.mxu0 0.0
  %6254 = vmatpush1.msra.mxu0 %v6230
  %6255 = vmatprep.subr.mxu0 0.0
  %6256 = vmatpush1.msra.mxu0 %v6231
  %6257 = vmatprep.subr.mxu0 0.0
  %6258 = vmatpush1.msra.mxu0 %v6232
  %6259 = vmatprep.subr.mxu0 0.0
  %6260 = vmatpush1.msra.mxu0 %v6233
  %6261 = vmatprep.subr.mxu0 0.0
  %6262 = vmatpush1.msra.mxu0 %v6234
  %6263 = vmatprep.subr.mxu0 0.0
  %6264 = vmatpush1.msra.mxu0 %v6235
  %6265 = vmatprep.subr.mxu0 0.0
  %6266 = vmatpush1.msra.mxu0 %v6236
  %6267 = vmatprep.subr.mxu0 0.0
  %6268 = vmatpush1.msra.mxu0 %v6237
  %6269 = vmatprep.subr.mxu0 0.0
  %6270 = vmatpush1.msra.mxu0 %v6238
  %6271 = vmatprep.subr.mxu0 0.0
  %6272 = vmatpush1.msra.mxu0 0.0
  %6273 = vmatprep.subr.mxu0 0.0
  %6274 = vmatpush1.msra.mxu0 0.0
  %6275 = vmatprep.subr.mxu0 0.0
  %6276 = vmatpush1.msra.mxu0 0.0
  %6277 = vmatprep.subr.mxu0 0.0
  %6278 = vmatpush1.msra.mxu0 0.0
  %6279 = vmatprep.subr.mxu0 0.0
  %6280 = vmatpush1.msra.mxu0 0.0
  %6281 = vmatprep.subr.mxu0 0.0
  %6282 = vmatpush1.msra.mxu0 0.0
  %6283 = vmatprep.subr.mxu0 0.0
  %6284 = vmatpush1.msra.mxu0 0.0
  %6285 = vmatprep.subr.mxu0 0.0
  %6286 = vmatpush1.msra.mxu0 0.0
  %6287 = vmatprep.subr.mxu0 0.0
  %6288 = vmatpush1.msra.mxu0 0.0
  %6289 = vmatprep.subr.mxu0 0.0
  %6290 = vmatpush1.msra.mxu0 0.0
  %6291 = vmatprep.subr.mxu0 0.0
  %6292 = vmatpush1.msra.mxu0 0.0
  %6293 = vmatprep.subr.mxu0 0.0
  %6294 = vmatpush1.msra.mxu0 0.0
  %6295 = vmatprep.subr.mxu0 0.0
  %6296 = vmatpush1.msra.mxu0 0.0
  %6297 = vmatprep.subr.mxu0 0.0
  %6298 = vmatpush1.msra.mxu0 0.0
  %6299 = vmatprep.subr.mxu0 0.0
  %6300 = vmatpush1.msra.mxu0 0.0
  %6301 = vmatprep.subr.mxu0 0.0
  %6302 = vmatpush1.msra.mxu0 0.0
  %6303 = vmatprep.mubr.f32.mxu0 0.0
  %6304 = vmatmul.mubr.f32.gmra.mrb[0].mxu0 %v5812
  %v6305 = vpop.f32.mrb[0].mxu0
  %v6306 = vadd.f32 0.0, %v6305
  %v6307 = vpop.f32.mrb[0].mxu0
  %6308 = vmatprep.mubr.f32.mxu0 0.0
  %6309 = vmatmul.mubr.f32.gmra.mrb[0].mxu0 %v5813
  %v6310 = vpop.f32.mrb[0].mxu0
  %v6311 = vadd.f32 0.0, %v6310
  %v6312 = vpop.f32.mrb[0].mxu0
  %6313 = vdwg.mxu0
  %6314 = vmatprep.subr.mxu0 0.0
  %6315 = vmatpush1.msra.mxu0 %v6223
  %6316 = vmatprep.subr.mxu0 0.0
  %6317 = vmatpush1.msra.mxu0 %v6224
  %6318 = vmatprep.subr.mxu0 0.0
  %6319 = vmatpush1.msra.mxu0 %v6225
  %6320 = vmatprep.subr.mxu0 0.0
  %6321 = vmatpush1.msra.mxu0 %v6226
  %6322 = vmatprep.subr.mxu0 0.0
  %6323 = vmatpush1.msra.mxu0 %v6227
  %6324 = vmatprep.subr.mxu0 0.0
  %6325 = vmatpush1.msra.mxu0 %v6228
  %6326 = vmatprep.subr.mxu0 0.0
  %6327 = vmatpush1.msra.mxu0 %v6229
  %6328 = vmatprep.subr.mxu0 0.0
  %6329 = vmatpush1.msra.mxu0 %v6230
  %6330 = vmatprep.subr.mxu0 0.0
  %6331 = vmatpush1.msra.mxu0 %v6231
  %6332 = vmatprep.subr.mxu0 0.0
  %6333 = vmatpush1.msra.mxu0 %v6232
  %6334 = vmatprep.subr.mxu0 0.0
  %6335 = vmatpush1.msra.mxu0 %v6233
  %6336 = vmatprep.subr.mxu0 0.0
  %6337 = vmatpush1.msra.mxu0 %v6234
  %6338 = vmatprep.subr.mxu0 0.0
  %6339 = vmatpush1.msra.mxu0 %v6235
  %6340 = vmatprep.subr.mxu0 0.0
  %6341 = vmatpush1.msra.mxu0 %v6236
  %6342 = vmatprep.subr.mxu0 0.0
  %6343 = vmatpush1.msra.mxu0 %v6237
  %6344 = vmatprep.subr.mxu0 0.0
  %6345 = vmatpush1.msra.mxu0 %v6238
  %6346 = vmatprep.subr.mxu0 0.0
  %6347 = vmatpush1.msra.mxu0 0.0
  %6348 = vmatprep.subr.mxu0 0.0
  %6349 = vmatpush1.msra.mxu0 0.0
  %6350 = vmatprep.subr.mxu0 0.0
  %6351 = vmatpush1.msra.mxu0 0.0
  %6352 = vmatprep.subr.mxu0 0.0
  %6353 = vmatpush1.msra.mxu0 0.0
  %6354 = vmatprep.subr.mxu0 0.0
  %6355 = vmatpush1.msra.mxu0 0.0
  %6356 = vmatprep.subr.mxu0 0.0
  %6357 = vmatpush1.msra.mxu0 0.0
  %6358 = vmatprep.subr.mxu0 0.0
  %6359 = vmatpush1.msra.mxu0 0.0
  %6360 = vmatprep.subr.mxu0 0.0
  %6361 = vmatpush1.msra.mxu0 0.0
  %6362 = vmatprep.subr.mxu0 0.0
  %6363 = vmatpush1.msra.mxu0 0.0
  %6364 = vmatprep.subr.mxu0 0.0
  %6365 = vmatpush1.msra.mxu0 0.0
  %6366 = vmatprep.subr.mxu0 0.0
  %6367 = vmatpush1.msra.mxu0 0.0
  %6368 = vmatprep.subr.mxu0 0.0
  %6369 = vmatpush1.msra.mxu0 0.0
  %6370 = vmatprep.subr.mxu0 0.0
  %6371 = vmatpush1.msra.mxu0 0.0
  %6372 = vmatprep.subr.mxu0 0.0
  %6373 = vmatpush1.msra.mxu0 0.0
  %6374 = vmatprep.subr.mxu0 0.0
  %6375 = vmatpush1.msra.mxu0 0.0
  %6376 = vmatprep.subr.mxu0 0.0
  %6377 = vmatpush1.msra.mxu0 0.0
  %6378 = vmatprep.mubr.f32.mxu0 0.0
  %6379 = vmatmul.mubr.f32.gmra.mrb[0].mxu0 %v5814
  %v6380 = vpop.f32.mrb[0].mxu0
  %v6381 = vadd.f32 0.0, %v6380
  %v6382 = vpop.f32.mrb[0].mxu0
  %6383 = vmatprep.mubr.f32.mxu0 0.0
  %6384 = vmatmul.mubr.f32.gmra.mrb[0].mxu0 %v5815
  %v6385 = vpop.f32.mrb[0].mxu0
  %v6386 = vadd.f32 0.0, %v6385
  %v6387 = vpop.f32.mrb[0].mxu0
  %6388 = vdwg.mxu0
  %v6389 = vsel %vm152, %v6306, 0.0
  %v6390 = vsel %vm152, %v6311, 0.0
  %v6391 = vadd.f32 %v6389, %v6390
  %v6392 = vrot.slane %v6391, 4
  %v6393 = vadd.f32 %v6391, %v6392
  %v6394 = vrot.slane %v6393, 2
  %v6395 = vadd.f32 %v6393, %v6394
  %v6396 = vrot.slane %v6395, 1
  %v6397 = vadd.f32 %v6395, %v6396
  %v6398 = vmul.f32 %v6306, %v6306
  %v6399 = vmul.f32 %v6311, %v6311
  %v6400 = vsel %vm152, %v6398, 0.0
  %v6401 = vsel %vm152, %v6399, 0.0
  %v6402 = vadd.f32 %v6400, %v6401
  %v6403 = vrot.slane %v6402, 4
  %v6404 = vadd.f32 %v6402, %v6403
  %v6405 = vrot.slane %v6404, 2
  %v6406 = vadd.f32 %v6404, %v6405
  %v6407 = vrot.slane %v6406, 1
  %v6408 = vadd.f32 %v6406, %v6407
  %v6409 = vsel %vm152, %v6381, 0.0
  %v6410 = vsel %vm152, %v6386, 0.0
  %v6411 = vadd.f32 %v6409, %v6410
  %v6412 = vrot.slane %v6411, 4
  %v6413 = vadd.f32 %v6411, %v6412
  %v6414 = vrot.slane %v6413, 2
  %v6415 = vadd.f32 %v6413, %v6414
  %v6416 = vrot.slane %v6415, 1
  %v6417 = vadd.f32 %v6415, %v6416
  %v6418 = vadd.f32 %v6397, %v6417
  %v6419 = vmul.f32 %v6381, %v6381
  %v6420 = vmul.f32 %v6386, %v6386
  %v6421 = vsel %vm152, %v6419, 0.0
  %v6422 = vsel %vm152, %v6420, 0.0
  %v6423 = vadd.f32 %v6421, %v6422
  %v6424 = vrot.slane %v6423, 4
  %v6425 = vadd.f32 %v6423, %v6424
  %v6426 = vrot.slane %v6425, 2
  %v6427 = vadd.f32 %v6425, %v6426
  %v6428 = vrot.slane %v6427, 1
  %v6429 = vadd.f32 %v6427, %v6428
  %v6430 = vadd.f32 %v6408, %v6429
  %v6431 = vsel %vm736, %v6418, %v6430
  %v6433 = vsel %vm152, %v6431, 0
  %6435 = vmatprep.subr.mxu0 0.0
  %6436 = vmatpush1.msra.mxu0 %v111
  %6437 = vmatprep.subr.mxu0 0.0
  %6438 = vmatpush1.msra.mxu0 %v112
  %6439 = vmatprep.subr.mxu0 0.0
  %6440 = vmatpush1.msra.mxu0 %v113
  %6441 = vmatprep.subr.mxu0 0.0
  %6442 = vmatpush1.msra.mxu0 %v114
  %6443 = vmatprep.subr.mxu0 0.0
  %6444 = vmatpush1.msra.mxu0 %v115
  %6445 = vmatprep.subr.mxu0 0.0
  %6446 = vmatpush1.msra.mxu0 %v116
  %6447 = vmatprep.subr.mxu0 0.0
  %6448 = vmatpush1.msra.mxu0 %v117
  %6449 = vmatprep.subr.mxu0 0.0
  %6450 = vmatpush1.msra.mxu0 %v118
  %6451 = vmatprep.subr.mxu0 0.0
  %6452 = vmatpush1.msra.mxu0 0.0
  %6453 = vmatprep.subr.mxu0 0.0
  %6454 = vmatpush1.msra.mxu0 0.0
  %6455 = vmatprep.subr.mxu0 0.0
  %6456 = vmatpush1.msra.mxu0 0.0
  %6457 = vmatprep.subr.mxu0 0.0
  %6458 = vmatpush1.msra.mxu0 0.0
  %6459 = vmatprep.subr.mxu0 0.0
  %6460 = vmatpush1.msra.mxu0 0.0
  %6461 = vmatprep.subr.mxu0 0.0
  %6462 = vmatpush1.msra.mxu0 0.0
  %6463 = vmatprep.subr.mxu0 0.0
  %6464 = vmatpush1.msra.mxu0 0.0
  %6465 = vmatprep.subr.mxu0 0.0
  %6466 = vmatpush1.msra.mxu0 0.0
  %6467 = vmatprep.subr.mxu0 0.0
  %6468 = vmatpush1.msra.mxu0 0.0
  %6469 = vmatprep.subr.mxu0 0.0
  %6470 = vmatpush1.msra.mxu0 0.0
  %6471 = vmatprep.subr.mxu0 0.0
  %6472 = vmatpush1.msra.mxu0 0.0
  %6473 = vmatprep.subr.mxu0 0.0
  %6474 = vmatpush1.msra.mxu0 0.0
  %6475 = vmatprep.subr.mxu0 0.0
  %6476 = vmatpush1.msra.mxu0 0.0
  %6477 = vmatprep.subr.mxu0 0.0
  %6478 = vmatpush1.msra.mxu0 0.0
  %6479 = vmatprep.subr.mxu0 0.0
  %6480 = vmatpush1.msra.mxu0 0.0
  %6481 = vmatprep.subr.mxu0 0.0
  %6482 = vmatpush1.msra.mxu0 0.0
  %6483 = vmatprep.subr.mxu0 0.0
  %6484 = vmatpush1.msra.mxu0 0.0
  %6485 = vmatprep.subr.mxu0 0.0
  %6486 = vmatpush1.msra.mxu0 0.0
  %6487 = vmatprep.subr.mxu0 0.0
  %6488 = vmatpush1.msra.mxu0 0.0
  %6489 = vmatprep.subr.mxu0 0.0
  %6490 = vmatpush1.msra.mxu0 0.0
  %6491 = vmatprep.subr.mxu0 0.0
  %6492 = vmatpush1.msra.mxu0 0.0
  %6493 = vmatprep.subr.mxu0 0.0
  %6494 = vmatpush1.msra.mxu0 0.0
  %6495 = vmatprep.subr.mxu0 0.0
  %6496 = vmatpush1.msra.mxu0 0.0
  %6497 = vmatprep.subr.mxu0 0.0
  %6498 = vmatpush1.msra.mxu0 0.0
  %6499 = vmatprep.mubr.f32.mxu0 0.0
  %6500 = vmatmul.mubr.f32.gmra.mrb[0].mxu0 %v6433
  %v6501 = vpop.f32.mrb[0].mxu0
  %v6502 = vadd.f32 0.0, %v6501
  %v6503 = vpop.f32.mrb[0].mxu0
  %6504 = vdwg.mxu0
  %v6505 = vmul.f32 %v6502, 0.001953125
  %v6506 = vmul.f32 %v6505, %v6505
  %v6508 = vrot.slane %v6506, 7
  %v6510 = vsub.f32 %v6505, %v6508
  %v6511 = vld [vmem:[%s5 + $0x12] sm:$0x1]
  %v6512 = vld [vmem:[%s5 + $0x13] sm:$0x1]
  %v6513 = vadd.f32 %v6510, 1e-05
  %v6514 = vrsqrt.pop %v6513
  %v6516 = vrot.slane %v6514, 1
  %v6518 = vmul.f32 %v6511, %v6516
  %v6519 = vmul.f32 %v6505, %v6518
  %v6520 = vsub.f32 %v6512, %v6519
  %v6522 = vrot.slane %v6520, 7
  %v6524 = vsel %vm736, %v6518, %v6522
  %v6526 = vsel %vm6129, %v6524, 0
  %6528 = vmatprep.subr.mxu0 0.0
  %6529 = vmatpush1.msra.mxu0 %v6135
  %6530 = vmatprep.subr.mxu0 0.0
  %6531 = vmatpush1.msra.mxu0 0.0
  %6532 = vmatprep.subr.mxu0 0.0
  %6533 = vmatpush1.msra.mxu0 0.0
  %6534 = vmatprep.subr.mxu0 0.0
  %6535 = vmatpush1.msra.mxu0 0.0
  %6536 = vmatprep.subr.mxu0 0.0
  %6537 = vmatpush1.msra.mxu0 0.0
  %6538 = vmatprep.subr.mxu0 0.0
  %6539 = vmatpush1.msra.mxu0 0.0
  %6540 = vmatprep.subr.mxu0 0.0
  %6541 = vmatpush1.msra.mxu0 0.0
  %6542 = vmatprep.subr.mxu0 0.0
  %6543 = vmatpush1.msra.mxu0 0.0
  %6544 = vmatprep.subr.mxu0 0.0
  %6545 = vmatpush1.msra.mxu0 0.0
  %6546 = vmatprep.subr.mxu0 0.0
  %6547 = vmatpush1.msra.mxu0 0.0
  %6548 = vmatprep.subr.mxu0 0.0
  %6549 = vmatpush1.msra.mxu0 0.0
  %6550 = vmatprep.subr.mxu0 0.0
  %6551 = vmatpush1.msra.mxu0 0.0
  %6552 = vmatprep.subr.mxu0 0.0
  %6553 = vmatpush1.msra.mxu0 0.0
  %6554 = vmatprep.subr.mxu0 0.0
  %6555 = vmatpush1.msra.mxu0 0.0
  %6556 = vmatprep.subr.mxu0 0.0
  %6557 = vmatpush1.msra.mxu0 0.0
  %6558 = vmatprep.subr.mxu0 0.0
  %6559 = vmatpush1.msra.mxu0 0.0
  %6560 = vmatprep.subr.mxu0 0.0
  %6561 = vmatpush1.msra.mxu0 0.0
  %6562 = vmatprep.subr.mxu0 0.0
  %6563 = vmatpush1.msra.mxu0 0.0
  %6564 = vmatprep.subr.mxu0 0.0
  %6565 = vmatpush1.msra.mxu0 0.0
  %6566 = vmatprep.subr.mxu0 0.0
  %6567 = vmatpush1.msra.mxu0 0.0
  %6568 = vmatprep.subr.mxu0 0.0
  %6569 = vmatpush1.msra.mxu0 0.0
  %6570 = vmatprep.subr.mxu0 0.0
  %6571 = vmatpush1.msra.mxu0 0.0
  %6572 = vmatprep.subr.mxu0 0.0
  %6573 = vmatpush1.msra.mxu0 0.0
  %6574 = vmatprep.subr.mxu0 0.0
  %6575 = vmatpush1.msra.mxu0 0.0
  %6576 = vmatprep.subr.mxu0 0.0
  %6577 = vmatpush1.msra.mxu0 0.0
  %6578 = vmatprep.subr.mxu0 0.0
  %6579 = vmatpush1.msra.mxu0 0.0
  %6580 = vmatprep.subr.mxu0 0.0
  %6581 = vmatpush1.msra.mxu0 0.0
  %6582 = vmatprep.subr.mxu0 0.0
  %6583 = vmatpush1.msra.mxu0 0.0
  %6584 = vmatprep.subr.mxu0 0.0
  %6585 = vmatpush1.msra.mxu0 0.0
  %6586 = vmatprep.subr.mxu0 0.0
  %6587 = vmatpush1.msra.mxu0 0.0
  %6588 = vmatprep.subr.mxu0 0.0
  %6589 = vmatpush1.msra.mxu0 0.0
  %6590 = vmatprep.subr.mxu0 0.0
  %6591 = vmatpush1.msra.mxu0 0.0
  %6592 = vmatprep.mubr.f32.mxu0 0.0
  %6593 = vmatmul.mubr.f32.gmra.mrb[0].mxu0 %v6526
  %v6594 = vpop.f32.mrb[0].mxu0
  %v6595 = vadd.f32 0.0, %v6594
  %v6596 = vpop.f32.mrb[0].mxu0
  %6597 = vdwg.mxu0
  %v6598 = vlaneseq
  %v6599 = vshrl.u32 %v6598, 7
  %v6600 = vsub.s32 0, %v6599
  %v6601 = vrot.slane %v6595, %v6600
  %v6602 = vmul.f32 %v6306, %v6601
  %v6603 = vmul.f32 %v6311, %v6601
  %v6604 = vlaneseq
  %v6605 = vshrl.u32 %v6604, 7
  %v6606 = vsub.s32 1, %v6605
  %v6607 = vrot.slane %v6595, %v6606
  %v6608 = vadd.f32 %v6602, %v6607
  %v6609 = vadd.f32 %v6603, %v6607
  %v6610 = vmul.f32 %v6381, %v6601
  %v6611 = vmul.f32 %v6386, %v6601
  %v6612 = vadd.f32 %v6610, %v6607
  %v6613 = vadd.f32 %v6611, %v6607
  %v6614 = vadd.f32 %v6217, %v6608
  %v6615 = vadd.f32 %v6218, %v6609
  %v6616 = vadd.f32 %v6221, %v6612
  %v6617 = vadd.f32 %v6222, %v6613
  %6620 = vrot.lane.b32.xlu0 %v6616, 64
  %v6621 = vpop.permute.xlu0 %6620
  %6622 = vrot.lane.b32.xlu0 %v6617, 64
  %v6623 = vpop.permute.xlu0 %6622
  %v6626 = vsel %vm152, %v6614, %v6621
  %v6627 = vsel %vm152, %v6615, %v6623
  %6628 = vst [vmem:[%s6] sm:$0xff] %v6626
  %6629 = vst [vmem:[%s6 + $0x8] sm:$0xff] %v6627
  // Predicated region
  $region26: #{resblock_forward.1} parent=0 // pred_check
    _
  $region27: #{resblock_forward.1} parent=0 // pred_check_branch
    %6631 = sbr.rel (0) target = $region29
  $region28: #{resblock_forward.1} parent=0 // pred_region
    _
  $region29: #{resblock_forward.1} parent=0 // pred_fallthru
    _
  // Predicated region
  $region30: #{resblock_forward.1} parent=0 // pred_check
    _
  $region31: #{resblock_forward.1} parent=0 // pred_check_branch
    %6633 = sbr.rel (0) target = $region33
  $region32: #{resblock_forward.1} parent=0 // pred_region
    _
  $region33: #{resblock_forward.1} parent=0 // pred_fallthru
    _

</llo_original>
